<compile_context>
chip_gen: v7x
topology: tpu7x:2x2x1
jax: 0.10.0
libtpu: 0.0.40
codegen_flags: <defaults>
</compile_context>

<pallas_src>
import functools

import numpy as np
import jax
import jax.numpy as jnp
from jax.experimental import pallas as pl
from jax.experimental.pallas import tpu as pltpu


def relative_position_index_np(window_size):
    """Replicates the torch buffer computation (including the 'xy' meshgrid)."""
    Wd, Wh, Ww = window_size
    coords_d = np.arange(Wd)
    coords_h = np.arange(Wh)
    coords_w = np.arange(Ww)
    grids = np.meshgrid(coords_d, coords_h, coords_w, indexing="xy")  # matches torch 'xy'
    coords = np.stack(grids)                       # (3, Wh, Wd, Ww)
    coords_flatten = coords.reshape(3, -1)         # (3, N)
    relative_coords = coords_flatten[:, :, None] - coords_flatten[:, None, :]
    relative_coords = np.transpose(relative_coords, (1, 2, 0)).astype(np.int64)
    relative_coords[:, :, 0] += Wd - 1
    relative_coords[:, :, 1] += Wh - 1
    relative_coords[:, :, 2] += Ww - 1
    relative_coords[:, :, 0] *= (2 * Wh - 1) * (2 * Ww - 1)
    relative_coords[:, :, 1] *= 2 * Ww - 1
    return relative_coords.sum(-1)                 # (N, N)


def window_attention_kernel(x_ref, wqkv_ref, wproj_ref, bproj_ref, rpb_ref,
                            xout_ref, qout_ref, kout_ref, vout_ref,
                            *, num_heads, scale):
    """One grid step: WB windows, fused QKV proj + MHSA + output projection."""
    WB, N, C = x_ref.shape
    hd = C // num_heads

    x = x_ref[...].astype(jnp.float32)

    # QKV projection: (WB, N, C) @ (C, 3C) on the MXU, f32 accumulation.
    qkv = jnp.einsum("bnc,cd->bnd", x, wqkv_ref[...],
                     preferred_element_type=jnp.float32)
    # 128-lane-aligned slices of the fused projection (C is a multiple of 128).
    q = qkv[:, :, :C] * scale       # torch scales q before attn and returns scaled q
    k = qkv[:, :, C:2 * C]
    v = qkv[:, :, 2 * C:]

    qout_ref[...] = q.astype(qout_ref.dtype)
    kout_ref[...] = k.astype(kout_ref.dtype)
    vout_ref[...] = v.astype(vout_ref.dtype)

    # Per-head attention (num_heads is small and static -> unrolled loop;
    # attention tiles are lane-dense (WB, N, N)).
    head_outs = []
    for h in range(num_heads):
        sl = slice(h * hd, (h + 1) * hd)
        qh, kh, vh = q[:, :, sl], k[:, :, sl], v[:, :, sl]
        attn = jnp.einsum("bqd,bkd->bqk", qh, kh,
                          preferred_element_type=jnp.float32)
        attn = attn + rpb_ref[h]                          # (N, N) bias, bcast over WB
        attn = attn - jnp.max(attn, axis=-1, keepdims=True)
        p = jnp.exp(attn)
        denom = jnp.sum(p, axis=-1, keepdims=True)        # (WB, N, 1)
        oh = jnp.einsum("bqk,bkd->bqd", p, vh,
                        preferred_element_type=jnp.float32)
        # Normalize after attn@v: scales (N, hd) instead of dividing (N, N).
        head_outs.append(oh * pl.reciprocal(denom, approx=True))

    # Merge heads (head-major channel order, matching transpose(1,2).reshape).
    o = jnp.concatenate(head_outs, axis=-1)               # (WB, N, C)

    # Output projection + bias.
    xout = jnp.einsum("bnc,cd->bnd", o, wproj_ref[...],
                      preferred_element_type=jnp.float32)
    xout = xout + bproj_ref[...]
    xout_ref[...] = xout.astype(xout_ref.dtype)


def window_attention_forward(x, w_qkv, w_proj, b_proj, rel_table, rel_index,
                             num_heads, scale):
    """x: (B_, N, C). Returns (x_out, None, v, k, q) like the torch module."""
    B_, N, C = x.shape
    hd = C // num_heads

    # Windows per grid step: amortize per-step overhead but keep >1 grid step
    # so megacore ("parallel") can shard steps across TensorCores.
    WB = 2 if (B_ % 2 == 0 and B_ >= 4) else 1

    # Relative-position-bias gather: pure data movement, done once in XLA glue.
    rpb = rel_table[rel_index.reshape(-1)].reshape(N, N, num_heads)
    rpb = jnp.transpose(rpb, (2, 0, 1)).astype(jnp.float32)   # (nH, N, N)

    wqkv_t = jnp.transpose(w_qkv)          # (C, 3C)   (torch Linear: y = x @ W^T)
    wproj_t = jnp.transpose(w_proj)        # (C, C)
    bproj_row = b_proj.reshape(1, C)

    kernel = functools.partial(window_attention_kernel,
                               num_heads=num_heads, scale=scale)

    out_shape = tuple(jax.ShapeDtypeStruct((B_, N, C), x.dtype) for _ in range(4))
    out_block = pl.BlockSpec((WB, N, C), lambda b: (b, 0, 0))

    xo, qo, ko, vo = pl.pallas_call(
        kernel,
        out_shape=out_shape,
        grid_spec=pltpu.PrefetchScalarGridSpec(
            num_scalar_prefetch=0,
            grid=(B_ // WB,),
            in_specs=[
                pl.BlockSpec((WB, N, C), lambda b: (b, 0, 0)),           # x (per step)
                pl.BlockSpec((C, 3 * C), lambda b: (0, 0)),              # qkv weight (resident)
                pl.BlockSpec((C, C), lambda b: (0, 0)),                  # proj weight (resident)
                pl.BlockSpec((1, C), lambda b: (0, 0)),                  # proj bias (resident)
                pl.BlockSpec((num_heads, N, N), lambda b: (0, 0, 0)),    # rel. pos. bias (resident)
            ],
            out_specs=(out_block, out_block, out_block, out_block),
        ),
        compiler_params=pltpu.CompilerParams(
            dimension_semantics=("parallel",),
            vmem_limit_bytes=32 * 1024 * 1024,
        ),
    )(x, wqkv_t, wproj_t, bproj_row, rpb)

    # Wrapper-side layout plumbing: (B_, N, C) -> (B_, nH, N, hd) like torch.
    def split_heads(t):
        return jnp.transpose(t.reshape(B_, N, num_heads, hd), (0, 2, 1, 3))

    return xo, None, split_heads(vo), split_heads(ko), split_heads(qo)


def reference(x, w_qkv, w_proj, b_proj, rel_table, rel_index, num_heads, scale):
    """Pure-JAX reference mirroring the torch forward (default path)."""
    B_, N, C = x.shape
    hd = C // num_heads
    qkv = jnp.einsum("bnc,dc->bnd", x, w_qkv)                       # Linear, bias=False
    qkv = qkv.reshape(B_, N, 3, num_heads, hd).transpose(2, 0, 3, 1, 4)
    q, k, v = qkv[0], qkv[1], qkv[2]
    q = q * scale
    attn = jnp.einsum("bhqd,bhkd->bhqk", q, k)
    rpb = rel_table[rel_index.reshape(-1)].reshape(N, N, num_heads)
    rpb = jnp.transpose(rpb, (2, 0, 1))
    attn = attn + rpb[None]
    attn = jax.nn.softmax(attn, axis=-1)
    out = jnp.einsum("bhqk,bhkd->bhqd", attn, v)
    out = jnp.transpose(out, (0, 2, 1, 3)).reshape(B_, N, C)
    out = out @ jnp.transpose(w_proj) + b_proj
    return out, q, k, v


if __name__ == "__main__":
    # Small shapes consistent with the module; chosen lane-dense (N = C = 128).
    window_size = (2, 8, 8)
    num_heads = 4
    dim = 128
    B_ = 4                                        # num_windows * batch
    N = window_size[0] * window_size[1] * window_size[2]   # 128
    head_dim = dim // num_heads
    scale = head_dim ** (-0.5)

    key = jax.random.PRNGKey(0)
    k_x, k_qkv, k_proj, k_bp, k_tab = jax.random.split(key, 5)

    x = jax.random.normal(k_x, (B_, N, dim), dtype=jnp.float32)
    w_qkv = jax.random.normal(k_qkv, (3 * dim, dim), jnp.float32) / np.sqrt(dim)
    w_proj = jax.random.normal(k_proj, (dim, dim), jnp.float32) / np.sqrt(dim)
    b_proj = 0.02 * jax.random.normal(k_bp, (dim,), jnp.float32)

    table_size = ((2 * window_size[0] - 1) * (2 * window_size[1] - 1)
                  * (2 * window_size[2] - 1))
    rel_table = 0.02 * jax.random.normal(k_tab, (table_size, num_heads), jnp.float32)
    rel_index = jnp.asarray(relative_position_index_np(window_size), jnp.int32)

    x_out, x2, v, k, q = window_attention_forward(
        x, w_qkv, w_proj, b_proj, rel_table, rel_index, num_heads, scale)
    jax.block_until_ready((x_out, v, k, q))

    assert x_out.shape == (B_, N, dim)
    assert q.shape == (B_, num_heads, N, head_dim)
    assert x2 is None

    ref_x, ref_q, ref_k, ref_v = reference(
        x, w_qkv, w_proj, b_proj, rel_table, rel_index, num_heads, scale)

    for name, got, want in (("x", x_out, ref_x), ("q", q, ref_q),
                            ("k", k, ref_k), ("v", v, ref_v)):
        if not jnp.allclose(got, want, atol=5e-3, rtol=5e-3):
            diff = float(jnp.max(jnp.abs(got - want)))
            raise AssertionError(f"Pallas output '{name}' mismatch, max abs diff {diff}")

    print("KERNEL_OK")
</pallas_src>

<mosaic_0001>
module attributes {stable_mosaic.version = 11 : i64} {
  func.func @window_attention_kernel(%arg0: i32, %arg1: memref<2x128x128xf32, #tpu.memory_space<vmem>>, %arg2: memref<128x384xf32, #tpu.memory_space<vmem>>, %arg3: memref<128x128xf32, #tpu.memory_space<vmem>>, %arg4: memref<1x128xf32, #tpu.memory_space<vmem>>, %arg5: memref<4x128x128xf32, #tpu.memory_space<vmem>>, %arg6: memref<2x128x128xf32, #tpu.memory_space<vmem>>, %arg7: memref<2x128x128xf32, #tpu.memory_space<vmem>>, %arg8: memref<2x128x128xf32, #tpu.memory_space<vmem>>, %arg9: memref<2x128x128xf32, #tpu.memory_space<vmem>>) attributes {dimension_semantics = [#tpu.dimension_semantics<parallel>], iteration_bounds = array<i64: 2>, scalar_prefetch = 0 : i64, scratch_operands = 0 : i64, tpu.core_type = #tpu.core_type<tc>, window_params = [{transform_indices = @transform_0, window_bounds = array<i64: 2, 128, 128>}, {pipeline_mode = #tpu.pipeline_mode<synchronous>, transform_indices = @transform_1, window_bounds = array<i64: 128, 384>}, {pipeline_mode = #tpu.pipeline_mode<synchronous>, transform_indices = @transform_2, window_bounds = array<i64: 128, 128>}, {pipeline_mode = #tpu.pipeline_mode<synchronous>, transform_indices = @transform_3, window_bounds = array<i64: 1, 128>}, {pipeline_mode = #tpu.pipeline_mode<synchronous>, transform_indices = @transform_4, window_bounds = array<i64: 4, 128, 128>}, {transform_indices = @transform_5, window_bounds = array<i64: 2, 128, 128>}, {transform_indices = @transform_6, window_bounds = array<i64: 2, 128, 128>}, {transform_indices = @transform_7, window_bounds = array<i64: 2, 128, 128>}, {transform_indices = @transform_8, window_bounds = array<i64: 2, 128, 128>}]} {
    %c0 = arith.constant 0 : index
    %c0_0 = arith.constant 0 : index
    %c0_1 = arith.constant 0 : index
    %0 = vector.load %arg1[%c0, %c0_0, %c0_1] : memref<2x128x128xf32, #tpu.memory_space<vmem>>, vector<2x128x128xf32>
    %c0_2 = arith.constant 0 : index
    %c0_3 = arith.constant 0 : index
    %1 = vector.load %arg2[%c0_2, %c0_3] : memref<128x384xf32, #tpu.memory_space<vmem>>, vector<128x384xf32>
    "tpu.trace_start"() <{level = 10 : i32, message = "bnc,cd->bnd"}> : () -> ()
    %cst = arith.constant dense<0.000000e+00> : vector<2x128x384xf32>
    %2 = tpu.matmul %0, %1, %cst {dimension_numbers = #tpu.dot_dimension_numbers<[2], [0], [0, 1], [1], [0, 0, 0, 1, 1, 1], [], []>} : vector<2x128x128xf32>, vector<128x384xf32>, vector<2x128x384xf32> -> vector<2x128x384xf32>
    "tpu.trace_stop"() : () -> ()
    %3 = vector.extract_strided_slice %2 {offsets = [0, 0, 0], sizes = [2, 128, 128], strides = [1, 1, 1]} : vector<2x128x384xf32> to vector<2x128x128xf32>
    %cst_4 = arith.constant 0.176776692 : f32
    %4 = vector.broadcast %cst_4 : f32 to vector<2x128x128xf32>
    %5 = arith.mulf %3, %4 : vector<2x128x128xf32>
    %6 = vector.extract_strided_slice %2 {offsets = [0, 0, 128], sizes = [2, 128, 128], strides = [1, 1, 1]} : vector<2x128x384xf32> to vector<2x128x128xf32>
    %7 = vector.extract_strided_slice %2 {offsets = [0, 0, 256], sizes = [2, 128, 128], strides = [1, 1, 1]} : vector<2x128x384xf32> to vector<2x128x128xf32>
    %c0_5 = arith.constant 0 : index
    %c0_6 = arith.constant 0 : index
    %c0_7 = arith.constant 0 : index
    %8 = vector.load %arg7[%c0_5, %c0_6, %c0_7] : memref<2x128x128xf32, #tpu.memory_space<vmem>>, vector<2x128x128xf32>
    tpu.vector_store %arg7[%c0_5, %c0_6, %c0_7], %5 {strides = array<i32>} : memref<2x128x128xf32, #tpu.memory_space<vmem>>, vector<2x128x128xf32>,
    %c0_8 = arith.constant 0 : index
    %c0_9 = arith.constant 0 : index
    %c0_10 = arith.constant 0 : index
    %9 = vector.load %arg8[%c0_8, %c0_9, %c0_10] : memref<2x128x128xf32, #tpu.memory_space<vmem>>, vector<2x128x128xf32>
    tpu.vector_store %arg8[%c0_8, %c0_9, %c0_10], %6 {strides = array<i32>} : memref<2x128x128xf32, #tpu.memory_space<vmem>>, vector<2x128x128xf32>,
    %c0_11 = arith.constant 0 : index
    %c0_12 = arith.constant 0 : index
    %c0_13 = arith.constant 0 : index
    %10 = vector.load %arg9[%c0_11, %c0_12, %c0_13] : memref<2x128x128xf32, #tpu.memory_space<vmem>>, vector<2x128x128xf32>
    tpu.vector_store %arg9[%c0_11, %c0_12, %c0_13], %7 {strides = array<i32>} : memref<2x128x128xf32, #tpu.memory_space<vmem>>, vector<2x128x128xf32>,
    %11 = vector.extract_strided_slice %5 {offsets = [0, 0, 0], sizes = [2, 128, 32], strides = [1, 1, 1]} : vector<2x128x128xf32> to vector<2x128x32xf32>
    %12 = vector.extract_strided_slice %6 {offsets = [0, 0, 0], sizes = [2, 128, 32], strides = [1, 1, 1]} : vector<2x128x128xf32> to vector<2x128x32xf32>
    %13 = vector.extract_strided_slice %7 {offsets = [0, 0, 0], sizes = [2, 128, 32], strides = [1, 1, 1]} : vector<2x128x128xf32> to vector<2x128x32xf32>
    "tpu.trace_start"() <{level = 10 : i32, message = "bqd,bkd->bqk"}> : () -> ()
    %cst_14 = arith.constant dense<0.000000e+00> : vector<2x128x128xf32>
    %14 = tpu.matmul %11, %12, %cst_14 {dimension_numbers = #tpu.dot_dimension_numbers<[2], [2], [1], [1], [0, 0, 0, 1, 1, 1], [0], [0]>} : vector<2x128x32xf32>, vector<2x128x32xf32>, vector<2x128x128xf32> -> vector<2x128x128xf32>
    "tpu.trace_stop"() : () -> ()
    %c0_15 = arith.constant 0 : index
    %c0_16 = arith.constant 0 : index
    %c0_17 = arith.constant 0 : index
    %15 = vector.load %arg5[%c0_15, %c0_16, %c0_17] : memref<4x128x128xf32, #tpu.memory_space<vmem>>, vector<1x128x128xf32>
    %16 = vector.shape_cast %15 : vector<1x128x128xf32> to vector<128x128xf32>
    %17 = vector.shape_cast %16 : vector<128x128xf32> to vector<1x128x128xf32>
    %18 = vector.broadcast %17 : vector<1x128x128xf32> to vector<2x128x128xf32>
    %19 = arith.addf %14, %18 : vector<2x128x128xf32>
    %cst_18 = arith.constant dense<0xFF800000> : vector<2x128xf32>
    %20 = vector.multi_reduction <maximumf>, %19, %cst_18 [2] : vector<2x128x128xf32> to vector<2x128xf32>
    %21 = vector.shape_cast %20 : vector<2x128xf32> to vector<2x128x1xf32>
    %22 = vector.broadcast %21 : vector<2x128x1xf32> to vector<2x128x128xf32>
    %23 = arith.subf %19, %22 : vector<2x128x128xf32>
    %24 = math.exp %23 : vector<2x128x128xf32>
    %cst_19 = arith.constant dense<0.000000e+00> : vector<2x128xf32>
    %25 = vector.multi_reduction <add>, %24, %cst_19 [2] : vector<2x128x128xf32> to vector<2x128xf32>
    %26 = vector.shape_cast %25 : vector<2x128xf32> to vector<2x128x1xf32>
    "tpu.trace_start"() <{level = 10 : i32, message = "bqk,bkd->bqd"}> : () -> ()
    %cst_20 = arith.constant dense<0.000000e+00> : vector<2x128x32xf32>
    %27 = tpu.matmul %24, %13, %cst_20 {dimension_numbers = #tpu.dot_dimension_numbers<[2], [1], [1], [2], [0, 0, 0, 1, 1, 2], [0], [0]>} : vector<2x128x128xf32>, vector<2x128x32xf32>, vector<2x128x32xf32> -> vector<2x128x32xf32>
    "tpu.trace_stop"() : () -> ()
    %28 = tpu.reciprocal %26 {approx = true} : vector<2x128x1xf32> -> vector<2x128x1xf32>
    %29 = vector.broadcast %28 : vector<2x128x1xf32> to vector<2x128x32xf32>
    %30 = arith.mulf %27, %29 : vector<2x128x32xf32>
    %31 = vector.extract_strided_slice %5 {offsets = [0, 0, 32], sizes = [2, 128, 32], strides = [1, 1, 1]} : vector<2x128x128xf32> to vector<2x128x32xf32>
    %32 = vector.extract_strided_slice %6 {offsets = [0, 0, 32], sizes = [2, 128, 32], strides = [1, 1, 1]} : vector<2x128x128xf32> to vector<2x128x32xf32>
    %33 = vector.extract_strided_slice %7 {offsets = [0, 0, 32], sizes = [2, 128, 32], strides = [1, 1, 1]} : vector<2x128x128xf32> to vector<2x128x32xf32>
    "tpu.trace_start"() <{level = 10 : i32, message = "bqd,bkd->bqk"}> : () -> ()
    %cst_21 = arith.constant dense<0.000000e+00> : vector<2x128x128xf32>
    %34 = tpu.matmul %31, %32, %cst_21 {dimension_numbers = #tpu.dot_dimension_numbers<[2], [2], [1], [1], [0, 0, 0, 1, 1, 1], [0], [0]>} : vector<2x128x32xf32>, vector<2x128x32xf32>, vector<2x128x128xf32> -> vector<2x128x128xf32>
    "tpu.trace_stop"() : () -> ()
    %c1 = arith.constant 1 : index
    %c0_22 = arith.constant 0 : index
    %c0_23 = arith.constant 0 : index
    %35 = vector.load %arg5[%c1, %c0_22, %c0_23] : memref<4x128x128xf32, #tpu.memory_space<vmem>>, vector<1x128x128xf32>
    %36 = vector.shape_cast %35 : vector<1x128x128xf32> to vector<128x128xf32>
    %37 = vector.shape_cast %36 : vector<128x128xf32> to vector<1x128x128xf32>
    %38 = vector.broadcast %37 : vector<1x128x128xf32> to vector<2x128x128xf32>
    %39 = arith.addf %34, %38 : vector<2x128x128xf32>
    %cst_24 = arith.constant dense<0xFF800000> : vector<2x128xf32>
    %40 = vector.multi_reduction <maximumf>, %39, %cst_24 [2] : vector<2x128x128xf32> to vector<2x128xf32>
    %41 = vector.shape_cast %40 : vector<2x128xf32> to vector<2x128x1xf32>
    %42 = vector.broadcast %41 : vector<2x128x1xf32> to vector<2x128x128xf32>
    %43 = arith.subf %39, %42 : vector<2x128x128xf32>
    %44 = math.exp %43 : vector<2x128x128xf32>
    %cst_25 = arith.constant dense<0.000000e+00> : vector<2x128xf32>
    %45 = vector.multi_reduction <add>, %44, %cst_25 [2] : vector<2x128x128xf32> to vector<2x128xf32>
    %46 = vector.shape_cast %45 : vector<2x128xf32> to vector<2x128x1xf32>
    "tpu.trace_start"() <{level = 10 : i32, message = "bqk,bkd->bqd"}> : () -> ()
    %cst_26 = arith.constant dense<0.000000e+00> : vector<2x128x32xf32>
    %47 = tpu.matmul %44, %33, %cst_26 {dimension_numbers = #tpu.dot_dimension_numbers<[2], [1], [1], [2], [0, 0, 0, 1, 1, 2], [0], [0]>} : vector<2x128x128xf32>, vector<2x128x32xf32>, vector<2x128x32xf32> -> vector<2x128x32xf32>
    "tpu.trace_stop"() : () -> ()
    %48 = tpu.reciprocal %46 {approx = true} : vector<2x128x1xf32> -> vector<2x128x1xf32>
    %49 = vector.broadcast %48 : vector<2x128x1xf32> to vector<2x128x32xf32>
    %50 = arith.mulf %47, %49 : vector<2x128x32xf32>
    %51 = vector.extract_strided_slice %5 {offsets = [0, 0, 64], sizes = [2, 128, 32], strides = [1, 1, 1]} : vector<2x128x128xf32> to vector<2x128x32xf32>
    %52 = vector.extract_strided_slice %6 {offsets = [0, 0, 64], sizes = [2, 128, 32], strides = [1, 1, 1]} : vector<2x128x128xf32> to vector<2x128x32xf32>
    %53 = vector.extract_strided_slice %7 {offsets = [0, 0, 64], sizes = [2, 128, 32], strides = [1, 1, 1]} : vector<2x128x128xf32> to vector<2x128x32xf32>
    "tpu.trace_start"() <{level = 10 : i32, message = "bqd,bkd->bqk"}> : () -> ()
    %cst_27 = arith.constant dense<0.000000e+00> : vector<2x128x128xf32>
    %54 = tpu.matmul %51, %52, %cst_27 {dimension_numbers = #tpu.dot_dimension_numbers<[2], [2], [1], [1], [0, 0, 0, 1, 1, 1], [0], [0]>} : vector<2x128x32xf32>, vector<2x128x32xf32>, vector<2x128x128xf32> -> vector<2x128x128xf32>
    "tpu.trace_stop"() : () -> ()
    %c2 = arith.constant 2 : index
    %c0_28 = arith.constant 0 : index
    %c0_29 = arith.constant 0 : index
    %55 = vector.load %arg5[%c2, %c0_28, %c0_29] : memref<4x128x128xf32, #tpu.memory_space<vmem>>, vector<1x128x128xf32>
    %56 = vector.shape_cast %55 : vector<1x128x128xf32> to vector<128x128xf32>
    %57 = vector.shape_cast %56 : vector<128x128xf32> to vector<1x128x128xf32>
    %58 = vector.broadcast %57 : vector<1x128x128xf32> to vector<2x128x128xf32>
    %59 = arith.addf %54, %58 : vector<2x128x128xf32>
    %cst_30 = arith.constant dense<0xFF800000> : vector<2x128xf32>
    %60 = vector.multi_reduction <maximumf>, %59, %cst_30 [2] : vector<2x128x128xf32> to vector<2x128xf32>
    %61 = vector.shape_cast %60 : vector<2x128xf32> to vector<2x128x1xf32>
    %62 = vector.broadcast %61 : vector<2x128x1xf32> to vector<2x128x128xf32>
    %63 = arith.subf %59, %62 : vector<2x128x128xf32>
    %64 = math.exp %63 : vector<2x128x128xf32>
    %cst_31 = arith.constant dense<0.000000e+00> : vector<2x128xf32>
    %65 = vector.multi_reduction <add>, %64, %cst_31 [2] : vector<2x128x128xf32> to vector<2x128xf32>
    %66 = vector.shape_cast %65 : vector<2x128xf32> to vector<2x128x1xf32>
    "tpu.trace_start"() <{level = 10 : i32, message = "bqk,bkd->bqd"}> : () -> ()
    %cst_32 = arith.constant dense<0.000000e+00> : vector<2x128x32xf32>
    %67 = tpu.matmul %64, %53, %cst_32 {dimension_numbers = #tpu.dot_dimension_numbers<[2], [1], [1], [2], [0, 0, 0, 1, 1, 2], [0], [0]>} : vector<2x128x128xf32>, vector<2x128x32xf32>, vector<2x128x32xf32> -> vector<2x128x32xf32>
    "tpu.trace_stop"() : () -> ()
    %68 = tpu.reciprocal %66 {approx = true} : vector<2x128x1xf32> -> vector<2x128x1xf32>
    %69 = vector.broadcast %68 : vector<2x128x1xf32> to vector<2x128x32xf32>
    %70 = arith.mulf %67, %69 : vector<2x128x32xf32>
    %71 = vector.extract_strided_slice %5 {offsets = [0, 0, 96], sizes = [2, 128, 32], strides = [1, 1, 1]} : vector<2x128x128xf32> to vector<2x128x32xf32>
    %72 = vector.extract_strided_slice %6 {offsets = [0, 0, 96], sizes = [2, 128, 32], strides = [1, 1, 1]} : vector<2x128x128xf32> to vector<2x128x32xf32>
    %73 = vector.extract_strided_slice %7 {offsets = [0, 0, 96], sizes = [2, 128, 32], strides = [1, 1, 1]} : vector<2x128x128xf32> to vector<2x128x32xf32>
    "tpu.trace_start"() <{level = 10 : i32, message = "bqd,bkd->bqk"}> : () -> ()
    %cst_33 = arith.constant dense<0.000000e+00> : vector<2x128x128xf32>
    %74 = tpu.matmul %71, %72, %cst_33 {dimension_numbers = #tpu.dot_dimension_numbers<[2], [2], [1], [1], [0, 0, 0, 1, 1, 1], [0], [0]>} : vector<2x128x32xf32>, vector<2x128x32xf32>, vector<2x128x128xf32> -> vector<2x128x128xf32>
    "tpu.trace_stop"() : () -> ()
    %c3 = arith.constant 3 : index
    %c0_34 = arith.constant 0 : index
    %c0_35 = arith.constant 0 : index
    %75 = vector.load %arg5[%c3, %c0_34, %c0_35] : memref<4x128x128xf32, #tpu.memory_space<vmem>>, vector<1x128x128xf32>
    %76 = vector.shape_cast %75 : vector<1x128x128xf32> to vector<128x128xf32>
    %77 = vector.shape_cast %76 : vector<128x128xf32> to vector<1x128x128xf32>
    %78 = vector.broadcast %77 : vector<1x128x128xf32> to vector<2x128x128xf32>
    %79 = arith.addf %74, %78 : vector<2x128x128xf32>
    %cst_36 = arith.constant dense<0xFF800000> : vector<2x128xf32>
    %80 = vector.multi_reduction <maximumf>, %79, %cst_36 [2] : vector<2x128x128xf32> to vector<2x128xf32>
    %81 = vector.shape_cast %80 : vector<2x128xf32> to vector<2x128x1xf32>
    %82 = vector.broadcast %81 : vector<2x128x1xf32> to vector<2x128x128xf32>
    %83 = arith.subf %79, %82 : vector<2x128x128xf32>
    %84 = math.exp %83 : vector<2x128x128xf32>
    %cst_37 = arith.constant dense<0.000000e+00> : vector<2x128xf32>
    %85 = vector.multi_reduction <add>, %84, %cst_37 [2] : vector<2x128x128xf32> to vector<2x128xf32>
    %86 = vector.shape_cast %85 : vector<2x128xf32> to vector<2x128x1xf32>
    "tpu.trace_start"() <{level = 10 : i32, message = "bqk,bkd->bqd"}> : () -> ()
    %cst_38 = arith.constant dense<0.000000e+00> : vector<2x128x32xf32>
    %87 = tpu.matmul %84, %73, %cst_38 {dimension_numbers = #tpu.dot_dimension_numbers<[2], [1], [1], [2], [0, 0, 0, 1, 1, 2], [0], [0]>} : vector<2x128x128xf32>, vector<2x128x32xf32>, vector<2x128x32xf32> -> vector<2x128x32xf32>
    "tpu.trace_stop"() : () -> ()
    %88 = tpu.reciprocal %86 {approx = true} : vector<2x128x1xf32> -> vector<2x128x1xf32>
    %89 = vector.broadcast %88 : vector<2x128x1xf32> to vector<2x128x32xf32>
    %90 = arith.mulf %87, %89 : vector<2x128x32xf32>
    %91 = tpu.concatenate %30, %50, %70, %90 in 2 : vector<2x128x32xf32>, vector<2x128x32xf32>, vector<2x128x32xf32>, vector<2x128x32xf32> -> vector<2x128x128xf32>
    %c0_39 = arith.constant 0 : index
    %c0_40 = arith.constant 0 : index
    %92 = vector.load %arg3[%c0_39, %c0_40] : memref<128x128xf32, #tpu.memory_space<vmem>>, vector<128x128xf32>
    "tpu.trace_start"() <{level = 10 : i32, message = "bnc,cd->bnd"}> : () -> ()
    %cst_41 = arith.constant dense<0.000000e+00> : vector<2x128x128xf32>
    %93 = tpu.matmul %91, %92, %cst_41 {dimension_numbers = #tpu.dot_dimension_numbers<[2], [0], [0, 1], [1], [0, 0, 0, 1, 1, 1], [], []>} : vector<2x128x128xf32>, vector<128x128xf32>, vector<2x128x128xf32> -> vector<2x128x128xf32>
    "tpu.trace_stop"() : () -> ()
    %c0_42 = arith.constant 0 : index
    %c0_43 = arith.constant 0 : index
    %94 = vector.load %arg4[%c0_42, %c0_43] : memref<1x128xf32, #tpu.memory_space<vmem>>, vector<1x128xf32>
    %95 = vector.shape_cast %94 : vector<1x128xf32> to vector<1x1x128xf32>
    %96 = vector.broadcast %95 : vector<1x1x128xf32> to vector<2x128x128xf32>
    %97 = arith.addf %93, %96 : vector<2x128x128xf32>
    %c0_44 = arith.constant 0 : index
    %c0_45 = arith.constant 0 : index
    %c0_46 = arith.constant 0 : index
    %98 = vector.load %arg6[%c0_44, %c0_45, %c0_46] : memref<2x128x128xf32, #tpu.memory_space<vmem>>, vector<2x128x128xf32>
    tpu.vector_store %arg6[%c0_44, %c0_45, %c0_46], %97 {strides = array<i32>} : memref<2x128x128xf32, #tpu.memory_space<vmem>>, vector<2x128x128xf32>,
    return
  }
  func.func @transform_0(%arg0: i32) -> (i32, i32, i32) {
    %c0_i32 = arith.constant 0 : i32
    %c0_i32_0 = arith.constant 0 : i32
    %c0_i32_1 = arith.constant 0 : i32
    return %arg0, %c0_i32, %c0_i32_0 : i32, i32, i32
  }
  func.func @transform_1(%arg0: i32) -> (i32, i32) {
    %c0_i32 = arith.constant 0 : i32
    %c0_i32_0 = arith.constant 0 : i32
    %c0_i32_1 = arith.constant 0 : i32
    return %c0_i32, %c0_i32_0 : i32, i32
  }
  func.func @transform_2(%arg0: i32) -> (i32, i32) {
    %c0_i32 = arith.constant 0 : i32
    %c0_i32_0 = arith.constant 0 : i32
    %c0_i32_1 = arith.constant 0 : i32
    return %c0_i32, %c0_i32_0 : i32, i32
  }
  func.func @transform_3(%arg0: i32) -> (i32, i32) {
    %c0_i32 = arith.constant 0 : i32
    %c0_i32_0 = arith.constant 0 : i32
    %c0_i32_1 = arith.constant 0 : i32
    return %c0_i32, %c0_i32_0 : i32, i32
  }
  func.func @transform_4(%arg0: i32) -> (i32, i32, i32) {
    %c0_i32 = arith.constant 0 : i32
    %c0_i32_0 = arith.constant 0 : i32
    %c0_i32_1 = arith.constant 0 : i32
    %c0_i32_2 = arith.constant 0 : i32
    return %c0_i32, %c0_i32_0, %c0_i32_1 : i32, i32, i32
  }
  func.func @transform_5(%arg0: i32) -> (i32, i32, i32) {
    %c0_i32 = arith.constant 0 : i32
    %c0_i32_0 = arith.constant 0 : i32
    %c0_i32_1 = arith.constant 0 : i32
    return %arg0, %c0_i32, %c0_i32_0 : i32, i32, i32
  }
  func.func @transform_6(%arg0: i32) -> (i32, i32, i32) {
    %c0_i32 = arith.constant 0 : i32
    %c0_i32_0 = arith.constant 0 : i32
    %c0_i32_1 = arith.constant 0 : i32
    return %arg0, %c0_i32, %c0_i32_0 : i32, i32, i32
  }
  func.func @transform_7(%arg0: i32) -> (i32, i32, i32) {
    %c0_i32 = arith.constant 0 : i32
    %c0_i32_0 = arith.constant 0 : i32
    %c0_i32_1 = arith.constant 0 : i32
    return %arg0, %c0_i32, %c0_i32_0 : i32, i32, i32
  }
  func.func @transform_8(%arg0: i32) -> (i32, i32, i32) {
    %c0_i32 = arith.constant 0 : i32
    %c0_i32_0 = arith.constant 0 : i32
    %c0_i32_1 = arith.constant 0 : i32
    return %arg0, %c0_i32, %c0_i32_0 : i32, i32, i32
  }
}

</mosaic_0001>

<llo_original>
// kernel: tpu_custom_call.1
$region0: #{tpu_custom_call.1}
  #allocation0 [shape = 'u32[]', space=smem, size = 0x4, offset = 0x4, fixed_abs, tag = 'smem constant byte address 0x4 - core index']
  #allocation1 [shape = 'u32[144,128]{1,0:T(1,128)}', space=vmem, size = 0x12000, scoped, tag = 'internal scratch']
  %s0 = inlined_call_operand.hbm [shape: f32[4,128,128], index: 0, kind: input, shape index: {}]
  %s1 = inlined_call_operand.hbm [shape: f32[128,384], index: 1, kind: input, shape index: {}]
  %s2 = inlined_call_operand.hbm [shape: f32[128,128], index: 2, kind: input, shape index: {}]
  %s3 = inlined_call_operand.vmem [shape: f32[1,128], index: 3, kind: input, shape index: {}]
  %s4 = inlined_call_operand.hbm [shape: f32[4,128,128], index: 4, kind: input, shape index: {}]
  %s5 = inlined_call_operand.hbm [shape: f32[4,128,128], index: 5, kind: output, shape index: {0}]
  %s6 = inlined_call_operand.hbm [shape: f32[4,128,128], index: 6, kind: output, shape index: {1}]
  %s7 = inlined_call_operand.hbm [shape: f32[4,128,128], index: 7, kind: output, shape index: {2}]
  %s8 = inlined_call_operand.hbm [shape: f32[4,128,128], index: 8, kind: output, shape index: {3}]
  %9 = xla_tuple %s5, %s6, %s7, %s8
  %s10 = sld [smem:[#allocation0]]
  $region93: #{tpu_custom_call.1} parent=0
    _
  %s12 = ssub.s32 1, %s10
  %s13 = scalar_select 0, %s12, %s10
  $region1: #{tpu_custom_call.1} parent=0
    #allocation2 [shape = 'u8[262144]{0}', space=vmem, size = 0x40000, scoped, tag = 'input window, operand 0']
    #allocation3 [shape = 's32[2]{0}', space=sflag, size = 0x8, scoped, tag = 'scoped memory for tpu_custom_call.1']
    #allocation4 [shape = 's32[2]{0}', space=sflag, size = 0x8, scoped, tag = 'scoped memory for tpu_custom_call.1']
    #allocation5 [shape = 'u8[196608]{0}', space=vmem, size = 0x30000, scoped, tag = 'input window, operand 1, single buffered']
    #allocation6 [shape = 's32[1]{0}', space=sflag, size = 0x4, scoped, tag = 'scoped memory for tpu_custom_call.1']
    #allocation7 [shape = 'u8[65536]{0}', space=vmem, size = 0x10000, scoped, tag = 'input window, operand 2, single buffered']
    #allocation8 [shape = 'u8[262144]{0}', space=vmem, size = 0x40000, scoped, tag = 'input window, operand 4, single buffered']
    #allocation9 [shape = 's32[1]{0}', space=sflag, size = 0x4, scoped, tag = 'scoped memory for tpu_custom_call.1']
    #allocation10 [shape = 'u8[262144]{0}', space=vmem, size = 0x40000, scoped, tag = 'output window, operand 0']
    #allocation11 [shape = 'u8[262144]{0}', space=vmem, size = 0x40000, scoped, tag = 'output window, operand 1']
    #allocation12 [shape = 's32[2]{0}', space=sflag, size = 0x8, scoped, tag = 'scoped memory for tpu_custom_call.1']
    #allocation13 [shape = 'u8[262144]{0}', space=vmem, size = 0x40000, scoped, tag = 'output window, operand 2']
    #allocation14 [shape = 'u8[262144]{0}', space=vmem, size = 0x40000, scoped, tag = 'output window, operand 3']
    #allocation15 [shape = 's32[2]{0}', space=sflag, size = 0x8, scoped, tag = 'scoped memory for tpu_custom_call.1']
    %14 = vsyncpa [#allocation3], 0
    %s15 = scalar_lea.sflag [#allocation3], 1
    %16 = vsyncpa %s15, 0
    %17 = vsyncpa [#allocation6], 0
    %18 = vsyncpa [#allocation9], 0
    %19 = vsyncpa [#allocation4], 0
    %s20 = scalar_lea.sflag [#allocation4], 1
    %21 = vsyncpa %s20, 0
    %22 = vsyncpa [#allocation12], 0
    %s23 = scalar_lea.sflag [#allocation12], 1
    %24 = vsyncpa %s23, 0
    %25 = vsyncpa [#allocation15], 0
    %s26 = scalar_lea.sflag [#allocation15], 1
    %27 = vsyncpa %s26, 0
    loop: start=0, step=1, limit=4
    $region2: #{tpu_custom_call.1} parent=1 // loop_pre_header
      _
    $region3: #{tpu_custom_call.1} parent=1 // loop_header
      %s29 = sphi 0, %s33
      %p30 = scmp.ge.s32.totalorder %s29, 4
      %s39 = sphi 0, %s41
      %s42 = sphi 0, %s39
      %s43 = sphi 0, %s42
      %s59 = sphi 0, %s43
      %s63 = sphi 0, %s63
      %s65 = sphi 0, %s63
      %s66 = sphi 0, %s65
      %s80 = sphi 0, %s66
      %s84 = sphi 0, %s84
      %s86 = sphi 0, %s84
      %s87 = sphi 0, %s86
      %s101 = sphi 0, %s87
      %s105 = sphi 0, %s105
      %s107 = sphi 0, %s105
      %s108 = sphi 0, %s107
      %s122 = sphi 0, %s108
      %s126 = sphi 0, %s126
      %s128 = sphi 0, %s126
      %s129 = sphi 0, %s128
      %s143 = sphi 0, %s129
      %s149 = sphi 0, %s151
      %s152 = sphi 0, %s149
      %s153 = sphi 0, %s152
      %s169 = sphi 0, %s153
      %s175 = sphi 0, %s177
      %s178 = sphi 0, %s175
      %s179 = sphi 0, %s178
      %s195 = sphi 0, %s179
      %s201 = sphi 0, %s203
      %s204 = sphi 0, %s201
      %s205 = sphi 0, %s204
      %s221 = sphi 0, %s205
      %s227 = sphi 0, %s229
      %s230 = sphi 0, %s227
      %s231 = sphi 0, %s230
      %s247 = sphi 0, %s231
    $region4: #{tpu_custom_call.1} parent=1 // loop_header_branch
      %32 = sbr.rel (%p30) target = $region8
    $region5: #{tpu_custom_call.1} parent=1 // loop_body
      %s34 = ssub.s32 %s29, 1
      %s35 = ssub.s32 %s29, 2
      %s36 = sadd.s32 %s29, 1
      %s37 = ssub.s32 %s29, %s36
      %p38 = scmp.eq.s32.totalorder %s37, 0
      %s40 = sadd.s32 %s39, 1
      %s41 = scalar_select %p38, %s39, %s40
      %p44 = pneg %p38
      %p45 = scmp.eq.s32.totalorder %s29, 1
      %p46 = por %p44, %p45
      %p47 = scmp.ne.s32.totalorder %s39, %s42
      %p48 = scmp.eq.s32.totalorder %s29, 0
      %p49 = por %p47, %p48
      %p50 = scmp.ne.s32.totalorder %s39, %s42
      %p51 = scmp.eq.s32.totalorder %s34, 1
      %p52 = por %p50, %p51
      %p53 = scmp.ne.s32.totalorder %s42, %s43
      %p54 = scmp.eq.s32.totalorder %s34, 0
      %p55 = por %p53, %p54
      %p56 = scmp.ne.s32.totalorder %s42, %s43
      %p57 = scmp.eq.s32.totalorder %s35, 1
      %p58 = por %p56, %p57
      %p60 = scmp.ne.s32.totalorder %s43, %s59
      %p61 = scmp.eq.s32.totalorder %s35, 0
      %p62 = por %p60, %p61
      %s64 = sadd.s32 %s63, 1
      %p67 = scmp.eq.s32.totalorder %s29, 1
      %p68 = scmp.ne.s32.totalorder %s63, %s65
      %p69 = scmp.eq.s32.totalorder %s29, 0
      %p70 = por %p68, %p69
      %p71 = scmp.ne.s32.totalorder %s63, %s65
      %p72 = scmp.eq.s32.totalorder %s34, 1
      %p73 = por %p71, %p72
      %p74 = scmp.ne.s32.totalorder %s65, %s66
      %p75 = scmp.eq.s32.totalorder %s34, 0
      %p76 = por %p74, %p75
      %p77 = scmp.ne.s32.totalorder %s65, %s66
      %p78 = scmp.eq.s32.totalorder %s35, 1
      %p79 = por %p77, %p78
      %p81 = scmp.ne.s32.totalorder %s66, %s80
      %p82 = scmp.eq.s32.totalorder %s35, 0
      %p83 = por %p81, %p82
      %s85 = sadd.s32 %s84, 1
      %p88 = scmp.eq.s32.totalorder %s29, 1
      %p89 = scmp.ne.s32.totalorder %s84, %s86
      %p90 = scmp.eq.s32.totalorder %s29, 0
      %p91 = por %p89, %p90
      %p92 = scmp.ne.s32.totalorder %s84, %s86
      %p93 = scmp.eq.s32.totalorder %s34, 1
      %p94 = por %p92, %p93
      %p95 = scmp.ne.s32.totalorder %s86, %s87
      %p96 = scmp.eq.s32.totalorder %s34, 0
      %p97 = por %p95, %p96
      %p98 = scmp.ne.s32.totalorder %s86, %s87
      %p99 = scmp.eq.s32.totalorder %s35, 1
      %p100 = por %p98, %p99
      %p102 = scmp.ne.s32.totalorder %s87, %s101
      %p103 = scmp.eq.s32.totalorder %s35, 0
      %p104 = por %p102, %p103
      %s106 = sadd.s32 %s105, 1
      %p109 = scmp.eq.s32.totalorder %s29, 1
      %p110 = scmp.ne.s32.totalorder %s105, %s107
      %p111 = scmp.eq.s32.totalorder %s29, 0
      %p112 = por %p110, %p111
      %p113 = scmp.ne.s32.totalorder %s105, %s107
      %p114 = scmp.eq.s32.totalorder %s34, 1
      %p115 = por %p113, %p114
      %p116 = scmp.ne.s32.totalorder %s107, %s108
      %p117 = scmp.eq.s32.totalorder %s34, 0
      %p118 = por %p116, %p117
      %p119 = scmp.ne.s32.totalorder %s107, %s108
      %p120 = scmp.eq.s32.totalorder %s35, 1
      %p121 = por %p119, %p120
      %p123 = scmp.ne.s32.totalorder %s108, %s122
      %p124 = scmp.eq.s32.totalorder %s35, 0
      %p125 = por %p123, %p124
      %s127 = sadd.s32 %s126, 1
      %p130 = scmp.eq.s32.totalorder %s29, 1
      %p131 = scmp.ne.s32.totalorder %s126, %s128
      %p132 = scmp.eq.s32.totalorder %s29, 0
      %p133 = por %p131, %p132
      %p134 = scmp.ne.s32.totalorder %s126, %s128
      %p135 = scmp.eq.s32.totalorder %s34, 1
      %p136 = por %p134, %p135
      %p137 = scmp.ne.s32.totalorder %s128, %s129
      %p138 = scmp.eq.s32.totalorder %s34, 0
      %p139 = por %p137, %p138
      %p140 = scmp.ne.s32.totalorder %s128, %s129
      %p141 = scmp.eq.s32.totalorder %s35, 1
      %p142 = por %p140, %p141
      %p144 = scmp.ne.s32.totalorder %s129, %s143
      %p145 = scmp.eq.s32.totalorder %s35, 0
      %p146 = por %p144, %p145
      %s147 = ssub.s32 %s29, %s36
      %p148 = scmp.eq.s32.totalorder %s147, 0
      %s150 = sadd.s32 %s149, 1
      %s151 = scalar_select %p148, %s149, %s150
      %p154 = pneg %p148
      %p155 = scmp.eq.s32.totalorder %s29, 1
      %p156 = por %p154, %p155
      %p157 = scmp.ne.s32.totalorder %s149, %s152
      %p158 = scmp.eq.s32.totalorder %s29, 0
      %p159 = por %p157, %p158
      %p160 = scmp.ne.s32.totalorder %s149, %s152
      %p161 = scmp.eq.s32.totalorder %s34, 1
      %p162 = por %p160, %p161
      %p163 = scmp.ne.s32.totalorder %s152, %s153
      %p164 = scmp.eq.s32.totalorder %s34, 0
      %p165 = por %p163, %p164
      %p166 = scmp.ne.s32.totalorder %s152, %s153
      %p167 = scmp.eq.s32.totalorder %s35, 1
      %p168 = por %p166, %p167
      %p170 = scmp.ne.s32.totalorder %s153, %s169
      %p171 = scmp.eq.s32.totalorder %s35, 0
      %p172 = por %p170, %p171
      %s173 = ssub.s32 %s29, %s36
      %p174 = scmp.eq.s32.totalorder %s173, 0
      %s176 = sadd.s32 %s175, 1
      %s177 = scalar_select %p174, %s175, %s176
      %p180 = pneg %p174
      %p181 = scmp.eq.s32.totalorder %s29, 1
      %p182 = por %p180, %p181
      %p183 = scmp.ne.s32.totalorder %s175, %s178
      %p184 = scmp.eq.s32.totalorder %s29, 0
      %p185 = por %p183, %p184
      %p186 = scmp.ne.s32.totalorder %s175, %s178
      %p187 = scmp.eq.s32.totalorder %s34, 1
      %p188 = por %p186, %p187
      %p189 = scmp.ne.s32.totalorder %s178, %s179
      %p190 = scmp.eq.s32.totalorder %s34, 0
      %p191 = por %p189, %p190
      %p192 = scmp.ne.s32.totalorder %s178, %s179
      %p193 = scmp.eq.s32.totalorder %s35, 1
      %p194 = por %p192, %p193
      %p196 = scmp.ne.s32.totalorder %s179, %s195
      %p197 = scmp.eq.s32.totalorder %s35, 0
      %p198 = por %p196, %p197
      %s199 = ssub.s32 %s29, %s36
      %p200 = scmp.eq.s32.totalorder %s199, 0
      %s202 = sadd.s32 %s201, 1
      %s203 = scalar_select %p200, %s201, %s202
      %p206 = pneg %p200
      %p207 = scmp.eq.s32.totalorder %s29, 1
      %p208 = por %p206, %p207
      %p209 = scmp.ne.s32.totalorder %s201, %s204
      %p210 = scmp.eq.s32.totalorder %s29, 0
      %p211 = por %p209, %p210
      %p212 = scmp.ne.s32.totalorder %s201, %s204
      %p213 = scmp.eq.s32.totalorder %s34, 1
      %p214 = por %p212, %p213
      %p215 = scmp.ne.s32.totalorder %s204, %s205
      %p216 = scmp.eq.s32.totalorder %s34, 0
      %p217 = por %p215, %p216
      %p218 = scmp.ne.s32.totalorder %s204, %s205
      %p219 = scmp.eq.s32.totalorder %s35, 1
      %p220 = por %p218, %p219
      %p222 = scmp.ne.s32.totalorder %s205, %s221
      %p223 = scmp.eq.s32.totalorder %s35, 0
      %p224 = por %p222, %p223
      %s225 = ssub.s32 %s29, %s36
      %p226 = scmp.eq.s32.totalorder %s225, 0
      %s228 = sadd.s32 %s227, 1
      %s229 = scalar_select %p226, %s227, %s228
      %p232 = pneg %p226
      %p233 = scmp.eq.s32.totalorder %s29, 1
      %p234 = por %p232, %p233
      %p235 = scmp.ne.s32.totalorder %s227, %s230
      %p236 = scmp.eq.s32.totalorder %s29, 0
      %p237 = por %p235, %p236
      %p238 = scmp.ne.s32.totalorder %s227, %s230
      %p239 = scmp.eq.s32.totalorder %s34, 1
      %p240 = por %p238, %p239
      %p241 = scmp.ne.s32.totalorder %s230, %s231
      %p242 = scmp.eq.s32.totalorder %s34, 0
      %p243 = por %p241, %p242
      %p244 = scmp.ne.s32.totalorder %s230, %s231
      %p245 = scmp.eq.s32.totalorder %s35, 1
      %p246 = por %p244, %p245
      %p248 = scmp.ne.s32.totalorder %s231, %s247
      %p249 = scmp.eq.s32.totalorder %s35, 0
      %p250 = por %p248, %p249
      %p251 = scmp.le.s32.totalorder 1, %s29
      %p252 = scmp.lt.s32.totalorder %s29, 3
      %p253 = pnand %p251, %p252
      %p254 = pneg %p253
      // Predicated region
      $region9: #{tpu_custom_call.1} parent=5 // pred_check
        _
      $region10: #{tpu_custom_call.1} parent=5 // pred_check_branch
        %256 = sbr.rel (%p253) target = $region12
      $region11: #{tpu_custom_call.1} parent=5 // pred_region
        %s257 = ssub.s32 %s29, 1
        // Predicated region
        $region13: #{tpu_custom_call.1} parent=11 // pred_check
          %p258 = pneg %p76
        $region14: #{tpu_custom_call.1} parent=11 // pred_check_branch
          %260 = sbr.rel (%p258) target = $region16
        $region15: #{tpu_custom_call.1} parent=11 // pred_region
          %s262 = ssub.s32 6144, 6144
          %263 = vsyncadd [#allocation6], %s262
          %s264 = sshll.u32 [#allocation5], 4
          %s265 = int_to_ptr.vmem [resolvable:$true] %s264
          %270 = dma.hbm_to_vmem [thread:$0]  %s1, 6144, %s265, [#allocation6], 384, 384, 24
        $region16: #{tpu_custom_call.1} parent=11 // pred_fallthru
          _
        // Predicated region
        $region17: #{tpu_custom_call.1} parent=11 // pred_check
          %p271 = pneg %p97
        $region18: #{tpu_custom_call.1} parent=11 // pred_check_branch
          %273 = sbr.rel (%p271) target = $region20
        $region19: #{tpu_custom_call.1} parent=11 // pred_region
          %s275 = ssub.s32 2048, 2048
          %276 = vsyncadd [#allocation6], %s275
          %s277 = sshll.u32 [#allocation7], 4
          %s278 = int_to_ptr.vmem [resolvable:$true] %s277
          %283 = dma.hbm_to_vmem [thread:$0]  %s2, 2048, %s278, [#allocation6], 128, 128, 8
        $region20: #{tpu_custom_call.1} parent=11 // pred_fallthru
          _
        // Predicated region
        $region21: #{tpu_custom_call.1} parent=11 // pred_check
          %p284 = pneg %p118
        $region22: #{tpu_custom_call.1} parent=11 // pred_check_branch
          %286 = sbr.rel (%p284) target = $region24
        $region23: #{tpu_custom_call.1} parent=11 // pred_region
          _
        $region24: #{tpu_custom_call.1} parent=11 // pred_fallthru
          _
        // Predicated region
        $region25: #{tpu_custom_call.1} parent=11 // pred_check
          %p287 = pneg %p139
        $region26: #{tpu_custom_call.1} parent=11 // pred_check_branch
          %289 = sbr.rel (%p287) target = $region28
        $region27: #{tpu_custom_call.1} parent=11 // pred_region
          %s291 = ssub.s32 8192, 8192
          %292 = vsyncadd [#allocation9], %s291
          %s293 = sshll.u32 [#allocation8], 4
          %s294 = int_to_ptr.vmem [resolvable:$true] %s293
          %299 = dma.hbm_to_vmem [thread:$0]  %s4, 8192, %s294, [#allocation9], 128, 128, 8
        $region28: #{tpu_custom_call.1} parent=11 // pred_fallthru
          _
      $region12: #{tpu_custom_call.1} parent=5 // pred_fallthru
        _
      %p300 = scmp.lt.s32.totalorder %s29, 2
      // Predicated region
      $region29: #{tpu_custom_call.1} parent=5 // pred_check
        %p301 = pneg %p300
      $region30: #{tpu_custom_call.1} parent=5 // pred_check_branch
        %303 = sbr.rel (%p301) target = $region32
      $region31: #{tpu_custom_call.1} parent=5 // pred_region
        // Predicated region
        $region33: #{tpu_custom_call.1} parent=31 // pred_check
          %p304 = pneg %p49
        $region34: #{tpu_custom_call.1} parent=31 // pred_check_branch
          %306 = sbr.rel (%p304) target = $region36
        $region35: #{tpu_custom_call.1} parent=31 // pred_region
          %s307 = sand.u32 %s39, 1
          %s308 = scalar_lea.sflag [#allocation3], %s307
          %s309 = sand.u32 %s39, 1
          %s310 = smul.addr %s309, 256
          %s311 = scalar_lea.vmem [#allocation2], %s310
          %s312 = smul.u32 2, %s29
          %s314 = ssub.s32 4096, 4096
          %315 = vsyncadd %s308, %s314
          %s316 = smul.addr %s312, 16
          %s317 = smul.addr %s316, 128
          %s318 = scalar_lea.hbm %s0, %s317
          %s319 = sshll.u32 %s311, 4
          %s320 = int_to_ptr.vmem [resolvable:$true] %s319
          %325 = dma.hbm_to_vmem [thread:$0]  %s318, 4096, %s320, %s308, 128, 128, 8
        $region36: #{tpu_custom_call.1} parent=31 // pred_fallthru
          _
      $region32: #{tpu_custom_call.1} parent=5 // pred_fallthru
        _
      %p326 = scmp.le.s32.totalorder 1, %s29
      %p327 = scmp.lt.s32.totalorder %s29, 3
      %p328 = pnand %p326, %p327
      %p329 = pneg %p328
      // Predicated region
      $region37: #{tpu_custom_call.1} parent=5 // pred_check
        _
      $region38: #{tpu_custom_call.1} parent=5 // pred_check_branch
        %331 = sbr.rel (%p328) target = $region40
      $region39: #{tpu_custom_call.1} parent=5 // pred_region
        %s332 = ssub.s32 %s29, 1
        %s333 = sand.u32 %s42, 1
        %s334 = scalar_lea.sflag [#allocation3], %s333
        %s335 = sand.u32 %s42, 1
        %s336 = smul.addr %s335, 256
        %s337 = scalar_lea.vmem [#allocation2], %s336
        // Predicated region
        $region41: #{tpu_custom_call.1} parent=39 // pred_check
          %p338 = pneg %p55
        $region42: #{tpu_custom_call.1} parent=39 // pred_check_branch
          %340 = sbr.rel (%p338) target = $region44
        $region43: #{tpu_custom_call.1} parent=39 // pred_region
          %341 = dma.done %s334, 4096
        $region44: #{tpu_custom_call.1} parent=39 // pred_fallthru
          _
        // Predicated region
        $region45: #{tpu_custom_call.1} parent=39 // pred_check
          %p342 = pneg %p76
        $region46: #{tpu_custom_call.1} parent=39 // pred_check_branch
          %344 = sbr.rel (%p342) target = $region48
        $region47: #{tpu_custom_call.1} parent=39 // pred_region
          %345 = dma.done [#allocation6], 6144
        $region48: #{tpu_custom_call.1} parent=39 // pred_fallthru
          _
        // Predicated region
        $region49: #{tpu_custom_call.1} parent=39 // pred_check
          %p346 = pneg %p97
        $region50: #{tpu_custom_call.1} parent=39 // pred_check_branch
          %348 = sbr.rel (%p346) target = $region52
        $region51: #{tpu_custom_call.1} parent=39 // pred_region
          %349 = dma.done [#allocation6], 2048
        $region52: #{tpu_custom_call.1} parent=39 // pred_fallthru
          _
        // Predicated region
        $region53: #{tpu_custom_call.1} parent=39 // pred_check
          %p350 = pneg %p139
        $region54: #{tpu_custom_call.1} parent=39 // pred_check_branch
          %352 = sbr.rel (%p350) target = $region56
        $region55: #{tpu_custom_call.1} parent=39 // pred_region
          %353 = dma.done [#allocation9], 8192
        $region56: #{tpu_custom_call.1} parent=39 // pred_fallthru
          _
        %s354 = sand.u32 %s42, 1
        %s355 = scalar_lea.sflag [#allocation3], %s354
        %s356 = sand.u32 %s42, 1
        %s357 = smul.addr %s356, 256
        %s358 = scalar_lea.vmem [#allocation2], %s357
        %p359 = pneg %p55
        %p360 = pneg %p52
        %p361 = pneg %p76
        %p362 = pneg %p73
        %p363 = pneg %p97
        %p364 = pneg %p94
        %p365 = pneg %p118
        %p366 = pneg %p115
        %p367 = pneg %p139
        %p368 = pneg %p136
        %p369 = pneg %p165
        %p370 = pneg %p162
        %s371 = sand.u32 %s152, 1
        %s372 = scalar_lea.sflag [#allocation4], %s371
        %s373 = sand.u32 %s152, 1
        %s374 = smul.addr %s373, 256
        %s375 = scalar_lea.vmem [#allocation10], %s374
        %p376 = pneg %p191
        %p377 = pneg %p188
        %s378 = sand.u32 %s34, 1
        %s379 = scalar_lea.sflag [#allocation12], %s378
        %s380 = sand.u32 %s178, 1
        %s381 = smul.addr %s380, 256
        %s382 = scalar_lea.vmem [#allocation11], %s381
        %p383 = pneg %p217
        %p384 = pneg %p214
        %s385 = sand.u32 %s34, 1
        %s386 = scalar_lea.sflag [#allocation12], %s385
        %s387 = sand.u32 %s204, 1
        %s388 = smul.addr %s387, 256
        %s389 = scalar_lea.vmem [#allocation13], %s388
        %p390 = pneg %p243
        %p391 = pneg %p240
        %s392 = sand.u32 %s230, 1
        %s393 = scalar_lea.sflag [#allocation15], %s392
        %s394 = sand.u32 %s230, 1
        %s395 = smul.addr %s394, 256
        %s396 = scalar_lea.vmem [#allocation14], %s395
        %s397 = smul.u32 2, %s34
        %s398 = smul.u32 2, %s34
        %s399 = smul.u32 2, %s34
        %s400 = smul.u32 2, %s34
        %s401 = smul.u32 2, %s34
        %v402 = vld [vmem:[%s337] sm:$0xff]
        %v403 = vld [vmem:[%s337 + $0x8] sm:$0xff]
        %v404 = vld [vmem:[%s337 + $0x10] sm:$0xff]
        %v405 = vld [vmem:[%s337 + $0x18] sm:$0xff]
        %v406 = vld [vmem:[%s337 + $0x20] sm:$0xff]
        %v407 = vld [vmem:[%s337 + $0x28] sm:$0xff]
        %v408 = vld [vmem:[%s337 + $0x30] sm:$0xff]
        %v409 = vld [vmem:[%s337 + $0x38] sm:$0xff]
        %v410 = vld [vmem:[%s337 + $0x40] sm:$0xff]
        %v411 = vld [vmem:[%s337 + $0x48] sm:$0xff]
        %v412 = vld [vmem:[%s337 + $0x50] sm:$0xff]
        %v413 = vld [vmem:[%s337 + $0x58] sm:$0xff]
        %v414 = vld [vmem:[%s337 + $0x60] sm:$0xff]
        %v415 = vld [vmem:[%s337 + $0x68] sm:$0xff]
        %v416 = vld [vmem:[%s337 + $0x70] sm:$0xff]
        %v417 = vld [vmem:[%s337 + $0x78] sm:$0xff]
        %v418 = vld [vmem:[%s337 + $0x80] sm:$0xff]
        %v419 = vld [vmem:[%s337 + $0x88] sm:$0xff]
        %v420 = vld [vmem:[%s337 + $0x90] sm:$0xff]
        %v421 = vld [vmem:[%s337 + $0x98] sm:$0xff]
        %v422 = vld [vmem:[%s337 + $0xa0] sm:$0xff]
        %v423 = vld [vmem:[%s337 + $0xa8] sm:$0xff]
        %v424 = vld [vmem:[%s337 + $0xb0] sm:$0xff]
        %v425 = vld [vmem:[%s337 + $0xb8] sm:$0xff]
        %v426 = vld [vmem:[%s337 + $0xc0] sm:$0xff]
        %v427 = vld [vmem:[%s337 + $0xc8] sm:$0xff]
        %v428 = vld [vmem:[%s337 + $0xd0] sm:$0xff]
        %v429 = vld [vmem:[%s337 + $0xd8] sm:$0xff]
        %v430 = vld [vmem:[%s337 + $0xe0] sm:$0xff]
        %v431 = vld [vmem:[%s337 + $0xe8] sm:$0xff]
        %v432 = vld [vmem:[%s337 + $0xf0] sm:$0xff]
        %v433 = vld [vmem:[%s337 + $0xf8] sm:$0xff]
        %v434 = vld [vmem:[#allocation5] sm:$0xff]
        %v435 = vld [vmem:[#allocation5 + $0x8] sm:$0xff]
        %v436 = vld [vmem:[#allocation5 + $0x10] sm:$0xff]
        %v437 = vld [vmem:[#allocation5 + $0x18] sm:$0xff]
        %v438 = vld [vmem:[#allocation5 + $0x20] sm:$0xff]
        %v439 = vld [vmem:[#allocation5 + $0x28] sm:$0xff]
        %v440 = vld [vmem:[#allocation5 + $0x30] sm:$0xff]
        %v441 = vld [vmem:[#allocation5 + $0x38] sm:$0xff]
        %v442 = vld [vmem:[#allocation5 + $0x40] sm:$0xff]
        %v443 = vld [vmem:[#allocation5 + $0x48] sm:$0xff]
        %v444 = vld [vmem:[#allocation5 + $0x50] sm:$0xff]
        %v445 = vld [vmem:[#allocation5 + $0x58] sm:$0xff]
        %v446 = vld [vmem:[#allocation5 + $0x60] sm:$0xff]
        %v447 = vld [vmem:[#allocation5 + $0x68] sm:$0xff]
        %v448 = vld [vmem:[#allocation5 + $0x70] sm:$0xff]
        %v449 = vld [vmem:[#allocation5 + $0x78] sm:$0xff]
        %v450 = vld [vmem:[#allocation5 + $0x80] sm:$0xff]
        %v451 = vld [vmem:[#allocation5 + $0x88] sm:$0xff]
        %v452 = vld [vmem:[#allocation5 + $0x90] sm:$0xff]
        %v453 = vld [vmem:[#allocation5 + $0x98] sm:$0xff]
        %v454 = vld [vmem:[#allocation5 + $0xa0] sm:$0xff]
        %v455 = vld [vmem:[#allocation5 + $0xa8] sm:$0xff]
        %v456 = vld [vmem:[#allocation5 + $0xb0] sm:$0xff]
        %v457 = vld [vmem:[#allocation5 + $0xb8] sm:$0xff]
        %v458 = vld [vmem:[#allocation5 + $0xc0] sm:$0xff]
        %v459 = vld [vmem:[#allocation5 + $0xc8] sm:$0xff]
        %v460 = vld [vmem:[#allocation5 + $0xd0] sm:$0xff]
        %v461 = vld [vmem:[#allocation5 + $0xd8] sm:$0xff]
        %v462 = vld [vmem:[#allocation5 + $0xe0] sm:$0xff]
        %v463 = vld [vmem:[#allocation5 + $0xe8] sm:$0xff]
        %v464 = vld [vmem:[#allocation5 + $0xf0] sm:$0xff]
        %v465 = vld [vmem:[#allocation5 + $0xf8] sm:$0xff]
        %v466 = vld [vmem:[#allocation5 + $0x100] sm:$0xff]
        %v467 = vld [vmem:[#allocation5 + $0x108] sm:$0xff]
        %v468 = vld [vmem:[#allocation5 + $0x110] sm:$0xff]
        %v469 = vld [vmem:[#allocation5 + $0x118] sm:$0xff]
        %v470 = vld [vmem:[#allocation5 + $0x120] sm:$0xff]
        %v471 = vld [vmem:[#allocation5 + $0x128] sm:$0xff]
        %v472 = vld [vmem:[#allocation5 + $0x130] sm:$0xff]
        %v473 = vld [vmem:[#allocation5 + $0x138] sm:$0xff]
        %v474 = vld [vmem:[#allocation5 + $0x140] sm:$0xff]
        %v475 = vld [vmem:[#allocation5 + $0x148] sm:$0xff]
        %v476 = vld [vmem:[#allocation5 + $0x150] sm:$0xff]
        %v477 = vld [vmem:[#allocation5 + $0x158] sm:$0xff]
        %v478 = vld [vmem:[#allocation5 + $0x160] sm:$0xff]
        %v479 = vld [vmem:[#allocation5 + $0x168] sm:$0xff]
        %v480 = vld [vmem:[#allocation5 + $0x170] sm:$0xff]
        %v481 = vld [vmem:[#allocation5 + $0x178] sm:$0xff]
        %482 = vmatprep.subr.mxu0 %v435
        %483 = vmatpush1.msra.mxu0 %v434
        %484 = vmatprep.subr.mxu0 %v438
        %485 = vmatpush1.msra.mxu0 %v437
        %486 = vmatprep.subr.mxu0 %v441
        %487 = vmatpush1.msra.mxu0 %v440
        %488 = vmatprep.subr.mxu0 %v444
        %489 = vmatpush1.msra.mxu0 %v443
        %490 = vmatprep.subr.mxu0 %v447
        %491 = vmatpush1.msra.mxu0 %v446
        %492 = vmatprep.subr.mxu0 %v450
        %493 = vmatpush1.msra.mxu0 %v449
        %494 = vmatprep.subr.mxu0 %v453
        %495 = vmatpush1.msra.mxu0 %v452
        %496 = vmatprep.subr.mxu0 %v456
        %497 = vmatpush1.msra.mxu0 %v455
        %498 = vmatprep.subr.mxu0 %v459
        %499 = vmatpush1.msra.mxu0 %v458
        %500 = vmatprep.subr.mxu0 %v462
        %501 = vmatpush1.msra.mxu0 %v461
        %502 = vmatprep.subr.mxu0 %v465
        %503 = vmatpush1.msra.mxu0 %v464
        %504 = vmatprep.subr.mxu0 %v468
        %505 = vmatpush1.msra.mxu0 %v467
        %506 = vmatprep.subr.mxu0 %v471
        %507 = vmatpush1.msra.mxu0 %v470
        %508 = vmatprep.subr.mxu0 %v474
        %509 = vmatpush1.msra.mxu0 %v473
        %510 = vmatprep.subr.mxu0 %v477
        %511 = vmatpush1.msra.mxu0 %v476
        %512 = vmatprep.subr.mxu0 %v480
        %513 = vmatpush1.msra.mxu0 %v479
        %514 = vmatprep.subr.mxu0 0.0
        %515 = vmatpush1.msra.mxu0 0.0
        %516 = vmatprep.subr.mxu0 0.0
        %517 = vmatpush1.msra.mxu0 0.0
        %518 = vmatprep.subr.mxu0 0.0
        %519 = vmatpush1.msra.mxu0 0.0
        %520 = vmatprep.subr.mxu0 0.0
        %521 = vmatpush1.msra.mxu0 0.0
        %522 = vmatprep.subr.mxu0 0.0
        %523 = vmatpush1.msra.mxu0 0.0
        %524 = vmatprep.subr.mxu0 0.0
        %525 = vmatpush1.msra.mxu0 0.0
        %526 = vmatprep.subr.mxu0 0.0
        %527 = vmatpush1.msra.mxu0 0.0
        %528 = vmatprep.subr.mxu0 0.0
        %529 = vmatpush1.msra.mxu0 0.0
        %530 = vmatprep.subr.mxu0 0.0
        %531 = vmatpush1.msra.mxu0 0.0
        %532 = vmatprep.subr.mxu0 0.0
        %533 = vmatpush1.msra.mxu0 0.0
        %534 = vmatprep.subr.mxu0 0.0
        %535 = vmatpush1.msra.mxu0 0.0
        %536 = vmatprep.subr.mxu0 0.0
        %537 = vmatpush1.msra.mxu0 0.0
        %538 = vmatprep.subr.mxu0 0.0
        %539 = vmatpush1.msra.mxu0 0.0
        %540 = vmatprep.subr.mxu0 0.0
        %541 = vmatpush1.msra.mxu0 0.0
        %542 = vmatprep.subr.mxu0 0.0
        %543 = vmatpush1.msra.mxu0 0.0
        %544 = vmatprep.subr.mxu0 0.0
        %545 = vmatpush1.msra.mxu0 0.0
        %546 = vmatprep.mubr.f32.mxu0 0.0
        %547 = vmatmul.mubr.f32.gmra.mrb[0].mxu0 %v402
        %v548 = vpop.f32.mrb[0].mxu0
        %v549 = vadd.f32 0.0, %v548
        %v550 = vpop.f32.mrb[0].mxu0
        %v551 = vadd.f32 0.0, %v550
        %552 = vmatprep.mubr.f32.mxu0 0.0
        %553 = vmatmul.mubr.f32.gmra.mrb[0].mxu0 %v403
        %v554 = vpop.f32.mrb[0].mxu0
        %v555 = vadd.f32 0.0, %v554
        %v556 = vpop.f32.mrb[0].mxu0
        %v557 = vadd.f32 0.0, %v556
        %558 = vmatprep.mubr.f32.mxu0 0.0
        %559 = vmatmul.mubr.f32.gmra.mrb[0].mxu0 %v404
        %v560 = vpop.f32.mrb[0].mxu0
        %v561 = vadd.f32 0.0, %v560
        %v562 = vpop.f32.mrb[0].mxu0
        %v563 = vadd.f32 0.0, %v562
        %564 = vmatprep.mubr.f32.mxu0 0.0
        %565 = vmatmul.mubr.f32.gmra.mrb[0].mxu0 %v405
        %v566 = vpop.f32.mrb[0].mxu0
        %v567 = vadd.f32 0.0, %v566
        %v568 = vpop.f32.mrb[0].mxu0
        %v569 = vadd.f32 0.0, %v568
        %570 = vmatprep.mubr.f32.mxu0 0.0
        %571 = vmatmul.mubr.f32.gmra.mrb[0].mxu0 %v406
        %v572 = vpop.f32.mrb[0].mxu0
        %v573 = vadd.f32 0.0, %v572
        %v574 = vpop.f32.mrb[0].mxu0
        %v575 = vadd.f32 0.0, %v574
        %576 = vmatprep.mubr.f32.mxu0 0.0
        %577 = vmatmul.mubr.f32.gmra.mrb[0].mxu0 %v407
        %v578 = vpop.f32.mrb[0].mxu0
        %v579 = vadd.f32 0.0, %v578
        %v580 = vpop.f32.mrb[0].mxu0
        %v581 = vadd.f32 0.0, %v580
        %582 = vmatprep.mubr.f32.mxu0 0.0
        %583 = vmatmul.mubr.f32.gmra.mrb[0].mxu0 %v408
        %v584 = vpop.f32.mrb[0].mxu0
        %v585 = vadd.f32 0.0, %v584
        %v586 = vpop.f32.mrb[0].mxu0
        %v587 = vadd.f32 0.0, %v586
        %588 = vmatprep.mubr.f32.mxu0 0.0
        %589 = vmatmul.mubr.f32.gmra.mrb[0].mxu0 %v409
        %v590 = vpop.f32.mrb[0].mxu0
        %v591 = vadd.f32 0.0, %v590
        %v592 = vpop.f32.mrb[0].mxu0
        %v593 = vadd.f32 0.0, %v592
        %594 = vmatprep.mubr.f32.mxu0 0.0
        %595 = vmatmul.mubr.f32.gmra.mrb[0].mxu0 %v410
        %v596 = vpop.f32.mrb[0].mxu0
        %v597 = vadd.f32 0.0, %v596
        %v598 = vpop.f32.mrb[0].mxu0
        %v599 = vadd.f32 0.0, %v598
        %600 = vmatprep.mubr.f32.mxu0 0.0
        %601 = vmatmul.mubr.f32.gmra.mrb[0].mxu0 %v411
        %v602 = vpop.f32.mrb[0].mxu0
        %v603 = vadd.f32 0.0, %v602
        %v604 = vpop.f32.mrb[0].mxu0
        %v605 = vadd.f32 0.0, %v604
        %606 = vmatprep.mubr.f32.mxu0 0.0
        %607 = vmatmul.mubr.f32.gmra.mrb[0].mxu0 %v412
        %v608 = vpop.f32.mrb[0].mxu0
        %v609 = vadd.f32 0.0, %v608
        %v610 = vpop.f32.mrb[0].mxu0
        %v611 = vadd.f32 0.0, %v610
        %612 = vmatprep.mubr.f32.mxu0 0.0
        %613 = vmatmul.mubr.f32.gmra.mrb[0].mxu0 %v413
        %v614 = vpop.f32.mrb[0].mxu0
        %v615 = vadd.f32 0.0, %v614
        %v616 = vpop.f32.mrb[0].mxu0
        %v617 = vadd.f32 0.0, %v616
        %618 = vmatprep.mubr.f32.mxu0 0.0
        %619 = vmatmul.mubr.f32.gmra.mrb[0].mxu0 %v414
        %v620 = vpop.f32.mrb[0].mxu0
        %v621 = vadd.f32 0.0, %v620
        %v622 = vpop.f32.mrb[0].mxu0
        %v623 = vadd.f32 0.0, %v622
        %624 = vmatprep.mubr.f32.mxu0 0.0
        %625 = vmatmul.mubr.f32.gmra.mrb[0].mxu0 %v415
        %v626 = vpop.f32.mrb[0].mxu0
        %v627 = vadd.f32 0.0, %v626
        %v628 = vpop.f32.mrb[0].mxu0
        %v629 = vadd.f32 0.0, %v628
        %630 = vmatprep.mubr.f32.mxu0 0.0
        %631 = vmatmul.mubr.f32.gmra.mrb[0].mxu0 %v416
        %v632 = vpop.f32.mrb[0].mxu0
        %v633 = vadd.f32 0.0, %v632
        %v634 = vpop.f32.mrb[0].mxu0
        %v635 = vadd.f32 0.0, %v634
        %636 = vmatprep.mubr.f32.mxu0 0.0
        %637 = vmatmul.mubr.f32.gmra.mrb[0].mxu0 %v417
        %v638 = vpop.f32.mrb[0].mxu0
        %v639 = vadd.f32 0.0, %v638
        %v640 = vpop.f32.mrb[0].mxu0
        %v641 = vadd.f32 0.0, %v640
        %642 = vmatprep.mubr.f32.mxu0 0.0
        %643 = vmatmul.mubr.f32.gmra.mrb[0].mxu0 %v418
        %v644 = vpop.f32.mrb[0].mxu0
        %v645 = vadd.f32 0.0, %v644
        %v646 = vpop.f32.mrb[0].mxu0
        %v647 = vadd.f32 0.0, %v646
        %648 = vmatprep.mubr.f32.mxu0 0.0
        %649 = vmatmul.mubr.f32.gmra.mrb[0].mxu0 %v419
        %v650 = vpop.f32.mrb[0].mxu0
        %v651 = vadd.f32 0.0, %v650
        %v652 = vpop.f32.mrb[0].mxu0
        %v653 = vadd.f32 0.0, %v652
        %654 = vmatprep.mubr.f32.mxu0 0.0
        %655 = vmatmul.mubr.f32.gmra.mrb[0].mxu0 %v420
        %v656 = vpop.f32.mrb[0].mxu0
        %v657 = vadd.f32 0.0, %v656
        %v658 = vpop.f32.mrb[0].mxu0
        %v659 = vadd.f32 0.0, %v658
        %660 = vmatprep.mubr.f32.mxu0 0.0
        %661 = vmatmul.mubr.f32.gmra.mrb[0].mxu0 %v421
        %v662 = vpop.f32.mrb[0].mxu0
        %v663 = vadd.f32 0.0, %v662
        %v664 = vpop.f32.mrb[0].mxu0
        %v665 = vadd.f32 0.0, %v664
        %666 = vmatprep.mubr.f32.mxu0 0.0
        %667 = vmatmul.mubr.f32.gmra.mrb[0].mxu0 %v422
        %v668 = vpop.f32.mrb[0].mxu0
        %v669 = vadd.f32 0.0, %v668
        %v670 = vpop.f32.mrb[0].mxu0
        %v671 = vadd.f32 0.0, %v670
        %672 = vmatprep.mubr.f32.mxu0 0.0
        %673 = vmatmul.mubr.f32.gmra.mrb[0].mxu0 %v423
        %v674 = vpop.f32.mrb[0].mxu0
        %v675 = vadd.f32 0.0, %v674
        %v676 = vpop.f32.mrb[0].mxu0
        %v677 = vadd.f32 0.0, %v676
        %678 = vmatprep.mubr.f32.mxu0 0.0
        %679 = vmatmul.mubr.f32.gmra.mrb[0].mxu0 %v424
        %v680 = vpop.f32.mrb[0].mxu0
        %v681 = vadd.f32 0.0, %v680
        %v682 = vpop.f32.mrb[0].mxu0
        %v683 = vadd.f32 0.0, %v682
        %684 = vmatprep.mubr.f32.mxu0 0.0
        %685 = vmatmul.mubr.f32.gmra.mrb[0].mxu0 %v425
        %v686 = vpop.f32.mrb[0].mxu0
        %v687 = vadd.f32 0.0, %v686
        %v688 = vpop.f32.mrb[0].mxu0
        %v689 = vadd.f32 0.0, %v688
        %690 = vmatprep.mubr.f32.mxu0 0.0
        %691 = vmatmul.mubr.f32.gmra.mrb[0].mxu0 %v426
        %v692 = vpop.f32.mrb[0].mxu0
        %v693 = vadd.f32 0.0, %v692
        %v694 = vpop.f32.mrb[0].mxu0
        %v695 = vadd.f32 0.0, %v694
        %696 = vmatprep.mubr.f32.mxu0 0.0
        %697 = vmatmul.mubr.f32.gmra.mrb[0].mxu0 %v427
        %v698 = vpop.f32.mrb[0].mxu0
        %v699 = vadd.f32 0.0, %v698
        %v700 = vpop.f32.mrb[0].mxu0
        %v701 = vadd.f32 0.0, %v700
        %702 = vmatprep.mubr.f32.mxu0 0.0
        %703 = vmatmul.mubr.f32.gmra.mrb[0].mxu0 %v428
        %v704 = vpop.f32.mrb[0].mxu0
        %v705 = vadd.f32 0.0, %v704
        %v706 = vpop.f32.mrb[0].mxu0
        %v707 = vadd.f32 0.0, %v706
        %708 = vmatprep.mubr.f32.mxu0 0.0
        %709 = vmatmul.mubr.f32.gmra.mrb[0].mxu0 %v429
        %v710 = vpop.f32.mrb[0].mxu0
        %v711 = vadd.f32 0.0, %v710
        %v712 = vpop.f32.mrb[0].mxu0
        %v713 = vadd.f32 0.0, %v712
        %714 = vmatprep.mubr.f32.mxu0 0.0
        %715 = vmatmul.mubr.f32.gmra.mrb[0].mxu0 %v430
        %v716 = vpop.f32.mrb[0].mxu0
        %v717 = vadd.f32 0.0, %v716
        %v718 = vpop.f32.mrb[0].mxu0
        %v719 = vadd.f32 0.0, %v718
        %720 = vmatprep.mubr.f32.mxu0 0.0
        %721 = vmatmul.mubr.f32.gmra.mrb[0].mxu0 %v431
        %v722 = vpop.f32.mrb[0].mxu0
        %v723 = vadd.f32 0.0, %v722
        %v724 = vpop.f32.mrb[0].mxu0
        %v725 = vadd.f32 0.0, %v724
        %726 = vmatprep.mubr.f32.mxu0 0.0
        %727 = vmatmul.mubr.f32.gmra.mrb[0].mxu0 %v432
        %v728 = vpop.f32.mrb[0].mxu0
        %v729 = vadd.f32 0.0, %v728
        %v730 = vpop.f32.mrb[0].mxu0
        %v731 = vadd.f32 0.0, %v730
        %732 = vmatprep.mubr.f32.mxu0 0.0
        %733 = vmatmul.mubr.f32.gmra.mrb[0].mxu0 %v433
        %v734 = vpop.f32.mrb[0].mxu0
        %v735 = vadd.f32 0.0, %v734
        %v736 = vpop.f32.mrb[0].mxu0
        %v737 = vadd.f32 0.0, %v736
        %738 = vdwg.mxu0
        %739 = vmatprep.subr.mxu0 0.0
        %740 = vmatpush1.msra.mxu0 %v436
        %741 = vmatprep.subr.mxu0 0.0
        %742 = vmatpush1.msra.mxu0 %v439
        %743 = vmatprep.subr.mxu0 0.0
        %744 = vmatpush1.msra.mxu0 %v442
        %745 = vmatprep.subr.mxu0 0.0
        %746 = vmatpush1.msra.mxu0 %v445
        %747 = vmatprep.subr.mxu0 0.0
        %748 = vmatpush1.msra.mxu0 %v448
        %749 = vmatprep.subr.mxu0 0.0
        %750 = vmatpush1.msra.mxu0 %v451
        %751 = vmatprep.subr.mxu0 0.0
        %752 = vmatpush1.msra.mxu0 %v454
        %753 = vmatprep.subr.mxu0 0.0
        %754 = vmatpush1.msra.mxu0 %v457
        %755 = vmatprep.subr.mxu0 0.0
        %756 = vmatpush1.msra.mxu0 %v460
        %757 = vmatprep.subr.mxu0 0.0
        %758 = vmatpush1.msra.mxu0 %v463
        %759 = vmatprep.subr.mxu0 0.0
        %760 = vmatpush1.msra.mxu0 %v466
        %761 = vmatprep.subr.mxu0 0.0
        %762 = vmatpush1.msra.mxu0 %v469
        %763 = vmatprep.subr.mxu0 0.0
        %764 = vmatpush1.msra.mxu0 %v472
        %765 = vmatprep.subr.mxu0 0.0
        %766 = vmatpush1.msra.mxu0 %v475
        %767 = vmatprep.subr.mxu0 0.0
        %768 = vmatpush1.msra.mxu0 %v478
        %769 = vmatprep.subr.mxu0 0.0
        %770 = vmatpush1.msra.mxu0 %v481
        %771 = vmatprep.subr.mxu0 0.0
        %772 = vmatpush1.msra.mxu0 0.0
        %773 = vmatprep.subr.mxu0 0.0
        %774 = vmatpush1.msra.mxu0 0.0
        %775 = vmatprep.subr.mxu0 0.0
        %776 = vmatpush1.msra.mxu0 0.0
        %777 = vmatprep.subr.mxu0 0.0
        %778 = vmatpush1.msra.mxu0 0.0
        %779 = vmatprep.subr.mxu0 0.0
        %780 = vmatpush1.msra.mxu0 0.0
        %781 = vmatprep.subr.mxu0 0.0
        %782 = vmatpush1.msra.mxu0 0.0
        %783 = vmatprep.subr.mxu0 0.0
        %784 = vmatpush1.msra.mxu0 0.0
        %785 = vmatprep.subr.mxu0 0.0
        %786 = vmatpush1.msra.mxu0 0.0
        %787 = vmatprep.subr.mxu0 0.0
        %788 = vmatpush1.msra.mxu0 0.0
        %789 = vmatprep.subr.mxu0 0.0
        %790 = vmatpush1.msra.mxu0 0.0
        %791 = vmatprep.subr.mxu0 0.0
        %792 = vmatpush1.msra.mxu0 0.0
        %793 = vmatprep.subr.mxu0 0.0
        %794 = vmatpush1.msra.mxu0 0.0
        %795 = vmatprep.subr.mxu0 0.0
        %796 = vmatpush1.msra.mxu0 0.0
        %797 = vmatprep.subr.mxu0 0.0
        %798 = vmatpush1.msra.mxu0 0.0
        %799 = vmatprep.subr.mxu0 0.0
        %800 = vmatpush1.msra.mxu0 0.0
        %801 = vmatprep.subr.mxu0 0.0
        %802 = vmatpush1.msra.mxu0 0.0
        %803 = vmatprep.mubr.f32.mxu0 0.0
        %804 = vmatmul.mubr.f32.gmra.mrb[0].mxu0 %v402
        %v805 = vpop.f32.mrb[0].mxu0
        %v806 = vadd.f32 0.0, %v805
        %v807 = vpop.f32.mrb[0].mxu0
        %808 = vmatprep.mubr.f32.mxu0 0.0
        %809 = vmatmul.mubr.f32.gmra.mrb[0].mxu0 %v403
        %v810 = vpop.f32.mrb[0].mxu0
        %v811 = vadd.f32 0.0, %v810
        %v812 = vpop.f32.mrb[0].mxu0
        %813 = vmatprep.mubr.f32.mxu0 0.0
        %814 = vmatmul.mubr.f32.gmra.mrb[0].mxu0 %v404
        %v815 = vpop.f32.mrb[0].mxu0
        %v816 = vadd.f32 0.0, %v815
        %v817 = vpop.f32.mrb[0].mxu0
        %818 = vmatprep.mubr.f32.mxu0 0.0
        %819 = vmatmul.mubr.f32.gmra.mrb[0].mxu0 %v405
        %v820 = vpop.f32.mrb[0].mxu0
        %v821 = vadd.f32 0.0, %v820
        %v822 = vpop.f32.mrb[0].mxu0
        %823 = vmatprep.mubr.f32.mxu0 0.0
        %824 = vmatmul.mubr.f32.gmra.mrb[0].mxu0 %v406
        %v825 = vpop.f32.mrb[0].mxu0
        %v826 = vadd.f32 0.0, %v825
        %v827 = vpop.f32.mrb[0].mxu0
        %828 = vmatprep.mubr.f32.mxu0 0.0
        %829 = vmatmul.mubr.f32.gmra.mrb[0].mxu0 %v407
        %v830 = vpop.f32.mrb[0].mxu0
        %v831 = vadd.f32 0.0, %v830
        %v832 = vpop.f32.mrb[0].mxu0
        %833 = vmatprep.mubr.f32.mxu0 0.0
        %834 = vmatmul.mubr.f32.gmra.mrb[0].mxu0 %v408
        %v835 = vpop.f32.mrb[0].mxu0
        %v836 = vadd.f32 0.0, %v835
        %v837 = vpop.f32.mrb[0].mxu0
        %838 = vmatprep.mubr.f32.mxu0 0.0
        %839 = vmatmul.mubr.f32.gmra.mrb[0].mxu0 %v409
        %v840 = vpop.f32.mrb[0].mxu0
        %v841 = vadd.f32 0.0, %v840
        %v842 = vpop.f32.mrb[0].mxu0
        %843 = vmatprep.mubr.f32.mxu0 0.0
        %844 = vmatmul.mubr.f32.gmra.mrb[0].mxu0 %v410
        %v845 = vpop.f32.mrb[0].mxu0
        %v846 = vadd.f32 0.0, %v845
        %v847 = vpop.f32.mrb[0].mxu0
        %848 = vmatprep.mubr.f32.mxu0 0.0
        %849 = vmatmul.mubr.f32.gmra.mrb[0].mxu0 %v411
        %v850 = vpop.f32.mrb[0].mxu0
        %v851 = vadd.f32 0.0, %v850
        %v852 = vpop.f32.mrb[0].mxu0
        %853 = vmatprep.mubr.f32.mxu0 0.0
        %854 = vmatmul.mubr.f32.gmra.mrb[0].mxu0 %v412
        %v855 = vpop.f32.mrb[0].mxu0
        %v856 = vadd.f32 0.0, %v855
        %v857 = vpop.f32.mrb[0].mxu0
        %858 = vmatprep.mubr.f32.mxu0 0.0
        %859 = vmatmul.mubr.f32.gmra.mrb[0].mxu0 %v413
        %v860 = vpop.f32.mrb[0].mxu0
        %v861 = vadd.f32 0.0, %v860
        %v862 = vpop.f32.mrb[0].mxu0
        %863 = vmatprep.mubr.f32.mxu0 0.0
        %864 = vmatmul.mubr.f32.gmra.mrb[0].mxu0 %v414
        %v865 = vpop.f32.mrb[0].mxu0
        %v866 = vadd.f32 0.0, %v865
        %v867 = vpop.f32.mrb[0].mxu0
        %868 = vmatprep.mubr.f32.mxu0 0.0
        %869 = vmatmul.mubr.f32.gmra.mrb[0].mxu0 %v415
        %v870 = vpop.f32.mrb[0].mxu0
        %v871 = vadd.f32 0.0, %v870
        %v872 = vpop.f32.mrb[0].mxu0
        %873 = vmatprep.mubr.f32.mxu0 0.0
        %874 = vmatmul.mubr.f32.gmra.mrb[0].mxu0 %v416
        %v875 = vpop.f32.mrb[0].mxu0
        %v876 = vadd.f32 0.0, %v875
        %v877 = vpop.f32.mrb[0].mxu0
        %878 = vmatprep.mubr.f32.mxu0 0.0
        %879 = vmatmul.mubr.f32.gmra.mrb[0].mxu0 %v417
        %v880 = vpop.f32.mrb[0].mxu0
        %v881 = vadd.f32 0.0, %v880
        %v882 = vpop.f32.mrb[0].mxu0
        %883 = vmatprep.mubr.f32.mxu0 0.0
        %884 = vmatmul.mubr.f32.gmra.mrb[0].mxu0 %v418
        %v885 = vpop.f32.mrb[0].mxu0
        %v886 = vadd.f32 0.0, %v885
        %v887 = vpop.f32.mrb[0].mxu0
        %888 = vmatprep.mubr.f32.mxu0 0.0
        %889 = vmatmul.mubr.f32.gmra.mrb[0].mxu0 %v419
        %v890 = vpop.f32.mrb[0].mxu0
        %v891 = vadd.f32 0.0, %v890
        %v892 = vpop.f32.mrb[0].mxu0
        %893 = vmatprep.mubr.f32.mxu0 0.0
        %894 = vmatmul.mubr.f32.gmra.mrb[0].mxu0 %v420
        %v895 = vpop.f32.mrb[0].mxu0
        %v896 = vadd.f32 0.0, %v895
        %v897 = vpop.f32.mrb[0].mxu0
        %898 = vmatprep.mubr.f32.mxu0 0.0
        %899 = vmatmul.mubr.f32.gmra.mrb[0].mxu0 %v421
        %v900 = vpop.f32.mrb[0].mxu0
        %v901 = vadd.f32 0.0, %v900
        %v902 = vpop.f32.mrb[0].mxu0
        %903 = vmatprep.mubr.f32.mxu0 0.0
        %904 = vmatmul.mubr.f32.gmra.mrb[0].mxu0 %v422
        %v905 = vpop.f32.mrb[0].mxu0
        %v906 = vadd.f32 0.0, %v905
        %v907 = vpop.f32.mrb[0].mxu0
        %908 = vmatprep.mubr.f32.mxu0 0.0
        %909 = vmatmul.mubr.f32.gmra.mrb[0].mxu0 %v423
        %v910 = vpop.f32.mrb[0].mxu0
        %v911 = vadd.f32 0.0, %v910
        %v912 = vpop.f32.mrb[0].mxu0
        %913 = vmatprep.mubr.f32.mxu0 0.0
        %914 = vmatmul.mubr.f32.gmra.mrb[0].mxu0 %v424
        %v915 = vpop.f32.mrb[0].mxu0
        %v916 = vadd.f32 0.0, %v915
        %v917 = vpop.f32.mrb[0].mxu0
        %918 = vmatprep.mubr.f32.mxu0 0.0
        %919 = vmatmul.mubr.f32.gmra.mrb[0].mxu0 %v425
        %v920 = vpop.f32.mrb[0].mxu0
        %v921 = vadd.f32 0.0, %v920
        %v922 = vpop.f32.mrb[0].mxu0
        %923 = vmatprep.mubr.f32.mxu0 0.0
        %924 = vmatmul.mubr.f32.gmra.mrb[0].mxu0 %v426
        %v925 = vpop.f32.mrb[0].mxu0
        %v926 = vadd.f32 0.0, %v925
        %v927 = vpop.f32.mrb[0].mxu0
        %928 = vmatprep.mubr.f32.mxu0 0.0
        %929 = vmatmul.mubr.f32.gmra.mrb[0].mxu0 %v427
        %v930 = vpop.f32.mrb[0].mxu0
        %v931 = vadd.f32 0.0, %v930
        %v932 = vpop.f32.mrb[0].mxu0
        %933 = vmatprep.mubr.f32.mxu0 0.0
        %934 = vmatmul.mubr.f32.gmra.mrb[0].mxu0 %v428
        %v935 = vpop.f32.mrb[0].mxu0
        %v936 = vadd.f32 0.0, %v935
        %v937 = vpop.f32.mrb[0].mxu0
        %938 = vmatprep.mubr.f32.mxu0 0.0
        %939 = vmatmul.mubr.f32.gmra.mrb[0].mxu0 %v429
        %v940 = vpop.f32.mrb[0].mxu0
        %v941 = vadd.f32 0.0, %v940
        %v942 = vpop.f32.mrb[0].mxu0
        %943 = vmatprep.mubr.f32.mxu0 0.0
        %944 = vmatmul.mubr.f32.gmra.mrb[0].mxu0 %v430
        %v945 = vpop.f32.mrb[0].mxu0
        %v946 = vadd.f32 0.0, %v945
        %v947 = vpop.f32.mrb[0].mxu0
        %948 = vmatprep.mubr.f32.mxu0 0.0
        %949 = vmatmul.mubr.f32.gmra.mrb[0].mxu0 %v431
        %v950 = vpop.f32.mrb[0].mxu0
        %v951 = vadd.f32 0.0, %v950
        %v952 = vpop.f32.mrb[0].mxu0
        %953 = vmatprep.mubr.f32.mxu0 0.0
        %954 = vmatmul.mubr.f32.gmra.mrb[0].mxu0 %v432
        %v955 = vpop.f32.mrb[0].mxu0
        %v956 = vadd.f32 0.0, %v955
        %v957 = vpop.f32.mrb[0].mxu0
        %958 = vmatprep.mubr.f32.mxu0 0.0
        %959 = vmatmul.mubr.f32.gmra.mrb[0].mxu0 %v433
        %v960 = vpop.f32.mrb[0].mxu0
        %v961 = vadd.f32 0.0, %v960
        %v962 = vpop.f32.mrb[0].mxu0
        %963 = vdwg.mxu0
        %v964 = vmul.f32 %v549, 0.17677669
        %v965 = vmul.f32 %v555, 0.17677669
        %v966 = vmul.f32 %v561, 0.17677669
        %v967 = vmul.f32 %v567, 0.17677669
        %v968 = vmul.f32 %v573, 0.17677669
        %v969 = vmul.f32 %v579, 0.17677669
        %v970 = vmul.f32 %v585, 0.17677669
        %v971 = vmul.f32 %v591, 0.17677669
        %v972 = vmul.f32 %v597, 0.17677669
        %v973 = vmul.f32 %v603, 0.17677669
        %v974 = vmul.f32 %v609, 0.17677669
        %v975 = vmul.f32 %v615, 0.17677669
        %v976 = vmul.f32 %v621, 0.17677669
        %v977 = vmul.f32 %v627, 0.17677669
        %v978 = vmul.f32 %v633, 0.17677669
        %v979 = vmul.f32 %v639, 0.17677669
        %v980 = vmul.f32 %v645, 0.17677669
        %v981 = vmul.f32 %v651, 0.17677669
        %v982 = vmul.f32 %v657, 0.17677669
        %v983 = vmul.f32 %v663, 0.17677669
        %v984 = vmul.f32 %v669, 0.17677669
        %v985 = vmul.f32 %v675, 0.17677669
        %v986 = vmul.f32 %v681, 0.17677669
        %v987 = vmul.f32 %v687, 0.17677669
        %v988 = vmul.f32 %v693, 0.17677669
        %v989 = vmul.f32 %v699, 0.17677669
        %v990 = vmul.f32 %v705, 0.17677669
        %v991 = vmul.f32 %v711, 0.17677669
        %v992 = vmul.f32 %v717, 0.17677669
        %v993 = vmul.f32 %v723, 0.17677669
        %v994 = vmul.f32 %v729, 0.17677669
        %v995 = vmul.f32 %v735, 0.17677669
        %996 = vst [vmem:[%s382] sm:$0xff] %v964
        %997 = vst [vmem:[%s382 + $0x8] sm:$0xff] %v965
        %998 = vst [vmem:[%s382 + $0x10] sm:$0xff] %v966
        %999 = vst [vmem:[%s382 + $0x18] sm:$0xff] %v967
        %1000 = vst [vmem:[%s382 + $0x20] sm:$0xff] %v968
        %1001 = vst [vmem:[%s382 + $0x28] sm:$0xff] %v969
        %1002 = vst [vmem:[%s382 + $0x30] sm:$0xff] %v970
        %1003 = vst [vmem:[%s382 + $0x38] sm:$0xff] %v971
        %1004 = vst [vmem:[%s382 + $0x40] sm:$0xff] %v972
        %1005 = vst [vmem:[%s382 + $0x48] sm:$0xff] %v973
        %1006 = vst [vmem:[%s382 + $0x50] sm:$0xff] %v974
        %1007 = vst [vmem:[%s382 + $0x58] sm:$0xff] %v975
        %1008 = vst [vmem:[%s382 + $0x60] sm:$0xff] %v976
        %1009 = vst [vmem:[%s382 + $0x68] sm:$0xff] %v977
        %1010 = vst [vmem:[%s382 + $0x70] sm:$0xff] %v978
        %1011 = vst [vmem:[%s382 + $0x78] sm:$0xff] %v979
        %1012 = vst [vmem:[%s382 + $0x80] sm:$0xff] %v980
        %1013 = vst [vmem:[%s382 + $0x88] sm:$0xff] %v981
        %1014 = vst [vmem:[%s382 + $0x90] sm:$0xff] %v982
        %1015 = vst [vmem:[%s382 + $0x98] sm:$0xff] %v983
        %1016 = vst [vmem:[%s382 + $0xa0] sm:$0xff] %v984
        %1017 = vst [vmem:[%s382 + $0xa8] sm:$0xff] %v985
        %1018 = vst [vmem:[%s382 + $0xb0] sm:$0xff] %v986
        %1019 = vst [vmem:[%s382 + $0xb8] sm:$0xff] %v987
        %1020 = vst [vmem:[%s382 + $0xc0] sm:$0xff] %v988
        %1021 = vst [vmem:[%s382 + $0xc8] sm:$0xff] %v989
        %1022 = vst [vmem:[%s382 + $0xd0] sm:$0xff] %v990
        %1023 = vst [vmem:[%s382 + $0xd8] sm:$0xff] %v991
        %1024 = vst [vmem:[%s382 + $0xe0] sm:$0xff] %v992
        %1025 = vst [vmem:[%s382 + $0xe8] sm:$0xff] %v993
        %1026 = vst [vmem:[%s382 + $0xf0] sm:$0xff] %v994
        %1027 = vst [vmem:[%s382 + $0xf8] sm:$0xff] %v995
        %1028 = vst [vmem:[%s389] sm:$0xff] %v551
        %1029 = vst [vmem:[%s389 + $0x8] sm:$0xff] %v557
        %1030 = vst [vmem:[%s389 + $0x10] sm:$0xff] %v563
        %1031 = vst [vmem:[%s389 + $0x18] sm:$0xff] %v569
        %1032 = vst [vmem:[%s389 + $0x20] sm:$0xff] %v575
        %1033 = vst [vmem:[%s389 + $0x28] sm:$0xff] %v581
        %1034 = vst [vmem:[%s389 + $0x30] sm:$0xff] %v587
        %1035 = vst [vmem:[%s389 + $0x38] sm:$0xff] %v593
        %1036 = vst [vmem:[%s389 + $0x40] sm:$0xff] %v599
        %1037 = vst [vmem:[%s389 + $0x48] sm:$0xff] %v605
        %1038 = vst [vmem:[%s389 + $0x50] sm:$0xff] %v611
        %1039 = vst [vmem:[%s389 + $0x58] sm:$0xff] %v617
        %1040 = vst [vmem:[%s389 + $0x60] sm:$0xff] %v623
        %1041 = vst [vmem:[%s389 + $0x68] sm:$0xff] %v629
        %1042 = vst [vmem:[%s389 + $0x70] sm:$0xff] %v635
        %1043 = vst [vmem:[%s389 + $0x78] sm:$0xff] %v641
        %1044 = vst [vmem:[%s389 + $0x80] sm:$0xff] %v647
        %1045 = vst [vmem:[%s389 + $0x88] sm:$0xff] %v653
        %1046 = vst [vmem:[%s389 + $0x90] sm:$0xff] %v659
        %1047 = vst [vmem:[%s389 + $0x98] sm:$0xff] %v665
        %1048 = vst [vmem:[%s389 + $0xa0] sm:$0xff] %v671
        %1049 = vst [vmem:[%s389 + $0xa8] sm:$0xff] %v677
        %1050 = vst [vmem:[%s389 + $0xb0] sm:$0xff] %v683
        %1051 = vst [vmem:[%s389 + $0xb8] sm:$0xff] %v689
        %1052 = vst [vmem:[%s389 + $0xc0] sm:$0xff] %v695
        %1053 = vst [vmem:[%s389 + $0xc8] sm:$0xff] %v701
        %1054 = vst [vmem:[%s389 + $0xd0] sm:$0xff] %v707
        %1055 = vst [vmem:[%s389 + $0xd8] sm:$0xff] %v713
        %1056 = vst [vmem:[%s389 + $0xe0] sm:$0xff] %v719
        %1057 = vst [vmem:[%s389 + $0xe8] sm:$0xff] %v725
        %1058 = vst [vmem:[%s389 + $0xf0] sm:$0xff] %v731
        %1059 = vst [vmem:[%s389 + $0xf8] sm:$0xff] %v737
        %1060 = vst [vmem:[%s396] sm:$0xff] %v806
        %1061 = vst [vmem:[%s396 + $0x8] sm:$0xff] %v811
        %1062 = vst [vmem:[%s396 + $0x10] sm:$0xff] %v816
        %1063 = vst [vmem:[%s396 + $0x18] sm:$0xff] %v821
        %1064 = vst [vmem:[%s396 + $0x20] sm:$0xff] %v826
        %1065 = vst [vmem:[%s396 + $0x28] sm:$0xff] %v831
        %1066 = vst [vmem:[%s396 + $0x30] sm:$0xff] %v836
        %1067 = vst [vmem:[%s396 + $0x38] sm:$0xff] %v841
        %1068 = vst [vmem:[%s396 + $0x40] sm:$0xff] %v846
        %1069 = vst [vmem:[%s396 + $0x48] sm:$0xff] %v851
        %1070 = vst [vmem:[%s396 + $0x50] sm:$0xff] %v856
        %1071 = vst [vmem:[%s396 + $0x58] sm:$0xff] %v861
        %1072 = vst [vmem:[%s396 + $0x60] sm:$0xff] %v866
        %1073 = vst [vmem:[%s396 + $0x68] sm:$0xff] %v871
        %1074 = vst [vmem:[%s396 + $0x70] sm:$0xff] %v876
        %1075 = vst [vmem:[%s396 + $0x78] sm:$0xff] %v881
        %1076 = vst [vmem:[%s396 + $0x80] sm:$0xff] %v886
        %1077 = vst [vmem:[%s396 + $0x88] sm:$0xff] %v891
        %1078 = vst [vmem:[%s396 + $0x90] sm:$0xff] %v896
        %1079 = vst [vmem:[%s396 + $0x98] sm:$0xff] %v901
        %1080 = vst [vmem:[%s396 + $0xa0] sm:$0xff] %v906
        %1081 = vst [vmem:[%s396 + $0xa8] sm:$0xff] %v911
        %1082 = vst [vmem:[%s396 + $0xb0] sm:$0xff] %v916
        %1083 = vst [vmem:[%s396 + $0xb8] sm:$0xff] %v921
        %1084 = vst [vmem:[%s396 + $0xc0] sm:$0xff] %v926
        %1085 = vst [vmem:[%s396 + $0xc8] sm:$0xff] %v931
        %1086 = vst [vmem:[%s396 + $0xd0] sm:$0xff] %v936
        %1087 = vst [vmem:[%s396 + $0xd8] sm:$0xff] %v941
        %1088 = vst [vmem:[%s396 + $0xe0] sm:$0xff] %v946
        %1089 = vst [vmem:[%s396 + $0xe8] sm:$0xff] %v951
        %1090 = vst [vmem:[%s396 + $0xf0] sm:$0xff] %v956
        %1091 = vst [vmem:[%s396 + $0xf8] sm:$0xff] %v961
        %v1092 = vld [vmem:[#allocation8] sm:$0xff]
        %v1093 = vld [vmem:[#allocation8 + $0x8] sm:$0xff]
        %v1094 = vld [vmem:[#allocation8 + $0x10] sm:$0xff]
        %v1095 = vld [vmem:[#allocation8 + $0x18] sm:$0xff]
        %v1096 = vld [vmem:[#allocation8 + $0x20] sm:$0xff]
        %v1097 = vld [vmem:[#allocation8 + $0x28] sm:$0xff]
        %v1098 = vld [vmem:[#allocation8 + $0x30] sm:$0xff]
        %v1099 = vld [vmem:[#allocation8 + $0x38] sm:$0xff]
        %v1100 = vld [vmem:[#allocation8 + $0x40] sm:$0xff]
        %v1101 = vld [vmem:[#allocation8 + $0x48] sm:$0xff]
        %v1102 = vld [vmem:[#allocation8 + $0x50] sm:$0xff]
        %v1103 = vld [vmem:[#allocation8 + $0x58] sm:$0xff]
        %v1104 = vld [vmem:[#allocation8 + $0x60] sm:$0xff]
        %v1105 = vld [vmem:[#allocation8 + $0x68] sm:$0xff]
        %v1106 = vld [vmem:[#allocation8 + $0x70] sm:$0xff]
        %v1107 = vld [vmem:[#allocation8 + $0x78] sm:$0xff]
        %vm1108 = vcmask 261120
        %v1110 = vsel %vm1108, %v964, 0
        %v1113 = vsel %vm1108, %v965, 0
        %v1116 = vsel %vm1108, %v966, 0
        %v1119 = vsel %vm1108, %v967, 0
        %v1122 = vsel %vm1108, %v968, 0
        %v1125 = vsel %vm1108, %v969, 0
        %v1128 = vsel %vm1108, %v970, 0
        %v1131 = vsel %vm1108, %v971, 0
        %v1134 = vsel %vm1108, %v972, 0
        %v1137 = vsel %vm1108, %v973, 0
        %v1140 = vsel %vm1108, %v974, 0
        %v1143 = vsel %vm1108, %v975, 0
        %v1146 = vsel %vm1108, %v976, 0
        %v1149 = vsel %vm1108, %v977, 0
        %v1152 = vsel %vm1108, %v978, 0
        %v1155 = vsel %vm1108, %v979, 0
        %v1158 = vsel %vm1108, %v551, 0
        %v1161 = vsel %vm1108, %v557, 0
        %v1164 = vsel %vm1108, %v563, 0
        %v1167 = vsel %vm1108, %v569, 0
        %v1170 = vsel %vm1108, %v575, 0
        %v1173 = vsel %vm1108, %v581, 0
        %v1176 = vsel %vm1108, %v587, 0
        %v1179 = vsel %vm1108, %v593, 0
        %v1182 = vsel %vm1108, %v599, 0
        %v1185 = vsel %vm1108, %v605, 0
        %v1188 = vsel %vm1108, %v611, 0
        %v1191 = vsel %vm1108, %v617, 0
        %v1194 = vsel %vm1108, %v623, 0
        %v1197 = vsel %vm1108, %v629, 0
        %v1200 = vsel %vm1108, %v635, 0
        %v1203 = vsel %vm1108, %v641, 0
        %1205 = vmatprep.subr.mxu0 0.0
        %1206 = vmatpush1.xpose.msra.mxu0 %v1158
        %1207 = vmatprep.subr.mxu0 0.0
        %1208 = vmatpush1.xpose.msra.mxu0 %v1161
        %1209 = vmatprep.subr.mxu0 0.0
        %1210 = vmatpush1.xpose.msra.mxu0 %v1164
        %1211 = vmatprep.subr.mxu0 0.0
        %1212 = vmatpush1.xpose.msra.mxu0 %v1167
        %1213 = vmatprep.subr.mxu0 0.0
        %1214 = vmatpush1.xpose.msra.mxu0 %v1170
        %1215 = vmatprep.subr.mxu0 0.0
        %1216 = vmatpush1.xpose.msra.mxu0 %v1173
        %1217 = vmatprep.subr.mxu0 0.0
        %1218 = vmatpush1.xpose.msra.mxu0 %v1176
        %1219 = vmatprep.subr.mxu0 0.0
        %1220 = vmatpush1.xpose.msra.mxu0 %v1179
        %1221 = vmatprep.subr.mxu0 0.0
        %1222 = vmatpush1.xpose.msra.mxu0 %v1182
        %1223 = vmatprep.subr.mxu0 0.0
        %1224 = vmatpush1.xpose.msra.mxu0 %v1185
        %1225 = vmatprep.subr.mxu0 0.0
        %1226 = vmatpush1.xpose.msra.mxu0 %v1188
        %1227 = vmatprep.subr.mxu0 0.0
        %1228 = vmatpush1.xpose.msra.mxu0 %v1191
        %1229 = vmatprep.subr.mxu0 0.0
        %1230 = vmatpush1.xpose.msra.mxu0 %v1194
        %1231 = vmatprep.subr.mxu0 0.0
        %1232 = vmatpush1.xpose.msra.mxu0 %v1197
        %1233 = vmatprep.subr.mxu0 0.0
        %1234 = vmatpush1.xpose.msra.mxu0 %v1200
        %1235 = vmatprep.subr.mxu0 0.0
        %1236 = vmatpush1.xpose.msra.mxu0 %v1203
        %1237 = vmatprep.subr.mxu0 0.0
        %1238 = vmatpush1.xpose.msra.mxu0 0.0
        %1239 = vmatprep.subr.mxu0 0.0
        %1240 = vmatpush1.xpose.msra.mxu0 0.0
        %1241 = vmatprep.subr.mxu0 0.0
        %1242 = vmatpush1.xpose.msra.mxu0 0.0
        %1243 = vmatprep.subr.mxu0 0.0
        %1244 = vmatpush1.xpose.msra.mxu0 0.0
        %1245 = vmatprep.subr.mxu0 0.0
        %1246 = vmatpush1.xpose.msra.mxu0 0.0
        %1247 = vmatprep.subr.mxu0 0.0
        %1248 = vmatpush1.xpose.msra.mxu0 0.0
        %1249 = vmatprep.subr.mxu0 0.0
        %1250 = vmatpush1.xpose.msra.mxu0 0.0
        %1251 = vmatprep.subr.mxu0 0.0
        %1252 = vmatpush1.xpose.msra.mxu0 0.0
        %1253 = vmatprep.subr.mxu0 0.0
        %1254 = vmatpush1.xpose.msra.mxu0 0.0
        %1255 = vmatprep.subr.mxu0 0.0
        %1256 = vmatpush1.xpose.msra.mxu0 0.0
        %1257 = vmatprep.subr.mxu0 0.0
        %1258 = vmatpush1.xpose.msra.mxu0 0.0
        %1259 = vmatprep.subr.mxu0 0.0
        %1260 = vmatpush1.xpose.msra.mxu0 0.0
        %1261 = vmatprep.subr.mxu0 0.0
        %1262 = vmatpush1.xpose.msra.mxu0 0.0
        %1263 = vmatprep.subr.mxu0 0.0
        %1264 = vmatpush1.xpose.msra.mxu0 0.0
        %1265 = vmatprep.subr.mxu0 0.0
        %1266 = vmatpush1.xpose.msra.mxu0 0.0
        %1267 = vmatprep.subr.mxu0 0.0
        %1268 = vmatpush1.xpose.msra.mxu0 0.0
        %1269 = vmatprep.mubr.f32.mxu0 0.0
        %1270 = vmatmul.mubr.f32.gmra.mrb[0].mxu0 %v1110
        %v1271 = vpop.f32.mrb[0].mxu0
        %v1272 = vadd.f32 %v1092, %v1271
        %v1273 = vpop.f32.mrb[0].mxu0
        %1274 = vmatprep.mubr.f32.mxu0 0.0
        %1275 = vmatmul.mubr.f32.gmra.mrb[0].mxu0 %v1113
        %v1276 = vpop.f32.mrb[0].mxu0
        %v1277 = vadd.f32 %v1093, %v1276
        %v1278 = vpop.f32.mrb[0].mxu0
        %1279 = vmatprep.mubr.f32.mxu0 0.0
        %1280 = vmatmul.mubr.f32.gmra.mrb[0].mxu0 %v1116
        %v1281 = vpop.f32.mrb[0].mxu0
        %v1282 = vadd.f32 %v1094, %v1281
        %v1283 = vpop.f32.mrb[0].mxu0
        %1284 = vmatprep.mubr.f32.mxu0 0.0
        %1285 = vmatmul.mubr.f32.gmra.mrb[0].mxu0 %v1119
        %v1286 = vpop.f32.mrb[0].mxu0
        %v1287 = vadd.f32 %v1095, %v1286
        %v1288 = vpop.f32.mrb[0].mxu0
        %1289 = vmatprep.mubr.f32.mxu0 0.0
        %1290 = vmatmul.mubr.f32.gmra.mrb[0].mxu0 %v1122
        %v1291 = vpop.f32.mrb[0].mxu0
        %v1292 = vadd.f32 %v1096, %v1291
        %v1293 = vpop.f32.mrb[0].mxu0
        %1294 = vmatprep.mubr.f32.mxu0 0.0
        %1295 = vmatmul.mubr.f32.gmra.mrb[0].mxu0 %v1125
        %v1296 = vpop.f32.mrb[0].mxu0
        %v1297 = vadd.f32 %v1097, %v1296
        %v1298 = vpop.f32.mrb[0].mxu0
        %1299 = vmatprep.mubr.f32.mxu0 0.0
        %1300 = vmatmul.mubr.f32.gmra.mrb[0].mxu0 %v1128
        %v1301 = vpop.f32.mrb[0].mxu0
        %v1302 = vadd.f32 %v1098, %v1301
        %v1303 = vpop.f32.mrb[0].mxu0
        %1304 = vmatprep.mubr.f32.mxu0 0.0
        %1305 = vmatmul.mubr.f32.gmra.mrb[0].mxu0 %v1131
        %v1306 = vpop.f32.mrb[0].mxu0
        %v1307 = vadd.f32 %v1099, %v1306
        %v1308 = vpop.f32.mrb[0].mxu0
        %1309 = vmatprep.mubr.f32.mxu0 0.0
        %1310 = vmatmul.mubr.f32.gmra.mrb[0].mxu0 %v1134
        %v1311 = vpop.f32.mrb[0].mxu0
        %v1312 = vadd.f32 %v1100, %v1311
        %v1313 = vpop.f32.mrb[0].mxu0
        %1314 = vmatprep.mubr.f32.mxu0 0.0
        %1315 = vmatmul.mubr.f32.gmra.mrb[0].mxu0 %v1137
        %v1316 = vpop.f32.mrb[0].mxu0
        %v1317 = vadd.f32 %v1101, %v1316
        %v1318 = vpop.f32.mrb[0].mxu0
        %1319 = vmatprep.mubr.f32.mxu0 0.0
        %1320 = vmatmul.mubr.f32.gmra.mrb[0].mxu0 %v1140
        %v1321 = vpop.f32.mrb[0].mxu0
        %v1322 = vadd.f32 %v1102, %v1321
        %v1323 = vpop.f32.mrb[0].mxu0
        %1324 = vmatprep.mubr.f32.mxu0 0.0
        %1325 = vmatmul.mubr.f32.gmra.mrb[0].mxu0 %v1143
        %v1326 = vpop.f32.mrb[0].mxu0
        %v1327 = vadd.f32 %v1103, %v1326
        %v1328 = vpop.f32.mrb[0].mxu0
        %1329 = vmatprep.mubr.f32.mxu0 0.0
        %1330 = vmatmul.mubr.f32.gmra.mrb[0].mxu0 %v1146
        %v1331 = vpop.f32.mrb[0].mxu0
        %v1332 = vadd.f32 %v1104, %v1331
        %v1333 = vpop.f32.mrb[0].mxu0
        %1334 = vmatprep.mubr.f32.mxu0 0.0
        %1335 = vmatmul.mubr.f32.gmra.mrb[0].mxu0 %v1149
        %v1336 = vpop.f32.mrb[0].mxu0
        %v1337 = vadd.f32 %v1105, %v1336
        %v1338 = vpop.f32.mrb[0].mxu0
        %1339 = vmatprep.mubr.f32.mxu0 0.0
        %1340 = vmatmul.mubr.f32.gmra.mrb[0].mxu0 %v1152
        %v1341 = vpop.f32.mrb[0].mxu0
        %v1342 = vadd.f32 %v1106, %v1341
        %v1343 = vpop.f32.mrb[0].mxu0
        %1344 = vmatprep.mubr.f32.mxu0 0.0
        %1345 = vmatmul.mubr.f32.gmra.mrb[0].mxu0 %v1155
        %v1346 = vpop.f32.mrb[0].mxu0
        %v1347 = vadd.f32 %v1107, %v1346
        %v1348 = vpop.f32.mrb[0].mxu0
        %1349 = vdwg.mxu0
        %v1351 = vsel %vm1108, %v980, 0
        %v1354 = vsel %vm1108, %v981, 0
        %v1357 = vsel %vm1108, %v982, 0
        %v1360 = vsel %vm1108, %v983, 0
        %v1363 = vsel %vm1108, %v984, 0
        %v1366 = vsel %vm1108, %v985, 0
        %v1369 = vsel %vm1108, %v986, 0
        %v1372 = vsel %vm1108, %v987, 0
        %v1375 = vsel %vm1108, %v988, 0
        %v1378 = vsel %vm1108, %v989, 0
        %v1381 = vsel %vm1108, %v990, 0
        %v1384 = vsel %vm1108, %v991, 0
        %v1387 = vsel %vm1108, %v992, 0
        %v1390 = vsel %vm1108, %v993, 0
        %v1393 = vsel %vm1108, %v994, 0
        %v1396 = vsel %vm1108, %v995, 0
        %v1399 = vsel %vm1108, %v647, 0
        %v1402 = vsel %vm1108, %v653, 0
        %v1405 = vsel %vm1108, %v659, 0
        %v1408 = vsel %vm1108, %v665, 0
        %v1411 = vsel %vm1108, %v671, 0
        %v1414 = vsel %vm1108, %v677, 0
        %v1417 = vsel %vm1108, %v683, 0
        %v1420 = vsel %vm1108, %v689, 0
        %v1423 = vsel %vm1108, %v695, 0
        %v1426 = vsel %vm1108, %v701, 0
        %v1429 = vsel %vm1108, %v707, 0
        %v1432 = vsel %vm1108, %v713, 0
        %v1435 = vsel %vm1108, %v719, 0
        %v1438 = vsel %vm1108, %v725, 0
        %v1441 = vsel %vm1108, %v731, 0
        %v1444 = vsel %vm1108, %v737, 0
        %1446 = vmatprep.subr.mxu0 0.0
        %1447 = vmatpush1.xpose.msra.mxu0 %v1399
        %1448 = vmatprep.subr.mxu0 0.0
        %1449 = vmatpush1.xpose.msra.mxu0 %v1402
        %1450 = vmatprep.subr.mxu0 0.0
        %1451 = vmatpush1.xpose.msra.mxu0 %v1405
        %1452 = vmatprep.subr.mxu0 0.0
        %1453 = vmatpush1.xpose.msra.mxu0 %v1408
        %1454 = vmatprep.subr.mxu0 0.0
        %1455 = vmatpush1.xpose.msra.mxu0 %v1411
        %1456 = vmatprep.subr.mxu0 0.0
        %1457 = vmatpush1.xpose.msra.mxu0 %v1414
        %1458 = vmatprep.subr.mxu0 0.0
        %1459 = vmatpush1.xpose.msra.mxu0 %v1417
        %1460 = vmatprep.subr.mxu0 0.0
        %1461 = vmatpush1.xpose.msra.mxu0 %v1420
        %1462 = vmatprep.subr.mxu0 0.0
        %1463 = vmatpush1.xpose.msra.mxu0 %v1423
        %1464 = vmatprep.subr.mxu0 0.0
        %1465 = vmatpush1.xpose.msra.mxu0 %v1426
        %1466 = vmatprep.subr.mxu0 0.0
        %1467 = vmatpush1.xpose.msra.mxu0 %v1429
        %1468 = vmatprep.subr.mxu0 0.0
        %1469 = vmatpush1.xpose.msra.mxu0 %v1432
        %1470 = vmatprep.subr.mxu0 0.0
        %1471 = vmatpush1.xpose.msra.mxu0 %v1435
        %1472 = vmatprep.subr.mxu0 0.0
        %1473 = vmatpush1.xpose.msra.mxu0 %v1438
        %1474 = vmatprep.subr.mxu0 0.0
        %1475 = vmatpush1.xpose.msra.mxu0 %v1441
        %1476 = vmatprep.subr.mxu0 0.0
        %1477 = vmatpush1.xpose.msra.mxu0 %v1444
        %1478 = vmatprep.subr.mxu0 0.0
        %1479 = vmatpush1.xpose.msra.mxu0 0.0
        %1480 = vmatprep.subr.mxu0 0.0
        %1481 = vmatpush1.xpose.msra.mxu0 0.0
        %1482 = vmatprep.subr.mxu0 0.0
        %1483 = vmatpush1.xpose.msra.mxu0 0.0
        %1484 = vmatprep.subr.mxu0 0.0
        %1485 = vmatpush1.xpose.msra.mxu0 0.0
        %1486 = vmatprep.subr.mxu0 0.0
        %1487 = vmatpush1.xpose.msra.mxu0 0.0
        %1488 = vmatprep.subr.mxu0 0.0
        %1489 = vmatpush1.xpose.msra.mxu0 0.0
        %1490 = vmatprep.subr.mxu0 0.0
        %1491 = vmatpush1.xpose.msra.mxu0 0.0
        %1492 = vmatprep.subr.mxu0 0.0
        %1493 = vmatpush1.xpose.msra.mxu0 0.0
        %1494 = vmatprep.subr.mxu0 0.0
        %1495 = vmatpush1.xpose.msra.mxu0 0.0
        %1496 = vmatprep.subr.mxu0 0.0
        %1497 = vmatpush1.xpose.msra.mxu0 0.0
        %1498 = vmatprep.subr.mxu0 0.0
        %1499 = vmatpush1.xpose.msra.mxu0 0.0
        %1500 = vmatprep.subr.mxu0 0.0
        %1501 = vmatpush1.xpose.msra.mxu0 0.0
        %1502 = vmatprep.subr.mxu0 0.0
        %1503 = vmatpush1.xpose.msra.mxu0 0.0
        %1504 = vmatprep.subr.mxu0 0.0
        %1505 = vmatpush1.xpose.msra.mxu0 0.0
        %1506 = vmatprep.subr.mxu0 0.0
        %1507 = vmatpush1.xpose.msra.mxu0 0.0
        %1508 = vmatprep.subr.mxu0 0.0
        %1509 = vmatpush1.xpose.msra.mxu0 0.0
        %1510 = vmatprep.mubr.f32.mxu0 0.0
        %1511 = vmatmul.mubr.f32.gmra.mrb[0].mxu0 %v1351
        %v1512 = vpop.f32.mrb[0].mxu0
        %v1513 = vadd.f32 %v1092, %v1512
        %v1514 = vpop.f32.mrb[0].mxu0
        %1515 = vmatprep.mubr.f32.mxu0 0.0
        %1516 = vmatmul.mubr.f32.gmra.mrb[0].mxu0 %v1354
        %v1517 = vpop.f32.mrb[0].mxu0
        %v1518 = vadd.f32 %v1093, %v1517
        %v1519 = vpop.f32.mrb[0].mxu0
        %1520 = vmatprep.mubr.f32.mxu0 0.0
        %1521 = vmatmul.mubr.f32.gmra.mrb[0].mxu0 %v1357
        %v1522 = vpop.f32.mrb[0].mxu0
        %v1523 = vadd.f32 %v1094, %v1522
        %v1524 = vpop.f32.mrb[0].mxu0
        %1525 = vmatprep.mubr.f32.mxu0 0.0
        %1526 = vmatmul.mubr.f32.gmra.mrb[0].mxu0 %v1360
        %v1527 = vpop.f32.mrb[0].mxu0
        %v1528 = vadd.f32 %v1095, %v1527
        %v1529 = vpop.f32.mrb[0].mxu0
        %1530 = vmatprep.mubr.f32.mxu0 0.0
        %1531 = vmatmul.mubr.f32.gmra.mrb[0].mxu0 %v1363
        %v1532 = vpop.f32.mrb[0].mxu0
        %v1533 = vadd.f32 %v1096, %v1532
        %v1534 = vpop.f32.mrb[0].mxu0
        %1535 = vmatprep.mubr.f32.mxu0 0.0
        %1536 = vmatmul.mubr.f32.gmra.mrb[0].mxu0 %v1366
        %v1537 = vpop.f32.mrb[0].mxu0
        %v1538 = vadd.f32 %v1097, %v1537
        %v1539 = vpop.f32.mrb[0].mxu0
        %1540 = vmatprep.mubr.f32.mxu0 0.0
        %1541 = vmatmul.mubr.f32.gmra.mrb[0].mxu0 %v1369
        %v1542 = vpop.f32.mrb[0].mxu0
        %v1543 = vadd.f32 %v1098, %v1542
        %v1544 = vpop.f32.mrb[0].mxu0
        %1545 = vmatprep.mubr.f32.mxu0 0.0
        %1546 = vmatmul.mubr.f32.gmra.mrb[0].mxu0 %v1372
        %v1547 = vpop.f32.mrb[0].mxu0
        %v1548 = vadd.f32 %v1099, %v1547
        %v1549 = vpop.f32.mrb[0].mxu0
        %1550 = vmatprep.mubr.f32.mxu0 0.0
        %1551 = vmatmul.mubr.f32.gmra.mrb[0].mxu0 %v1375
        %v1552 = vpop.f32.mrb[0].mxu0
        %v1553 = vadd.f32 %v1100, %v1552
        %v1554 = vpop.f32.mrb[0].mxu0
        %1555 = vmatprep.mubr.f32.mxu0 0.0
        %1556 = vmatmul.mubr.f32.gmra.mrb[0].mxu0 %v1378
        %v1557 = vpop.f32.mrb[0].mxu0
        %v1558 = vadd.f32 %v1101, %v1557
        %v1559 = vpop.f32.mrb[0].mxu0
        %1560 = vmatprep.mubr.f32.mxu0 0.0
        %1561 = vmatmul.mubr.f32.gmra.mrb[0].mxu0 %v1381
        %v1562 = vpop.f32.mrb[0].mxu0
        %v1563 = vadd.f32 %v1102, %v1562
        %v1564 = vpop.f32.mrb[0].mxu0
        %1565 = vmatprep.mubr.f32.mxu0 0.0
        %1566 = vmatmul.mubr.f32.gmra.mrb[0].mxu0 %v1384
        %v1567 = vpop.f32.mrb[0].mxu0
        %v1568 = vadd.f32 %v1103, %v1567
        %v1569 = vpop.f32.mrb[0].mxu0
        %1570 = vmatprep.mubr.f32.mxu0 0.0
        %1571 = vmatmul.mubr.f32.gmra.mrb[0].mxu0 %v1387
        %v1572 = vpop.f32.mrb[0].mxu0
        %v1573 = vadd.f32 %v1104, %v1572
        %v1574 = vpop.f32.mrb[0].mxu0
        %1575 = vmatprep.mubr.f32.mxu0 0.0
        %1576 = vmatmul.mubr.f32.gmra.mrb[0].mxu0 %v1390
        %v1577 = vpop.f32.mrb[0].mxu0
        %v1578 = vadd.f32 %v1105, %v1577
        %v1579 = vpop.f32.mrb[0].mxu0
        %1580 = vmatprep.mubr.f32.mxu0 0.0
        %1581 = vmatmul.mubr.f32.gmra.mrb[0].mxu0 %v1393
        %v1582 = vpop.f32.mrb[0].mxu0
        %v1583 = vadd.f32 %v1106, %v1582
        %v1584 = vpop.f32.mrb[0].mxu0
        %1585 = vmatprep.mubr.f32.mxu0 0.0
        %1586 = vmatmul.mubr.f32.gmra.mrb[0].mxu0 %v1396
        %v1587 = vpop.f32.mrb[0].mxu0
        %v1588 = vadd.f32 %v1107, %v1587
        %v1589 = vpop.f32.mrb[0].mxu0
        %1590 = vdwg.mxu0
        %1591 = vmax.xlane.f32.xlu0 %v1272
        %v1592 = vpop.xlane.xlu0 %1591
        %1593 = vmax.xlane.f32.xlu0 %v1277
        %v1594 = vpop.xlane.xlu0 %1593
        %1595 = vmax.xlane.f32.xlu0 %v1282
        %v1596 = vpop.xlane.xlu0 %1595
        %1597 = vmax.xlane.f32.xlu0 %v1287
        %v1598 = vpop.xlane.xlu0 %1597
        %1599 = vmax.xlane.f32.xlu0 %v1292
        %v1600 = vpop.xlane.xlu0 %1599
        %1601 = vmax.xlane.f32.xlu0 %v1297
        %v1602 = vpop.xlane.xlu0 %1601
        %1603 = vmax.xlane.f32.xlu0 %v1302
        %v1604 = vpop.xlane.xlu0 %1603
        %1605 = vmax.xlane.f32.xlu0 %v1307
        %v1606 = vpop.xlane.xlu0 %1605
        %1607 = vmax.xlane.f32.xlu0 %v1312
        %v1608 = vpop.xlane.xlu0 %1607
        %1609 = vmax.xlane.f32.xlu0 %v1317
        %v1610 = vpop.xlane.xlu0 %1609
        %1611 = vmax.xlane.f32.xlu0 %v1322
        %v1612 = vpop.xlane.xlu0 %1611
        %1613 = vmax.xlane.f32.xlu0 %v1327
        %v1614 = vpop.xlane.xlu0 %1613
        %1615 = vmax.xlane.f32.xlu0 %v1332
        %v1616 = vpop.xlane.xlu0 %1615
        %1617 = vmax.xlane.f32.xlu0 %v1337
        %v1618 = vpop.xlane.xlu0 %1617
        %1619 = vmax.xlane.f32.xlu0 %v1342
        %v1620 = vpop.xlane.xlu0 %1619
        %1621 = vmax.xlane.f32.xlu0 %v1347
        %v1622 = vpop.xlane.xlu0 %1621
        %1623 = vmax.xlane.f32.xlu0 %v1513
        %v1624 = vpop.xlane.xlu0 %1623
        %1625 = vmax.xlane.f32.xlu0 %v1518
        %v1626 = vpop.xlane.xlu0 %1625
        %1627 = vmax.xlane.f32.xlu0 %v1523
        %v1628 = vpop.xlane.xlu0 %1627
        %1629 = vmax.xlane.f32.xlu0 %v1528
        %v1630 = vpop.xlane.xlu0 %1629
        %1631 = vmax.xlane.f32.xlu0 %v1533
        %v1632 = vpop.xlane.xlu0 %1631
        %1633 = vmax.xlane.f32.xlu0 %v1538
        %v1634 = vpop.xlane.xlu0 %1633
        %1635 = vmax.xlane.f32.xlu0 %v1543
        %v1636 = vpop.xlane.xlu0 %1635
        %1637 = vmax.xlane.f32.xlu0 %v1548
        %v1638 = vpop.xlane.xlu0 %1637
        %1639 = vmax.xlane.f32.xlu0 %v1553
        %v1640 = vpop.xlane.xlu0 %1639
        %1641 = vmax.xlane.f32.xlu0 %v1558
        %v1642 = vpop.xlane.xlu0 %1641
        %1643 = vmax.xlane.f32.xlu0 %v1563
        %v1644 = vpop.xlane.xlu0 %1643
        %1645 = vmax.xlane.f32.xlu0 %v1568
        %v1646 = vpop.xlane.xlu0 %1645
        %1647 = vmax.xlane.f32.xlu0 %v1573
        %v1648 = vpop.xlane.xlu0 %1647
        %1649 = vmax.xlane.f32.xlu0 %v1578
        %v1650 = vpop.xlane.xlu0 %1649
        %1651 = vmax.xlane.f32.xlu0 %v1583
        %v1652 = vpop.xlane.xlu0 %1651
        %1653 = vmax.xlane.f32.xlu0 %v1588
        %v1654 = vpop.xlane.xlu0 %1653
        %v1655 = vsub.f32 %v1272, %v1592
        %v1656 = vsub.f32 %v1277, %v1594
        %v1657 = vsub.f32 %v1282, %v1596
        %v1658 = vsub.f32 %v1287, %v1598
        %v1659 = vsub.f32 %v1292, %v1600
        %v1660 = vsub.f32 %v1297, %v1602
        %v1661 = vsub.f32 %v1302, %v1604
        %v1662 = vsub.f32 %v1307, %v1606
        %v1663 = vsub.f32 %v1312, %v1608
        %v1664 = vsub.f32 %v1317, %v1610
        %v1665 = vsub.f32 %v1322, %v1612
        %v1666 = vsub.f32 %v1327, %v1614
        %v1667 = vsub.f32 %v1332, %v1616
        %v1668 = vsub.f32 %v1337, %v1618
        %v1669 = vsub.f32 %v1342, %v1620
        %v1670 = vsub.f32 %v1347, %v1622
        %v1671 = vsub.f32 %v1513, %v1624
        %v1672 = vsub.f32 %v1518, %v1626
        %v1673 = vsub.f32 %v1523, %v1628
        %v1674 = vsub.f32 %v1528, %v1630
        %v1675 = vsub.f32 %v1533, %v1632
        %v1676 = vsub.f32 %v1538, %v1634
        %v1677 = vsub.f32 %v1543, %v1636
        %v1678 = vsub.f32 %v1548, %v1638
        %v1679 = vsub.f32 %v1553, %v1640
        %v1680 = vsub.f32 %v1558, %v1642
        %v1681 = vsub.f32 %v1563, %v1644
        %v1682 = vsub.f32 %v1568, %v1646
        %v1683 = vsub.f32 %v1573, %v1648
        %v1684 = vsub.f32 %v1578, %v1650
        %v1685 = vsub.f32 %v1583, %v1652
        %v1686 = vsub.f32 %v1588, %v1654
        %v1687 = vmul.f32 %v1655, 1.442695
        %v1688 = vpow.pop %v1687
        %v1689 = vmul.f32 %v1656, 1.442695
        %v1690 = vpow.pop %v1689
        %v1691 = vmul.f32 %v1657, 1.442695
        %v1692 = vpow.pop %v1691
        %v1693 = vmul.f32 %v1658, 1.442695
        %v1694 = vpow.pop %v1693
        %v1695 = vmul.f32 %v1659, 1.442695
        %v1696 = vpow.pop %v1695
        %v1697 = vmul.f32 %v1660, 1.442695
        %v1698 = vpow.pop %v1697
        %v1699 = vmul.f32 %v1661, 1.442695
        %v1700 = vpow.pop %v1699
        %v1701 = vmul.f32 %v1662, 1.442695
        %v1702 = vpow.pop %v1701
        %v1703 = vmul.f32 %v1663, 1.442695
        %v1704 = vpow.pop %v1703
        %v1705 = vmul.f32 %v1664, 1.442695
        %v1706 = vpow.pop %v1705
        %v1707 = vmul.f32 %v1665, 1.442695
        %v1708 = vpow.pop %v1707
        %v1709 = vmul.f32 %v1666, 1.442695
        %v1710 = vpow.pop %v1709
        %v1711 = vmul.f32 %v1667, 1.442695
        %v1712 = vpow.pop %v1711
        %v1713 = vmul.f32 %v1668, 1.442695
        %v1714 = vpow.pop %v1713
        %v1715 = vmul.f32 %v1669, 1.442695
        %v1716 = vpow.pop %v1715
        %v1717 = vmul.f32 %v1670, 1.442695
        %v1718 = vpow.pop %v1717
        %v1719 = vmul.f32 %v1671, 1.442695
        %v1720 = vpow.pop %v1719
        %v1721 = vmul.f32 %v1672, 1.442695
        %v1722 = vpow.pop %v1721
        %v1723 = vmul.f32 %v1673, 1.442695
        %v1724 = vpow.pop %v1723
        %v1725 = vmul.f32 %v1674, 1.442695
        %v1726 = vpow.pop %v1725
        %v1727 = vmul.f32 %v1675, 1.442695
        %v1728 = vpow.pop %v1727
        %v1729 = vmul.f32 %v1676, 1.442695
        %v1730 = vpow.pop %v1729
        %v1731 = vmul.f32 %v1677, 1.442695
        %v1732 = vpow.pop %v1731
        %v1733 = vmul.f32 %v1678, 1.442695
        %v1734 = vpow.pop %v1733
        %v1735 = vmul.f32 %v1679, 1.442695
        %v1736 = vpow.pop %v1735
        %v1737 = vmul.f32 %v1680, 1.442695
        %v1738 = vpow.pop %v1737
        %v1739 = vmul.f32 %v1681, 1.442695
        %v1740 = vpow.pop %v1739
        %v1741 = vmul.f32 %v1682, 1.442695
        %v1742 = vpow.pop %v1741
        %v1743 = vmul.f32 %v1683, 1.442695
        %v1744 = vpow.pop %v1743
        %v1745 = vmul.f32 %v1684, 1.442695
        %v1746 = vpow.pop %v1745
        %v1747 = vmul.f32 %v1685, 1.442695
        %v1748 = vpow.pop %v1747
        %v1749 = vmul.f32 %v1686, 1.442695
        %v1750 = vpow.pop %v1749
        %1751 = vadd.xlane.f32.xlu0 %v1688
        %v1752 = vpop.xlane.xlu0 %1751
        %1753 = vadd.xlane.f32.xlu0 %v1690
        %v1754 = vpop.xlane.xlu0 %1753
        %1755 = vadd.xlane.f32.xlu0 %v1692
        %v1756 = vpop.xlane.xlu0 %1755
        %1757 = vadd.xlane.f32.xlu0 %v1694
        %v1758 = vpop.xlane.xlu0 %1757
        %1759 = vadd.xlane.f32.xlu0 %v1696
        %v1760 = vpop.xlane.xlu0 %1759
        %1761 = vadd.xlane.f32.xlu0 %v1698
        %v1762 = vpop.xlane.xlu0 %1761
        %1763 = vadd.xlane.f32.xlu0 %v1700
        %v1764 = vpop.xlane.xlu0 %1763
        %1765 = vadd.xlane.f32.xlu0 %v1702
        %v1766 = vpop.xlane.xlu0 %1765
        %1767 = vadd.xlane.f32.xlu0 %v1704
        %v1768 = vpop.xlane.xlu0 %1767
        %1769 = vadd.xlane.f32.xlu0 %v1706
        %v1770 = vpop.xlane.xlu0 %1769
        %1771 = vadd.xlane.f32.xlu0 %v1708
        %v1772 = vpop.xlane.xlu0 %1771
        %1773 = vadd.xlane.f32.xlu0 %v1710
        %v1774 = vpop.xlane.xlu0 %1773
        %1775 = vadd.xlane.f32.xlu0 %v1712
        %v1776 = vpop.xlane.xlu0 %1775
        %1777 = vadd.xlane.f32.xlu0 %v1714
        %v1778 = vpop.xlane.xlu0 %1777
        %1779 = vadd.xlane.f32.xlu0 %v1716
        %v1780 = vpop.xlane.xlu0 %1779
        %1781 = vadd.xlane.f32.xlu0 %v1718
        %v1782 = vpop.xlane.xlu0 %1781
        %1783 = vadd.xlane.f32.xlu0 %v1720
        %v1784 = vpop.xlane.xlu0 %1783
        %1785 = vadd.xlane.f32.xlu0 %v1722
        %v1786 = vpop.xlane.xlu0 %1785
        %1787 = vadd.xlane.f32.xlu0 %v1724
        %v1788 = vpop.xlane.xlu0 %1787
        %1789 = vadd.xlane.f32.xlu0 %v1726
        %v1790 = vpop.xlane.xlu0 %1789
        %1791 = vadd.xlane.f32.xlu0 %v1728
        %v1792 = vpop.xlane.xlu0 %1791
        %1793 = vadd.xlane.f32.xlu0 %v1730
        %v1794 = vpop.xlane.xlu0 %1793
        %1795 = vadd.xlane.f32.xlu0 %v1732
        %v1796 = vpop.xlane.xlu0 %1795
        %1797 = vadd.xlane.f32.xlu0 %v1734
        %v1798 = vpop.xlane.xlu0 %1797
        %1799 = vadd.xlane.f32.xlu0 %v1736
        %v1800 = vpop.xlane.xlu0 %1799
        %1801 = vadd.xlane.f32.xlu0 %v1738
        %v1802 = vpop.xlane.xlu0 %1801
        %1803 = vadd.xlane.f32.xlu0 %v1740
        %v1804 = vpop.xlane.xlu0 %1803
        %1805 = vadd.xlane.f32.xlu0 %v1742
        %v1806 = vpop.xlane.xlu0 %1805
        %1807 = vadd.xlane.f32.xlu0 %v1744
        %v1808 = vpop.xlane.xlu0 %1807
        %1809 = vadd.xlane.f32.xlu0 %v1746
        %v1810 = vpop.xlane.xlu0 %1809
        %1811 = vadd.xlane.f32.xlu0 %v1748
        %v1812 = vpop.xlane.xlu0 %1811
        %1813 = vadd.xlane.f32.xlu0 %v1750
        %v1814 = vpop.xlane.xlu0 %1813
        %1815 = vmatprep.subr.mxu0 0.0
        %1816 = vmatpush1.msra.mxu0 %v806
        %1817 = vmatprep.subr.mxu0 0.0
        %1818 = vmatpush1.msra.mxu0 %v811
        %1819 = vmatprep.subr.mxu0 0.0
        %1820 = vmatpush1.msra.mxu0 %v816
        %1821 = vmatprep.subr.mxu0 0.0
        %1822 = vmatpush1.msra.mxu0 %v821
        %1823 = vmatprep.subr.mxu0 0.0
        %1824 = vmatpush1.msra.mxu0 %v826
        %1825 = vmatprep.subr.mxu0 0.0
        %1826 = vmatpush1.msra.mxu0 %v831
        %1827 = vmatprep.subr.mxu0 0.0
        %1828 = vmatpush1.msra.mxu0 %v836
        %1829 = vmatprep.subr.mxu0 0.0
        %1830 = vmatpush1.msra.mxu0 %v841
        %1831 = vmatprep.subr.mxu0 0.0
        %1832 = vmatpush1.msra.mxu0 %v846
        %1833 = vmatprep.subr.mxu0 0.0
        %1834 = vmatpush1.msra.mxu0 %v851
        %1835 = vmatprep.subr.mxu0 0.0
        %1836 = vmatpush1.msra.mxu0 %v856
        %1837 = vmatprep.subr.mxu0 0.0
        %1838 = vmatpush1.msra.mxu0 %v861
        %1839 = vmatprep.subr.mxu0 0.0
        %1840 = vmatpush1.msra.mxu0 %v866
        %1841 = vmatprep.subr.mxu0 0.0
        %1842 = vmatpush1.msra.mxu0 %v871
        %1843 = vmatprep.subr.mxu0 0.0
        %1844 = vmatpush1.msra.mxu0 %v876
        %1845 = vmatprep.subr.mxu0 0.0
        %1846 = vmatpush1.msra.mxu0 %v881
        %1847 = vmatprep.subr.mxu0 0.0
        %1848 = vmatpush1.msra.mxu0 0.0
        %1849 = vmatprep.subr.mxu0 0.0
        %1850 = vmatpush1.msra.mxu0 0.0
        %1851 = vmatprep.subr.mxu0 0.0
        %1852 = vmatpush1.msra.mxu0 0.0
        %1853 = vmatprep.subr.mxu0 0.0
        %1854 = vmatpush1.msra.mxu0 0.0
        %1855 = vmatprep.subr.mxu0 0.0
        %1856 = vmatpush1.msra.mxu0 0.0
        %1857 = vmatprep.subr.mxu0 0.0
        %1858 = vmatpush1.msra.mxu0 0.0
        %1859 = vmatprep.subr.mxu0 0.0
        %1860 = vmatpush1.msra.mxu0 0.0
        %1861 = vmatprep.subr.mxu0 0.0
        %1862 = vmatpush1.msra.mxu0 0.0
        %1863 = vmatprep.subr.mxu0 0.0
        %1864 = vmatpush1.msra.mxu0 0.0
        %1865 = vmatprep.subr.mxu0 0.0
        %1866 = vmatpush1.msra.mxu0 0.0
        %1867 = vmatprep.subr.mxu0 0.0
        %1868 = vmatpush1.msra.mxu0 0.0
        %1869 = vmatprep.subr.mxu0 0.0
        %1870 = vmatpush1.msra.mxu0 0.0
        %1871 = vmatprep.subr.mxu0 0.0
        %1872 = vmatpush1.msra.mxu0 0.0
        %1873 = vmatprep.subr.mxu0 0.0
        %1874 = vmatpush1.msra.mxu0 0.0
        %1875 = vmatprep.subr.mxu0 0.0
        %1876 = vmatpush1.msra.mxu0 0.0
        %1877 = vmatprep.subr.mxu0 0.0
        %1878 = vmatpush1.msra.mxu0 0.0
        %1879 = vmatprep.mubr.f32.mxu0 0.0
        %1880 = vmatmul.mubr.f32.gmra.mrb[0].mxu0 %v1688
        %v1881 = vpop.f32.mrb[0].mxu0
        %v1882 = vadd.f32 0.0, %v1881
        %v1883 = vpop.f32.mrb[0].mxu0
        %1884 = vmatprep.mubr.f32.mxu0 0.0
        %1885 = vmatmul.mubr.f32.gmra.mrb[0].mxu0 %v1690
        %v1886 = vpop.f32.mrb[0].mxu0
        %v1887 = vadd.f32 0.0, %v1886
        %v1888 = vpop.f32.mrb[0].mxu0
        %1889 = vmatprep.mubr.f32.mxu0 0.0
        %1890 = vmatmul.mubr.f32.gmra.mrb[0].mxu0 %v1692
        %v1891 = vpop.f32.mrb[0].mxu0
        %v1892 = vadd.f32 0.0, %v1891
        %v1893 = vpop.f32.mrb[0].mxu0
        %1894 = vmatprep.mubr.f32.mxu0 0.0
        %1895 = vmatmul.mubr.f32.gmra.mrb[0].mxu0 %v1694
        %v1896 = vpop.f32.mrb[0].mxu0
        %v1897 = vadd.f32 0.0, %v1896
        %v1898 = vpop.f32.mrb[0].mxu0
        %1899 = vmatprep.mubr.f32.mxu0 0.0
        %1900 = vmatmul.mubr.f32.gmra.mrb[0].mxu0 %v1696
        %v1901 = vpop.f32.mrb[0].mxu0
        %v1902 = vadd.f32 0.0, %v1901
        %v1903 = vpop.f32.mrb[0].mxu0
        %1904 = vmatprep.mubr.f32.mxu0 0.0
        %1905 = vmatmul.mubr.f32.gmra.mrb[0].mxu0 %v1698
        %v1906 = vpop.f32.mrb[0].mxu0
        %v1907 = vadd.f32 0.0, %v1906
        %v1908 = vpop.f32.mrb[0].mxu0
        %1909 = vmatprep.mubr.f32.mxu0 0.0
        %1910 = vmatmul.mubr.f32.gmra.mrb[0].mxu0 %v1700
        %v1911 = vpop.f32.mrb[0].mxu0
        %v1912 = vadd.f32 0.0, %v1911
        %v1913 = vpop.f32.mrb[0].mxu0
        %1914 = vmatprep.mubr.f32.mxu0 0.0
        %1915 = vmatmul.mubr.f32.gmra.mrb[0].mxu0 %v1702
        %v1916 = vpop.f32.mrb[0].mxu0
        %v1917 = vadd.f32 0.0, %v1916
        %v1918 = vpop.f32.mrb[0].mxu0
        %1919 = vmatprep.mubr.f32.mxu0 0.0
        %1920 = vmatmul.mubr.f32.gmra.mrb[0].mxu0 %v1704
        %v1921 = vpop.f32.mrb[0].mxu0
        %v1922 = vadd.f32 0.0, %v1921
        %v1923 = vpop.f32.mrb[0].mxu0
        %1924 = vmatprep.mubr.f32.mxu0 0.0
        %1925 = vmatmul.mubr.f32.gmra.mrb[0].mxu0 %v1706
        %v1926 = vpop.f32.mrb[0].mxu0
        %v1927 = vadd.f32 0.0, %v1926
        %v1928 = vpop.f32.mrb[0].mxu0
        %1929 = vmatprep.mubr.f32.mxu0 0.0
        %1930 = vmatmul.mubr.f32.gmra.mrb[0].mxu0 %v1708
        %v1931 = vpop.f32.mrb[0].mxu0
        %v1932 = vadd.f32 0.0, %v1931
        %v1933 = vpop.f32.mrb[0].mxu0
        %1934 = vmatprep.mubr.f32.mxu0 0.0
        %1935 = vmatmul.mubr.f32.gmra.mrb[0].mxu0 %v1710
        %v1936 = vpop.f32.mrb[0].mxu0
        %v1937 = vadd.f32 0.0, %v1936
        %v1938 = vpop.f32.mrb[0].mxu0
        %1939 = vmatprep.mubr.f32.mxu0 0.0
        %1940 = vmatmul.mubr.f32.gmra.mrb[0].mxu0 %v1712
        %v1941 = vpop.f32.mrb[0].mxu0
        %v1942 = vadd.f32 0.0, %v1941
        %v1943 = vpop.f32.mrb[0].mxu0
        %1944 = vmatprep.mubr.f32.mxu0 0.0
        %1945 = vmatmul.mubr.f32.gmra.mrb[0].mxu0 %v1714
        %v1946 = vpop.f32.mrb[0].mxu0
        %v1947 = vadd.f32 0.0, %v1946
        %v1948 = vpop.f32.mrb[0].mxu0
        %1949 = vmatprep.mubr.f32.mxu0 0.0
        %1950 = vmatmul.mubr.f32.gmra.mrb[0].mxu0 %v1716
        %v1951 = vpop.f32.mrb[0].mxu0
        %v1952 = vadd.f32 0.0, %v1951
        %v1953 = vpop.f32.mrb[0].mxu0
        %1954 = vmatprep.mubr.f32.mxu0 0.0
        %1955 = vmatmul.mubr.f32.gmra.mrb[0].mxu0 %v1718
        %v1956 = vpop.f32.mrb[0].mxu0
        %v1957 = vadd.f32 0.0, %v1956
        %v1958 = vpop.f32.mrb[0].mxu0
        %1959 = vdwg.mxu0
        %1960 = vmatprep.subr.mxu0 0.0
        %1961 = vmatpush1.msra.mxu0 %v886
        %1962 = vmatprep.subr.mxu0 0.0
        %1963 = vmatpush1.msra.mxu0 %v891
        %1964 = vmatprep.subr.mxu0 0.0
        %1965 = vmatpush1.msra.mxu0 %v896
        %1966 = vmatprep.subr.mxu0 0.0
        %1967 = vmatpush1.msra.mxu0 %v901
        %1968 = vmatprep.subr.mxu0 0.0
        %1969 = vmatpush1.msra.mxu0 %v906
        %1970 = vmatprep.subr.mxu0 0.0
        %1971 = vmatpush1.msra.mxu0 %v911
        %1972 = vmatprep.subr.mxu0 0.0
        %1973 = vmatpush1.msra.mxu0 %v916
        %1974 = vmatprep.subr.mxu0 0.0
        %1975 = vmatpush1.msra.mxu0 %v921
        %1976 = vmatprep.subr.mxu0 0.0
        %1977 = vmatpush1.msra.mxu0 %v926
        %1978 = vmatprep.subr.mxu0 0.0
        %1979 = vmatpush1.msra.mxu0 %v931
        %1980 = vmatprep.subr.mxu0 0.0
        %1981 = vmatpush1.msra.mxu0 %v936
        %1982 = vmatprep.subr.mxu0 0.0
        %1983 = vmatpush1.msra.mxu0 %v941
        %1984 = vmatprep.subr.mxu0 0.0
        %1985 = vmatpush1.msra.mxu0 %v946
        %1986 = vmatprep.subr.mxu0 0.0
        %1987 = vmatpush1.msra.mxu0 %v951
        %1988 = vmatprep.subr.mxu0 0.0
        %1989 = vmatpush1.msra.mxu0 %v956
        %1990 = vmatprep.subr.mxu0 0.0
        %1991 = vmatpush1.msra.mxu0 %v961
        %1992 = vmatprep.subr.mxu0 0.0
        %1993 = vmatpush1.msra.mxu0 0.0
        %1994 = vmatprep.subr.mxu0 0.0
        %1995 = vmatpush1.msra.mxu0 0.0
        %1996 = vmatprep.subr.mxu0 0.0
        %1997 = vmatpush1.msra.mxu0 0.0
        %1998 = vmatprep.subr.mxu0 0.0
        %1999 = vmatpush1.msra.mxu0 0.0
        %2000 = vmatprep.subr.mxu0 0.0
        %2001 = vmatpush1.msra.mxu0 0.0
        %2002 = vmatprep.subr.mxu0 0.0
        %2003 = vmatpush1.msra.mxu0 0.0
        %2004 = vmatprep.subr.mxu0 0.0
        %2005 = vmatpush1.msra.mxu0 0.0
        %2006 = vmatprep.subr.mxu0 0.0
        %2007 = vmatpush1.msra.mxu0 0.0
        %2008 = vmatprep.subr.mxu0 0.0
        %2009 = vmatpush1.msra.mxu0 0.0
        %2010 = vmatprep.subr.mxu0 0.0
        %2011 = vmatpush1.msra.mxu0 0.0
        %2012 = vmatprep.subr.mxu0 0.0
        %2013 = vmatpush1.msra.mxu0 0.0
        %2014 = vmatprep.subr.mxu0 0.0
        %2015 = vmatpush1.msra.mxu0 0.0
        %2016 = vmatprep.subr.mxu0 0.0
        %2017 = vmatpush1.msra.mxu0 0.0
        %2018 = vmatprep.subr.mxu0 0.0
        %2019 = vmatpush1.msra.mxu0 0.0
        %2020 = vmatprep.subr.mxu0 0.0
        %2021 = vmatpush1.msra.mxu0 0.0
        %2022 = vmatprep.subr.mxu0 0.0
        %2023 = vmatpush1.msra.mxu0 0.0
        %2024 = vmatprep.mubr.f32.mxu0 0.0
        %2025 = vmatmul.mubr.f32.gmra.mrb[0].mxu0 %v1720
        %v2026 = vpop.f32.mrb[0].mxu0
        %v2027 = vadd.f32 0.0, %v2026
        %v2028 = vpop.f32.mrb[0].mxu0
        %2029 = vmatprep.mubr.f32.mxu0 0.0
        %2030 = vmatmul.mubr.f32.gmra.mrb[0].mxu0 %v1722
        %v2031 = vpop.f32.mrb[0].mxu0
        %v2032 = vadd.f32 0.0, %v2031
        %v2033 = vpop.f32.mrb[0].mxu0
        %2034 = vmatprep.mubr.f32.mxu0 0.0
        %2035 = vmatmul.mubr.f32.gmra.mrb[0].mxu0 %v1724
        %v2036 = vpop.f32.mrb[0].mxu0
        %v2037 = vadd.f32 0.0, %v2036
        %v2038 = vpop.f32.mrb[0].mxu0
        %2039 = vmatprep.mubr.f32.mxu0 0.0
        %2040 = vmatmul.mubr.f32.gmra.mrb[0].mxu0 %v1726
        %v2041 = vpop.f32.mrb[0].mxu0
        %v2042 = vadd.f32 0.0, %v2041
        %v2043 = vpop.f32.mrb[0].mxu0
        %2044 = vmatprep.mubr.f32.mxu0 0.0
        %2045 = vmatmul.mubr.f32.gmra.mrb[0].mxu0 %v1728
        %v2046 = vpop.f32.mrb[0].mxu0
        %v2047 = vadd.f32 0.0, %v2046
        %v2048 = vpop.f32.mrb[0].mxu0
        %2049 = vmatprep.mubr.f32.mxu0 0.0
        %2050 = vmatmul.mubr.f32.gmra.mrb[0].mxu0 %v1730
        %v2051 = vpop.f32.mrb[0].mxu0
        %v2052 = vadd.f32 0.0, %v2051
        %v2053 = vpop.f32.mrb[0].mxu0
        %2054 = vmatprep.mubr.f32.mxu0 0.0
        %2055 = vmatmul.mubr.f32.gmra.mrb[0].mxu0 %v1732
        %v2056 = vpop.f32.mrb[0].mxu0
        %v2057 = vadd.f32 0.0, %v2056
        %v2058 = vpop.f32.mrb[0].mxu0
        %2059 = vmatprep.mubr.f32.mxu0 0.0
        %2060 = vmatmul.mubr.f32.gmra.mrb[0].mxu0 %v1734
        %v2061 = vpop.f32.mrb[0].mxu0
        %v2062 = vadd.f32 0.0, %v2061
        %v2063 = vpop.f32.mrb[0].mxu0
        %2064 = vmatprep.mubr.f32.mxu0 0.0
        %2065 = vmatmul.mubr.f32.gmra.mrb[0].mxu0 %v1736
        %v2066 = vpop.f32.mrb[0].mxu0
        %v2067 = vadd.f32 0.0, %v2066
        %v2068 = vpop.f32.mrb[0].mxu0
        %2069 = vmatprep.mubr.f32.mxu0 0.0
        %2070 = vmatmul.mubr.f32.gmra.mrb[0].mxu0 %v1738
        %v2071 = vpop.f32.mrb[0].mxu0
        %v2072 = vadd.f32 0.0, %v2071
        %v2073 = vpop.f32.mrb[0].mxu0
        %2074 = vmatprep.mubr.f32.mxu0 0.0
        %2075 = vmatmul.mubr.f32.gmra.mrb[0].mxu0 %v1740
        %v2076 = vpop.f32.mrb[0].mxu0
        %v2077 = vadd.f32 0.0, %v2076
        %v2078 = vpop.f32.mrb[0].mxu0
        %2079 = vmatprep.mubr.f32.mxu0 0.0
        %2080 = vmatmul.mubr.f32.gmra.mrb[0].mxu0 %v1742
        %v2081 = vpop.f32.mrb[0].mxu0
        %v2082 = vadd.f32 0.0, %v2081
        %v2083 = vpop.f32.mrb[0].mxu0
        %2084 = vmatprep.mubr.f32.mxu0 0.0
        %2085 = vmatmul.mubr.f32.gmra.mrb[0].mxu0 %v1744
        %v2086 = vpop.f32.mrb[0].mxu0
        %v2087 = vadd.f32 0.0, %v2086
        %v2088 = vpop.f32.mrb[0].mxu0
        %2089 = vmatprep.mubr.f32.mxu0 0.0
        %2090 = vmatmul.mubr.f32.gmra.mrb[0].mxu0 %v1746
        %v2091 = vpop.f32.mrb[0].mxu0
        %v2092 = vadd.f32 0.0, %v2091
        %v2093 = vpop.f32.mrb[0].mxu0
        %2094 = vmatprep.mubr.f32.mxu0 0.0
        %2095 = vmatmul.mubr.f32.gmra.mrb[0].mxu0 %v1748
        %v2096 = vpop.f32.mrb[0].mxu0
        %v2097 = vadd.f32 0.0, %v2096
        %v2098 = vpop.f32.mrb[0].mxu0
        %2099 = vmatprep.mubr.f32.mxu0 0.0
        %2100 = vmatmul.mubr.f32.gmra.mrb[0].mxu0 %v1750
        %v2101 = vpop.f32.mrb[0].mxu0
        %v2102 = vadd.f32 0.0, %v2101
        %v2103 = vpop.f32.mrb[0].mxu0
        %2104 = vdwg.mxu0
        %v2105 = vrcp.pop %v1752
        %v2106 = vrcp.pop %v1754
        %v2107 = vrcp.pop %v1756
        %v2108 = vrcp.pop %v1758
        %v2109 = vrcp.pop %v1760
        %v2110 = vrcp.pop %v1762
        %v2111 = vrcp.pop %v1764
        %v2112 = vrcp.pop %v1766
        %v2113 = vrcp.pop %v1768
        %v2114 = vrcp.pop %v1770
        %v2115 = vrcp.pop %v1772
        %v2116 = vrcp.pop %v1774
        %v2117 = vrcp.pop %v1776
        %v2118 = vrcp.pop %v1778
        %v2119 = vrcp.pop %v1780
        %v2120 = vrcp.pop %v1782
        %v2121 = vrcp.pop %v1784
        %v2122 = vrcp.pop %v1786
        %v2123 = vrcp.pop %v1788
        %v2124 = vrcp.pop %v1790
        %v2125 = vrcp.pop %v1792
        %v2126 = vrcp.pop %v1794
        %v2127 = vrcp.pop %v1796
        %v2128 = vrcp.pop %v1798
        %v2129 = vrcp.pop %v1800
        %v2130 = vrcp.pop %v1802
        %v2131 = vrcp.pop %v1804
        %v2132 = vrcp.pop %v1806
        %v2133 = vrcp.pop %v1808
        %v2134 = vrcp.pop %v1810
        %v2135 = vrcp.pop %v1812
        %v2136 = vrcp.pop %v1814
        %v2137 = vmul.f32 %v1882, %v2105
        %v2138 = vmul.f32 %v1887, %v2106
        %v2139 = vmul.f32 %v1892, %v2107
        %v2140 = vmul.f32 %v1897, %v2108
        %v2141 = vmul.f32 %v1902, %v2109
        %v2142 = vmul.f32 %v1907, %v2110
        %v2143 = vmul.f32 %v1912, %v2111
        %v2144 = vmul.f32 %v1917, %v2112
        %v2145 = vmul.f32 %v1922, %v2113
        %v2146 = vmul.f32 %v1927, %v2114
        %v2147 = vmul.f32 %v1932, %v2115
        %v2148 = vmul.f32 %v1937, %v2116
        %v2149 = vmul.f32 %v1942, %v2117
        %v2150 = vmul.f32 %v1947, %v2118
        %v2151 = vmul.f32 %v1952, %v2119
        %v2152 = vmul.f32 %v1957, %v2120
        %v2153 = vmul.f32 %v2027, %v2121
        %v2154 = vmul.f32 %v2032, %v2122
        %v2155 = vmul.f32 %v2037, %v2123
        %v2156 = vmul.f32 %v2042, %v2124
        %v2157 = vmul.f32 %v2047, %v2125
        %v2158 = vmul.f32 %v2052, %v2126
        %v2159 = vmul.f32 %v2057, %v2127
        %v2160 = vmul.f32 %v2062, %v2128
        %v2161 = vmul.f32 %v2067, %v2129
        %v2162 = vmul.f32 %v2072, %v2130
        %v2163 = vmul.f32 %v2077, %v2131
        %v2164 = vmul.f32 %v2082, %v2132
        %v2165 = vmul.f32 %v2087, %v2133
        %v2166 = vmul.f32 %v2092, %v2134
        %v2167 = vmul.f32 %v2097, %v2135
        %v2168 = vmul.f32 %v2102, %v2136
        %s2169 = scalar_lea.vmem [#allocation8], 128
        %v2170 = vld [vmem:[%s2169] sm:$0xff]
        %v2171 = vld [vmem:[%s2169 + $0x8] sm:$0xff]
        %v2172 = vld [vmem:[%s2169 + $0x10] sm:$0xff]
        %v2173 = vld [vmem:[%s2169 + $0x18] sm:$0xff]
        %v2174 = vld [vmem:[%s2169 + $0x20] sm:$0xff]
        %v2175 = vld [vmem:[%s2169 + $0x28] sm:$0xff]
        %v2176 = vld [vmem:[%s2169 + $0x30] sm:$0xff]
        %v2177 = vld [vmem:[%s2169 + $0x38] sm:$0xff]
        %v2178 = vld [vmem:[%s2169 + $0x40] sm:$0xff]
        %v2179 = vld [vmem:[%s2169 + $0x48] sm:$0xff]
        %v2180 = vld [vmem:[%s2169 + $0x50] sm:$0xff]
        %v2181 = vld [vmem:[%s2169 + $0x58] sm:$0xff]
        %v2182 = vld [vmem:[%s2169 + $0x60] sm:$0xff]
        %v2183 = vld [vmem:[%s2169 + $0x68] sm:$0xff]
        %v2184 = vld [vmem:[%s2169 + $0x70] sm:$0xff]
        %v2185 = vld [vmem:[%s2169 + $0x78] sm:$0xff]
        %2186 = vrot.lane.b32.xlu0 %v964, 96
        %v2187 = vpop.permute.xlu0 %2186
        %2188 = vrot.lane.b32.xlu0 %v965, 96
        %v2189 = vpop.permute.xlu0 %2188
        %2190 = vrot.lane.b32.xlu0 %v966, 96
        %v2191 = vpop.permute.xlu0 %2190
        %2192 = vrot.lane.b32.xlu0 %v967, 96
        %v2193 = vpop.permute.xlu0 %2192
        %2194 = vrot.lane.b32.xlu0 %v968, 96
        %v2195 = vpop.permute.xlu0 %2194
        %2196 = vrot.lane.b32.xlu0 %v969, 96
        %v2197 = vpop.permute.xlu0 %2196
        %2198 = vrot.lane.b32.xlu0 %v970, 96
        %v2199 = vpop.permute.xlu0 %2198
        %2200 = vrot.lane.b32.xlu0 %v971, 96
        %v2201 = vpop.permute.xlu0 %2200
        %2202 = vrot.lane.b32.xlu0 %v972, 96
        %v2203 = vpop.permute.xlu0 %2202
        %2204 = vrot.lane.b32.xlu0 %v973, 96
        %v2205 = vpop.permute.xlu0 %2204
        %2206 = vrot.lane.b32.xlu0 %v974, 96
        %v2207 = vpop.permute.xlu0 %2206
        %2208 = vrot.lane.b32.xlu0 %v975, 96
        %v2209 = vpop.permute.xlu0 %2208
        %2210 = vrot.lane.b32.xlu0 %v976, 96
        %v2211 = vpop.permute.xlu0 %2210
        %2212 = vrot.lane.b32.xlu0 %v977, 96
        %v2213 = vpop.permute.xlu0 %2212
        %2214 = vrot.lane.b32.xlu0 %v978, 96
        %v2215 = vpop.permute.xlu0 %2214
        %2216 = vrot.lane.b32.xlu0 %v979, 96
        %v2217 = vpop.permute.xlu0 %2216
        %2218 = vrot.lane.b32.xlu0 %v551, 96
        %v2219 = vpop.permute.xlu0 %2218
        %2220 = vrot.lane.b32.xlu0 %v557, 96
        %v2221 = vpop.permute.xlu0 %2220
        %2222 = vrot.lane.b32.xlu0 %v563, 96
        %v2223 = vpop.permute.xlu0 %2222
        %2224 = vrot.lane.b32.xlu0 %v569, 96
        %v2225 = vpop.permute.xlu0 %2224
        %2226 = vrot.lane.b32.xlu0 %v575, 96
        %v2227 = vpop.permute.xlu0 %2226
        %2228 = vrot.lane.b32.xlu0 %v581, 96
        %v2229 = vpop.permute.xlu0 %2228
        %2230 = vrot.lane.b32.xlu0 %v587, 96
        %v2231 = vpop.permute.xlu0 %2230
        %2232 = vrot.lane.b32.xlu0 %v593, 96
        %v2233 = vpop.permute.xlu0 %2232
        %2234 = vrot.lane.b32.xlu0 %v599, 96
        %v2235 = vpop.permute.xlu0 %2234
        %2236 = vrot.lane.b32.xlu0 %v605, 96
        %v2237 = vpop.permute.xlu0 %2236
        %2238 = vrot.lane.b32.xlu0 %v611, 96
        %v2239 = vpop.permute.xlu0 %2238
        %2240 = vrot.lane.b32.xlu0 %v617, 96
        %v2241 = vpop.permute.xlu0 %2240
        %2242 = vrot.lane.b32.xlu0 %v623, 96
        %v2243 = vpop.permute.xlu0 %2242
        %2244 = vrot.lane.b32.xlu0 %v629, 96
        %v2245 = vpop.permute.xlu0 %2244
        %2246 = vrot.lane.b32.xlu0 %v635, 96
        %v2247 = vpop.permute.xlu0 %2246
        %2248 = vrot.lane.b32.xlu0 %v641, 96
        %v2249 = vpop.permute.xlu0 %2248
        %v2250 = vsel %vm1108, %v2187, 0
        %v2252 = vsel %vm1108, %v2189, 0
        %v2254 = vsel %vm1108, %v2191, 0
        %v2256 = vsel %vm1108, %v2193, 0
        %v2258 = vsel %vm1108, %v2195, 0
        %v2260 = vsel %vm1108, %v2197, 0
        %v2262 = vsel %vm1108, %v2199, 0
        %v2264 = vsel %vm1108, %v2201, 0
        %v2266 = vsel %vm1108, %v2203, 0
        %v2268 = vsel %vm1108, %v2205, 0
        %v2270 = vsel %vm1108, %v2207, 0
        %v2272 = vsel %vm1108, %v2209, 0
        %v2274 = vsel %vm1108, %v2211, 0
        %v2276 = vsel %vm1108, %v2213, 0
        %v2278 = vsel %vm1108, %v2215, 0
        %v2280 = vsel %vm1108, %v2217, 0
        %v2282 = vsel %vm1108, %v2219, 0
        %v2284 = vsel %vm1108, %v2221, 0
        %v2286 = vsel %vm1108, %v2223, 0
        %v2288 = vsel %vm1108, %v2225, 0
        %v2290 = vsel %vm1108, %v2227, 0
        %v2292 = vsel %vm1108, %v2229, 0
        %v2294 = vsel %vm1108, %v2231, 0
        %v2296 = vsel %vm1108, %v2233, 0
        %v2298 = vsel %vm1108, %v2235, 0
        %v2300 = vsel %vm1108, %v2237, 0
        %v2302 = vsel %vm1108, %v2239, 0
        %v2304 = vsel %vm1108, %v2241, 0
        %v2306 = vsel %vm1108, %v2243, 0
        %v2308 = vsel %vm1108, %v2245, 0
        %v2310 = vsel %vm1108, %v2247, 0
        %v2312 = vsel %vm1108, %v2249, 0
        %2314 = vmatprep.subr.mxu0 0.0
        %2315 = vmatpush1.xpose.msra.mxu0 %v2282
        %2316 = vmatprep.subr.mxu0 0.0
        %2317 = vmatpush1.xpose.msra.mxu0 %v2284
        %2318 = vmatprep.subr.mxu0 0.0
        %2319 = vmatpush1.xpose.msra.mxu0 %v2286
        %2320 = vmatprep.subr.mxu0 0.0
        %2321 = vmatpush1.xpose.msra.mxu0 %v2288
        %2322 = vmatprep.subr.mxu0 0.0
        %2323 = vmatpush1.xpose.msra.mxu0 %v2290
        %2324 = vmatprep.subr.mxu0 0.0
        %2325 = vmatpush1.xpose.msra.mxu0 %v2292
        %2326 = vmatprep.subr.mxu0 0.0
        %2327 = vmatpush1.xpose.msra.mxu0 %v2294
        %2328 = vmatprep.subr.mxu0 0.0
        %2329 = vmatpush1.xpose.msra.mxu0 %v2296
        %2330 = vmatprep.subr.mxu0 0.0
        %2331 = vmatpush1.xpose.msra.mxu0 %v2298
        %2332 = vmatprep.subr.mxu0 0.0
        %2333 = vmatpush1.xpose.msra.mxu0 %v2300
        %2334 = vmatprep.subr.mxu0 0.0
        %2335 = vmatpush1.xpose.msra.mxu0 %v2302
        %2336 = vmatprep.subr.mxu0 0.0
        %2337 = vmatpush1.xpose.msra.mxu0 %v2304
        %2338 = vmatprep.subr.mxu0 0.0
        %2339 = vmatpush1.xpose.msra.mxu0 %v2306
        %2340 = vmatprep.subr.mxu0 0.0
        %2341 = vmatpush1.xpose.msra.mxu0 %v2308
        %2342 = vmatprep.subr.mxu0 0.0
        %2343 = vmatpush1.xpose.msra.mxu0 %v2310
        %2344 = vmatprep.subr.mxu0 0.0
        %2345 = vmatpush1.xpose.msra.mxu0 %v2312
        %2346 = vmatprep.subr.mxu0 0.0
        %2347 = vmatpush1.xpose.msra.mxu0 0.0
        %2348 = vmatprep.subr.mxu0 0.0
        %2349 = vmatpush1.xpose.msra.mxu0 0.0
        %2350 = vmatprep.subr.mxu0 0.0
        %2351 = vmatpush1.xpose.msra.mxu0 0.0
        %2352 = vmatprep.subr.mxu0 0.0
        %2353 = vmatpush1.xpose.msra.mxu0 0.0
        %2354 = vmatprep.subr.mxu0 0.0
        %2355 = vmatpush1.xpose.msra.mxu0 0.0
        %2356 = vmatprep.subr.mxu0 0.0
        %2357 = vmatpush1.xpose.msra.mxu0 0.0
        %2358 = vmatprep.subr.mxu0 0.0
        %2359 = vmatpush1.xpose.msra.mxu0 0.0
        %2360 = vmatprep.subr.mxu0 0.0
        %2361 = vmatpush1.xpose.msra.mxu0 0.0
        %2362 = vmatprep.subr.mxu0 0.0
        %2363 = vmatpush1.xpose.msra.mxu0 0.0
        %2364 = vmatprep.subr.mxu0 0.0
        %2365 = vmatpush1.xpose.msra.mxu0 0.0
        %2366 = vmatprep.subr.mxu0 0.0
        %2367 = vmatpush1.xpose.msra.mxu0 0.0
        %2368 = vmatprep.subr.mxu0 0.0
        %2369 = vmatpush1.xpose.msra.mxu0 0.0
        %2370 = vmatprep.subr.mxu0 0.0
        %2371 = vmatpush1.xpose.msra.mxu0 0.0
        %2372 = vmatprep.subr.mxu0 0.0
        %2373 = vmatpush1.xpose.msra.mxu0 0.0
        %2374 = vmatprep.subr.mxu0 0.0
        %2375 = vmatpush1.xpose.msra.mxu0 0.0
        %2376 = vmatprep.subr.mxu0 0.0
        %2377 = vmatpush1.xpose.msra.mxu0 0.0
        %2378 = vmatprep.mubr.f32.mxu0 0.0
        %2379 = vmatmul.mubr.f32.gmra.mrb[0].mxu0 %v2250
        %v2380 = vpop.f32.mrb[0].mxu0
        %v2381 = vadd.f32 %v2170, %v2380
        %v2382 = vpop.f32.mrb[0].mxu0
        %2383 = vmatprep.mubr.f32.mxu0 0.0
        %2384 = vmatmul.mubr.f32.gmra.mrb[0].mxu0 %v2252
        %v2385 = vpop.f32.mrb[0].mxu0
        %v2386 = vadd.f32 %v2171, %v2385
        %v2387 = vpop.f32.mrb[0].mxu0
        %2388 = vmatprep.mubr.f32.mxu0 0.0
        %2389 = vmatmul.mubr.f32.gmra.mrb[0].mxu0 %v2254
        %v2390 = vpop.f32.mrb[0].mxu0
        %v2391 = vadd.f32 %v2172, %v2390
        %v2392 = vpop.f32.mrb[0].mxu0
        %2393 = vmatprep.mubr.f32.mxu0 0.0
        %2394 = vmatmul.mubr.f32.gmra.mrb[0].mxu0 %v2256
        %v2395 = vpop.f32.mrb[0].mxu0
        %v2396 = vadd.f32 %v2173, %v2395
        %v2397 = vpop.f32.mrb[0].mxu0
        %2398 = vmatprep.mubr.f32.mxu0 0.0
        %2399 = vmatmul.mubr.f32.gmra.mrb[0].mxu0 %v2258
        %v2400 = vpop.f32.mrb[0].mxu0
        %v2401 = vadd.f32 %v2174, %v2400
        %v2402 = vpop.f32.mrb[0].mxu0
        %2403 = vmatprep.mubr.f32.mxu0 0.0
        %2404 = vmatmul.mubr.f32.gmra.mrb[0].mxu0 %v2260
        %v2405 = vpop.f32.mrb[0].mxu0
        %v2406 = vadd.f32 %v2175, %v2405
        %v2407 = vpop.f32.mrb[0].mxu0
        %2408 = vmatprep.mubr.f32.mxu0 0.0
        %2409 = vmatmul.mubr.f32.gmra.mrb[0].mxu0 %v2262
        %v2410 = vpop.f32.mrb[0].mxu0
        %v2411 = vadd.f32 %v2176, %v2410
        %v2412 = vpop.f32.mrb[0].mxu0
        %2413 = vmatprep.mubr.f32.mxu0 0.0
        %2414 = vmatmul.mubr.f32.gmra.mrb[0].mxu0 %v2264
        %v2415 = vpop.f32.mrb[0].mxu0
        %v2416 = vadd.f32 %v2177, %v2415
        %v2417 = vpop.f32.mrb[0].mxu0
        %2418 = vmatprep.mubr.f32.mxu0 0.0
        %2419 = vmatmul.mubr.f32.gmra.mrb[0].mxu0 %v2266
        %v2420 = vpop.f32.mrb[0].mxu0
        %v2421 = vadd.f32 %v2178, %v2420
        %v2422 = vpop.f32.mrb[0].mxu0
        %2423 = vmatprep.mubr.f32.mxu0 0.0
        %2424 = vmatmul.mubr.f32.gmra.mrb[0].mxu0 %v2268
        %v2425 = vpop.f32.mrb[0].mxu0
        %v2426 = vadd.f32 %v2179, %v2425
        %v2427 = vpop.f32.mrb[0].mxu0
        %2428 = vmatprep.mubr.f32.mxu0 0.0
        %2429 = vmatmul.mubr.f32.gmra.mrb[0].mxu0 %v2270
        %v2430 = vpop.f32.mrb[0].mxu0
        %v2431 = vadd.f32 %v2180, %v2430
        %v2432 = vpop.f32.mrb[0].mxu0
        %2433 = vmatprep.mubr.f32.mxu0 0.0
        %2434 = vmatmul.mubr.f32.gmra.mrb[0].mxu0 %v2272
        %v2435 = vpop.f32.mrb[0].mxu0
        %v2436 = vadd.f32 %v2181, %v2435
        %v2437 = vpop.f32.mrb[0].mxu0
        %2438 = vmatprep.mubr.f32.mxu0 0.0
        %2439 = vmatmul.mubr.f32.gmra.mrb[0].mxu0 %v2274
        %v2440 = vpop.f32.mrb[0].mxu0
        %v2441 = vadd.f32 %v2182, %v2440
        %v2442 = vpop.f32.mrb[0].mxu0
        %2443 = vmatprep.mubr.f32.mxu0 0.0
        %2444 = vmatmul.mubr.f32.gmra.mrb[0].mxu0 %v2276
        %v2445 = vpop.f32.mrb[0].mxu0
        %v2446 = vadd.f32 %v2183, %v2445
        %v2447 = vpop.f32.mrb[0].mxu0
        %2448 = vmatprep.mubr.f32.mxu0 0.0
        %2449 = vmatmul.mubr.f32.gmra.mrb[0].mxu0 %v2278
        %v2450 = vpop.f32.mrb[0].mxu0
        %v2451 = vadd.f32 %v2184, %v2450
        %v2452 = vpop.f32.mrb[0].mxu0
        %2453 = vmatprep.mubr.f32.mxu0 0.0
        %2454 = vmatmul.mubr.f32.gmra.mrb[0].mxu0 %v2280
        %v2455 = vpop.f32.mrb[0].mxu0
        %v2456 = vadd.f32 %v2185, %v2455
        %v2457 = vpop.f32.mrb[0].mxu0
        %2458 = vdwg.mxu0
        %2459 = vrot.lane.b32.xlu0 %v980, 96
        %v2460 = vpop.permute.xlu0 %2459
        %2461 = vrot.lane.b32.xlu0 %v981, 96
        %v2462 = vpop.permute.xlu0 %2461
        %2463 = vrot.lane.b32.xlu0 %v982, 96
        %v2464 = vpop.permute.xlu0 %2463
        %2465 = vrot.lane.b32.xlu0 %v983, 96
        %v2466 = vpop.permute.xlu0 %2465
        %2467 = vrot.lane.b32.xlu0 %v984, 96
        %v2468 = vpop.permute.xlu0 %2467
        %2469 = vrot.lane.b32.xlu0 %v985, 96
        %v2470 = vpop.permute.xlu0 %2469
        %2471 = vrot.lane.b32.xlu0 %v986, 96
        %v2472 = vpop.permute.xlu0 %2471
        %2473 = vrot.lane.b32.xlu0 %v987, 96
        %v2474 = vpop.permute.xlu0 %2473
        %2475 = vrot.lane.b32.xlu0 %v988, 96
        %v2476 = vpop.permute.xlu0 %2475
        %2477 = vrot.lane.b32.xlu0 %v989, 96
        %v2478 = vpop.permute.xlu0 %2477
        %2479 = vrot.lane.b32.xlu0 %v990, 96
        %v2480 = vpop.permute.xlu0 %2479
        %2481 = vrot.lane.b32.xlu0 %v991, 96
        %v2482 = vpop.permute.xlu0 %2481
        %2483 = vrot.lane.b32.xlu0 %v992, 96
        %v2484 = vpop.permute.xlu0 %2483
        %2485 = vrot.lane.b32.xlu0 %v993, 96
        %v2486 = vpop.permute.xlu0 %2485
        %2487 = vrot.lane.b32.xlu0 %v994, 96
        %v2488 = vpop.permute.xlu0 %2487
        %2489 = vrot.lane.b32.xlu0 %v995, 96
        %v2490 = vpop.permute.xlu0 %2489
        %2491 = vrot.lane.b32.xlu0 %v647, 96
        %v2492 = vpop.permute.xlu0 %2491
        %2493 = vrot.lane.b32.xlu0 %v653, 96
        %v2494 = vpop.permute.xlu0 %2493
        %2495 = vrot.lane.b32.xlu0 %v659, 96
        %v2496 = vpop.permute.xlu0 %2495
        %2497 = vrot.lane.b32.xlu0 %v665, 96
        %v2498 = vpop.permute.xlu0 %2497
        %2499 = vrot.lane.b32.xlu0 %v671, 96
        %v2500 = vpop.permute.xlu0 %2499
        %2501 = vrot.lane.b32.xlu0 %v677, 96
        %v2502 = vpop.permute.xlu0 %2501
        %2503 = vrot.lane.b32.xlu0 %v683, 96
        %v2504 = vpop.permute.xlu0 %2503
        %2505 = vrot.lane.b32.xlu0 %v689, 96
        %v2506 = vpop.permute.xlu0 %2505
        %2507 = vrot.lane.b32.xlu0 %v695, 96
        %v2508 = vpop.permute.xlu0 %2507
        %2509 = vrot.lane.b32.xlu0 %v701, 96
        %v2510 = vpop.permute.xlu0 %2509
        %2511 = vrot.lane.b32.xlu0 %v707, 96
        %v2512 = vpop.permute.xlu0 %2511
        %2513 = vrot.lane.b32.xlu0 %v713, 96
        %v2514 = vpop.permute.xlu0 %2513
        %2515 = vrot.lane.b32.xlu0 %v719, 96
        %v2516 = vpop.permute.xlu0 %2515
        %2517 = vrot.lane.b32.xlu0 %v725, 96
        %v2518 = vpop.permute.xlu0 %2517
        %2519 = vrot.lane.b32.xlu0 %v731, 96
        %v2520 = vpop.permute.xlu0 %2519
        %2521 = vrot.lane.b32.xlu0 %v737, 96
        %v2522 = vpop.permute.xlu0 %2521
        %v2523 = vsel %vm1108, %v2460, 0
        %v2525 = vsel %vm1108, %v2462, 0
        %v2527 = vsel %vm1108, %v2464, 0
        %v2529 = vsel %vm1108, %v2466, 0
        %v2531 = vsel %vm1108, %v2468, 0
        %v2533 = vsel %vm1108, %v2470, 0
        %v2535 = vsel %vm1108, %v2472, 0
        %v2537 = vsel %vm1108, %v2474, 0
        %v2539 = vsel %vm1108, %v2476, 0
        %v2541 = vsel %vm1108, %v2478, 0
        %v2543 = vsel %vm1108, %v2480, 0
        %v2545 = vsel %vm1108, %v2482, 0
        %v2547 = vsel %vm1108, %v2484, 0
        %v2549 = vsel %vm1108, %v2486, 0
        %v2551 = vsel %vm1108, %v2488, 0
        %v2553 = vsel %vm1108, %v2490, 0
        %v2555 = vsel %vm1108, %v2492, 0
        %v2557 = vsel %vm1108, %v2494, 0
        %v2559 = vsel %vm1108, %v2496, 0
        %v2561 = vsel %vm1108, %v2498, 0
        %v2563 = vsel %vm1108, %v2500, 0
        %v2565 = vsel %vm1108, %v2502, 0
        %v2567 = vsel %vm1108, %v2504, 0
        %v2569 = vsel %vm1108, %v2506, 0
        %v2571 = vsel %vm1108, %v2508, 0
        %v2573 = vsel %vm1108, %v2510, 0
        %v2575 = vsel %vm1108, %v2512, 0
        %v2577 = vsel %vm1108, %v2514, 0
        %v2579 = vsel %vm1108, %v2516, 0
        %v2581 = vsel %vm1108, %v2518, 0
        %v2583 = vsel %vm1108, %v2520, 0
        %v2585 = vsel %vm1108, %v2522, 0
        %2587 = vmatprep.subr.mxu0 0.0
        %2588 = vmatpush1.xpose.msra.mxu0 %v2555
        %2589 = vmatprep.subr.mxu0 0.0
        %2590 = vmatpush1.xpose.msra.mxu0 %v2557
        %2591 = vmatprep.subr.mxu0 0.0
        %2592 = vmatpush1.xpose.msra.mxu0 %v2559
        %2593 = vmatprep.subr.mxu0 0.0
        %2594 = vmatpush1.xpose.msra.mxu0 %v2561
        %2595 = vmatprep.subr.mxu0 0.0
        %2596 = vmatpush1.xpose.msra.mxu0 %v2563
        %2597 = vmatprep.subr.mxu0 0.0
        %2598 = vmatpush1.xpose.msra.mxu0 %v2565
        %2599 = vmatprep.subr.mxu0 0.0
        %2600 = vmatpush1.xpose.msra.mxu0 %v2567
        %2601 = vmatprep.subr.mxu0 0.0
        %2602 = vmatpush1.xpose.msra.mxu0 %v2569
        %2603 = vmatprep.subr.mxu0 0.0
        %2604 = vmatpush1.xpose.msra.mxu0 %v2571
        %2605 = vmatprep.subr.mxu0 0.0
        %2606 = vmatpush1.xpose.msra.mxu0 %v2573
        %2607 = vmatprep.subr.mxu0 0.0
        %2608 = vmatpush1.xpose.msra.mxu0 %v2575
        %2609 = vmatprep.subr.mxu0 0.0
        %2610 = vmatpush1.xpose.msra.mxu0 %v2577
        %2611 = vmatprep.subr.mxu0 0.0
        %2612 = vmatpush1.xpose.msra.mxu0 %v2579
        %2613 = vmatprep.subr.mxu0 0.0
        %2614 = vmatpush1.xpose.msra.mxu0 %v2581
        %2615 = vmatprep.subr.mxu0 0.0
        %2616 = vmatpush1.xpose.msra.mxu0 %v2583
        %2617 = vmatprep.subr.mxu0 0.0
        %2618 = vmatpush1.xpose.msra.mxu0 %v2585
        %2619 = vmatprep.subr.mxu0 0.0
        %2620 = vmatpush1.xpose.msra.mxu0 0.0
        %2621 = vmatprep.subr.mxu0 0.0
        %2622 = vmatpush1.xpose.msra.mxu0 0.0
        %2623 = vmatprep.subr.mxu0 0.0
        %2624 = vmatpush1.xpose.msra.mxu0 0.0
        %2625 = vmatprep.subr.mxu0 0.0
        %2626 = vmatpush1.xpose.msra.mxu0 0.0
        %2627 = vmatprep.subr.mxu0 0.0
        %2628 = vmatpush1.xpose.msra.mxu0 0.0
        %2629 = vmatprep.subr.mxu0 0.0
        %2630 = vmatpush1.xpose.msra.mxu0 0.0
        %2631 = vmatprep.subr.mxu0 0.0
        %2632 = vmatpush1.xpose.msra.mxu0 0.0
        %2633 = vmatprep.subr.mxu0 0.0
        %2634 = vmatpush1.xpose.msra.mxu0 0.0
        %2635 = vmatprep.subr.mxu0 0.0
        %2636 = vmatpush1.xpose.msra.mxu0 0.0
        %2637 = vmatprep.subr.mxu0 0.0
        %2638 = vmatpush1.xpose.msra.mxu0 0.0
        %2639 = vmatprep.subr.mxu0 0.0
        %2640 = vmatpush1.xpose.msra.mxu0 0.0
        %2641 = vmatprep.subr.mxu0 0.0
        %2642 = vmatpush1.xpose.msra.mxu0 0.0
        %2643 = vmatprep.subr.mxu0 0.0
        %2644 = vmatpush1.xpose.msra.mxu0 0.0
        %2645 = vmatprep.subr.mxu0 0.0
        %2646 = vmatpush1.xpose.msra.mxu0 0.0
        %2647 = vmatprep.subr.mxu0 0.0
        %2648 = vmatpush1.xpose.msra.mxu0 0.0
        %2649 = vmatprep.subr.mxu0 0.0
        %2650 = vmatpush1.xpose.msra.mxu0 0.0
        %2651 = vmatprep.mubr.f32.mxu0 0.0
        %2652 = vmatmul.mubr.f32.gmra.mrb[0].mxu0 %v2523
        %v2653 = vpop.f32.mrb[0].mxu0
        %v2654 = vadd.f32 %v2170, %v2653
        %v2655 = vpop.f32.mrb[0].mxu0
        %2656 = vmatprep.mubr.f32.mxu0 0.0
        %2657 = vmatmul.mubr.f32.gmra.mrb[0].mxu0 %v2525
        %v2658 = vpop.f32.mrb[0].mxu0
        %v2659 = vadd.f32 %v2171, %v2658
        %v2660 = vpop.f32.mrb[0].mxu0
        %2661 = vmatprep.mubr.f32.mxu0 0.0
        %2662 = vmatmul.mubr.f32.gmra.mrb[0].mxu0 %v2527
        %v2663 = vpop.f32.mrb[0].mxu0
        %v2664 = vadd.f32 %v2172, %v2663
        %v2665 = vpop.f32.mrb[0].mxu0
        %2666 = vmatprep.mubr.f32.mxu0 0.0
        %2667 = vmatmul.mubr.f32.gmra.mrb[0].mxu0 %v2529
        %v2668 = vpop.f32.mrb[0].mxu0
        %v2669 = vadd.f32 %v2173, %v2668
        %v2670 = vpop.f32.mrb[0].mxu0
        %2671 = vmatprep.mubr.f32.mxu0 0.0
        %2672 = vmatmul.mubr.f32.gmra.mrb[0].mxu0 %v2531
        %v2673 = vpop.f32.mrb[0].mxu0
        %v2674 = vadd.f32 %v2174, %v2673
        %v2675 = vpop.f32.mrb[0].mxu0
        %2676 = vmatprep.mubr.f32.mxu0 0.0
        %2677 = vmatmul.mubr.f32.gmra.mrb[0].mxu0 %v2533
        %v2678 = vpop.f32.mrb[0].mxu0
        %v2679 = vadd.f32 %v2175, %v2678
        %v2680 = vpop.f32.mrb[0].mxu0
        %2681 = vmatprep.mubr.f32.mxu0 0.0
        %2682 = vmatmul.mubr.f32.gmra.mrb[0].mxu0 %v2535
        %v2683 = vpop.f32.mrb[0].mxu0
        %v2684 = vadd.f32 %v2176, %v2683
        %v2685 = vpop.f32.mrb[0].mxu0
        %2686 = vmatprep.mubr.f32.mxu0 0.0
        %2687 = vmatmul.mubr.f32.gmra.mrb[0].mxu0 %v2537
        %v2688 = vpop.f32.mrb[0].mxu0
        %v2689 = vadd.f32 %v2177, %v2688
        %v2690 = vpop.f32.mrb[0].mxu0
        %2691 = vmatprep.mubr.f32.mxu0 0.0
        %2692 = vmatmul.mubr.f32.gmra.mrb[0].mxu0 %v2539
        %v2693 = vpop.f32.mrb[0].mxu0
        %v2694 = vadd.f32 %v2178, %v2693
        %v2695 = vpop.f32.mrb[0].mxu0
        %2696 = vmatprep.mubr.f32.mxu0 0.0
        %2697 = vmatmul.mubr.f32.gmra.mrb[0].mxu0 %v2541
        %v2698 = vpop.f32.mrb[0].mxu0
        %v2699 = vadd.f32 %v2179, %v2698
        %v2700 = vpop.f32.mrb[0].mxu0
        %2701 = vmatprep.mubr.f32.mxu0 0.0
        %2702 = vmatmul.mubr.f32.gmra.mrb[0].mxu0 %v2543
        %v2703 = vpop.f32.mrb[0].mxu0
        %v2704 = vadd.f32 %v2180, %v2703
        %v2705 = vpop.f32.mrb[0].mxu0
        %2706 = vmatprep.mubr.f32.mxu0 0.0
        %2707 = vmatmul.mubr.f32.gmra.mrb[0].mxu0 %v2545
        %v2708 = vpop.f32.mrb[0].mxu0
        %v2709 = vadd.f32 %v2181, %v2708
        %v2710 = vpop.f32.mrb[0].mxu0
        %2711 = vmatprep.mubr.f32.mxu0 0.0
        %2712 = vmatmul.mubr.f32.gmra.mrb[0].mxu0 %v2547
        %v2713 = vpop.f32.mrb[0].mxu0
        %v2714 = vadd.f32 %v2182, %v2713
        %v2715 = vpop.f32.mrb[0].mxu0
        %2716 = vmatprep.mubr.f32.mxu0 0.0
        %2717 = vmatmul.mubr.f32.gmra.mrb[0].mxu0 %v2549
        %v2718 = vpop.f32.mrb[0].mxu0
        %v2719 = vadd.f32 %v2183, %v2718
        %v2720 = vpop.f32.mrb[0].mxu0
        %2721 = vmatprep.mubr.f32.mxu0 0.0
        %2722 = vmatmul.mubr.f32.gmra.mrb[0].mxu0 %v2551
        %v2723 = vpop.f32.mrb[0].mxu0
        %v2724 = vadd.f32 %v2184, %v2723
        %v2725 = vpop.f32.mrb[0].mxu0
        %2726 = vmatprep.mubr.f32.mxu0 0.0
        %2727 = vmatmul.mubr.f32.gmra.mrb[0].mxu0 %v2553
        %v2728 = vpop.f32.mrb[0].mxu0
        %v2729 = vadd.f32 %v2185, %v2728
        %v2730 = vpop.f32.mrb[0].mxu0
        %2731 = vdwg.mxu0
        %2732 = vmax.xlane.f32.xlu0 %v2381
        %v2733 = vpop.xlane.xlu0 %2732
        %2734 = vmax.xlane.f32.xlu0 %v2386
        %v2735 = vpop.xlane.xlu0 %2734
        %2736 = vmax.xlane.f32.xlu0 %v2391
        %v2737 = vpop.xlane.xlu0 %2736
        %2738 = vmax.xlane.f32.xlu0 %v2396
        %v2739 = vpop.xlane.xlu0 %2738
        %2740 = vmax.xlane.f32.xlu0 %v2401
        %v2741 = vpop.xlane.xlu0 %2740
        %2742 = vmax.xlane.f32.xlu0 %v2406
        %v2743 = vpop.xlane.xlu0 %2742
        %2744 = vmax.xlane.f32.xlu0 %v2411
        %v2745 = vpop.xlane.xlu0 %2744
        %2746 = vmax.xlane.f32.xlu0 %v2416
        %v2747 = vpop.xlane.xlu0 %2746
        %2748 = vmax.xlane.f32.xlu0 %v2421
        %v2749 = vpop.xlane.xlu0 %2748
        %2750 = vmax.xlane.f32.xlu0 %v2426
        %v2751 = vpop.xlane.xlu0 %2750
        %2752 = vmax.xlane.f32.xlu0 %v2431
        %v2753 = vpop.xlane.xlu0 %2752
        %2754 = vmax.xlane.f32.xlu0 %v2436
        %v2755 = vpop.xlane.xlu0 %2754
        %2756 = vmax.xlane.f32.xlu0 %v2441
        %v2757 = vpop.xlane.xlu0 %2756
        %2758 = vmax.xlane.f32.xlu0 %v2446
        %v2759 = vpop.xlane.xlu0 %2758
        %2760 = vmax.xlane.f32.xlu0 %v2451
        %v2761 = vpop.xlane.xlu0 %2760
        %2762 = vmax.xlane.f32.xlu0 %v2456
        %v2763 = vpop.xlane.xlu0 %2762
        %2764 = vmax.xlane.f32.xlu0 %v2654
        %v2765 = vpop.xlane.xlu0 %2764
        %2766 = vmax.xlane.f32.xlu0 %v2659
        %v2767 = vpop.xlane.xlu0 %2766
        %2768 = vmax.xlane.f32.xlu0 %v2664
        %v2769 = vpop.xlane.xlu0 %2768
        %2770 = vmax.xlane.f32.xlu0 %v2669
        %v2771 = vpop.xlane.xlu0 %2770
        %2772 = vmax.xlane.f32.xlu0 %v2674
        %v2773 = vpop.xlane.xlu0 %2772
        %2774 = vmax.xlane.f32.xlu0 %v2679
        %v2775 = vpop.xlane.xlu0 %2774
        %2776 = vmax.xlane.f32.xlu0 %v2684
        %v2777 = vpop.xlane.xlu0 %2776
        %2778 = vmax.xlane.f32.xlu0 %v2689
        %v2779 = vpop.xlane.xlu0 %2778
        %2780 = vmax.xlane.f32.xlu0 %v2694
        %v2781 = vpop.xlane.xlu0 %2780
        %2782 = vmax.xlane.f32.xlu0 %v2699
        %v2783 = vpop.xlane.xlu0 %2782
        %2784 = vmax.xlane.f32.xlu0 %v2704
        %v2785 = vpop.xlane.xlu0 %2784
        %2786 = vmax.xlane.f32.xlu0 %v2709
        %v2787 = vpop.xlane.xlu0 %2786
        %2788 = vmax.xlane.f32.xlu0 %v2714
        %v2789 = vpop.xlane.xlu0 %2788
        %2790 = vmax.xlane.f32.xlu0 %v2719
        %v2791 = vpop.xlane.xlu0 %2790
        %2792 = vmax.xlane.f32.xlu0 %v2724
        %v2793 = vpop.xlane.xlu0 %2792
        %2794 = vmax.xlane.f32.xlu0 %v2729
        %v2795 = vpop.xlane.xlu0 %2794
        %v2796 = vsub.f32 %v2381, %v2733
        %v2797 = vsub.f32 %v2386, %v2735
        %v2798 = vsub.f32 %v2391, %v2737
        %v2799 = vsub.f32 %v2396, %v2739
        %v2800 = vsub.f32 %v2401, %v2741
        %v2801 = vsub.f32 %v2406, %v2743
        %v2802 = vsub.f32 %v2411, %v2745
        %v2803 = vsub.f32 %v2416, %v2747
        %v2804 = vsub.f32 %v2421, %v2749
        %v2805 = vsub.f32 %v2426, %v2751
        %v2806 = vsub.f32 %v2431, %v2753
        %v2807 = vsub.f32 %v2436, %v2755
        %v2808 = vsub.f32 %v2441, %v2757
        %v2809 = vsub.f32 %v2446, %v2759
        %v2810 = vsub.f32 %v2451, %v2761
        %v2811 = vsub.f32 %v2456, %v2763
        %v2812 = vsub.f32 %v2654, %v2765
        %v2813 = vsub.f32 %v2659, %v2767
        %v2814 = vsub.f32 %v2664, %v2769
        %v2815 = vsub.f32 %v2669, %v2771
        %v2816 = vsub.f32 %v2674, %v2773
        %v2817 = vsub.f32 %v2679, %v2775
        %v2818 = vsub.f32 %v2684, %v2777
        %v2819 = vsub.f32 %v2689, %v2779
        %v2820 = vsub.f32 %v2694, %v2781
        %v2821 = vsub.f32 %v2699, %v2783
        %v2822 = vsub.f32 %v2704, %v2785
        %v2823 = vsub.f32 %v2709, %v2787
        %v2824 = vsub.f32 %v2714, %v2789
        %v2825 = vsub.f32 %v2719, %v2791
        %v2826 = vsub.f32 %v2724, %v2793
        %v2827 = vsub.f32 %v2729, %v2795
        %v2828 = vmul.f32 %v2796, 1.442695
        %v2829 = vpow.pop %v2828
        %v2830 = vmul.f32 %v2797, 1.442695
        %v2831 = vpow.pop %v2830
        %v2832 = vmul.f32 %v2798, 1.442695
        %v2833 = vpow.pop %v2832
        %v2834 = vmul.f32 %v2799, 1.442695
        %v2835 = vpow.pop %v2834
        %v2836 = vmul.f32 %v2800, 1.442695
        %v2837 = vpow.pop %v2836
        %v2838 = vmul.f32 %v2801, 1.442695
        %v2839 = vpow.pop %v2838
        %v2840 = vmul.f32 %v2802, 1.442695
        %v2841 = vpow.pop %v2840
        %v2842 = vmul.f32 %v2803, 1.442695
        %v2843 = vpow.pop %v2842
        %v2844 = vmul.f32 %v2804, 1.442695
        %v2845 = vpow.pop %v2844
        %v2846 = vmul.f32 %v2805, 1.442695
        %v2847 = vpow.pop %v2846
        %v2848 = vmul.f32 %v2806, 1.442695
        %v2849 = vpow.pop %v2848
        %v2850 = vmul.f32 %v2807, 1.442695
        %v2851 = vpow.pop %v2850
        %v2852 = vmul.f32 %v2808, 1.442695
        %v2853 = vpow.pop %v2852
        %v2854 = vmul.f32 %v2809, 1.442695
        %v2855 = vpow.pop %v2854
        %v2856 = vmul.f32 %v2810, 1.442695
        %v2857 = vpow.pop %v2856
        %v2858 = vmul.f32 %v2811, 1.442695
        %v2859 = vpow.pop %v2858
        %v2860 = vmul.f32 %v2812, 1.442695
        %v2861 = vpow.pop %v2860
        %v2862 = vmul.f32 %v2813, 1.442695
        %v2863 = vpow.pop %v2862
        %v2864 = vmul.f32 %v2814, 1.442695
        %v2865 = vpow.pop %v2864
        %v2866 = vmul.f32 %v2815, 1.442695
        %v2867 = vpow.pop %v2866
        %v2868 = vmul.f32 %v2816, 1.442695
        %v2869 = vpow.pop %v2868
        %v2870 = vmul.f32 %v2817, 1.442695
        %v2871 = vpow.pop %v2870
        %v2872 = vmul.f32 %v2818, 1.442695
        %v2873 = vpow.pop %v2872
        %v2874 = vmul.f32 %v2819, 1.442695
        %v2875 = vpow.pop %v2874
        %v2876 = vmul.f32 %v2820, 1.442695
        %v2877 = vpow.pop %v2876
        %v2878 = vmul.f32 %v2821, 1.442695
        %v2879 = vpow.pop %v2878
        %v2880 = vmul.f32 %v2822, 1.442695
        %v2881 = vpow.pop %v2880
        %v2882 = vmul.f32 %v2823, 1.442695
        %v2883 = vpow.pop %v2882
        %v2884 = vmul.f32 %v2824, 1.442695
        %v2885 = vpow.pop %v2884
        %v2886 = vmul.f32 %v2825, 1.442695
        %v2887 = vpow.pop %v2886
        %v2888 = vmul.f32 %v2826, 1.442695
        %v2889 = vpow.pop %v2888
        %v2890 = vmul.f32 %v2827, 1.442695
        %v2891 = vpow.pop %v2890
        %2892 = vadd.xlane.f32.xlu0 %v2829
        %v2893 = vpop.xlane.xlu0 %2892
        %2894 = vadd.xlane.f32.xlu0 %v2831
        %v2895 = vpop.xlane.xlu0 %2894
        %2896 = vadd.xlane.f32.xlu0 %v2833
        %v2897 = vpop.xlane.xlu0 %2896
        %2898 = vadd.xlane.f32.xlu0 %v2835
        %v2899 = vpop.xlane.xlu0 %2898
        %2900 = vadd.xlane.f32.xlu0 %v2837
        %v2901 = vpop.xlane.xlu0 %2900
        %2902 = vadd.xlane.f32.xlu0 %v2839
        %v2903 = vpop.xlane.xlu0 %2902
        %2904 = vadd.xlane.f32.xlu0 %v2841
        %v2905 = vpop.xlane.xlu0 %2904
        %2906 = vadd.xlane.f32.xlu0 %v2843
        %v2907 = vpop.xlane.xlu0 %2906
        %2908 = vadd.xlane.f32.xlu0 %v2845
        %v2909 = vpop.xlane.xlu0 %2908
        %2910 = vadd.xlane.f32.xlu0 %v2847
        %v2911 = vpop.xlane.xlu0 %2910
        %2912 = vadd.xlane.f32.xlu0 %v2849
        %v2913 = vpop.xlane.xlu0 %2912
        %2914 = vadd.xlane.f32.xlu0 %v2851
        %v2915 = vpop.xlane.xlu0 %2914
        %2916 = vadd.xlane.f32.xlu0 %v2853
        %v2917 = vpop.xlane.xlu0 %2916
        %2918 = vadd.xlane.f32.xlu0 %v2855
        %v2919 = vpop.xlane.xlu0 %2918
        %2920 = vadd.xlane.f32.xlu0 %v2857
        %v2921 = vpop.xlane.xlu0 %2920
        %2922 = vadd.xlane.f32.xlu0 %v2859
        %v2923 = vpop.xlane.xlu0 %2922
        %2924 = vadd.xlane.f32.xlu0 %v2861
        %v2925 = vpop.xlane.xlu0 %2924
        %2926 = vadd.xlane.f32.xlu0 %v2863
        %v2927 = vpop.xlane.xlu0 %2926
        %2928 = vadd.xlane.f32.xlu0 %v2865
        %v2929 = vpop.xlane.xlu0 %2928
        %2930 = vadd.xlane.f32.xlu0 %v2867
        %v2931 = vpop.xlane.xlu0 %2930
        %2932 = vadd.xlane.f32.xlu0 %v2869
        %v2933 = vpop.xlane.xlu0 %2932
        %2934 = vadd.xlane.f32.xlu0 %v2871
        %v2935 = vpop.xlane.xlu0 %2934
        %2936 = vadd.xlane.f32.xlu0 %v2873
        %v2937 = vpop.xlane.xlu0 %2936
        %2938 = vadd.xlane.f32.xlu0 %v2875
        %v2939 = vpop.xlane.xlu0 %2938
        %2940 = vadd.xlane.f32.xlu0 %v2877
        %v2941 = vpop.xlane.xlu0 %2940
        %2942 = vadd.xlane.f32.xlu0 %v2879
        %v2943 = vpop.xlane.xlu0 %2942
        %2944 = vadd.xlane.f32.xlu0 %v2881
        %v2945 = vpop.xlane.xlu0 %2944
        %2946 = vadd.xlane.f32.xlu0 %v2883
        %v2947 = vpop.xlane.xlu0 %2946
        %2948 = vadd.xlane.f32.xlu0 %v2885
        %v2949 = vpop.xlane.xlu0 %2948
        %2950 = vadd.xlane.f32.xlu0 %v2887
        %v2951 = vpop.xlane.xlu0 %2950
        %2952 = vadd.xlane.f32.xlu0 %v2889
        %v2953 = vpop.xlane.xlu0 %2952
        %2954 = vadd.xlane.f32.xlu0 %v2891
        %v2955 = vpop.xlane.xlu0 %2954
        %2972 = vrot.lane.b32.xlu0 %v806, 96
        %v2973 = vpop.permute.xlu0 %2972
        %2974 = vrot.lane.b32.xlu0 %v811, 96
        %v2975 = vpop.permute.xlu0 %2974
        %2976 = vrot.lane.b32.xlu0 %v816, 96
        %v2977 = vpop.permute.xlu0 %2976
        %2978 = vrot.lane.b32.xlu0 %v821, 96
        %v2979 = vpop.permute.xlu0 %2978
        %2980 = vrot.lane.b32.xlu0 %v826, 96
        %v2981 = vpop.permute.xlu0 %2980
        %2982 = vrot.lane.b32.xlu0 %v831, 96
        %v2983 = vpop.permute.xlu0 %2982
        %2984 = vrot.lane.b32.xlu0 %v836, 96
        %v2985 = vpop.permute.xlu0 %2984
        %2986 = vrot.lane.b32.xlu0 %v841, 96
        %v2987 = vpop.permute.xlu0 %2986
        %2988 = vrot.lane.b32.xlu0 %v846, 96
        %v2989 = vpop.permute.xlu0 %2988
        %2990 = vrot.lane.b32.xlu0 %v851, 96
        %v2991 = vpop.permute.xlu0 %2990
        %2992 = vrot.lane.b32.xlu0 %v856, 96
        %v2993 = vpop.permute.xlu0 %2992
        %2994 = vrot.lane.b32.xlu0 %v861, 96
        %v2995 = vpop.permute.xlu0 %2994
        %2996 = vrot.lane.b32.xlu0 %v866, 96
        %v2997 = vpop.permute.xlu0 %2996
        %2998 = vrot.lane.b32.xlu0 %v871, 96
        %v2999 = vpop.permute.xlu0 %2998
        %3000 = vrot.lane.b32.xlu0 %v876, 96
        %v3001 = vpop.permute.xlu0 %3000
        %3002 = vrot.lane.b32.xlu0 %v881, 96
        %v3003 = vpop.permute.xlu0 %3002
        %3020 = vmatprep.subr.mxu0 0.0
        %3021 = vmatpush1.msra.mxu0 %v2973
        %3022 = vmatprep.subr.mxu0 0.0
        %3023 = vmatpush1.msra.mxu0 %v2975
        %3024 = vmatprep.subr.mxu0 0.0
        %3025 = vmatpush1.msra.mxu0 %v2977
        %3026 = vmatprep.subr.mxu0 0.0
        %3027 = vmatpush1.msra.mxu0 %v2979
        %3028 = vmatprep.subr.mxu0 0.0
        %3029 = vmatpush1.msra.mxu0 %v2981
        %3030 = vmatprep.subr.mxu0 0.0
        %3031 = vmatpush1.msra.mxu0 %v2983
        %3032 = vmatprep.subr.mxu0 0.0
        %3033 = vmatpush1.msra.mxu0 %v2985
        %3034 = vmatprep.subr.mxu0 0.0
        %3035 = vmatpush1.msra.mxu0 %v2987
        %3036 = vmatprep.subr.mxu0 0.0
        %3037 = vmatpush1.msra.mxu0 %v2989
        %3038 = vmatprep.subr.mxu0 0.0
        %3039 = vmatpush1.msra.mxu0 %v2991
        %3040 = vmatprep.subr.mxu0 0.0
        %3041 = vmatpush1.msra.mxu0 %v2993
        %3042 = vmatprep.subr.mxu0 0.0
        %3043 = vmatpush1.msra.mxu0 %v2995
        %3044 = vmatprep.subr.mxu0 0.0
        %3045 = vmatpush1.msra.mxu0 %v2997
        %3046 = vmatprep.subr.mxu0 0.0
        %3047 = vmatpush1.msra.mxu0 %v2999
        %3048 = vmatprep.subr.mxu0 0.0
        %3049 = vmatpush1.msra.mxu0 %v3001
        %3050 = vmatprep.subr.mxu0 0.0
        %3051 = vmatpush1.msra.mxu0 %v3003
        %3052 = vmatprep.subr.mxu0 0.0
        %3053 = vmatpush1.msra.mxu0 0.0
        %3054 = vmatprep.subr.mxu0 0.0
        %3055 = vmatpush1.msra.mxu0 0.0
        %3056 = vmatprep.subr.mxu0 0.0
        %3057 = vmatpush1.msra.mxu0 0.0
        %3058 = vmatprep.subr.mxu0 0.0
        %3059 = vmatpush1.msra.mxu0 0.0
        %3060 = vmatprep.subr.mxu0 0.0
        %3061 = vmatpush1.msra.mxu0 0.0
        %3062 = vmatprep.subr.mxu0 0.0
        %3063 = vmatpush1.msra.mxu0 0.0
        %3064 = vmatprep.subr.mxu0 0.0
        %3065 = vmatpush1.msra.mxu0 0.0
        %3066 = vmatprep.subr.mxu0 0.0
        %3067 = vmatpush1.msra.mxu0 0.0
        %3068 = vmatprep.subr.mxu0 0.0
        %3069 = vmatpush1.msra.mxu0 0.0
        %3070 = vmatprep.subr.mxu0 0.0
        %3071 = vmatpush1.msra.mxu0 0.0
        %3072 = vmatprep.subr.mxu0 0.0
        %3073 = vmatpush1.msra.mxu0 0.0
        %3074 = vmatprep.subr.mxu0 0.0
        %3075 = vmatpush1.msra.mxu0 0.0
        %3076 = vmatprep.subr.mxu0 0.0
        %3077 = vmatpush1.msra.mxu0 0.0
        %3078 = vmatprep.subr.mxu0 0.0
        %3079 = vmatpush1.msra.mxu0 0.0
        %3080 = vmatprep.subr.mxu0 0.0
        %3081 = vmatpush1.msra.mxu0 0.0
        %3082 = vmatprep.subr.mxu0 0.0
        %3083 = vmatpush1.msra.mxu0 0.0
        %3084 = vmatprep.mubr.f32.mxu0 0.0
        %3085 = vmatmul.mubr.f32.gmra.mrb[0].mxu0 %v2829
        %v3086 = vpop.f32.mrb[0].mxu0
        %v3087 = vadd.f32 0.0, %v3086
        %v3088 = vpop.f32.mrb[0].mxu0
        %3089 = vmatprep.mubr.f32.mxu0 0.0
        %3090 = vmatmul.mubr.f32.gmra.mrb[0].mxu0 %v2831
        %v3091 = vpop.f32.mrb[0].mxu0
        %v3092 = vadd.f32 0.0, %v3091
        %v3093 = vpop.f32.mrb[0].mxu0
        %3094 = vmatprep.mubr.f32.mxu0 0.0
        %3095 = vmatmul.mubr.f32.gmra.mrb[0].mxu0 %v2833
        %v3096 = vpop.f32.mrb[0].mxu0
        %v3097 = vadd.f32 0.0, %v3096
        %v3098 = vpop.f32.mrb[0].mxu0
        %3099 = vmatprep.mubr.f32.mxu0 0.0
        %3100 = vmatmul.mubr.f32.gmra.mrb[0].mxu0 %v2835
        %v3101 = vpop.f32.mrb[0].mxu0
        %v3102 = vadd.f32 0.0, %v3101
        %v3103 = vpop.f32.mrb[0].mxu0
        %3104 = vmatprep.mubr.f32.mxu0 0.0
        %3105 = vmatmul.mubr.f32.gmra.mrb[0].mxu0 %v2837
        %v3106 = vpop.f32.mrb[0].mxu0
        %v3107 = vadd.f32 0.0, %v3106
        %v3108 = vpop.f32.mrb[0].mxu0
        %3109 = vmatprep.mubr.f32.mxu0 0.0
        %3110 = vmatmul.mubr.f32.gmra.mrb[0].mxu0 %v2839
        %v3111 = vpop.f32.mrb[0].mxu0
        %v3112 = vadd.f32 0.0, %v3111
        %v3113 = vpop.f32.mrb[0].mxu0
        %3114 = vmatprep.mubr.f32.mxu0 0.0
        %3115 = vmatmul.mubr.f32.gmra.mrb[0].mxu0 %v2841
        %v3116 = vpop.f32.mrb[0].mxu0
        %v3117 = vadd.f32 0.0, %v3116
        %v3118 = vpop.f32.mrb[0].mxu0
        %3119 = vmatprep.mubr.f32.mxu0 0.0
        %3120 = vmatmul.mubr.f32.gmra.mrb[0].mxu0 %v2843
        %v3121 = vpop.f32.mrb[0].mxu0
        %v3122 = vadd.f32 0.0, %v3121
        %v3123 = vpop.f32.mrb[0].mxu0
        %3124 = vmatprep.mubr.f32.mxu0 0.0
        %3125 = vmatmul.mubr.f32.gmra.mrb[0].mxu0 %v2845
        %v3126 = vpop.f32.mrb[0].mxu0
        %v3127 = vadd.f32 0.0, %v3126
        %v3128 = vpop.f32.mrb[0].mxu0
        %3129 = vmatprep.mubr.f32.mxu0 0.0
        %3130 = vmatmul.mubr.f32.gmra.mrb[0].mxu0 %v2847
        %v3131 = vpop.f32.mrb[0].mxu0
        %v3132 = vadd.f32 0.0, %v3131
        %v3133 = vpop.f32.mrb[0].mxu0
        %3134 = vmatprep.mubr.f32.mxu0 0.0
        %3135 = vmatmul.mubr.f32.gmra.mrb[0].mxu0 %v2849
        %v3136 = vpop.f32.mrb[0].mxu0
        %v3137 = vadd.f32 0.0, %v3136
        %v3138 = vpop.f32.mrb[0].mxu0
        %3139 = vmatprep.mubr.f32.mxu0 0.0
        %3140 = vmatmul.mubr.f32.gmra.mrb[0].mxu0 %v2851
        %v3141 = vpop.f32.mrb[0].mxu0
        %v3142 = vadd.f32 0.0, %v3141
        %v3143 = vpop.f32.mrb[0].mxu0
        %3144 = vmatprep.mubr.f32.mxu0 0.0
        %3145 = vmatmul.mubr.f32.gmra.mrb[0].mxu0 %v2853
        %v3146 = vpop.f32.mrb[0].mxu0
        %v3147 = vadd.f32 0.0, %v3146
        %v3148 = vpop.f32.mrb[0].mxu0
        %3149 = vmatprep.mubr.f32.mxu0 0.0
        %3150 = vmatmul.mubr.f32.gmra.mrb[0].mxu0 %v2855
        %v3151 = vpop.f32.mrb[0].mxu0
        %v3152 = vadd.f32 0.0, %v3151
        %v3153 = vpop.f32.mrb[0].mxu0
        %3154 = vmatprep.mubr.f32.mxu0 0.0
        %3155 = vmatmul.mubr.f32.gmra.mrb[0].mxu0 %v2857
        %v3156 = vpop.f32.mrb[0].mxu0
        %v3157 = vadd.f32 0.0, %v3156
        %v3158 = vpop.f32.mrb[0].mxu0
        %3159 = vmatprep.mubr.f32.mxu0 0.0
        %3160 = vmatmul.mubr.f32.gmra.mrb[0].mxu0 %v2859
        %v3161 = vpop.f32.mrb[0].mxu0
        %v3162 = vadd.f32 0.0, %v3161
        %v3163 = vpop.f32.mrb[0].mxu0
        %3164 = vdwg.mxu0
        %3181 = vrot.lane.b32.xlu0 %v886, 96
        %v3182 = vpop.permute.xlu0 %3181
        %3183 = vrot.lane.b32.xlu0 %v891, 96
        %v3184 = vpop.permute.xlu0 %3183
        %3185 = vrot.lane.b32.xlu0 %v896, 96
        %v3186 = vpop.permute.xlu0 %3185
        %3187 = vrot.lane.b32.xlu0 %v901, 96
        %v3188 = vpop.permute.xlu0 %3187
        %3189 = vrot.lane.b32.xlu0 %v906, 96
        %v3190 = vpop.permute.xlu0 %3189
        %3191 = vrot.lane.b32.xlu0 %v911, 96
        %v3192 = vpop.permute.xlu0 %3191
        %3193 = vrot.lane.b32.xlu0 %v916, 96
        %v3194 = vpop.permute.xlu0 %3193
        %3195 = vrot.lane.b32.xlu0 %v921, 96
        %v3196 = vpop.permute.xlu0 %3195
        %3197 = vrot.lane.b32.xlu0 %v926, 96
        %v3198 = vpop.permute.xlu0 %3197
        %3199 = vrot.lane.b32.xlu0 %v931, 96
        %v3200 = vpop.permute.xlu0 %3199
        %3201 = vrot.lane.b32.xlu0 %v936, 96
        %v3202 = vpop.permute.xlu0 %3201
        %3203 = vrot.lane.b32.xlu0 %v941, 96
        %v3204 = vpop.permute.xlu0 %3203
        %3205 = vrot.lane.b32.xlu0 %v946, 96
        %v3206 = vpop.permute.xlu0 %3205
        %3207 = vrot.lane.b32.xlu0 %v951, 96
        %v3208 = vpop.permute.xlu0 %3207
        %3209 = vrot.lane.b32.xlu0 %v956, 96
        %v3210 = vpop.permute.xlu0 %3209
        %3211 = vrot.lane.b32.xlu0 %v961, 96
        %v3212 = vpop.permute.xlu0 %3211
        %3229 = vmatprep.subr.mxu0 0.0
        %3230 = vmatpush1.msra.mxu0 %v3182
        %3231 = vmatprep.subr.mxu0 0.0
        %3232 = vmatpush1.msra.mxu0 %v3184
        %3233 = vmatprep.subr.mxu0 0.0
        %3234 = vmatpush1.msra.mxu0 %v3186
        %3235 = vmatprep.subr.mxu0 0.0
        %3236 = vmatpush1.msra.mxu0 %v3188
        %3237 = vmatprep.subr.mxu0 0.0
        %3238 = vmatpush1.msra.mxu0 %v3190
        %3239 = vmatprep.subr.mxu0 0.0
        %3240 = vmatpush1.msra.mxu0 %v3192
        %3241 = vmatprep.subr.mxu0 0.0
        %3242 = vmatpush1.msra.mxu0 %v3194
        %3243 = vmatprep.subr.mxu0 0.0
        %3244 = vmatpush1.msra.mxu0 %v3196
        %3245 = vmatprep.subr.mxu0 0.0
        %3246 = vmatpush1.msra.mxu0 %v3198
        %3247 = vmatprep.subr.mxu0 0.0
        %3248 = vmatpush1.msra.mxu0 %v3200
        %3249 = vmatprep.subr.mxu0 0.0
        %3250 = vmatpush1.msra.mxu0 %v3202
        %3251 = vmatprep.subr.mxu0 0.0
        %3252 = vmatpush1.msra.mxu0 %v3204
        %3253 = vmatprep.subr.mxu0 0.0
        %3254 = vmatpush1.msra.mxu0 %v3206
        %3255 = vmatprep.subr.mxu0 0.0
        %3256 = vmatpush1.msra.mxu0 %v3208
        %3257 = vmatprep.subr.mxu0 0.0
        %3258 = vmatpush1.msra.mxu0 %v3210
        %3259 = vmatprep.subr.mxu0 0.0
        %3260 = vmatpush1.msra.mxu0 %v3212
        %3261 = vmatprep.subr.mxu0 0.0
        %3262 = vmatpush1.msra.mxu0 0.0
        %3263 = vmatprep.subr.mxu0 0.0
        %3264 = vmatpush1.msra.mxu0 0.0
        %3265 = vmatprep.subr.mxu0 0.0
        %3266 = vmatpush1.msra.mxu0 0.0
        %3267 = vmatprep.subr.mxu0 0.0
        %3268 = vmatpush1.msra.mxu0 0.0
        %3269 = vmatprep.subr.mxu0 0.0
        %3270 = vmatpush1.msra.mxu0 0.0
        %3271 = vmatprep.subr.mxu0 0.0
        %3272 = vmatpush1.msra.mxu0 0.0
        %3273 = vmatprep.subr.mxu0 0.0
        %3274 = vmatpush1.msra.mxu0 0.0
        %3275 = vmatprep.subr.mxu0 0.0
        %3276 = vmatpush1.msra.mxu0 0.0
        %3277 = vmatprep.subr.mxu0 0.0
        %3278 = vmatpush1.msra.mxu0 0.0
        %3279 = vmatprep.subr.mxu0 0.0
        %3280 = vmatpush1.msra.mxu0 0.0
        %3281 = vmatprep.subr.mxu0 0.0
        %3282 = vmatpush1.msra.mxu0 0.0
        %3283 = vmatprep.subr.mxu0 0.0
        %3284 = vmatpush1.msra.mxu0 0.0
        %3285 = vmatprep.subr.mxu0 0.0
        %3286 = vmatpush1.msra.mxu0 0.0
        %3287 = vmatprep.subr.mxu0 0.0
        %3288 = vmatpush1.msra.mxu0 0.0
        %3289 = vmatprep.subr.mxu0 0.0
        %3290 = vmatpush1.msra.mxu0 0.0
        %3291 = vmatprep.subr.mxu0 0.0
        %3292 = vmatpush1.msra.mxu0 0.0
        %3293 = vmatprep.mubr.f32.mxu0 0.0
        %3294 = vmatmul.mubr.f32.gmra.mrb[0].mxu0 %v2861
        %v3295 = vpop.f32.mrb[0].mxu0
        %v3296 = vadd.f32 0.0, %v3295
        %v3297 = vpop.f32.mrb[0].mxu0
        %3298 = vmatprep.mubr.f32.mxu0 0.0
        %3299 = vmatmul.mubr.f32.gmra.mrb[0].mxu0 %v2863
        %v3300 = vpop.f32.mrb[0].mxu0
        %v3301 = vadd.f32 0.0, %v3300
        %v3302 = vpop.f32.mrb[0].mxu0
        %3303 = vmatprep.mubr.f32.mxu0 0.0
        %3304 = vmatmul.mubr.f32.gmra.mrb[0].mxu0 %v2865
        %v3305 = vpop.f32.mrb[0].mxu0
        %v3306 = vadd.f32 0.0, %v3305
        %v3307 = vpop.f32.mrb[0].mxu0
        %3308 = vmatprep.mubr.f32.mxu0 0.0
        %3309 = vmatmul.mubr.f32.gmra.mrb[0].mxu0 %v2867
        %v3310 = vpop.f32.mrb[0].mxu0
        %v3311 = vadd.f32 0.0, %v3310
        %v3312 = vpop.f32.mrb[0].mxu0
        %3313 = vmatprep.mubr.f32.mxu0 0.0
        %3314 = vmatmul.mubr.f32.gmra.mrb[0].mxu0 %v2869
        %v3315 = vpop.f32.mrb[0].mxu0
        %v3316 = vadd.f32 0.0, %v3315
        %v3317 = vpop.f32.mrb[0].mxu0
        %3318 = vmatprep.mubr.f32.mxu0 0.0
        %3319 = vmatmul.mubr.f32.gmra.mrb[0].mxu0 %v2871
        %v3320 = vpop.f32.mrb[0].mxu0
        %v3321 = vadd.f32 0.0, %v3320
        %v3322 = vpop.f32.mrb[0].mxu0
        %3323 = vmatprep.mubr.f32.mxu0 0.0
        %3324 = vmatmul.mubr.f32.gmra.mrb[0].mxu0 %v2873
        %v3325 = vpop.f32.mrb[0].mxu0
        %v3326 = vadd.f32 0.0, %v3325
        %v3327 = vpop.f32.mrb[0].mxu0
        %3328 = vmatprep.mubr.f32.mxu0 0.0
        %3329 = vmatmul.mubr.f32.gmra.mrb[0].mxu0 %v2875
        %v3330 = vpop.f32.mrb[0].mxu0
        %v3331 = vadd.f32 0.0, %v3330
        %v3332 = vpop.f32.mrb[0].mxu0
        %3333 = vmatprep.mubr.f32.mxu0 0.0
        %3334 = vmatmul.mubr.f32.gmra.mrb[0].mxu0 %v2877
        %v3335 = vpop.f32.mrb[0].mxu0
        %v3336 = vadd.f32 0.0, %v3335
        %v3337 = vpop.f32.mrb[0].mxu0
        %3338 = vmatprep.mubr.f32.mxu0 0.0
        %3339 = vmatmul.mubr.f32.gmra.mrb[0].mxu0 %v2879
        %v3340 = vpop.f32.mrb[0].mxu0
        %v3341 = vadd.f32 0.0, %v3340
        %v3342 = vpop.f32.mrb[0].mxu0
        %3343 = vmatprep.mubr.f32.mxu0 0.0
        %3344 = vmatmul.mubr.f32.gmra.mrb[0].mxu0 %v2881
        %v3345 = vpop.f32.mrb[0].mxu0
        %v3346 = vadd.f32 0.0, %v3345
        %v3347 = vpop.f32.mrb[0].mxu0
        %3348 = vmatprep.mubr.f32.mxu0 0.0
        %3349 = vmatmul.mubr.f32.gmra.mrb[0].mxu0 %v2883
        %v3350 = vpop.f32.mrb[0].mxu0
        %v3351 = vadd.f32 0.0, %v3350
        %v3352 = vpop.f32.mrb[0].mxu0
        %3353 = vmatprep.mubr.f32.mxu0 0.0
        %3354 = vmatmul.mubr.f32.gmra.mrb[0].mxu0 %v2885
        %v3355 = vpop.f32.mrb[0].mxu0
        %v3356 = vadd.f32 0.0, %v3355
        %v3357 = vpop.f32.mrb[0].mxu0
        %3358 = vmatprep.mubr.f32.mxu0 0.0
        %3359 = vmatmul.mubr.f32.gmra.mrb[0].mxu0 %v2887
        %v3360 = vpop.f32.mrb[0].mxu0
        %v3361 = vadd.f32 0.0, %v3360
        %v3362 = vpop.f32.mrb[0].mxu0
        %3363 = vmatprep.mubr.f32.mxu0 0.0
        %3364 = vmatmul.mubr.f32.gmra.mrb[0].mxu0 %v2889
        %v3365 = vpop.f32.mrb[0].mxu0
        %v3366 = vadd.f32 0.0, %v3365
        %v3367 = vpop.f32.mrb[0].mxu0
        %3368 = vmatprep.mubr.f32.mxu0 0.0
        %3369 = vmatmul.mubr.f32.gmra.mrb[0].mxu0 %v2891
        %v3370 = vpop.f32.mrb[0].mxu0
        %v3371 = vadd.f32 0.0, %v3370
        %v3372 = vpop.f32.mrb[0].mxu0
        %3373 = vdwg.mxu0
        %v3374 = vrcp.pop %v2893
        %v3375 = vrcp.pop %v2895
        %v3376 = vrcp.pop %v2897
        %v3377 = vrcp.pop %v2899
        %v3378 = vrcp.pop %v2901
        %v3379 = vrcp.pop %v2903
        %v3380 = vrcp.pop %v2905
        %v3381 = vrcp.pop %v2907
        %v3382 = vrcp.pop %v2909
        %v3383 = vrcp.pop %v2911
        %v3384 = vrcp.pop %v2913
        %v3385 = vrcp.pop %v2915
        %v3386 = vrcp.pop %v2917
        %v3387 = vrcp.pop %v2919
        %v3388 = vrcp.pop %v2921
        %v3389 = vrcp.pop %v2923
        %v3390 = vrcp.pop %v2925
        %v3391 = vrcp.pop %v2927
        %v3392 = vrcp.pop %v2929
        %v3393 = vrcp.pop %v2931
        %v3394 = vrcp.pop %v2933
        %v3395 = vrcp.pop %v2935
        %v3396 = vrcp.pop %v2937
        %v3397 = vrcp.pop %v2939
        %v3398 = vrcp.pop %v2941
        %v3399 = vrcp.pop %v2943
        %v3400 = vrcp.pop %v2945
        %v3401 = vrcp.pop %v2947
        %v3402 = vrcp.pop %v2949
        %v3403 = vrcp.pop %v2951
        %v3404 = vrcp.pop %v2953
        %v3405 = vrcp.pop %v2955
        %v3406 = vmul.f32 %v3087, %v3374
        %v3407 = vmul.f32 %v3092, %v3375
        %v3408 = vmul.f32 %v3097, %v3376
        %v3409 = vmul.f32 %v3102, %v3377
        %v3410 = vmul.f32 %v3107, %v3378
        %v3411 = vmul.f32 %v3112, %v3379
        %v3412 = vmul.f32 %v3117, %v3380
        %v3413 = vmul.f32 %v3122, %v3381
        %v3414 = vmul.f32 %v3127, %v3382
        %v3415 = vmul.f32 %v3132, %v3383
        %v3416 = vmul.f32 %v3137, %v3384
        %v3417 = vmul.f32 %v3142, %v3385
        %v3418 = vmul.f32 %v3147, %v3386
        %v3419 = vmul.f32 %v3152, %v3387
        %v3420 = vmul.f32 %v3157, %v3388
        %v3421 = vmul.f32 %v3162, %v3389
        %v3422 = vmul.f32 %v3296, %v3390
        %v3423 = vmul.f32 %v3301, %v3391
        %v3424 = vmul.f32 %v3306, %v3392
        %v3425 = vmul.f32 %v3311, %v3393
        %v3426 = vmul.f32 %v3316, %v3394
        %v3427 = vmul.f32 %v3321, %v3395
        %v3428 = vmul.f32 %v3326, %v3396
        %v3429 = vmul.f32 %v3331, %v3397
        %v3430 = vmul.f32 %v3336, %v3398
        %v3431 = vmul.f32 %v3341, %v3399
        %v3432 = vmul.f32 %v3346, %v3400
        %v3433 = vmul.f32 %v3351, %v3401
        %v3434 = vmul.f32 %v3356, %v3402
        %v3435 = vmul.f32 %v3361, %v3403
        %v3436 = vmul.f32 %v3366, %v3404
        %v3437 = vmul.f32 %v3371, %v3405
        %s3438 = scalar_lea.vmem [#allocation8], 256
        %v3439 = vld [vmem:[%s3438] sm:$0xff]
        %v3440 = vld [vmem:[%s3438 + $0x8] sm:$0xff]
        %v3441 = vld [vmem:[%s3438 + $0x10] sm:$0xff]
        %v3442 = vld [vmem:[%s3438 + $0x18] sm:$0xff]
        %v3443 = vld [vmem:[%s3438 + $0x20] sm:$0xff]
        %v3444 = vld [vmem:[%s3438 + $0x28] sm:$0xff]
        %v3445 = vld [vmem:[%s3438 + $0x30] sm:$0xff]
        %v3446 = vld [vmem:[%s3438 + $0x38] sm:$0xff]
        %v3447 = vld [vmem:[%s3438 + $0x40] sm:$0xff]
        %v3448 = vld [vmem:[%s3438 + $0x48] sm:$0xff]
        %v3449 = vld [vmem:[%s3438 + $0x50] sm:$0xff]
        %v3450 = vld [vmem:[%s3438 + $0x58] sm:$0xff]
        %v3451 = vld [vmem:[%s3438 + $0x60] sm:$0xff]
        %v3452 = vld [vmem:[%s3438 + $0x68] sm:$0xff]
        %v3453 = vld [vmem:[%s3438 + $0x70] sm:$0xff]
        %v3454 = vld [vmem:[%s3438 + $0x78] sm:$0xff]
        %3455 = vrot.lane.b32.xlu0 %v964, 64
        %v3456 = vpop.permute.xlu0 %3455
        %3457 = vrot.lane.b32.xlu0 %v965, 64
        %v3458 = vpop.permute.xlu0 %3457
        %3459 = vrot.lane.b32.xlu0 %v966, 64
        %v3460 = vpop.permute.xlu0 %3459
        %3461 = vrot.lane.b32.xlu0 %v967, 64
        %v3462 = vpop.permute.xlu0 %3461
        %3463 = vrot.lane.b32.xlu0 %v968, 64
        %v3464 = vpop.permute.xlu0 %3463
        %3465 = vrot.lane.b32.xlu0 %v969, 64
        %v3466 = vpop.permute.xlu0 %3465
        %3467 = vrot.lane.b32.xlu0 %v970, 64
        %v3468 = vpop.permute.xlu0 %3467
        %3469 = vrot.lane.b32.xlu0 %v971, 64
        %v3470 = vpop.permute.xlu0 %3469
        %3471 = vrot.lane.b32.xlu0 %v972, 64
        %v3472 = vpop.permute.xlu0 %3471
        %3473 = vrot.lane.b32.xlu0 %v973, 64
        %v3474 = vpop.permute.xlu0 %3473
        %3475 = vrot.lane.b32.xlu0 %v974, 64
        %v3476 = vpop.permute.xlu0 %3475
        %3477 = vrot.lane.b32.xlu0 %v975, 64
        %v3478 = vpop.permute.xlu0 %3477
        %3479 = vrot.lane.b32.xlu0 %v976, 64
        %v3480 = vpop.permute.xlu0 %3479
        %3481 = vrot.lane.b32.xlu0 %v977, 64
        %v3482 = vpop.permute.xlu0 %3481
        %3483 = vrot.lane.b32.xlu0 %v978, 64
        %v3484 = vpop.permute.xlu0 %3483
        %3485 = vrot.lane.b32.xlu0 %v979, 64
        %v3486 = vpop.permute.xlu0 %3485
        %3487 = vrot.lane.b32.xlu0 %v551, 64
        %v3488 = vpop.permute.xlu0 %3487
        %3489 = vrot.lane.b32.xlu0 %v557, 64
        %v3490 = vpop.permute.xlu0 %3489
        %3491 = vrot.lane.b32.xlu0 %v563, 64
        %v3492 = vpop.permute.xlu0 %3491
        %3493 = vrot.lane.b32.xlu0 %v569, 64
        %v3494 = vpop.permute.xlu0 %3493
        %3495 = vrot.lane.b32.xlu0 %v575, 64
        %v3496 = vpop.permute.xlu0 %3495
        %3497 = vrot.lane.b32.xlu0 %v581, 64
        %v3498 = vpop.permute.xlu0 %3497
        %3499 = vrot.lane.b32.xlu0 %v587, 64
        %v3500 = vpop.permute.xlu0 %3499
        %3501 = vrot.lane.b32.xlu0 %v593, 64
        %v3502 = vpop.permute.xlu0 %3501
        %3503 = vrot.lane.b32.xlu0 %v599, 64
        %v3504 = vpop.permute.xlu0 %3503
        %3505 = vrot.lane.b32.xlu0 %v605, 64
        %v3506 = vpop.permute.xlu0 %3505
        %3507 = vrot.lane.b32.xlu0 %v611, 64
        %v3508 = vpop.permute.xlu0 %3507
        %3509 = vrot.lane.b32.xlu0 %v617, 64
        %v3510 = vpop.permute.xlu0 %3509
        %3511 = vrot.lane.b32.xlu0 %v623, 64
        %v3512 = vpop.permute.xlu0 %3511
        %3513 = vrot.lane.b32.xlu0 %v629, 64
        %v3514 = vpop.permute.xlu0 %3513
        %3515 = vrot.lane.b32.xlu0 %v635, 64
        %v3516 = vpop.permute.xlu0 %3515
        %3517 = vrot.lane.b32.xlu0 %v641, 64
        %v3518 = vpop.permute.xlu0 %3517
        %v3519 = vsel %vm1108, %v3456, 0
        %v3521 = vsel %vm1108, %v3458, 0
        %v3523 = vsel %vm1108, %v3460, 0
        %v3525 = vsel %vm1108, %v3462, 0
        %v3527 = vsel %vm1108, %v3464, 0
        %v3529 = vsel %vm1108, %v3466, 0
        %v3531 = vsel %vm1108, %v3468, 0
        %v3533 = vsel %vm1108, %v3470, 0
        %v3535 = vsel %vm1108, %v3472, 0
        %v3537 = vsel %vm1108, %v3474, 0
        %v3539 = vsel %vm1108, %v3476, 0
        %v3541 = vsel %vm1108, %v3478, 0
        %v3543 = vsel %vm1108, %v3480, 0
        %v3545 = vsel %vm1108, %v3482, 0
        %v3547 = vsel %vm1108, %v3484, 0
        %v3549 = vsel %vm1108, %v3486, 0
        %v3551 = vsel %vm1108, %v3488, 0
        %v3553 = vsel %vm1108, %v3490, 0
        %v3555 = vsel %vm1108, %v3492, 0
        %v3557 = vsel %vm1108, %v3494, 0
        %v3559 = vsel %vm1108, %v3496, 0
        %v3561 = vsel %vm1108, %v3498, 0
        %v3563 = vsel %vm1108, %v3500, 0
        %v3565 = vsel %vm1108, %v3502, 0
        %v3567 = vsel %vm1108, %v3504, 0
        %v3569 = vsel %vm1108, %v3506, 0
        %v3571 = vsel %vm1108, %v3508, 0
        %v3573 = vsel %vm1108, %v3510, 0
        %v3575 = vsel %vm1108, %v3512, 0
        %v3577 = vsel %vm1108, %v3514, 0
        %v3579 = vsel %vm1108, %v3516, 0
        %v3581 = vsel %vm1108, %v3518, 0
        %3583 = vmatprep.subr.mxu0 0.0
        %3584 = vmatpush1.xpose.msra.mxu0 %v3551
        %3585 = vmatprep.subr.mxu0 0.0
        %3586 = vmatpush1.xpose.msra.mxu0 %v3553
        %3587 = vmatprep.subr.mxu0 0.0
        %3588 = vmatpush1.xpose.msra.mxu0 %v3555
        %3589 = vmatprep.subr.mxu0 0.0
        %3590 = vmatpush1.xpose.msra.mxu0 %v3557
        %3591 = vmatprep.subr.mxu0 0.0
        %3592 = vmatpush1.xpose.msra.mxu0 %v3559
        %3593 = vmatprep.subr.mxu0 0.0
        %3594 = vmatpush1.xpose.msra.mxu0 %v3561
        %3595 = vmatprep.subr.mxu0 0.0
        %3596 = vmatpush1.xpose.msra.mxu0 %v3563
        %3597 = vmatprep.subr.mxu0 0.0
        %3598 = vmatpush1.xpose.msra.mxu0 %v3565
        %3599 = vmatprep.subr.mxu0 0.0
        %3600 = vmatpush1.xpose.msra.mxu0 %v3567
        %3601 = vmatprep.subr.mxu0 0.0
        %3602 = vmatpush1.xpose.msra.mxu0 %v3569
        %3603 = vmatprep.subr.mxu0 0.0
        %3604 = vmatpush1.xpose.msra.mxu0 %v3571
        %3605 = vmatprep.subr.mxu0 0.0
        %3606 = vmatpush1.xpose.msra.mxu0 %v3573
        %3607 = vmatprep.subr.mxu0 0.0
        %3608 = vmatpush1.xpose.msra.mxu0 %v3575
        %3609 = vmatprep.subr.mxu0 0.0
        %3610 = vmatpush1.xpose.msra.mxu0 %v3577
        %3611 = vmatprep.subr.mxu0 0.0
        %3612 = vmatpush1.xpose.msra.mxu0 %v3579
        %3613 = vmatprep.subr.mxu0 0.0
        %3614 = vmatpush1.xpose.msra.mxu0 %v3581
        %3615 = vmatprep.subr.mxu0 0.0
        %3616 = vmatpush1.xpose.msra.mxu0 0.0
        %3617 = vmatprep.subr.mxu0 0.0
        %3618 = vmatpush1.xpose.msra.mxu0 0.0
        %3619 = vmatprep.subr.mxu0 0.0
        %3620 = vmatpush1.xpose.msra.mxu0 0.0
        %3621 = vmatprep.subr.mxu0 0.0
        %3622 = vmatpush1.xpose.msra.mxu0 0.0
        %3623 = vmatprep.subr.mxu0 0.0
        %3624 = vmatpush1.xpose.msra.mxu0 0.0
        %3625 = vmatprep.subr.mxu0 0.0
        %3626 = vmatpush1.xpose.msra.mxu0 0.0
        %3627 = vmatprep.subr.mxu0 0.0
        %3628 = vmatpush1.xpose.msra.mxu0 0.0
        %3629 = vmatprep.subr.mxu0 0.0
        %3630 = vmatpush1.xpose.msra.mxu0 0.0
        %3631 = vmatprep.subr.mxu0 0.0
        %3632 = vmatpush1.xpose.msra.mxu0 0.0
        %3633 = vmatprep.subr.mxu0 0.0
        %3634 = vmatpush1.xpose.msra.mxu0 0.0
        %3635 = vmatprep.subr.mxu0 0.0
        %3636 = vmatpush1.xpose.msra.mxu0 0.0
        %3637 = vmatprep.subr.mxu0 0.0
        %3638 = vmatpush1.xpose.msra.mxu0 0.0
        %3639 = vmatprep.subr.mxu0 0.0
        %3640 = vmatpush1.xpose.msra.mxu0 0.0
        %3641 = vmatprep.subr.mxu0 0.0
        %3642 = vmatpush1.xpose.msra.mxu0 0.0
        %3643 = vmatprep.subr.mxu0 0.0
        %3644 = vmatpush1.xpose.msra.mxu0 0.0
        %3645 = vmatprep.subr.mxu0 0.0
        %3646 = vmatpush1.xpose.msra.mxu0 0.0
        %3647 = vmatprep.mubr.f32.mxu0 0.0
        %3648 = vmatmul.mubr.f32.gmra.mrb[0].mxu0 %v3519
        %v3649 = vpop.f32.mrb[0].mxu0
        %v3650 = vadd.f32 %v3439, %v3649
        %v3651 = vpop.f32.mrb[0].mxu0
        %3652 = vmatprep.mubr.f32.mxu0 0.0
        %3653 = vmatmul.mubr.f32.gmra.mrb[0].mxu0 %v3521
        %v3654 = vpop.f32.mrb[0].mxu0
        %v3655 = vadd.f32 %v3440, %v3654
        %v3656 = vpop.f32.mrb[0].mxu0
        %3657 = vmatprep.mubr.f32.mxu0 0.0
        %3658 = vmatmul.mubr.f32.gmra.mrb[0].mxu0 %v3523
        %v3659 = vpop.f32.mrb[0].mxu0
        %v3660 = vadd.f32 %v3441, %v3659
        %v3661 = vpop.f32.mrb[0].mxu0
        %3662 = vmatprep.mubr.f32.mxu0 0.0
        %3663 = vmatmul.mubr.f32.gmra.mrb[0].mxu0 %v3525
        %v3664 = vpop.f32.mrb[0].mxu0
        %v3665 = vadd.f32 %v3442, %v3664
        %v3666 = vpop.f32.mrb[0].mxu0
        %3667 = vmatprep.mubr.f32.mxu0 0.0
        %3668 = vmatmul.mubr.f32.gmra.mrb[0].mxu0 %v3527
        %v3669 = vpop.f32.mrb[0].mxu0
        %v3670 = vadd.f32 %v3443, %v3669
        %v3671 = vpop.f32.mrb[0].mxu0
        %3672 = vmatprep.mubr.f32.mxu0 0.0
        %3673 = vmatmul.mubr.f32.gmra.mrb[0].mxu0 %v3529
        %v3674 = vpop.f32.mrb[0].mxu0
        %v3675 = vadd.f32 %v3444, %v3674
        %v3676 = vpop.f32.mrb[0].mxu0
        %3677 = vmatprep.mubr.f32.mxu0 0.0
        %3678 = vmatmul.mubr.f32.gmra.mrb[0].mxu0 %v3531
        %v3679 = vpop.f32.mrb[0].mxu0
        %v3680 = vadd.f32 %v3445, %v3679
        %v3681 = vpop.f32.mrb[0].mxu0
        %3682 = vmatprep.mubr.f32.mxu0 0.0
        %3683 = vmatmul.mubr.f32.gmra.mrb[0].mxu0 %v3533
        %v3684 = vpop.f32.mrb[0].mxu0
        %v3685 = vadd.f32 %v3446, %v3684
        %v3686 = vpop.f32.mrb[0].mxu0
        %3687 = vmatprep.mubr.f32.mxu0 0.0
        %3688 = vmatmul.mubr.f32.gmra.mrb[0].mxu0 %v3535
        %v3689 = vpop.f32.mrb[0].mxu0
        %v3690 = vadd.f32 %v3447, %v3689
        %v3691 = vpop.f32.mrb[0].mxu0
        %3692 = vmatprep.mubr.f32.mxu0 0.0
        %3693 = vmatmul.mubr.f32.gmra.mrb[0].mxu0 %v3537
        %v3694 = vpop.f32.mrb[0].mxu0
        %v3695 = vadd.f32 %v3448, %v3694
        %v3696 = vpop.f32.mrb[0].mxu0
        %3697 = vmatprep.mubr.f32.mxu0 0.0
        %3698 = vmatmul.mubr.f32.gmra.mrb[0].mxu0 %v3539
        %v3699 = vpop.f32.mrb[0].mxu0
        %v3700 = vadd.f32 %v3449, %v3699
        %v3701 = vpop.f32.mrb[0].mxu0
        %3702 = vmatprep.mubr.f32.mxu0 0.0
        %3703 = vmatmul.mubr.f32.gmra.mrb[0].mxu0 %v3541
        %v3704 = vpop.f32.mrb[0].mxu0
        %v3705 = vadd.f32 %v3450, %v3704
        %v3706 = vpop.f32.mrb[0].mxu0
        %3707 = vmatprep.mubr.f32.mxu0 0.0
        %3708 = vmatmul.mubr.f32.gmra.mrb[0].mxu0 %v3543
        %v3709 = vpop.f32.mrb[0].mxu0
        %v3710 = vadd.f32 %v3451, %v3709
        %v3711 = vpop.f32.mrb[0].mxu0
        %3712 = vmatprep.mubr.f32.mxu0 0.0
        %3713 = vmatmul.mubr.f32.gmra.mrb[0].mxu0 %v3545
        %v3714 = vpop.f32.mrb[0].mxu0
        %v3715 = vadd.f32 %v3452, %v3714
        %v3716 = vpop.f32.mrb[0].mxu0
        %3717 = vmatprep.mubr.f32.mxu0 0.0
        %3718 = vmatmul.mubr.f32.gmra.mrb[0].mxu0 %v3547
        %v3719 = vpop.f32.mrb[0].mxu0
        %v3720 = vadd.f32 %v3453, %v3719
        %v3721 = vpop.f32.mrb[0].mxu0
        %3722 = vmatprep.mubr.f32.mxu0 0.0
        %3723 = vmatmul.mubr.f32.gmra.mrb[0].mxu0 %v3549
        %v3724 = vpop.f32.mrb[0].mxu0
        %v3725 = vadd.f32 %v3454, %v3724
        %v3726 = vpop.f32.mrb[0].mxu0
        %3727 = vdwg.mxu0
        %3728 = vrot.lane.b32.xlu0 %v980, 64
        %v3729 = vpop.permute.xlu0 %3728
        %3730 = vrot.lane.b32.xlu0 %v981, 64
        %v3731 = vpop.permute.xlu0 %3730
        %3732 = vrot.lane.b32.xlu0 %v982, 64
        %v3733 = vpop.permute.xlu0 %3732
        %3734 = vrot.lane.b32.xlu0 %v983, 64
        %v3735 = vpop.permute.xlu0 %3734
        %3736 = vrot.lane.b32.xlu0 %v984, 64
        %v3737 = vpop.permute.xlu0 %3736
        %3738 = vrot.lane.b32.xlu0 %v985, 64
        %v3739 = vpop.permute.xlu0 %3738
        %3740 = vrot.lane.b32.xlu0 %v986, 64
        %v3741 = vpop.permute.xlu0 %3740
        %3742 = vrot.lane.b32.xlu0 %v987, 64
        %v3743 = vpop.permute.xlu0 %3742
        %3744 = vrot.lane.b32.xlu0 %v988, 64
        %v3745 = vpop.permute.xlu0 %3744
        %3746 = vrot.lane.b32.xlu0 %v989, 64
        %v3747 = vpop.permute.xlu0 %3746
        %3748 = vrot.lane.b32.xlu0 %v990, 64
        %v3749 = vpop.permute.xlu0 %3748
        %3750 = vrot.lane.b32.xlu0 %v991, 64
        %v3751 = vpop.permute.xlu0 %3750
        %3752 = vrot.lane.b32.xlu0 %v992, 64
        %v3753 = vpop.permute.xlu0 %3752
        %3754 = vrot.lane.b32.xlu0 %v993, 64
        %v3755 = vpop.permute.xlu0 %3754
        %3756 = vrot.lane.b32.xlu0 %v994, 64
        %v3757 = vpop.permute.xlu0 %3756
        %3758 = vrot.lane.b32.xlu0 %v995, 64
        %v3759 = vpop.permute.xlu0 %3758
        %3760 = vrot.lane.b32.xlu0 %v647, 64
        %v3761 = vpop.permute.xlu0 %3760
        %3762 = vrot.lane.b32.xlu0 %v653, 64
        %v3763 = vpop.permute.xlu0 %3762
        %3764 = vrot.lane.b32.xlu0 %v659, 64
        %v3765 = vpop.permute.xlu0 %3764
        %3766 = vrot.lane.b32.xlu0 %v665, 64
        %v3767 = vpop.permute.xlu0 %3766
        %3768 = vrot.lane.b32.xlu0 %v671, 64
        %v3769 = vpop.permute.xlu0 %3768
        %3770 = vrot.lane.b32.xlu0 %v677, 64
        %v3771 = vpop.permute.xlu0 %3770
        %3772 = vrot.lane.b32.xlu0 %v683, 64
        %v3773 = vpop.permute.xlu0 %3772
        %3774 = vrot.lane.b32.xlu0 %v689, 64
        %v3775 = vpop.permute.xlu0 %3774
        %3776 = vrot.lane.b32.xlu0 %v695, 64
        %v3777 = vpop.permute.xlu0 %3776
        %3778 = vrot.lane.b32.xlu0 %v701, 64
        %v3779 = vpop.permute.xlu0 %3778
        %3780 = vrot.lane.b32.xlu0 %v707, 64
        %v3781 = vpop.permute.xlu0 %3780
        %3782 = vrot.lane.b32.xlu0 %v713, 64
        %v3783 = vpop.permute.xlu0 %3782
        %3784 = vrot.lane.b32.xlu0 %v719, 64
        %v3785 = vpop.permute.xlu0 %3784
        %3786 = vrot.lane.b32.xlu0 %v725, 64
        %v3787 = vpop.permute.xlu0 %3786
        %3788 = vrot.lane.b32.xlu0 %v731, 64
        %v3789 = vpop.permute.xlu0 %3788
        %3790 = vrot.lane.b32.xlu0 %v737, 64
        %v3791 = vpop.permute.xlu0 %3790
        %v3792 = vsel %vm1108, %v3729, 0
        %v3794 = vsel %vm1108, %v3731, 0
        %v3796 = vsel %vm1108, %v3733, 0
        %v3798 = vsel %vm1108, %v3735, 0
        %v3800 = vsel %vm1108, %v3737, 0
        %v3802 = vsel %vm1108, %v3739, 0
        %v3804 = vsel %vm1108, %v3741, 0
        %v3806 = vsel %vm1108, %v3743, 0
        %v3808 = vsel %vm1108, %v3745, 0
        %v3810 = vsel %vm1108, %v3747, 0
        %v3812 = vsel %vm1108, %v3749, 0
        %v3814 = vsel %vm1108, %v3751, 0
        %v3816 = vsel %vm1108, %v3753, 0
        %v3818 = vsel %vm1108, %v3755, 0
        %v3820 = vsel %vm1108, %v3757, 0
        %v3822 = vsel %vm1108, %v3759, 0
        %v3824 = vsel %vm1108, %v3761, 0
        %v3826 = vsel %vm1108, %v3763, 0
        %v3828 = vsel %vm1108, %v3765, 0
        %v3830 = vsel %vm1108, %v3767, 0
        %v3832 = vsel %vm1108, %v3769, 0
        %v3834 = vsel %vm1108, %v3771, 0
        %v3836 = vsel %vm1108, %v3773, 0
        %v3838 = vsel %vm1108, %v3775, 0
        %v3840 = vsel %vm1108, %v3777, 0
        %v3842 = vsel %vm1108, %v3779, 0
        %v3844 = vsel %vm1108, %v3781, 0
        %v3846 = vsel %vm1108, %v3783, 0
        %v3848 = vsel %vm1108, %v3785, 0
        %v3850 = vsel %vm1108, %v3787, 0
        %v3852 = vsel %vm1108, %v3789, 0
        %v3854 = vsel %vm1108, %v3791, 0
        %3856 = vmatprep.subr.mxu0 0.0
        %3857 = vmatpush1.xpose.msra.mxu0 %v3824
        %3858 = vmatprep.subr.mxu0 0.0
        %3859 = vmatpush1.xpose.msra.mxu0 %v3826
        %3860 = vmatprep.subr.mxu0 0.0
        %3861 = vmatpush1.xpose.msra.mxu0 %v3828
        %3862 = vmatprep.subr.mxu0 0.0
        %3863 = vmatpush1.xpose.msra.mxu0 %v3830
        %3864 = vmatprep.subr.mxu0 0.0
        %3865 = vmatpush1.xpose.msra.mxu0 %v3832
        %3866 = vmatprep.subr.mxu0 0.0
        %3867 = vmatpush1.xpose.msra.mxu0 %v3834
        %3868 = vmatprep.subr.mxu0 0.0
        %3869 = vmatpush1.xpose.msra.mxu0 %v3836
        %3870 = vmatprep.subr.mxu0 0.0
        %3871 = vmatpush1.xpose.msra.mxu0 %v3838
        %3872 = vmatprep.subr.mxu0 0.0
        %3873 = vmatpush1.xpose.msra.mxu0 %v3840
        %3874 = vmatprep.subr.mxu0 0.0
        %3875 = vmatpush1.xpose.msra.mxu0 %v3842
        %3876 = vmatprep.subr.mxu0 0.0
        %3877 = vmatpush1.xpose.msra.mxu0 %v3844
        %3878 = vmatprep.subr.mxu0 0.0
        %3879 = vmatpush1.xpose.msra.mxu0 %v3846
        %3880 = vmatprep.subr.mxu0 0.0
        %3881 = vmatpush1.xpose.msra.mxu0 %v3848
        %3882 = vmatprep.subr.mxu0 0.0
        %3883 = vmatpush1.xpose.msra.mxu0 %v3850
        %3884 = vmatprep.subr.mxu0 0.0
        %3885 = vmatpush1.xpose.msra.mxu0 %v3852
        %3886 = vmatprep.subr.mxu0 0.0
        %3887 = vmatpush1.xpose.msra.mxu0 %v3854
        %3888 = vmatprep.subr.mxu0 0.0
        %3889 = vmatpush1.xpose.msra.mxu0 0.0
        %3890 = vmatprep.subr.mxu0 0.0
        %3891 = vmatpush1.xpose.msra.mxu0 0.0
        %3892 = vmatprep.subr.mxu0 0.0
        %3893 = vmatpush1.xpose.msra.mxu0 0.0
        %3894 = vmatprep.subr.mxu0 0.0
        %3895 = vmatpush1.xpose.msra.mxu0 0.0
        %3896 = vmatprep.subr.mxu0 0.0
        %3897 = vmatpush1.xpose.msra.mxu0 0.0
        %3898 = vmatprep.subr.mxu0 0.0
        %3899 = vmatpush1.xpose.msra.mxu0 0.0
        %3900 = vmatprep.subr.mxu0 0.0
        %3901 = vmatpush1.xpose.msra.mxu0 0.0
        %3902 = vmatprep.subr.mxu0 0.0
        %3903 = vmatpush1.xpose.msra.mxu0 0.0
        %3904 = vmatprep.subr.mxu0 0.0
        %3905 = vmatpush1.xpose.msra.mxu0 0.0
        %3906 = vmatprep.subr.mxu0 0.0
        %3907 = vmatpush1.xpose.msra.mxu0 0.0
        %3908 = vmatprep.subr.mxu0 0.0
        %3909 = vmatpush1.xpose.msra.mxu0 0.0
        %3910 = vmatprep.subr.mxu0 0.0
        %3911 = vmatpush1.xpose.msra.mxu0 0.0
        %3912 = vmatprep.subr.mxu0 0.0
        %3913 = vmatpush1.xpose.msra.mxu0 0.0
        %3914 = vmatprep.subr.mxu0 0.0
        %3915 = vmatpush1.xpose.msra.mxu0 0.0
        %3916 = vmatprep.subr.mxu0 0.0
        %3917 = vmatpush1.xpose.msra.mxu0 0.0
        %3918 = vmatprep.subr.mxu0 0.0
        %3919 = vmatpush1.xpose.msra.mxu0 0.0
        %3920 = vmatprep.mubr.f32.mxu0 0.0
        %3921 = vmatmul.mubr.f32.gmra.mrb[0].mxu0 %v3792
        %v3922 = vpop.f32.mrb[0].mxu0
        %v3923 = vadd.f32 %v3439, %v3922
        %v3924 = vpop.f32.mrb[0].mxu0
        %3925 = vmatprep.mubr.f32.mxu0 0.0
        %3926 = vmatmul.mubr.f32.gmra.mrb[0].mxu0 %v3794
        %v3927 = vpop.f32.mrb[0].mxu0
        %v3928 = vadd.f32 %v3440, %v3927
        %v3929 = vpop.f32.mrb[0].mxu0
        %3930 = vmatprep.mubr.f32.mxu0 0.0
        %3931 = vmatmul.mubr.f32.gmra.mrb[0].mxu0 %v3796
        %v3932 = vpop.f32.mrb[0].mxu0
        %v3933 = vadd.f32 %v3441, %v3932
        %v3934 = vpop.f32.mrb[0].mxu0
        %3935 = vmatprep.mubr.f32.mxu0 0.0
        %3936 = vmatmul.mubr.f32.gmra.mrb[0].mxu0 %v3798
        %v3937 = vpop.f32.mrb[0].mxu0
        %v3938 = vadd.f32 %v3442, %v3937
        %v3939 = vpop.f32.mrb[0].mxu0
        %3940 = vmatprep.mubr.f32.mxu0 0.0
        %3941 = vmatmul.mubr.f32.gmra.mrb[0].mxu0 %v3800
        %v3942 = vpop.f32.mrb[0].mxu0
        %v3943 = vadd.f32 %v3443, %v3942
        %v3944 = vpop.f32.mrb[0].mxu0
        %3945 = vmatprep.mubr.f32.mxu0 0.0
        %3946 = vmatmul.mubr.f32.gmra.mrb[0].mxu0 %v3802
        %v3947 = vpop.f32.mrb[0].mxu0
        %v3948 = vadd.f32 %v3444, %v3947
        %v3949 = vpop.f32.mrb[0].mxu0
        %3950 = vmatprep.mubr.f32.mxu0 0.0
        %3951 = vmatmul.mubr.f32.gmra.mrb[0].mxu0 %v3804
        %v3952 = vpop.f32.mrb[0].mxu0
        %v3953 = vadd.f32 %v3445, %v3952
        %v3954 = vpop.f32.mrb[0].mxu0
        %3955 = vmatprep.mubr.f32.mxu0 0.0
        %3956 = vmatmul.mubr.f32.gmra.mrb[0].mxu0 %v3806
        %v3957 = vpop.f32.mrb[0].mxu0
        %v3958 = vadd.f32 %v3446, %v3957
        %v3959 = vpop.f32.mrb[0].mxu0
        %3960 = vmatprep.mubr.f32.mxu0 0.0
        %3961 = vmatmul.mubr.f32.gmra.mrb[0].mxu0 %v3808
        %v3962 = vpop.f32.mrb[0].mxu0
        %v3963 = vadd.f32 %v3447, %v3962
        %v3964 = vpop.f32.mrb[0].mxu0
        %3965 = vmatprep.mubr.f32.mxu0 0.0
        %3966 = vmatmul.mubr.f32.gmra.mrb[0].mxu0 %v3810
        %v3967 = vpop.f32.mrb[0].mxu0
        %v3968 = vadd.f32 %v3448, %v3967
        %v3969 = vpop.f32.mrb[0].mxu0
        %3970 = vmatprep.mubr.f32.mxu0 0.0
        %3971 = vmatmul.mubr.f32.gmra.mrb[0].mxu0 %v3812
        %v3972 = vpop.f32.mrb[0].mxu0
        %v3973 = vadd.f32 %v3449, %v3972
        %v3974 = vpop.f32.mrb[0].mxu0
        %3975 = vmatprep.mubr.f32.mxu0 0.0
        %3976 = vmatmul.mubr.f32.gmra.mrb[0].mxu0 %v3814
        %v3977 = vpop.f32.mrb[0].mxu0
        %v3978 = vadd.f32 %v3450, %v3977
        %v3979 = vpop.f32.mrb[0].mxu0
        %3980 = vmatprep.mubr.f32.mxu0 0.0
        %3981 = vmatmul.mubr.f32.gmra.mrb[0].mxu0 %v3816
        %v3982 = vpop.f32.mrb[0].mxu0
        %v3983 = vadd.f32 %v3451, %v3982
        %v3984 = vpop.f32.mrb[0].mxu0
        %3985 = vmatprep.mubr.f32.mxu0 0.0
        %3986 = vmatmul.mubr.f32.gmra.mrb[0].mxu0 %v3818
        %v3987 = vpop.f32.mrb[0].mxu0
        %v3988 = vadd.f32 %v3452, %v3987
        %v3989 = vpop.f32.mrb[0].mxu0
        %3990 = vmatprep.mubr.f32.mxu0 0.0
        %3991 = vmatmul.mubr.f32.gmra.mrb[0].mxu0 %v3820
        %v3992 = vpop.f32.mrb[0].mxu0
        %v3993 = vadd.f32 %v3453, %v3992
        %v3994 = vpop.f32.mrb[0].mxu0
        %3995 = vmatprep.mubr.f32.mxu0 0.0
        %3996 = vmatmul.mubr.f32.gmra.mrb[0].mxu0 %v3822
        %v3997 = vpop.f32.mrb[0].mxu0
        %v3998 = vadd.f32 %v3454, %v3997
        %v3999 = vpop.f32.mrb[0].mxu0
        %4000 = vdwg.mxu0
        %4001 = vmax.xlane.f32.xlu0 %v3650
        %v4002 = vpop.xlane.xlu0 %4001
        %4003 = vmax.xlane.f32.xlu0 %v3655
        %v4004 = vpop.xlane.xlu0 %4003
        %4005 = vmax.xlane.f32.xlu0 %v3660
        %v4006 = vpop.xlane.xlu0 %4005
        %4007 = vmax.xlane.f32.xlu0 %v3665
        %v4008 = vpop.xlane.xlu0 %4007
        %4009 = vmax.xlane.f32.xlu0 %v3670
        %v4010 = vpop.xlane.xlu0 %4009
        %4011 = vmax.xlane.f32.xlu0 %v3675
        %v4012 = vpop.xlane.xlu0 %4011
        %4013 = vmax.xlane.f32.xlu0 %v3680
        %v4014 = vpop.xlane.xlu0 %4013
        %4015 = vmax.xlane.f32.xlu0 %v3685
        %v4016 = vpop.xlane.xlu0 %4015
        %4017 = vmax.xlane.f32.xlu0 %v3690
        %v4018 = vpop.xlane.xlu0 %4017
        %4019 = vmax.xlane.f32.xlu0 %v3695
        %v4020 = vpop.xlane.xlu0 %4019
        %4021 = vmax.xlane.f32.xlu0 %v3700
        %v4022 = vpop.xlane.xlu0 %4021
        %4023 = vmax.xlane.f32.xlu0 %v3705
        %v4024 = vpop.xlane.xlu0 %4023
        %4025 = vmax.xlane.f32.xlu0 %v3710
        %v4026 = vpop.xlane.xlu0 %4025
        %4027 = vmax.xlane.f32.xlu0 %v3715
        %v4028 = vpop.xlane.xlu0 %4027
        %4029 = vmax.xlane.f32.xlu0 %v3720
        %v4030 = vpop.xlane.xlu0 %4029
        %4031 = vmax.xlane.f32.xlu0 %v3725
        %v4032 = vpop.xlane.xlu0 %4031
        %4033 = vmax.xlane.f32.xlu0 %v3923
        %v4034 = vpop.xlane.xlu0 %4033
        %4035 = vmax.xlane.f32.xlu0 %v3928
        %v4036 = vpop.xlane.xlu0 %4035
        %4037 = vmax.xlane.f32.xlu0 %v3933
        %v4038 = vpop.xlane.xlu0 %4037
        %4039 = vmax.xlane.f32.xlu0 %v3938
        %v4040 = vpop.xlane.xlu0 %4039
        %4041 = vmax.xlane.f32.xlu0 %v3943
        %v4042 = vpop.xlane.xlu0 %4041
        %4043 = vmax.xlane.f32.xlu0 %v3948
        %v4044 = vpop.xlane.xlu0 %4043
        %4045 = vmax.xlane.f32.xlu0 %v3953
        %v4046 = vpop.xlane.xlu0 %4045
        %4047 = vmax.xlane.f32.xlu0 %v3958
        %v4048 = vpop.xlane.xlu0 %4047
        %4049 = vmax.xlane.f32.xlu0 %v3963
        %v4050 = vpop.xlane.xlu0 %4049
        %4051 = vmax.xlane.f32.xlu0 %v3968
        %v4052 = vpop.xlane.xlu0 %4051
        %4053 = vmax.xlane.f32.xlu0 %v3973
        %v4054 = vpop.xlane.xlu0 %4053
        %4055 = vmax.xlane.f32.xlu0 %v3978
        %v4056 = vpop.xlane.xlu0 %4055
        %4057 = vmax.xlane.f32.xlu0 %v3983
        %v4058 = vpop.xlane.xlu0 %4057
        %4059 = vmax.xlane.f32.xlu0 %v3988
        %v4060 = vpop.xlane.xlu0 %4059
        %4061 = vmax.xlane.f32.xlu0 %v3993
        %v4062 = vpop.xlane.xlu0 %4061
        %4063 = vmax.xlane.f32.xlu0 %v3998
        %v4064 = vpop.xlane.xlu0 %4063
        %v4065 = vsub.f32 %v3650, %v4002
        %v4066 = vsub.f32 %v3655, %v4004
        %v4067 = vsub.f32 %v3660, %v4006
        %v4068 = vsub.f32 %v3665, %v4008
        %v4069 = vsub.f32 %v3670, %v4010
        %v4070 = vsub.f32 %v3675, %v4012
        %v4071 = vsub.f32 %v3680, %v4014
        %v4072 = vsub.f32 %v3685, %v4016
        %v4073 = vsub.f32 %v3690, %v4018
        %v4074 = vsub.f32 %v3695, %v4020
        %v4075 = vsub.f32 %v3700, %v4022
        %v4076 = vsub.f32 %v3705, %v4024
        %v4077 = vsub.f32 %v3710, %v4026
        %v4078 = vsub.f32 %v3715, %v4028
        %v4079 = vsub.f32 %v3720, %v4030
        %v4080 = vsub.f32 %v3725, %v4032
        %v4081 = vsub.f32 %v3923, %v4034
        %v4082 = vsub.f32 %v3928, %v4036
        %v4083 = vsub.f32 %v3933, %v4038
        %v4084 = vsub.f32 %v3938, %v4040
        %v4085 = vsub.f32 %v3943, %v4042
        %v4086 = vsub.f32 %v3948, %v4044
        %v4087 = vsub.f32 %v3953, %v4046
        %v4088 = vsub.f32 %v3958, %v4048
        %v4089 = vsub.f32 %v3963, %v4050
        %v4090 = vsub.f32 %v3968, %v4052
        %v4091 = vsub.f32 %v3973, %v4054
        %v4092 = vsub.f32 %v3978, %v4056
        %v4093 = vsub.f32 %v3983, %v4058
        %v4094 = vsub.f32 %v3988, %v4060
        %v4095 = vsub.f32 %v3993, %v4062
        %v4096 = vsub.f32 %v3998, %v4064
        %v4097 = vmul.f32 %v4065, 1.442695
        %v4098 = vpow.pop %v4097
        %v4099 = vmul.f32 %v4066, 1.442695
        %v4100 = vpow.pop %v4099
        %v4101 = vmul.f32 %v4067, 1.442695
        %v4102 = vpow.pop %v4101
        %v4103 = vmul.f32 %v4068, 1.442695
        %v4104 = vpow.pop %v4103
        %v4105 = vmul.f32 %v4069, 1.442695
        %v4106 = vpow.pop %v4105
        %v4107 = vmul.f32 %v4070, 1.442695
        %v4108 = vpow.pop %v4107
        %v4109 = vmul.f32 %v4071, 1.442695
        %v4110 = vpow.pop %v4109
        %v4111 = vmul.f32 %v4072, 1.442695
        %v4112 = vpow.pop %v4111
        %v4113 = vmul.f32 %v4073, 1.442695
        %v4114 = vpow.pop %v4113
        %v4115 = vmul.f32 %v4074, 1.442695
        %v4116 = vpow.pop %v4115
        %v4117 = vmul.f32 %v4075, 1.442695
        %v4118 = vpow.pop %v4117
        %v4119 = vmul.f32 %v4076, 1.442695
        %v4120 = vpow.pop %v4119
        %v4121 = vmul.f32 %v4077, 1.442695
        %v4122 = vpow.pop %v4121
        %v4123 = vmul.f32 %v4078, 1.442695
        %v4124 = vpow.pop %v4123
        %v4125 = vmul.f32 %v4079, 1.442695
        %v4126 = vpow.pop %v4125
        %v4127 = vmul.f32 %v4080, 1.442695
        %v4128 = vpow.pop %v4127
        %v4129 = vmul.f32 %v4081, 1.442695
        %v4130 = vpow.pop %v4129
        %v4131 = vmul.f32 %v4082, 1.442695
        %v4132 = vpow.pop %v4131
        %v4133 = vmul.f32 %v4083, 1.442695
        %v4134 = vpow.pop %v4133
        %v4135 = vmul.f32 %v4084, 1.442695
        %v4136 = vpow.pop %v4135
        %v4137 = vmul.f32 %v4085, 1.442695
        %v4138 = vpow.pop %v4137
        %v4139 = vmul.f32 %v4086, 1.442695
        %v4140 = vpow.pop %v4139
        %v4141 = vmul.f32 %v4087, 1.442695
        %v4142 = vpow.pop %v4141
        %v4143 = vmul.f32 %v4088, 1.442695
        %v4144 = vpow.pop %v4143
        %v4145 = vmul.f32 %v4089, 1.442695
        %v4146 = vpow.pop %v4145
        %v4147 = vmul.f32 %v4090, 1.442695
        %v4148 = vpow.pop %v4147
        %v4149 = vmul.f32 %v4091, 1.442695
        %v4150 = vpow.pop %v4149
        %v4151 = vmul.f32 %v4092, 1.442695
        %v4152 = vpow.pop %v4151
        %v4153 = vmul.f32 %v4093, 1.442695
        %v4154 = vpow.pop %v4153
        %v4155 = vmul.f32 %v4094, 1.442695
        %v4156 = vpow.pop %v4155
        %v4157 = vmul.f32 %v4095, 1.442695
        %v4158 = vpow.pop %v4157
        %v4159 = vmul.f32 %v4096, 1.442695
        %v4160 = vpow.pop %v4159
        %4161 = vadd.xlane.f32.xlu0 %v4098
        %v4162 = vpop.xlane.xlu0 %4161
        %4163 = vadd.xlane.f32.xlu0 %v4100
        %v4164 = vpop.xlane.xlu0 %4163
        %4165 = vadd.xlane.f32.xlu0 %v4102
        %v4166 = vpop.xlane.xlu0 %4165
        %4167 = vadd.xlane.f32.xlu0 %v4104
        %v4168 = vpop.xlane.xlu0 %4167
        %4169 = vadd.xlane.f32.xlu0 %v4106
        %v4170 = vpop.xlane.xlu0 %4169
        %4171 = vadd.xlane.f32.xlu0 %v4108
        %v4172 = vpop.xlane.xlu0 %4171
        %4173 = vadd.xlane.f32.xlu0 %v4110
        %v4174 = vpop.xlane.xlu0 %4173
        %4175 = vadd.xlane.f32.xlu0 %v4112
        %v4176 = vpop.xlane.xlu0 %4175
        %4177 = vadd.xlane.f32.xlu0 %v4114
        %v4178 = vpop.xlane.xlu0 %4177
        %4179 = vadd.xlane.f32.xlu0 %v4116
        %v4180 = vpop.xlane.xlu0 %4179
        %4181 = vadd.xlane.f32.xlu0 %v4118
        %v4182 = vpop.xlane.xlu0 %4181
        %4183 = vadd.xlane.f32.xlu0 %v4120
        %v4184 = vpop.xlane.xlu0 %4183
        %4185 = vadd.xlane.f32.xlu0 %v4122
        %v4186 = vpop.xlane.xlu0 %4185
        %4187 = vadd.xlane.f32.xlu0 %v4124
        %v4188 = vpop.xlane.xlu0 %4187
        %4189 = vadd.xlane.f32.xlu0 %v4126
        %v4190 = vpop.xlane.xlu0 %4189
        %4191 = vadd.xlane.f32.xlu0 %v4128
        %v4192 = vpop.xlane.xlu0 %4191
        %4193 = vadd.xlane.f32.xlu0 %v4130
        %v4194 = vpop.xlane.xlu0 %4193
        %4195 = vadd.xlane.f32.xlu0 %v4132
        %v4196 = vpop.xlane.xlu0 %4195
        %4197 = vadd.xlane.f32.xlu0 %v4134
        %v4198 = vpop.xlane.xlu0 %4197
        %4199 = vadd.xlane.f32.xlu0 %v4136
        %v4200 = vpop.xlane.xlu0 %4199
        %4201 = vadd.xlane.f32.xlu0 %v4138
        %v4202 = vpop.xlane.xlu0 %4201
        %4203 = vadd.xlane.f32.xlu0 %v4140
        %v4204 = vpop.xlane.xlu0 %4203
        %4205 = vadd.xlane.f32.xlu0 %v4142
        %v4206 = vpop.xlane.xlu0 %4205
        %4207 = vadd.xlane.f32.xlu0 %v4144
        %v4208 = vpop.xlane.xlu0 %4207
        %4209 = vadd.xlane.f32.xlu0 %v4146
        %v4210 = vpop.xlane.xlu0 %4209
        %4211 = vadd.xlane.f32.xlu0 %v4148
        %v4212 = vpop.xlane.xlu0 %4211
        %4213 = vadd.xlane.f32.xlu0 %v4150
        %v4214 = vpop.xlane.xlu0 %4213
        %4215 = vadd.xlane.f32.xlu0 %v4152
        %v4216 = vpop.xlane.xlu0 %4215
        %4217 = vadd.xlane.f32.xlu0 %v4154
        %v4218 = vpop.xlane.xlu0 %4217
        %4219 = vadd.xlane.f32.xlu0 %v4156
        %v4220 = vpop.xlane.xlu0 %4219
        %4221 = vadd.xlane.f32.xlu0 %v4158
        %v4222 = vpop.xlane.xlu0 %4221
        %4223 = vadd.xlane.f32.xlu0 %v4160
        %v4224 = vpop.xlane.xlu0 %4223
        %4225 = vrot.lane.b32.xlu0 %v806, 64
        %v4226 = vpop.permute.xlu0 %4225
        %4227 = vrot.lane.b32.xlu0 %v811, 64
        %v4228 = vpop.permute.xlu0 %4227
        %4229 = vrot.lane.b32.xlu0 %v816, 64
        %v4230 = vpop.permute.xlu0 %4229
        %4231 = vrot.lane.b32.xlu0 %v821, 64
        %v4232 = vpop.permute.xlu0 %4231
        %4233 = vrot.lane.b32.xlu0 %v826, 64
        %v4234 = vpop.permute.xlu0 %4233
        %4235 = vrot.lane.b32.xlu0 %v831, 64
        %v4236 = vpop.permute.xlu0 %4235
        %4237 = vrot.lane.b32.xlu0 %v836, 64
        %v4238 = vpop.permute.xlu0 %4237
        %4239 = vrot.lane.b32.xlu0 %v841, 64
        %v4240 = vpop.permute.xlu0 %4239
        %4241 = vrot.lane.b32.xlu0 %v846, 64
        %v4242 = vpop.permute.xlu0 %4241
        %4243 = vrot.lane.b32.xlu0 %v851, 64
        %v4244 = vpop.permute.xlu0 %4243
        %4245 = vrot.lane.b32.xlu0 %v856, 64
        %v4246 = vpop.permute.xlu0 %4245
        %4247 = vrot.lane.b32.xlu0 %v861, 64
        %v4248 = vpop.permute.xlu0 %4247
        %4249 = vrot.lane.b32.xlu0 %v866, 64
        %v4250 = vpop.permute.xlu0 %4249
        %4251 = vrot.lane.b32.xlu0 %v871, 64
        %v4252 = vpop.permute.xlu0 %4251
        %4253 = vrot.lane.b32.xlu0 %v876, 64
        %v4254 = vpop.permute.xlu0 %4253
        %4255 = vrot.lane.b32.xlu0 %v881, 64
        %v4256 = vpop.permute.xlu0 %4255
        %4273 = vmatprep.subr.mxu0 0.0
        %4274 = vmatpush1.msra.mxu0 %v4226
        %4275 = vmatprep.subr.mxu0 0.0
        %4276 = vmatpush1.msra.mxu0 %v4228
        %4277 = vmatprep.subr.mxu0 0.0
        %4278 = vmatpush1.msra.mxu0 %v4230
        %4279 = vmatprep.subr.mxu0 0.0
        %4280 = vmatpush1.msra.mxu0 %v4232
        %4281 = vmatprep.subr.mxu0 0.0
        %4282 = vmatpush1.msra.mxu0 %v4234
        %4283 = vmatprep.subr.mxu0 0.0
        %4284 = vmatpush1.msra.mxu0 %v4236
        %4285 = vmatprep.subr.mxu0 0.0
        %4286 = vmatpush1.msra.mxu0 %v4238
        %4287 = vmatprep.subr.mxu0 0.0
        %4288 = vmatpush1.msra.mxu0 %v4240
        %4289 = vmatprep.subr.mxu0 0.0
        %4290 = vmatpush1.msra.mxu0 %v4242
        %4291 = vmatprep.subr.mxu0 0.0
        %4292 = vmatpush1.msra.mxu0 %v4244
        %4293 = vmatprep.subr.mxu0 0.0
        %4294 = vmatpush1.msra.mxu0 %v4246
        %4295 = vmatprep.subr.mxu0 0.0
        %4296 = vmatpush1.msra.mxu0 %v4248
        %4297 = vmatprep.subr.mxu0 0.0
        %4298 = vmatpush1.msra.mxu0 %v4250
        %4299 = vmatprep.subr.mxu0 0.0
        %4300 = vmatpush1.msra.mxu0 %v4252
        %4301 = vmatprep.subr.mxu0 0.0
        %4302 = vmatpush1.msra.mxu0 %v4254
        %4303 = vmatprep.subr.mxu0 0.0
        %4304 = vmatpush1.msra.mxu0 %v4256
        %4305 = vmatprep.subr.mxu0 0.0
        %4306 = vmatpush1.msra.mxu0 0.0
        %4307 = vmatprep.subr.mxu0 0.0
        %4308 = vmatpush1.msra.mxu0 0.0
        %4309 = vmatprep.subr.mxu0 0.0
        %4310 = vmatpush1.msra.mxu0 0.0
        %4311 = vmatprep.subr.mxu0 0.0
        %4312 = vmatpush1.msra.mxu0 0.0
        %4313 = vmatprep.subr.mxu0 0.0
        %4314 = vmatpush1.msra.mxu0 0.0
        %4315 = vmatprep.subr.mxu0 0.0
        %4316 = vmatpush1.msra.mxu0 0.0
        %4317 = vmatprep.subr.mxu0 0.0
        %4318 = vmatpush1.msra.mxu0 0.0
        %4319 = vmatprep.subr.mxu0 0.0
        %4320 = vmatpush1.msra.mxu0 0.0
        %4321 = vmatprep.subr.mxu0 0.0
        %4322 = vmatpush1.msra.mxu0 0.0
        %4323 = vmatprep.subr.mxu0 0.0
        %4324 = vmatpush1.msra.mxu0 0.0
        %4325 = vmatprep.subr.mxu0 0.0
        %4326 = vmatpush1.msra.mxu0 0.0
        %4327 = vmatprep.subr.mxu0 0.0
        %4328 = vmatpush1.msra.mxu0 0.0
        %4329 = vmatprep.subr.mxu0 0.0
        %4330 = vmatpush1.msra.mxu0 0.0
        %4331 = vmatprep.subr.mxu0 0.0
        %4332 = vmatpush1.msra.mxu0 0.0
        %4333 = vmatprep.subr.mxu0 0.0
        %4334 = vmatpush1.msra.mxu0 0.0
        %4335 = vmatprep.subr.mxu0 0.0
        %4336 = vmatpush1.msra.mxu0 0.0
        %4337 = vmatprep.mubr.f32.mxu0 0.0
        %4338 = vmatmul.mubr.f32.gmra.mrb[0].mxu0 %v4098
        %v4339 = vpop.f32.mrb[0].mxu0
        %v4340 = vadd.f32 0.0, %v4339
        %v4341 = vpop.f32.mrb[0].mxu0
        %4342 = vmatprep.mubr.f32.mxu0 0.0
        %4343 = vmatmul.mubr.f32.gmra.mrb[0].mxu0 %v4100
        %v4344 = vpop.f32.mrb[0].mxu0
        %v4345 = vadd.f32 0.0, %v4344
        %v4346 = vpop.f32.mrb[0].mxu0
        %4347 = vmatprep.mubr.f32.mxu0 0.0
        %4348 = vmatmul.mubr.f32.gmra.mrb[0].mxu0 %v4102
        %v4349 = vpop.f32.mrb[0].mxu0
        %v4350 = vadd.f32 0.0, %v4349
        %v4351 = vpop.f32.mrb[0].mxu0
        %4352 = vmatprep.mubr.f32.mxu0 0.0
        %4353 = vmatmul.mubr.f32.gmra.mrb[0].mxu0 %v4104
        %v4354 = vpop.f32.mrb[0].mxu0
        %v4355 = vadd.f32 0.0, %v4354
        %v4356 = vpop.f32.mrb[0].mxu0
        %4357 = vmatprep.mubr.f32.mxu0 0.0
        %4358 = vmatmul.mubr.f32.gmra.mrb[0].mxu0 %v4106
        %v4359 = vpop.f32.mrb[0].mxu0
        %v4360 = vadd.f32 0.0, %v4359
        %v4361 = vpop.f32.mrb[0].mxu0
        %4362 = vmatprep.mubr.f32.mxu0 0.0
        %4363 = vmatmul.mubr.f32.gmra.mrb[0].mxu0 %v4108
        %v4364 = vpop.f32.mrb[0].mxu0
        %v4365 = vadd.f32 0.0, %v4364
        %v4366 = vpop.f32.mrb[0].mxu0
        %4367 = vmatprep.mubr.f32.mxu0 0.0
        %4368 = vmatmul.mubr.f32.gmra.mrb[0].mxu0 %v4110
        %v4369 = vpop.f32.mrb[0].mxu0
        %v4370 = vadd.f32 0.0, %v4369
        %v4371 = vpop.f32.mrb[0].mxu0
        %4372 = vmatprep.mubr.f32.mxu0 0.0
        %4373 = vmatmul.mubr.f32.gmra.mrb[0].mxu0 %v4112
        %v4374 = vpop.f32.mrb[0].mxu0
        %v4375 = vadd.f32 0.0, %v4374
        %v4376 = vpop.f32.mrb[0].mxu0
        %4377 = vmatprep.mubr.f32.mxu0 0.0
        %4378 = vmatmul.mubr.f32.gmra.mrb[0].mxu0 %v4114
        %v4379 = vpop.f32.mrb[0].mxu0
        %v4380 = vadd.f32 0.0, %v4379
        %v4381 = vpop.f32.mrb[0].mxu0
        %4382 = vmatprep.mubr.f32.mxu0 0.0
        %4383 = vmatmul.mubr.f32.gmra.mrb[0].mxu0 %v4116
        %v4384 = vpop.f32.mrb[0].mxu0
        %v4385 = vadd.f32 0.0, %v4384
        %v4386 = vpop.f32.mrb[0].mxu0
        %4387 = vmatprep.mubr.f32.mxu0 0.0
        %4388 = vmatmul.mubr.f32.gmra.mrb[0].mxu0 %v4118
        %v4389 = vpop.f32.mrb[0].mxu0
        %v4390 = vadd.f32 0.0, %v4389
        %v4391 = vpop.f32.mrb[0].mxu0
        %4392 = vmatprep.mubr.f32.mxu0 0.0
        %4393 = vmatmul.mubr.f32.gmra.mrb[0].mxu0 %v4120
        %v4394 = vpop.f32.mrb[0].mxu0
        %v4395 = vadd.f32 0.0, %v4394
        %v4396 = vpop.f32.mrb[0].mxu0
        %4397 = vmatprep.mubr.f32.mxu0 0.0
        %4398 = vmatmul.mubr.f32.gmra.mrb[0].mxu0 %v4122
        %v4399 = vpop.f32.mrb[0].mxu0
        %v4400 = vadd.f32 0.0, %v4399
        %v4401 = vpop.f32.mrb[0].mxu0
        %4402 = vmatprep.mubr.f32.mxu0 0.0
        %4403 = vmatmul.mubr.f32.gmra.mrb[0].mxu0 %v4124
        %v4404 = vpop.f32.mrb[0].mxu0
        %v4405 = vadd.f32 0.0, %v4404
        %v4406 = vpop.f32.mrb[0].mxu0
        %4407 = vmatprep.mubr.f32.mxu0 0.0
        %4408 = vmatmul.mubr.f32.gmra.mrb[0].mxu0 %v4126
        %v4409 = vpop.f32.mrb[0].mxu0
        %v4410 = vadd.f32 0.0, %v4409
        %v4411 = vpop.f32.mrb[0].mxu0
        %4412 = vmatprep.mubr.f32.mxu0 0.0
        %4413 = vmatmul.mubr.f32.gmra.mrb[0].mxu0 %v4128
        %v4414 = vpop.f32.mrb[0].mxu0
        %v4415 = vadd.f32 0.0, %v4414
        %v4416 = vpop.f32.mrb[0].mxu0
        %4417 = vdwg.mxu0
        %4418 = vrot.lane.b32.xlu0 %v886, 64
        %v4419 = vpop.permute.xlu0 %4418
        %4420 = vrot.lane.b32.xlu0 %v891, 64
        %v4421 = vpop.permute.xlu0 %4420
        %4422 = vrot.lane.b32.xlu0 %v896, 64
        %v4423 = vpop.permute.xlu0 %4422
        %4424 = vrot.lane.b32.xlu0 %v901, 64
        %v4425 = vpop.permute.xlu0 %4424
        %4426 = vrot.lane.b32.xlu0 %v906, 64
        %v4427 = vpop.permute.xlu0 %4426
        %4428 = vrot.lane.b32.xlu0 %v911, 64
        %v4429 = vpop.permute.xlu0 %4428
        %4430 = vrot.lane.b32.xlu0 %v916, 64
        %v4431 = vpop.permute.xlu0 %4430
        %4432 = vrot.lane.b32.xlu0 %v921, 64
        %v4433 = vpop.permute.xlu0 %4432
        %4434 = vrot.lane.b32.xlu0 %v926, 64
        %v4435 = vpop.permute.xlu0 %4434
        %4436 = vrot.lane.b32.xlu0 %v931, 64
        %v4437 = vpop.permute.xlu0 %4436
        %4438 = vrot.lane.b32.xlu0 %v936, 64
        %v4439 = vpop.permute.xlu0 %4438
        %4440 = vrot.lane.b32.xlu0 %v941, 64
        %v4441 = vpop.permute.xlu0 %4440
        %4442 = vrot.lane.b32.xlu0 %v946, 64
        %v4443 = vpop.permute.xlu0 %4442
        %4444 = vrot.lane.b32.xlu0 %v951, 64
        %v4445 = vpop.permute.xlu0 %4444
        %4446 = vrot.lane.b32.xlu0 %v956, 64
        %v4447 = vpop.permute.xlu0 %4446
        %4448 = vrot.lane.b32.xlu0 %v961, 64
        %v4449 = vpop.permute.xlu0 %4448
        %4466 = vmatprep.subr.mxu0 0.0
        %4467 = vmatpush1.msra.mxu0 %v4419
        %4468 = vmatprep.subr.mxu0 0.0
        %4469 = vmatpush1.msra.mxu0 %v4421
        %4470 = vmatprep.subr.mxu0 0.0
        %4471 = vmatpush1.msra.mxu0 %v4423
        %4472 = vmatprep.subr.mxu0 0.0
        %4473 = vmatpush1.msra.mxu0 %v4425
        %4474 = vmatprep.subr.mxu0 0.0
        %4475 = vmatpush1.msra.mxu0 %v4427
        %4476 = vmatprep.subr.mxu0 0.0
        %4477 = vmatpush1.msra.mxu0 %v4429
        %4478 = vmatprep.subr.mxu0 0.0
        %4479 = vmatpush1.msra.mxu0 %v4431
        %4480 = vmatprep.subr.mxu0 0.0
        %4481 = vmatpush1.msra.mxu0 %v4433
        %4482 = vmatprep.subr.mxu0 0.0
        %4483 = vmatpush1.msra.mxu0 %v4435
        %4484 = vmatprep.subr.mxu0 0.0
        %4485 = vmatpush1.msra.mxu0 %v4437
        %4486 = vmatprep.subr.mxu0 0.0
        %4487 = vmatpush1.msra.mxu0 %v4439
        %4488 = vmatprep.subr.mxu0 0.0
        %4489 = vmatpush1.msra.mxu0 %v4441
        %4490 = vmatprep.subr.mxu0 0.0
        %4491 = vmatpush1.msra.mxu0 %v4443
        %4492 = vmatprep.subr.mxu0 0.0
        %4493 = vmatpush1.msra.mxu0 %v4445
        %4494 = vmatprep.subr.mxu0 0.0
        %4495 = vmatpush1.msra.mxu0 %v4447
        %4496 = vmatprep.subr.mxu0 0.0
        %4497 = vmatpush1.msra.mxu0 %v4449
        %4498 = vmatprep.subr.mxu0 0.0
        %4499 = vmatpush1.msra.mxu0 0.0
        %4500 = vmatprep.subr.mxu0 0.0
        %4501 = vmatpush1.msra.mxu0 0.0
        %4502 = vmatprep.subr.mxu0 0.0
        %4503 = vmatpush1.msra.mxu0 0.0
        %4504 = vmatprep.subr.mxu0 0.0
        %4505 = vmatpush1.msra.mxu0 0.0
        %4506 = vmatprep.subr.mxu0 0.0
        %4507 = vmatpush1.msra.mxu0 0.0
        %4508 = vmatprep.subr.mxu0 0.0
        %4509 = vmatpush1.msra.mxu0 0.0
        %4510 = vmatprep.subr.mxu0 0.0
        %4511 = vmatpush1.msra.mxu0 0.0
        %4512 = vmatprep.subr.mxu0 0.0
        %4513 = vmatpush1.msra.mxu0 0.0
        %4514 = vmatprep.subr.mxu0 0.0
        %4515 = vmatpush1.msra.mxu0 0.0
        %4516 = vmatprep.subr.mxu0 0.0
        %4517 = vmatpush1.msra.mxu0 0.0
        %4518 = vmatprep.subr.mxu0 0.0
        %4519 = vmatpush1.msra.mxu0 0.0
        %4520 = vmatprep.subr.mxu0 0.0
        %4521 = vmatpush1.msra.mxu0 0.0
        %4522 = vmatprep.subr.mxu0 0.0
        %4523 = vmatpush1.msra.mxu0 0.0
        %4524 = vmatprep.subr.mxu0 0.0
        %4525 = vmatpush1.msra.mxu0 0.0
        %4526 = vmatprep.subr.mxu0 0.0
        %4527 = vmatpush1.msra.mxu0 0.0
        %4528 = vmatprep.subr.mxu0 0.0
        %4529 = vmatpush1.msra.mxu0 0.0
        %4530 = vmatprep.mubr.f32.mxu0 0.0
        %4531 = vmatmul.mubr.f32.gmra.mrb[0].mxu0 %v4130
        %v4532 = vpop.f32.mrb[0].mxu0
        %v4533 = vadd.f32 0.0, %v4532
        %v4534 = vpop.f32.mrb[0].mxu0
        %4535 = vmatprep.mubr.f32.mxu0 0.0
        %4536 = vmatmul.mubr.f32.gmra.mrb[0].mxu0 %v4132
        %v4537 = vpop.f32.mrb[0].mxu0
        %v4538 = vadd.f32 0.0, %v4537
        %v4539 = vpop.f32.mrb[0].mxu0
        %4540 = vmatprep.mubr.f32.mxu0 0.0
        %4541 = vmatmul.mubr.f32.gmra.mrb[0].mxu0 %v4134
        %v4542 = vpop.f32.mrb[0].mxu0
        %v4543 = vadd.f32 0.0, %v4542
        %v4544 = vpop.f32.mrb[0].mxu0
        %4545 = vmatprep.mubr.f32.mxu0 0.0
        %4546 = vmatmul.mubr.f32.gmra.mrb[0].mxu0 %v4136
        %v4547 = vpop.f32.mrb[0].mxu0
        %v4548 = vadd.f32 0.0, %v4547
        %v4549 = vpop.f32.mrb[0].mxu0
        %4550 = vmatprep.mubr.f32.mxu0 0.0
        %4551 = vmatmul.mubr.f32.gmra.mrb[0].mxu0 %v4138
        %v4552 = vpop.f32.mrb[0].mxu0
        %v4553 = vadd.f32 0.0, %v4552
        %v4554 = vpop.f32.mrb[0].mxu0
        %4555 = vmatprep.mubr.f32.mxu0 0.0
        %4556 = vmatmul.mubr.f32.gmra.mrb[0].mxu0 %v4140
        %v4557 = vpop.f32.mrb[0].mxu0
        %v4558 = vadd.f32 0.0, %v4557
        %v4559 = vpop.f32.mrb[0].mxu0
        %4560 = vmatprep.mubr.f32.mxu0 0.0
        %4561 = vmatmul.mubr.f32.gmra.mrb[0].mxu0 %v4142
        %v4562 = vpop.f32.mrb[0].mxu0
        %v4563 = vadd.f32 0.0, %v4562
        %v4564 = vpop.f32.mrb[0].mxu0
        %4565 = vmatprep.mubr.f32.mxu0 0.0
        %4566 = vmatmul.mubr.f32.gmra.mrb[0].mxu0 %v4144
        %v4567 = vpop.f32.mrb[0].mxu0
        %v4568 = vadd.f32 0.0, %v4567
        %v4569 = vpop.f32.mrb[0].mxu0
        %4570 = vmatprep.mubr.f32.mxu0 0.0
        %4571 = vmatmul.mubr.f32.gmra.mrb[0].mxu0 %v4146
        %v4572 = vpop.f32.mrb[0].mxu0
        %v4573 = vadd.f32 0.0, %v4572
        %v4574 = vpop.f32.mrb[0].mxu0
        %4575 = vmatprep.mubr.f32.mxu0 0.0
        %4576 = vmatmul.mubr.f32.gmra.mrb[0].mxu0 %v4148
        %v4577 = vpop.f32.mrb[0].mxu0
        %v4578 = vadd.f32 0.0, %v4577
        %v4579 = vpop.f32.mrb[0].mxu0
        %4580 = vmatprep.mubr.f32.mxu0 0.0
        %4581 = vmatmul.mubr.f32.gmra.mrb[0].mxu0 %v4150
        %v4582 = vpop.f32.mrb[0].mxu0
        %v4583 = vadd.f32 0.0, %v4582
        %v4584 = vpop.f32.mrb[0].mxu0
        %4585 = vmatprep.mubr.f32.mxu0 0.0
        %4586 = vmatmul.mubr.f32.gmra.mrb[0].mxu0 %v4152
        %v4587 = vpop.f32.mrb[0].mxu0
        %v4588 = vadd.f32 0.0, %v4587
        %v4589 = vpop.f32.mrb[0].mxu0
        %4590 = vmatprep.mubr.f32.mxu0 0.0
        %4591 = vmatmul.mubr.f32.gmra.mrb[0].mxu0 %v4154
        %v4592 = vpop.f32.mrb[0].mxu0
        %v4593 = vadd.f32 0.0, %v4592
        %v4594 = vpop.f32.mrb[0].mxu0
        %4595 = vmatprep.mubr.f32.mxu0 0.0
        %4596 = vmatmul.mubr.f32.gmra.mrb[0].mxu0 %v4156
        %v4597 = vpop.f32.mrb[0].mxu0
        %v4598 = vadd.f32 0.0, %v4597
        %v4599 = vpop.f32.mrb[0].mxu0
        %4600 = vmatprep.mubr.f32.mxu0 0.0
        %4601 = vmatmul.mubr.f32.gmra.mrb[0].mxu0 %v4158
        %v4602 = vpop.f32.mrb[0].mxu0
        %v4603 = vadd.f32 0.0, %v4602
        %v4604 = vpop.f32.mrb[0].mxu0
        %4605 = vmatprep.mubr.f32.mxu0 0.0
        %4606 = vmatmul.mubr.f32.gmra.mrb[0].mxu0 %v4160
        %v4607 = vpop.f32.mrb[0].mxu0
        %v4608 = vadd.f32 0.0, %v4607
        %v4609 = vpop.f32.mrb[0].mxu0
        %4610 = vdwg.mxu0
        %v4611 = vrcp.pop %v4162
        %v4612 = vrcp.pop %v4164
        %v4613 = vrcp.pop %v4166
        %v4614 = vrcp.pop %v4168
        %v4615 = vrcp.pop %v4170
        %v4616 = vrcp.pop %v4172
        %v4617 = vrcp.pop %v4174
        %v4618 = vrcp.pop %v4176
        %v4619 = vrcp.pop %v4178
        %v4620 = vrcp.pop %v4180
        %v4621 = vrcp.pop %v4182
        %v4622 = vrcp.pop %v4184
        %v4623 = vrcp.pop %v4186
        %v4624 = vrcp.pop %v4188
        %v4625 = vrcp.pop %v4190
        %v4626 = vrcp.pop %v4192
        %v4627 = vrcp.pop %v4194
        %v4628 = vrcp.pop %v4196
        %v4629 = vrcp.pop %v4198
        %v4630 = vrcp.pop %v4200
        %v4631 = vrcp.pop %v4202
        %v4632 = vrcp.pop %v4204
        %v4633 = vrcp.pop %v4206
        %v4634 = vrcp.pop %v4208
        %v4635 = vrcp.pop %v4210
        %v4636 = vrcp.pop %v4212
        %v4637 = vrcp.pop %v4214
        %v4638 = vrcp.pop %v4216
        %v4639 = vrcp.pop %v4218
        %v4640 = vrcp.pop %v4220
        %v4641 = vrcp.pop %v4222
        %v4642 = vrcp.pop %v4224
        %v4643 = vmul.f32 %v4340, %v4611
        %v4644 = vmul.f32 %v4345, %v4612
        %v4645 = vmul.f32 %v4350, %v4613
        %v4646 = vmul.f32 %v4355, %v4614
        %v4647 = vmul.f32 %v4360, %v4615
        %v4648 = vmul.f32 %v4365, %v4616
        %v4649 = vmul.f32 %v4370, %v4617
        %v4650 = vmul.f32 %v4375, %v4618
        %v4651 = vmul.f32 %v4380, %v4619
        %v4652 = vmul.f32 %v4385, %v4620
        %v4653 = vmul.f32 %v4390, %v4621
        %v4654 = vmul.f32 %v4395, %v4622
        %v4655 = vmul.f32 %v4400, %v4623
        %v4656 = vmul.f32 %v4405, %v4624
        %v4657 = vmul.f32 %v4410, %v4625
        %v4658 = vmul.f32 %v4415, %v4626
        %v4659 = vmul.f32 %v4533, %v4627
        %v4660 = vmul.f32 %v4538, %v4628
        %v4661 = vmul.f32 %v4543, %v4629
        %v4662 = vmul.f32 %v4548, %v4630
        %v4663 = vmul.f32 %v4553, %v4631
        %v4664 = vmul.f32 %v4558, %v4632
        %v4665 = vmul.f32 %v4563, %v4633
        %v4666 = vmul.f32 %v4568, %v4634
        %v4667 = vmul.f32 %v4573, %v4635
        %v4668 = vmul.f32 %v4578, %v4636
        %v4669 = vmul.f32 %v4583, %v4637
        %v4670 = vmul.f32 %v4588, %v4638
        %v4671 = vmul.f32 %v4593, %v4639
        %v4672 = vmul.f32 %v4598, %v4640
        %v4673 = vmul.f32 %v4603, %v4641
        %v4674 = vmul.f32 %v4608, %v4642
        %s4675 = scalar_lea.vmem [#allocation8], 384
        %v4676 = vld [vmem:[%s4675] sm:$0xff]
        %v4677 = vld [vmem:[%s4675 + $0x8] sm:$0xff]
        %v4678 = vld [vmem:[%s4675 + $0x10] sm:$0xff]
        %v4679 = vld [vmem:[%s4675 + $0x18] sm:$0xff]
        %v4680 = vld [vmem:[%s4675 + $0x20] sm:$0xff]
        %v4681 = vld [vmem:[%s4675 + $0x28] sm:$0xff]
        %v4682 = vld [vmem:[%s4675 + $0x30] sm:$0xff]
        %v4683 = vld [vmem:[%s4675 + $0x38] sm:$0xff]
        %v4684 = vld [vmem:[%s4675 + $0x40] sm:$0xff]
        %v4685 = vld [vmem:[%s4675 + $0x48] sm:$0xff]
        %v4686 = vld [vmem:[%s4675 + $0x50] sm:$0xff]
        %v4687 = vld [vmem:[%s4675 + $0x58] sm:$0xff]
        %v4688 = vld [vmem:[%s4675 + $0x60] sm:$0xff]
        %v4689 = vld [vmem:[%s4675 + $0x68] sm:$0xff]
        %v4690 = vld [vmem:[%s4675 + $0x70] sm:$0xff]
        %v4691 = vld [vmem:[%s4675 + $0x78] sm:$0xff]
        %4692 = vrot.lane.b32.xlu0 %v964, 32
        %v4693 = vpop.permute.xlu0 %4692
        %4694 = vrot.lane.b32.xlu0 %v965, 32
        %v4695 = vpop.permute.xlu0 %4694
        %4696 = vrot.lane.b32.xlu0 %v966, 32
        %v4697 = vpop.permute.xlu0 %4696
        %4698 = vrot.lane.b32.xlu0 %v967, 32
        %v4699 = vpop.permute.xlu0 %4698
        %4700 = vrot.lane.b32.xlu0 %v968, 32
        %v4701 = vpop.permute.xlu0 %4700
        %4702 = vrot.lane.b32.xlu0 %v969, 32
        %v4703 = vpop.permute.xlu0 %4702
        %4704 = vrot.lane.b32.xlu0 %v970, 32
        %v4705 = vpop.permute.xlu0 %4704
        %4706 = vrot.lane.b32.xlu0 %v971, 32
        %v4707 = vpop.permute.xlu0 %4706
        %4708 = vrot.lane.b32.xlu0 %v972, 32
        %v4709 = vpop.permute.xlu0 %4708
        %4710 = vrot.lane.b32.xlu0 %v973, 32
        %v4711 = vpop.permute.xlu0 %4710
        %4712 = vrot.lane.b32.xlu0 %v974, 32
        %v4713 = vpop.permute.xlu0 %4712
        %4714 = vrot.lane.b32.xlu0 %v975, 32
        %v4715 = vpop.permute.xlu0 %4714
        %4716 = vrot.lane.b32.xlu0 %v976, 32
        %v4717 = vpop.permute.xlu0 %4716
        %4718 = vrot.lane.b32.xlu0 %v977, 32
        %v4719 = vpop.permute.xlu0 %4718
        %4720 = vrot.lane.b32.xlu0 %v978, 32
        %v4721 = vpop.permute.xlu0 %4720
        %4722 = vrot.lane.b32.xlu0 %v979, 32
        %v4723 = vpop.permute.xlu0 %4722
        %4724 = vrot.lane.b32.xlu0 %v551, 32
        %v4725 = vpop.permute.xlu0 %4724
        %4726 = vrot.lane.b32.xlu0 %v557, 32
        %v4727 = vpop.permute.xlu0 %4726
        %4728 = vrot.lane.b32.xlu0 %v563, 32
        %v4729 = vpop.permute.xlu0 %4728
        %4730 = vrot.lane.b32.xlu0 %v569, 32
        %v4731 = vpop.permute.xlu0 %4730
        %4732 = vrot.lane.b32.xlu0 %v575, 32
        %v4733 = vpop.permute.xlu0 %4732
        %4734 = vrot.lane.b32.xlu0 %v581, 32
        %v4735 = vpop.permute.xlu0 %4734
        %4736 = vrot.lane.b32.xlu0 %v587, 32
        %v4737 = vpop.permute.xlu0 %4736
        %4738 = vrot.lane.b32.xlu0 %v593, 32
        %v4739 = vpop.permute.xlu0 %4738
        %4740 = vrot.lane.b32.xlu0 %v599, 32
        %v4741 = vpop.permute.xlu0 %4740
        %4742 = vrot.lane.b32.xlu0 %v605, 32
        %v4743 = vpop.permute.xlu0 %4742
        %4744 = vrot.lane.b32.xlu0 %v611, 32
        %v4745 = vpop.permute.xlu0 %4744
        %4746 = vrot.lane.b32.xlu0 %v617, 32
        %v4747 = vpop.permute.xlu0 %4746
        %4748 = vrot.lane.b32.xlu0 %v623, 32
        %v4749 = vpop.permute.xlu0 %4748
        %4750 = vrot.lane.b32.xlu0 %v629, 32
        %v4751 = vpop.permute.xlu0 %4750
        %4752 = vrot.lane.b32.xlu0 %v635, 32
        %v4753 = vpop.permute.xlu0 %4752
        %4754 = vrot.lane.b32.xlu0 %v641, 32
        %v4755 = vpop.permute.xlu0 %4754
        %v4756 = vsel %vm1108, %v4693, 0
        %v4758 = vsel %vm1108, %v4695, 0
        %v4760 = vsel %vm1108, %v4697, 0
        %v4762 = vsel %vm1108, %v4699, 0
        %v4764 = vsel %vm1108, %v4701, 0
        %v4766 = vsel %vm1108, %v4703, 0
        %v4768 = vsel %vm1108, %v4705, 0
        %v4770 = vsel %vm1108, %v4707, 0
        %v4772 = vsel %vm1108, %v4709, 0
        %v4774 = vsel %vm1108, %v4711, 0
        %v4776 = vsel %vm1108, %v4713, 0
        %v4778 = vsel %vm1108, %v4715, 0
        %v4780 = vsel %vm1108, %v4717, 0
        %v4782 = vsel %vm1108, %v4719, 0
        %v4784 = vsel %vm1108, %v4721, 0
        %v4786 = vsel %vm1108, %v4723, 0
        %v4788 = vsel %vm1108, %v4725, 0
        %v4790 = vsel %vm1108, %v4727, 0
        %v4792 = vsel %vm1108, %v4729, 0
        %v4794 = vsel %vm1108, %v4731, 0
        %v4796 = vsel %vm1108, %v4733, 0
        %v4798 = vsel %vm1108, %v4735, 0
        %v4800 = vsel %vm1108, %v4737, 0
        %v4802 = vsel %vm1108, %v4739, 0
        %v4804 = vsel %vm1108, %v4741, 0
        %v4806 = vsel %vm1108, %v4743, 0
        %v4808 = vsel %vm1108, %v4745, 0
        %v4810 = vsel %vm1108, %v4747, 0
        %v4812 = vsel %vm1108, %v4749, 0
        %v4814 = vsel %vm1108, %v4751, 0
        %v4816 = vsel %vm1108, %v4753, 0
        %v4818 = vsel %vm1108, %v4755, 0
        %4820 = vmatprep.subr.mxu0 0.0
        %4821 = vmatpush1.xpose.msra.mxu0 %v4788
        %4822 = vmatprep.subr.mxu0 0.0
        %4823 = vmatpush1.xpose.msra.mxu0 %v4790
        %4824 = vmatprep.subr.mxu0 0.0
        %4825 = vmatpush1.xpose.msra.mxu0 %v4792
        %4826 = vmatprep.subr.mxu0 0.0
        %4827 = vmatpush1.xpose.msra.mxu0 %v4794
        %4828 = vmatprep.subr.mxu0 0.0
        %4829 = vmatpush1.xpose.msra.mxu0 %v4796
        %4830 = vmatprep.subr.mxu0 0.0
        %4831 = vmatpush1.xpose.msra.mxu0 %v4798
        %4832 = vmatprep.subr.mxu0 0.0
        %4833 = vmatpush1.xpose.msra.mxu0 %v4800
        %4834 = vmatprep.subr.mxu0 0.0
        %4835 = vmatpush1.xpose.msra.mxu0 %v4802
        %4836 = vmatprep.subr.mxu0 0.0
        %4837 = vmatpush1.xpose.msra.mxu0 %v4804
        %4838 = vmatprep.subr.mxu0 0.0
        %4839 = vmatpush1.xpose.msra.mxu0 %v4806
        %4840 = vmatprep.subr.mxu0 0.0
        %4841 = vmatpush1.xpose.msra.mxu0 %v4808
        %4842 = vmatprep.subr.mxu0 0.0
        %4843 = vmatpush1.xpose.msra.mxu0 %v4810
        %4844 = vmatprep.subr.mxu0 0.0
        %4845 = vmatpush1.xpose.msra.mxu0 %v4812
        %4846 = vmatprep.subr.mxu0 0.0
        %4847 = vmatpush1.xpose.msra.mxu0 %v4814
        %4848 = vmatprep.subr.mxu0 0.0
        %4849 = vmatpush1.xpose.msra.mxu0 %v4816
        %4850 = vmatprep.subr.mxu0 0.0
        %4851 = vmatpush1.xpose.msra.mxu0 %v4818
        %4852 = vmatprep.subr.mxu0 0.0
        %4853 = vmatpush1.xpose.msra.mxu0 0.0
        %4854 = vmatprep.subr.mxu0 0.0
        %4855 = vmatpush1.xpose.msra.mxu0 0.0
        %4856 = vmatprep.subr.mxu0 0.0
        %4857 = vmatpush1.xpose.msra.mxu0 0.0
        %4858 = vmatprep.subr.mxu0 0.0
        %4859 = vmatpush1.xpose.msra.mxu0 0.0
        %4860 = vmatprep.subr.mxu0 0.0
        %4861 = vmatpush1.xpose.msra.mxu0 0.0
        %4862 = vmatprep.subr.mxu0 0.0
        %4863 = vmatpush1.xpose.msra.mxu0 0.0
        %4864 = vmatprep.subr.mxu0 0.0
        %4865 = vmatpush1.xpose.msra.mxu0 0.0
        %4866 = vmatprep.subr.mxu0 0.0
        %4867 = vmatpush1.xpose.msra.mxu0 0.0
        %4868 = vmatprep.subr.mxu0 0.0
        %4869 = vmatpush1.xpose.msra.mxu0 0.0
        %4870 = vmatprep.subr.mxu0 0.0
        %4871 = vmatpush1.xpose.msra.mxu0 0.0
        %4872 = vmatprep.subr.mxu0 0.0
        %4873 = vmatpush1.xpose.msra.mxu0 0.0
        %4874 = vmatprep.subr.mxu0 0.0
        %4875 = vmatpush1.xpose.msra.mxu0 0.0
        %4876 = vmatprep.subr.mxu0 0.0
        %4877 = vmatpush1.xpose.msra.mxu0 0.0
        %4878 = vmatprep.subr.mxu0 0.0
        %4879 = vmatpush1.xpose.msra.mxu0 0.0
        %4880 = vmatprep.subr.mxu0 0.0
        %4881 = vmatpush1.xpose.msra.mxu0 0.0
        %4882 = vmatprep.subr.mxu0 0.0
        %4883 = vmatpush1.xpose.msra.mxu0 0.0
        %4884 = vmatprep.mubr.f32.mxu0 0.0
        %4885 = vmatmul.mubr.f32.gmra.mrb[0].mxu0 %v4756
        %v4886 = vpop.f32.mrb[0].mxu0
        %v4887 = vadd.f32 %v4676, %v4886
        %v4888 = vpop.f32.mrb[0].mxu0
        %4889 = vmatprep.mubr.f32.mxu0 0.0
        %4890 = vmatmul.mubr.f32.gmra.mrb[0].mxu0 %v4758
        %v4891 = vpop.f32.mrb[0].mxu0
        %v4892 = vadd.f32 %v4677, %v4891
        %v4893 = vpop.f32.mrb[0].mxu0
        %4894 = vmatprep.mubr.f32.mxu0 0.0
        %4895 = vmatmul.mubr.f32.gmra.mrb[0].mxu0 %v4760
        %v4896 = vpop.f32.mrb[0].mxu0
        %v4897 = vadd.f32 %v4678, %v4896
        %v4898 = vpop.f32.mrb[0].mxu0
        %4899 = vmatprep.mubr.f32.mxu0 0.0
        %4900 = vmatmul.mubr.f32.gmra.mrb[0].mxu0 %v4762
        %v4901 = vpop.f32.mrb[0].mxu0
        %v4902 = vadd.f32 %v4679, %v4901
        %v4903 = vpop.f32.mrb[0].mxu0
        %4904 = vmatprep.mubr.f32.mxu0 0.0
        %4905 = vmatmul.mubr.f32.gmra.mrb[0].mxu0 %v4764
        %v4906 = vpop.f32.mrb[0].mxu0
        %v4907 = vadd.f32 %v4680, %v4906
        %v4908 = vpop.f32.mrb[0].mxu0
        %4909 = vmatprep.mubr.f32.mxu0 0.0
        %4910 = vmatmul.mubr.f32.gmra.mrb[0].mxu0 %v4766
        %v4911 = vpop.f32.mrb[0].mxu0
        %v4912 = vadd.f32 %v4681, %v4911
        %v4913 = vpop.f32.mrb[0].mxu0
        %4914 = vmatprep.mubr.f32.mxu0 0.0
        %4915 = vmatmul.mubr.f32.gmra.mrb[0].mxu0 %v4768
        %v4916 = vpop.f32.mrb[0].mxu0
        %v4917 = vadd.f32 %v4682, %v4916
        %v4918 = vpop.f32.mrb[0].mxu0
        %4919 = vmatprep.mubr.f32.mxu0 0.0
        %4920 = vmatmul.mubr.f32.gmra.mrb[0].mxu0 %v4770
        %v4921 = vpop.f32.mrb[0].mxu0
        %v4922 = vadd.f32 %v4683, %v4921
        %v4923 = vpop.f32.mrb[0].mxu0
        %4924 = vmatprep.mubr.f32.mxu0 0.0
        %4925 = vmatmul.mubr.f32.gmra.mrb[0].mxu0 %v4772
        %v4926 = vpop.f32.mrb[0].mxu0
        %v4927 = vadd.f32 %v4684, %v4926
        %v4928 = vpop.f32.mrb[0].mxu0
        %4929 = vmatprep.mubr.f32.mxu0 0.0
        %4930 = vmatmul.mubr.f32.gmra.mrb[0].mxu0 %v4774
        %v4931 = vpop.f32.mrb[0].mxu0
        %v4932 = vadd.f32 %v4685, %v4931
        %v4933 = vpop.f32.mrb[0].mxu0
        %4934 = vmatprep.mubr.f32.mxu0 0.0
        %4935 = vmatmul.mubr.f32.gmra.mrb[0].mxu0 %v4776
        %v4936 = vpop.f32.mrb[0].mxu0
        %v4937 = vadd.f32 %v4686, %v4936
        %v4938 = vpop.f32.mrb[0].mxu0
        %4939 = vmatprep.mubr.f32.mxu0 0.0
        %4940 = vmatmul.mubr.f32.gmra.mrb[0].mxu0 %v4778
        %v4941 = vpop.f32.mrb[0].mxu0
        %v4942 = vadd.f32 %v4687, %v4941
        %v4943 = vpop.f32.mrb[0].mxu0
        %4944 = vmatprep.mubr.f32.mxu0 0.0
        %4945 = vmatmul.mubr.f32.gmra.mrb[0].mxu0 %v4780
        %v4946 = vpop.f32.mrb[0].mxu0
        %v4947 = vadd.f32 %v4688, %v4946
        %v4948 = vpop.f32.mrb[0].mxu0
        %4949 = vmatprep.mubr.f32.mxu0 0.0
        %4950 = vmatmul.mubr.f32.gmra.mrb[0].mxu0 %v4782
        %v4951 = vpop.f32.mrb[0].mxu0
        %v4952 = vadd.f32 %v4689, %v4951
        %v4953 = vpop.f32.mrb[0].mxu0
        %4954 = vmatprep.mubr.f32.mxu0 0.0
        %4955 = vmatmul.mubr.f32.gmra.mrb[0].mxu0 %v4784
        %v4956 = vpop.f32.mrb[0].mxu0
        %v4957 = vadd.f32 %v4690, %v4956
        %v4958 = vpop.f32.mrb[0].mxu0
        %4959 = vmatprep.mubr.f32.mxu0 0.0
        %4960 = vmatmul.mubr.f32.gmra.mrb[0].mxu0 %v4786
        %v4961 = vpop.f32.mrb[0].mxu0
        %v4962 = vadd.f32 %v4691, %v4961
        %v4963 = vpop.f32.mrb[0].mxu0
        %4964 = vdwg.mxu0
        %4965 = vrot.lane.b32.xlu0 %v980, 32
        %v4966 = vpop.permute.xlu0 %4965
        %4967 = vrot.lane.b32.xlu0 %v981, 32
        %v4968 = vpop.permute.xlu0 %4967
        %4969 = vrot.lane.b32.xlu0 %v982, 32
        %v4970 = vpop.permute.xlu0 %4969
        %4971 = vrot.lane.b32.xlu0 %v983, 32
        %v4972 = vpop.permute.xlu0 %4971
        %4973 = vrot.lane.b32.xlu0 %v984, 32
        %v4974 = vpop.permute.xlu0 %4973
        %4975 = vrot.lane.b32.xlu0 %v985, 32
        %v4976 = vpop.permute.xlu0 %4975
        %4977 = vrot.lane.b32.xlu0 %v986, 32
        %v4978 = vpop.permute.xlu0 %4977
        %4979 = vrot.lane.b32.xlu0 %v987, 32
        %v4980 = vpop.permute.xlu0 %4979
        %4981 = vrot.lane.b32.xlu0 %v988, 32
        %v4982 = vpop.permute.xlu0 %4981
        %4983 = vrot.lane.b32.xlu0 %v989, 32
        %v4984 = vpop.permute.xlu0 %4983
        %4985 = vrot.lane.b32.xlu0 %v990, 32
        %v4986 = vpop.permute.xlu0 %4985
        %4987 = vrot.lane.b32.xlu0 %v991, 32
        %v4988 = vpop.permute.xlu0 %4987
        %4989 = vrot.lane.b32.xlu0 %v992, 32
        %v4990 = vpop.permute.xlu0 %4989
        %4991 = vrot.lane.b32.xlu0 %v993, 32
        %v4992 = vpop.permute.xlu0 %4991
        %4993 = vrot.lane.b32.xlu0 %v994, 32
        %v4994 = vpop.permute.xlu0 %4993
        %4995 = vrot.lane.b32.xlu0 %v995, 32
        %v4996 = vpop.permute.xlu0 %4995
        %4997 = vrot.lane.b32.xlu0 %v647, 32
        %v4998 = vpop.permute.xlu0 %4997
        %4999 = vrot.lane.b32.xlu0 %v653, 32
        %v5000 = vpop.permute.xlu0 %4999
        %5001 = vrot.lane.b32.xlu0 %v659, 32
        %v5002 = vpop.permute.xlu0 %5001
        %5003 = vrot.lane.b32.xlu0 %v665, 32
        %v5004 = vpop.permute.xlu0 %5003
        %5005 = vrot.lane.b32.xlu0 %v671, 32
        %v5006 = vpop.permute.xlu0 %5005
        %5007 = vrot.lane.b32.xlu0 %v677, 32
        %v5008 = vpop.permute.xlu0 %5007
        %5009 = vrot.lane.b32.xlu0 %v683, 32
        %v5010 = vpop.permute.xlu0 %5009
        %5011 = vrot.lane.b32.xlu0 %v689, 32
        %v5012 = vpop.permute.xlu0 %5011
        %5013 = vrot.lane.b32.xlu0 %v695, 32
        %v5014 = vpop.permute.xlu0 %5013
        %5015 = vrot.lane.b32.xlu0 %v701, 32
        %v5016 = vpop.permute.xlu0 %5015
        %5017 = vrot.lane.b32.xlu0 %v707, 32
        %v5018 = vpop.permute.xlu0 %5017
        %5019 = vrot.lane.b32.xlu0 %v713, 32
        %v5020 = vpop.permute.xlu0 %5019
        %5021 = vrot.lane.b32.xlu0 %v719, 32
        %v5022 = vpop.permute.xlu0 %5021
        %5023 = vrot.lane.b32.xlu0 %v725, 32
        %v5024 = vpop.permute.xlu0 %5023
        %5025 = vrot.lane.b32.xlu0 %v731, 32
        %v5026 = vpop.permute.xlu0 %5025
        %5027 = vrot.lane.b32.xlu0 %v737, 32
        %v5028 = vpop.permute.xlu0 %5027
        %v5029 = vsel %vm1108, %v4966, 0
        %v5031 = vsel %vm1108, %v4968, 0
        %v5033 = vsel %vm1108, %v4970, 0
        %v5035 = vsel %vm1108, %v4972, 0
        %v5037 = vsel %vm1108, %v4974, 0
        %v5039 = vsel %vm1108, %v4976, 0
        %v5041 = vsel %vm1108, %v4978, 0
        %v5043 = vsel %vm1108, %v4980, 0
        %v5045 = vsel %vm1108, %v4982, 0
        %v5047 = vsel %vm1108, %v4984, 0
        %v5049 = vsel %vm1108, %v4986, 0
        %v5051 = vsel %vm1108, %v4988, 0
        %v5053 = vsel %vm1108, %v4990, 0
        %v5055 = vsel %vm1108, %v4992, 0
        %v5057 = vsel %vm1108, %v4994, 0
        %v5059 = vsel %vm1108, %v4996, 0
        %v5061 = vsel %vm1108, %v4998, 0
        %v5063 = vsel %vm1108, %v5000, 0
        %v5065 = vsel %vm1108, %v5002, 0
        %v5067 = vsel %vm1108, %v5004, 0
        %v5069 = vsel %vm1108, %v5006, 0
        %v5071 = vsel %vm1108, %v5008, 0
        %v5073 = vsel %vm1108, %v5010, 0
        %v5075 = vsel %vm1108, %v5012, 0
        %v5077 = vsel %vm1108, %v5014, 0
        %v5079 = vsel %vm1108, %v5016, 0
        %v5081 = vsel %vm1108, %v5018, 0
        %v5083 = vsel %vm1108, %v5020, 0
        %v5085 = vsel %vm1108, %v5022, 0
        %v5087 = vsel %vm1108, %v5024, 0
        %v5089 = vsel %vm1108, %v5026, 0
        %v5091 = vsel %vm1108, %v5028, 0
        %5093 = vmatprep.subr.mxu0 0.0
        %5094 = vmatpush1.xpose.msra.mxu0 %v5061
        %5095 = vmatprep.subr.mxu0 0.0
        %5096 = vmatpush1.xpose.msra.mxu0 %v5063
        %5097 = vmatprep.subr.mxu0 0.0
        %5098 = vmatpush1.xpose.msra.mxu0 %v5065
        %5099 = vmatprep.subr.mxu0 0.0
        %5100 = vmatpush1.xpose.msra.mxu0 %v5067
        %5101 = vmatprep.subr.mxu0 0.0
        %5102 = vmatpush1.xpose.msra.mxu0 %v5069
        %5103 = vmatprep.subr.mxu0 0.0
        %5104 = vmatpush1.xpose.msra.mxu0 %v5071
        %5105 = vmatprep.subr.mxu0 0.0
        %5106 = vmatpush1.xpose.msra.mxu0 %v5073
        %5107 = vmatprep.subr.mxu0 0.0
        %5108 = vmatpush1.xpose.msra.mxu0 %v5075
        %5109 = vmatprep.subr.mxu0 0.0
        %5110 = vmatpush1.xpose.msra.mxu0 %v5077
        %5111 = vmatprep.subr.mxu0 0.0
        %5112 = vmatpush1.xpose.msra.mxu0 %v5079
        %5113 = vmatprep.subr.mxu0 0.0
        %5114 = vmatpush1.xpose.msra.mxu0 %v5081
        %5115 = vmatprep.subr.mxu0 0.0
        %5116 = vmatpush1.xpose.msra.mxu0 %v5083
        %5117 = vmatprep.subr.mxu0 0.0
        %5118 = vmatpush1.xpose.msra.mxu0 %v5085
        %5119 = vmatprep.subr.mxu0 0.0
        %5120 = vmatpush1.xpose.msra.mxu0 %v5087
        %5121 = vmatprep.subr.mxu0 0.0
        %5122 = vmatpush1.xpose.msra.mxu0 %v5089
        %5123 = vmatprep.subr.mxu0 0.0
        %5124 = vmatpush1.xpose.msra.mxu0 %v5091
        %5125 = vmatprep.subr.mxu0 0.0
        %5126 = vmatpush1.xpose.msra.mxu0 0.0
        %5127 = vmatprep.subr.mxu0 0.0
        %5128 = vmatpush1.xpose.msra.mxu0 0.0
        %5129 = vmatprep.subr.mxu0 0.0
        %5130 = vmatpush1.xpose.msra.mxu0 0.0
        %5131 = vmatprep.subr.mxu0 0.0
        %5132 = vmatpush1.xpose.msra.mxu0 0.0
        %5133 = vmatprep.subr.mxu0 0.0
        %5134 = vmatpush1.xpose.msra.mxu0 0.0
        %5135 = vmatprep.subr.mxu0 0.0
        %5136 = vmatpush1.xpose.msra.mxu0 0.0
        %5137 = vmatprep.subr.mxu0 0.0
        %5138 = vmatpush1.xpose.msra.mxu0 0.0
        %5139 = vmatprep.subr.mxu0 0.0
        %5140 = vmatpush1.xpose.msra.mxu0 0.0
        %5141 = vmatprep.subr.mxu0 0.0
        %5142 = vmatpush1.xpose.msra.mxu0 0.0
        %5143 = vmatprep.subr.mxu0 0.0
        %5144 = vmatpush1.xpose.msra.mxu0 0.0
        %5145 = vmatprep.subr.mxu0 0.0
        %5146 = vmatpush1.xpose.msra.mxu0 0.0
        %5147 = vmatprep.subr.mxu0 0.0
        %5148 = vmatpush1.xpose.msra.mxu0 0.0
        %5149 = vmatprep.subr.mxu0 0.0
        %5150 = vmatpush1.xpose.msra.mxu0 0.0
        %5151 = vmatprep.subr.mxu0 0.0
        %5152 = vmatpush1.xpose.msra.mxu0 0.0
        %5153 = vmatprep.subr.mxu0 0.0
        %5154 = vmatpush1.xpose.msra.mxu0 0.0
        %5155 = vmatprep.subr.mxu0 0.0
        %5156 = vmatpush1.xpose.msra.mxu0 0.0
        %5157 = vmatprep.mubr.f32.mxu0 0.0
        %5158 = vmatmul.mubr.f32.gmra.mrb[0].mxu0 %v5029
        %v5159 = vpop.f32.mrb[0].mxu0
        %v5160 = vadd.f32 %v4676, %v5159
        %v5161 = vpop.f32.mrb[0].mxu0
        %5162 = vmatprep.mubr.f32.mxu0 0.0
        %5163 = vmatmul.mubr.f32.gmra.mrb[0].mxu0 %v5031
        %v5164 = vpop.f32.mrb[0].mxu0
        %v5165 = vadd.f32 %v4677, %v5164
        %v5166 = vpop.f32.mrb[0].mxu0
        %5167 = vmatprep.mubr.f32.mxu0 0.0
        %5168 = vmatmul.mubr.f32.gmra.mrb[0].mxu0 %v5033
        %v5169 = vpop.f32.mrb[0].mxu0
        %v5170 = vadd.f32 %v4678, %v5169
        %v5171 = vpop.f32.mrb[0].mxu0
        %5172 = vmatprep.mubr.f32.mxu0 0.0
        %5173 = vmatmul.mubr.f32.gmra.mrb[0].mxu0 %v5035
        %v5174 = vpop.f32.mrb[0].mxu0
        %v5175 = vadd.f32 %v4679, %v5174
        %v5176 = vpop.f32.mrb[0].mxu0
        %5177 = vmatprep.mubr.f32.mxu0 0.0
        %5178 = vmatmul.mubr.f32.gmra.mrb[0].mxu0 %v5037
        %v5179 = vpop.f32.mrb[0].mxu0
        %v5180 = vadd.f32 %v4680, %v5179
        %v5181 = vpop.f32.mrb[0].mxu0
        %5182 = vmatprep.mubr.f32.mxu0 0.0
        %5183 = vmatmul.mubr.f32.gmra.mrb[0].mxu0 %v5039
        %v5184 = vpop.f32.mrb[0].mxu0
        %v5185 = vadd.f32 %v4681, %v5184
        %v5186 = vpop.f32.mrb[0].mxu0
        %5187 = vmatprep.mubr.f32.mxu0 0.0
        %5188 = vmatmul.mubr.f32.gmra.mrb[0].mxu0 %v5041
        %v5189 = vpop.f32.mrb[0].mxu0
        %v5190 = vadd.f32 %v4682, %v5189
        %v5191 = vpop.f32.mrb[0].mxu0
        %5192 = vmatprep.mubr.f32.mxu0 0.0
        %5193 = vmatmul.mubr.f32.gmra.mrb[0].mxu0 %v5043
        %v5194 = vpop.f32.mrb[0].mxu0
        %v5195 = vadd.f32 %v4683, %v5194
        %v5196 = vpop.f32.mrb[0].mxu0
        %5197 = vmatprep.mubr.f32.mxu0 0.0
        %5198 = vmatmul.mubr.f32.gmra.mrb[0].mxu0 %v5045
        %v5199 = vpop.f32.mrb[0].mxu0
        %v5200 = vadd.f32 %v4684, %v5199
        %v5201 = vpop.f32.mrb[0].mxu0
        %5202 = vmatprep.mubr.f32.mxu0 0.0
        %5203 = vmatmul.mubr.f32.gmra.mrb[0].mxu0 %v5047
        %v5204 = vpop.f32.mrb[0].mxu0
        %v5205 = vadd.f32 %v4685, %v5204
        %v5206 = vpop.f32.mrb[0].mxu0
        %5207 = vmatprep.mubr.f32.mxu0 0.0
        %5208 = vmatmul.mubr.f32.gmra.mrb[0].mxu0 %v5049
        %v5209 = vpop.f32.mrb[0].mxu0
        %v5210 = vadd.f32 %v4686, %v5209
        %v5211 = vpop.f32.mrb[0].mxu0
        %5212 = vmatprep.mubr.f32.mxu0 0.0
        %5213 = vmatmul.mubr.f32.gmra.mrb[0].mxu0 %v5051
        %v5214 = vpop.f32.mrb[0].mxu0
        %v5215 = vadd.f32 %v4687, %v5214
        %v5216 = vpop.f32.mrb[0].mxu0
        %5217 = vmatprep.mubr.f32.mxu0 0.0
        %5218 = vmatmul.mubr.f32.gmra.mrb[0].mxu0 %v5053
        %v5219 = vpop.f32.mrb[0].mxu0
        %v5220 = vadd.f32 %v4688, %v5219
        %v5221 = vpop.f32.mrb[0].mxu0
        %5222 = vmatprep.mubr.f32.mxu0 0.0
        %5223 = vmatmul.mubr.f32.gmra.mrb[0].mxu0 %v5055
        %v5224 = vpop.f32.mrb[0].mxu0
        %v5225 = vadd.f32 %v4689, %v5224
        %v5226 = vpop.f32.mrb[0].mxu0
        %5227 = vmatprep.mubr.f32.mxu0 0.0
        %5228 = vmatmul.mubr.f32.gmra.mrb[0].mxu0 %v5057
        %v5229 = vpop.f32.mrb[0].mxu0
        %v5230 = vadd.f32 %v4690, %v5229
        %v5231 = vpop.f32.mrb[0].mxu0
        %5232 = vmatprep.mubr.f32.mxu0 0.0
        %5233 = vmatmul.mubr.f32.gmra.mrb[0].mxu0 %v5059
        %v5234 = vpop.f32.mrb[0].mxu0
        %v5235 = vadd.f32 %v4691, %v5234
        %v5236 = vpop.f32.mrb[0].mxu0
        %5237 = vdwg.mxu0
        %5238 = vmax.xlane.f32.xlu0 %v4887
        %v5239 = vpop.xlane.xlu0 %5238
        %5240 = vmax.xlane.f32.xlu0 %v4892
        %v5241 = vpop.xlane.xlu0 %5240
        %5242 = vmax.xlane.f32.xlu0 %v4897
        %v5243 = vpop.xlane.xlu0 %5242
        %5244 = vmax.xlane.f32.xlu0 %v4902
        %v5245 = vpop.xlane.xlu0 %5244
        %5246 = vmax.xlane.f32.xlu0 %v4907
        %v5247 = vpop.xlane.xlu0 %5246
        %5248 = vmax.xlane.f32.xlu0 %v4912
        %v5249 = vpop.xlane.xlu0 %5248
        %5250 = vmax.xlane.f32.xlu0 %v4917
        %v5251 = vpop.xlane.xlu0 %5250
        %5252 = vmax.xlane.f32.xlu0 %v4922
        %v5253 = vpop.xlane.xlu0 %5252
        %5254 = vmax.xlane.f32.xlu0 %v4927
        %v5255 = vpop.xlane.xlu0 %5254
        %5256 = vmax.xlane.f32.xlu0 %v4932
        %v5257 = vpop.xlane.xlu0 %5256
        %5258 = vmax.xlane.f32.xlu0 %v4937
        %v5259 = vpop.xlane.xlu0 %5258
        %5260 = vmax.xlane.f32.xlu0 %v4942
        %v5261 = vpop.xlane.xlu0 %5260
        %5262 = vmax.xlane.f32.xlu0 %v4947
        %v5263 = vpop.xlane.xlu0 %5262
        %5264 = vmax.xlane.f32.xlu0 %v4952
        %v5265 = vpop.xlane.xlu0 %5264
        %5266 = vmax.xlane.f32.xlu0 %v4957
        %v5267 = vpop.xlane.xlu0 %5266
        %5268 = vmax.xlane.f32.xlu0 %v4962
        %v5269 = vpop.xlane.xlu0 %5268
        %5270 = vmax.xlane.f32.xlu0 %v5160
        %v5271 = vpop.xlane.xlu0 %5270
        %5272 = vmax.xlane.f32.xlu0 %v5165
        %v5273 = vpop.xlane.xlu0 %5272
        %5274 = vmax.xlane.f32.xlu0 %v5170
        %v5275 = vpop.xlane.xlu0 %5274
        %5276 = vmax.xlane.f32.xlu0 %v5175
        %v5277 = vpop.xlane.xlu0 %5276
        %5278 = vmax.xlane.f32.xlu0 %v5180
        %v5279 = vpop.xlane.xlu0 %5278
        %5280 = vmax.xlane.f32.xlu0 %v5185
        %v5281 = vpop.xlane.xlu0 %5280
        %5282 = vmax.xlane.f32.xlu0 %v5190
        %v5283 = vpop.xlane.xlu0 %5282
        %5284 = vmax.xlane.f32.xlu0 %v5195
        %v5285 = vpop.xlane.xlu0 %5284
        %5286 = vmax.xlane.f32.xlu0 %v5200
        %v5287 = vpop.xlane.xlu0 %5286
        %5288 = vmax.xlane.f32.xlu0 %v5205
        %v5289 = vpop.xlane.xlu0 %5288
        %5290 = vmax.xlane.f32.xlu0 %v5210
        %v5291 = vpop.xlane.xlu0 %5290
        %5292 = vmax.xlane.f32.xlu0 %v5215
        %v5293 = vpop.xlane.xlu0 %5292
        %5294 = vmax.xlane.f32.xlu0 %v5220
        %v5295 = vpop.xlane.xlu0 %5294
        %5296 = vmax.xlane.f32.xlu0 %v5225
        %v5297 = vpop.xlane.xlu0 %5296
        %5298 = vmax.xlane.f32.xlu0 %v5230
        %v5299 = vpop.xlane.xlu0 %5298
        %5300 = vmax.xlane.f32.xlu0 %v5235
        %v5301 = vpop.xlane.xlu0 %5300
        %v5302 = vsub.f32 %v4887, %v5239
        %v5303 = vsub.f32 %v4892, %v5241
        %v5304 = vsub.f32 %v4897, %v5243
        %v5305 = vsub.f32 %v4902, %v5245
        %v5306 = vsub.f32 %v4907, %v5247
        %v5307 = vsub.f32 %v4912, %v5249
        %v5308 = vsub.f32 %v4917, %v5251
        %v5309 = vsub.f32 %v4922, %v5253
        %v5310 = vsub.f32 %v4927, %v5255
        %v5311 = vsub.f32 %v4932, %v5257
        %v5312 = vsub.f32 %v4937, %v5259
        %v5313 = vsub.f32 %v4942, %v5261
        %v5314 = vsub.f32 %v4947, %v5263
        %v5315 = vsub.f32 %v4952, %v5265
        %v5316 = vsub.f32 %v4957, %v5267
        %v5317 = vsub.f32 %v4962, %v5269
        %v5318 = vsub.f32 %v5160, %v5271
        %v5319 = vsub.f32 %v5165, %v5273
        %v5320 = vsub.f32 %v5170, %v5275
        %v5321 = vsub.f32 %v5175, %v5277
        %v5322 = vsub.f32 %v5180, %v5279
        %v5323 = vsub.f32 %v5185, %v5281
        %v5324 = vsub.f32 %v5190, %v5283
        %v5325 = vsub.f32 %v5195, %v5285
        %v5326 = vsub.f32 %v5200, %v5287
        %v5327 = vsub.f32 %v5205, %v5289
        %v5328 = vsub.f32 %v5210, %v5291
        %v5329 = vsub.f32 %v5215, %v5293
        %v5330 = vsub.f32 %v5220, %v5295
        %v5331 = vsub.f32 %v5225, %v5297
        %v5332 = vsub.f32 %v5230, %v5299
        %v5333 = vsub.f32 %v5235, %v5301
        %v5334 = vmul.f32 %v5302, 1.442695
        %v5335 = vpow.pop %v5334
        %v5336 = vmul.f32 %v5303, 1.442695
        %v5337 = vpow.pop %v5336
        %v5338 = vmul.f32 %v5304, 1.442695
        %v5339 = vpow.pop %v5338
        %v5340 = vmul.f32 %v5305, 1.442695
        %v5341 = vpow.pop %v5340
        %v5342 = vmul.f32 %v5306, 1.442695
        %v5343 = vpow.pop %v5342
        %v5344 = vmul.f32 %v5307, 1.442695
        %v5345 = vpow.pop %v5344
        %v5346 = vmul.f32 %v5308, 1.442695
        %v5347 = vpow.pop %v5346
        %v5348 = vmul.f32 %v5309, 1.442695
        %v5349 = vpow.pop %v5348
        %v5350 = vmul.f32 %v5310, 1.442695
        %v5351 = vpow.pop %v5350
        %v5352 = vmul.f32 %v5311, 1.442695
        %v5353 = vpow.pop %v5352
        %v5354 = vmul.f32 %v5312, 1.442695
        %v5355 = vpow.pop %v5354
        %v5356 = vmul.f32 %v5313, 1.442695
        %v5357 = vpow.pop %v5356
        %v5358 = vmul.f32 %v5314, 1.442695
        %v5359 = vpow.pop %v5358
        %v5360 = vmul.f32 %v5315, 1.442695
        %v5361 = vpow.pop %v5360
        %v5362 = vmul.f32 %v5316, 1.442695
        %v5363 = vpow.pop %v5362
        %v5364 = vmul.f32 %v5317, 1.442695
        %v5365 = vpow.pop %v5364
        %v5366 = vmul.f32 %v5318, 1.442695
        %v5367 = vpow.pop %v5366
        %v5368 = vmul.f32 %v5319, 1.442695
        %v5369 = vpow.pop %v5368
        %v5370 = vmul.f32 %v5320, 1.442695
        %v5371 = vpow.pop %v5370
        %v5372 = vmul.f32 %v5321, 1.442695
        %v5373 = vpow.pop %v5372
        %v5374 = vmul.f32 %v5322, 1.442695
        %v5375 = vpow.pop %v5374
        %v5376 = vmul.f32 %v5323, 1.442695
        %v5377 = vpow.pop %v5376
        %v5378 = vmul.f32 %v5324, 1.442695
        %v5379 = vpow.pop %v5378
        %v5380 = vmul.f32 %v5325, 1.442695
        %v5381 = vpow.pop %v5380
        %v5382 = vmul.f32 %v5326, 1.442695
        %v5383 = vpow.pop %v5382
        %v5384 = vmul.f32 %v5327, 1.442695
        %v5385 = vpow.pop %v5384
        %v5386 = vmul.f32 %v5328, 1.442695
        %v5387 = vpow.pop %v5386
        %v5388 = vmul.f32 %v5329, 1.442695
        %v5389 = vpow.pop %v5388
        %v5390 = vmul.f32 %v5330, 1.442695
        %v5391 = vpow.pop %v5390
        %v5392 = vmul.f32 %v5331, 1.442695
        %v5393 = vpow.pop %v5392
        %v5394 = vmul.f32 %v5332, 1.442695
        %v5395 = vpow.pop %v5394
        %v5396 = vmul.f32 %v5333, 1.442695
        %v5397 = vpow.pop %v5396
        %5398 = vadd.xlane.f32.xlu0 %v5335
        %v5399 = vpop.xlane.xlu0 %5398
        %5400 = vadd.xlane.f32.xlu0 %v5337
        %v5401 = vpop.xlane.xlu0 %5400
        %5402 = vadd.xlane.f32.xlu0 %v5339
        %v5403 = vpop.xlane.xlu0 %5402
        %5404 = vadd.xlane.f32.xlu0 %v5341
        %v5405 = vpop.xlane.xlu0 %5404
        %5406 = vadd.xlane.f32.xlu0 %v5343
        %v5407 = vpop.xlane.xlu0 %5406
        %5408 = vadd.xlane.f32.xlu0 %v5345
        %v5409 = vpop.xlane.xlu0 %5408
        %5410 = vadd.xlane.f32.xlu0 %v5347
        %v5411 = vpop.xlane.xlu0 %5410
        %5412 = vadd.xlane.f32.xlu0 %v5349
        %v5413 = vpop.xlane.xlu0 %5412
        %5414 = vadd.xlane.f32.xlu0 %v5351
        %v5415 = vpop.xlane.xlu0 %5414
        %5416 = vadd.xlane.f32.xlu0 %v5353
        %v5417 = vpop.xlane.xlu0 %5416
        %5418 = vadd.xlane.f32.xlu0 %v5355
        %v5419 = vpop.xlane.xlu0 %5418
        %5420 = vadd.xlane.f32.xlu0 %v5357
        %v5421 = vpop.xlane.xlu0 %5420
        %5422 = vadd.xlane.f32.xlu0 %v5359
        %v5423 = vpop.xlane.xlu0 %5422
        %5424 = vadd.xlane.f32.xlu0 %v5361
        %v5425 = vpop.xlane.xlu0 %5424
        %5426 = vadd.xlane.f32.xlu0 %v5363
        %v5427 = vpop.xlane.xlu0 %5426
        %5428 = vadd.xlane.f32.xlu0 %v5365
        %v5429 = vpop.xlane.xlu0 %5428
        %5430 = vadd.xlane.f32.xlu0 %v5367
        %v5431 = vpop.xlane.xlu0 %5430
        %5432 = vadd.xlane.f32.xlu0 %v5369
        %v5433 = vpop.xlane.xlu0 %5432
        %5434 = vadd.xlane.f32.xlu0 %v5371
        %v5435 = vpop.xlane.xlu0 %5434
        %5436 = vadd.xlane.f32.xlu0 %v5373
        %v5437 = vpop.xlane.xlu0 %5436
        %5438 = vadd.xlane.f32.xlu0 %v5375
        %v5439 = vpop.xlane.xlu0 %5438
        %5440 = vadd.xlane.f32.xlu0 %v5377
        %v5441 = vpop.xlane.xlu0 %5440
        %5442 = vadd.xlane.f32.xlu0 %v5379
        %v5443 = vpop.xlane.xlu0 %5442
        %5444 = vadd.xlane.f32.xlu0 %v5381
        %v5445 = vpop.xlane.xlu0 %5444
        %5446 = vadd.xlane.f32.xlu0 %v5383
        %v5447 = vpop.xlane.xlu0 %5446
        %5448 = vadd.xlane.f32.xlu0 %v5385
        %v5449 = vpop.xlane.xlu0 %5448
        %5450 = vadd.xlane.f32.xlu0 %v5387
        %v5451 = vpop.xlane.xlu0 %5450
        %5452 = vadd.xlane.f32.xlu0 %v5389
        %v5453 = vpop.xlane.xlu0 %5452
        %5454 = vadd.xlane.f32.xlu0 %v5391
        %v5455 = vpop.xlane.xlu0 %5454
        %5456 = vadd.xlane.f32.xlu0 %v5393
        %v5457 = vpop.xlane.xlu0 %5456
        %5458 = vadd.xlane.f32.xlu0 %v5395
        %v5459 = vpop.xlane.xlu0 %5458
        %5460 = vadd.xlane.f32.xlu0 %v5397
        %v5461 = vpop.xlane.xlu0 %5460
        %5462 = vrot.lane.b32.xlu0 %v806, 32
        %v5463 = vpop.permute.xlu0 %5462
        %5464 = vrot.lane.b32.xlu0 %v811, 32
        %v5465 = vpop.permute.xlu0 %5464
        %5466 = vrot.lane.b32.xlu0 %v816, 32
        %v5467 = vpop.permute.xlu0 %5466
        %5468 = vrot.lane.b32.xlu0 %v821, 32
        %v5469 = vpop.permute.xlu0 %5468
        %5470 = vrot.lane.b32.xlu0 %v826, 32
        %v5471 = vpop.permute.xlu0 %5470
        %5472 = vrot.lane.b32.xlu0 %v831, 32
        %v5473 = vpop.permute.xlu0 %5472
        %5474 = vrot.lane.b32.xlu0 %v836, 32
        %v5475 = vpop.permute.xlu0 %5474
        %5476 = vrot.lane.b32.xlu0 %v841, 32
        %v5477 = vpop.permute.xlu0 %5476
        %5478 = vrot.lane.b32.xlu0 %v846, 32
        %v5479 = vpop.permute.xlu0 %5478
        %5480 = vrot.lane.b32.xlu0 %v851, 32
        %v5481 = vpop.permute.xlu0 %5480
        %5482 = vrot.lane.b32.xlu0 %v856, 32
        %v5483 = vpop.permute.xlu0 %5482
        %5484 = vrot.lane.b32.xlu0 %v861, 32
        %v5485 = vpop.permute.xlu0 %5484
        %5486 = vrot.lane.b32.xlu0 %v866, 32
        %v5487 = vpop.permute.xlu0 %5486
        %5488 = vrot.lane.b32.xlu0 %v871, 32
        %v5489 = vpop.permute.xlu0 %5488
        %5490 = vrot.lane.b32.xlu0 %v876, 32
        %v5491 = vpop.permute.xlu0 %5490
        %5492 = vrot.lane.b32.xlu0 %v881, 32
        %v5493 = vpop.permute.xlu0 %5492
        %5510 = vmatprep.subr.mxu0 0.0
        %5511 = vmatpush1.msra.mxu0 %v5463
        %5512 = vmatprep.subr.mxu0 0.0
        %5513 = vmatpush1.msra.mxu0 %v5465
        %5514 = vmatprep.subr.mxu0 0.0
        %5515 = vmatpush1.msra.mxu0 %v5467
        %5516 = vmatprep.subr.mxu0 0.0
        %5517 = vmatpush1.msra.mxu0 %v5469
        %5518 = vmatprep.subr.mxu0 0.0
        %5519 = vmatpush1.msra.mxu0 %v5471
        %5520 = vmatprep.subr.mxu0 0.0
        %5521 = vmatpush1.msra.mxu0 %v5473
        %5522 = vmatprep.subr.mxu0 0.0
        %5523 = vmatpush1.msra.mxu0 %v5475
        %5524 = vmatprep.subr.mxu0 0.0
        %5525 = vmatpush1.msra.mxu0 %v5477
        %5526 = vmatprep.subr.mxu0 0.0
        %5527 = vmatpush1.msra.mxu0 %v5479
        %5528 = vmatprep.subr.mxu0 0.0
        %5529 = vmatpush1.msra.mxu0 %v5481
        %5530 = vmatprep.subr.mxu0 0.0
        %5531 = vmatpush1.msra.mxu0 %v5483
        %5532 = vmatprep.subr.mxu0 0.0
        %5533 = vmatpush1.msra.mxu0 %v5485
        %5534 = vmatprep.subr.mxu0 0.0
        %5535 = vmatpush1.msra.mxu0 %v5487
        %5536 = vmatprep.subr.mxu0 0.0
        %5537 = vmatpush1.msra.mxu0 %v5489
        %5538 = vmatprep.subr.mxu0 0.0
        %5539 = vmatpush1.msra.mxu0 %v5491
        %5540 = vmatprep.subr.mxu0 0.0
        %5541 = vmatpush1.msra.mxu0 %v5493
        %5542 = vmatprep.subr.mxu0 0.0
        %5543 = vmatpush1.msra.mxu0 0.0
        %5544 = vmatprep.subr.mxu0 0.0
        %5545 = vmatpush1.msra.mxu0 0.0
        %5546 = vmatprep.subr.mxu0 0.0
        %5547 = vmatpush1.msra.mxu0 0.0
        %5548 = vmatprep.subr.mxu0 0.0
        %5549 = vmatpush1.msra.mxu0 0.0
        %5550 = vmatprep.subr.mxu0 0.0
        %5551 = vmatpush1.msra.mxu0 0.0
        %5552 = vmatprep.subr.mxu0 0.0
        %5553 = vmatpush1.msra.mxu0 0.0
        %5554 = vmatprep.subr.mxu0 0.0
        %5555 = vmatpush1.msra.mxu0 0.0
        %5556 = vmatprep.subr.mxu0 0.0
        %5557 = vmatpush1.msra.mxu0 0.0
        %5558 = vmatprep.subr.mxu0 0.0
        %5559 = vmatpush1.msra.mxu0 0.0
        %5560 = vmatprep.subr.mxu0 0.0
        %5561 = vmatpush1.msra.mxu0 0.0
        %5562 = vmatprep.subr.mxu0 0.0
        %5563 = vmatpush1.msra.mxu0 0.0
        %5564 = vmatprep.subr.mxu0 0.0
        %5565 = vmatpush1.msra.mxu0 0.0
        %5566 = vmatprep.subr.mxu0 0.0
        %5567 = vmatpush1.msra.mxu0 0.0
        %5568 = vmatprep.subr.mxu0 0.0
        %5569 = vmatpush1.msra.mxu0 0.0
        %5570 = vmatprep.subr.mxu0 0.0
        %5571 = vmatpush1.msra.mxu0 0.0
        %5572 = vmatprep.subr.mxu0 0.0
        %5573 = vmatpush1.msra.mxu0 0.0
        %5574 = vmatprep.mubr.f32.mxu0 0.0
        %5575 = vmatmul.mubr.f32.gmra.mrb[0].mxu0 %v5335
        %v5576 = vpop.f32.mrb[0].mxu0
        %v5577 = vadd.f32 0.0, %v5576
        %v5578 = vpop.f32.mrb[0].mxu0
        %5579 = vmatprep.mubr.f32.mxu0 0.0
        %5580 = vmatmul.mubr.f32.gmra.mrb[0].mxu0 %v5337
        %v5581 = vpop.f32.mrb[0].mxu0
        %v5582 = vadd.f32 0.0, %v5581
        %v5583 = vpop.f32.mrb[0].mxu0
        %5584 = vmatprep.mubr.f32.mxu0 0.0
        %5585 = vmatmul.mubr.f32.gmra.mrb[0].mxu0 %v5339
        %v5586 = vpop.f32.mrb[0].mxu0
        %v5587 = vadd.f32 0.0, %v5586
        %v5588 = vpop.f32.mrb[0].mxu0
        %5589 = vmatprep.mubr.f32.mxu0 0.0
        %5590 = vmatmul.mubr.f32.gmra.mrb[0].mxu0 %v5341
        %v5591 = vpop.f32.mrb[0].mxu0
        %v5592 = vadd.f32 0.0, %v5591
        %v5593 = vpop.f32.mrb[0].mxu0
        %5594 = vmatprep.mubr.f32.mxu0 0.0
        %5595 = vmatmul.mubr.f32.gmra.mrb[0].mxu0 %v5343
        %v5596 = vpop.f32.mrb[0].mxu0
        %v5597 = vadd.f32 0.0, %v5596
        %v5598 = vpop.f32.mrb[0].mxu0
        %5599 = vmatprep.mubr.f32.mxu0 0.0
        %5600 = vmatmul.mubr.f32.gmra.mrb[0].mxu0 %v5345
        %v5601 = vpop.f32.mrb[0].mxu0
        %v5602 = vadd.f32 0.0, %v5601
        %v5603 = vpop.f32.mrb[0].mxu0
        %5604 = vmatprep.mubr.f32.mxu0 0.0
        %5605 = vmatmul.mubr.f32.gmra.mrb[0].mxu0 %v5347
        %v5606 = vpop.f32.mrb[0].mxu0
        %v5607 = vadd.f32 0.0, %v5606
        %v5608 = vpop.f32.mrb[0].mxu0
        %5609 = vmatprep.mubr.f32.mxu0 0.0
        %5610 = vmatmul.mubr.f32.gmra.mrb[0].mxu0 %v5349
        %v5611 = vpop.f32.mrb[0].mxu0
        %v5612 = vadd.f32 0.0, %v5611
        %v5613 = vpop.f32.mrb[0].mxu0
        %5614 = vmatprep.mubr.f32.mxu0 0.0
        %5615 = vmatmul.mubr.f32.gmra.mrb[0].mxu0 %v5351
        %v5616 = vpop.f32.mrb[0].mxu0
        %v5617 = vadd.f32 0.0, %v5616
        %v5618 = vpop.f32.mrb[0].mxu0
        %5619 = vmatprep.mubr.f32.mxu0 0.0
        %5620 = vmatmul.mubr.f32.gmra.mrb[0].mxu0 %v5353
        %v5621 = vpop.f32.mrb[0].mxu0
        %v5622 = vadd.f32 0.0, %v5621
        %v5623 = vpop.f32.mrb[0].mxu0
        %5624 = vmatprep.mubr.f32.mxu0 0.0
        %5625 = vmatmul.mubr.f32.gmra.mrb[0].mxu0 %v5355
        %v5626 = vpop.f32.mrb[0].mxu0
        %v5627 = vadd.f32 0.0, %v5626
        %v5628 = vpop.f32.mrb[0].mxu0
        %5629 = vmatprep.mubr.f32.mxu0 0.0
        %5630 = vmatmul.mubr.f32.gmra.mrb[0].mxu0 %v5357
        %v5631 = vpop.f32.mrb[0].mxu0
        %v5632 = vadd.f32 0.0, %v5631
        %v5633 = vpop.f32.mrb[0].mxu0
        %5634 = vmatprep.mubr.f32.mxu0 0.0
        %5635 = vmatmul.mubr.f32.gmra.mrb[0].mxu0 %v5359
        %v5636 = vpop.f32.mrb[0].mxu0
        %v5637 = vadd.f32 0.0, %v5636
        %v5638 = vpop.f32.mrb[0].mxu0
        %5639 = vmatprep.mubr.f32.mxu0 0.0
        %5640 = vmatmul.mubr.f32.gmra.mrb[0].mxu0 %v5361
        %v5641 = vpop.f32.mrb[0].mxu0
        %v5642 = vadd.f32 0.0, %v5641
        %v5643 = vpop.f32.mrb[0].mxu0
        %5644 = vmatprep.mubr.f32.mxu0 0.0
        %5645 = vmatmul.mubr.f32.gmra.mrb[0].mxu0 %v5363
        %v5646 = vpop.f32.mrb[0].mxu0
        %v5647 = vadd.f32 0.0, %v5646
        %v5648 = vpop.f32.mrb[0].mxu0
        %5649 = vmatprep.mubr.f32.mxu0 0.0
        %5650 = vmatmul.mubr.f32.gmra.mrb[0].mxu0 %v5365
        %v5651 = vpop.f32.mrb[0].mxu0
        %v5652 = vadd.f32 0.0, %v5651
        %v5653 = vpop.f32.mrb[0].mxu0
        %5654 = vdwg.mxu0
        %5655 = vrot.lane.b32.xlu0 %v886, 32
        %v5656 = vpop.permute.xlu0 %5655
        %5657 = vrot.lane.b32.xlu0 %v891, 32
        %v5658 = vpop.permute.xlu0 %5657
        %5659 = vrot.lane.b32.xlu0 %v896, 32
        %v5660 = vpop.permute.xlu0 %5659
        %5661 = vrot.lane.b32.xlu0 %v901, 32
        %v5662 = vpop.permute.xlu0 %5661
        %5663 = vrot.lane.b32.xlu0 %v906, 32
        %v5664 = vpop.permute.xlu0 %5663
        %5665 = vrot.lane.b32.xlu0 %v911, 32
        %v5666 = vpop.permute.xlu0 %5665
        %5667 = vrot.lane.b32.xlu0 %v916, 32
        %v5668 = vpop.permute.xlu0 %5667
        %5669 = vrot.lane.b32.xlu0 %v921, 32
        %v5670 = vpop.permute.xlu0 %5669
        %5671 = vrot.lane.b32.xlu0 %v926, 32
        %v5672 = vpop.permute.xlu0 %5671
        %5673 = vrot.lane.b32.xlu0 %v931, 32
        %v5674 = vpop.permute.xlu0 %5673
        %5675 = vrot.lane.b32.xlu0 %v936, 32
        %v5676 = vpop.permute.xlu0 %5675
        %5677 = vrot.lane.b32.xlu0 %v941, 32
        %v5678 = vpop.permute.xlu0 %5677
        %5679 = vrot.lane.b32.xlu0 %v946, 32
        %v5680 = vpop.permute.xlu0 %5679
        %5681 = vrot.lane.b32.xlu0 %v951, 32
        %v5682 = vpop.permute.xlu0 %5681
        %5683 = vrot.lane.b32.xlu0 %v956, 32
        %v5684 = vpop.permute.xlu0 %5683
        %5685 = vrot.lane.b32.xlu0 %v961, 32
        %v5686 = vpop.permute.xlu0 %5685
        %5703 = vmatprep.subr.mxu0 0.0
        %5704 = vmatpush1.msra.mxu0 %v5656
        %5705 = vmatprep.subr.mxu0 0.0
        %5706 = vmatpush1.msra.mxu0 %v5658
        %5707 = vmatprep.subr.mxu0 0.0
        %5708 = vmatpush1.msra.mxu0 %v5660
        %5709 = vmatprep.subr.mxu0 0.0
        %5710 = vmatpush1.msra.mxu0 %v5662
        %5711 = vmatprep.subr.mxu0 0.0
        %5712 = vmatpush1.msra.mxu0 %v5664
        %5713 = vmatprep.subr.mxu0 0.0
        %5714 = vmatpush1.msra.mxu0 %v5666
        %5715 = vmatprep.subr.mxu0 0.0
        %5716 = vmatpush1.msra.mxu0 %v5668
        %5717 = vmatprep.subr.mxu0 0.0
        %5718 = vmatpush1.msra.mxu0 %v5670
        %5719 = vmatprep.subr.mxu0 0.0
        %5720 = vmatpush1.msra.mxu0 %v5672
        %5721 = vmatprep.subr.mxu0 0.0
        %5722 = vmatpush1.msra.mxu0 %v5674
        %5723 = vmatprep.subr.mxu0 0.0
        %5724 = vmatpush1.msra.mxu0 %v5676
        %5725 = vmatprep.subr.mxu0 0.0
        %5726 = vmatpush1.msra.mxu0 %v5678
        %5727 = vmatprep.subr.mxu0 0.0
        %5728 = vmatpush1.msra.mxu0 %v5680
        %5729 = vmatprep.subr.mxu0 0.0
        %5730 = vmatpush1.msra.mxu0 %v5682
        %5731 = vmatprep.subr.mxu0 0.0
        %5732 = vmatpush1.msra.mxu0 %v5684
        %5733 = vmatprep.subr.mxu0 0.0
        %5734 = vmatpush1.msra.mxu0 %v5686
        %5735 = vmatprep.subr.mxu0 0.0
        %5736 = vmatpush1.msra.mxu0 0.0
        %5737 = vmatprep.subr.mxu0 0.0
        %5738 = vmatpush1.msra.mxu0 0.0
        %5739 = vmatprep.subr.mxu0 0.0
        %5740 = vmatpush1.msra.mxu0 0.0
        %5741 = vmatprep.subr.mxu0 0.0
        %5742 = vmatpush1.msra.mxu0 0.0
        %5743 = vmatprep.subr.mxu0 0.0
        %5744 = vmatpush1.msra.mxu0 0.0
        %5745 = vmatprep.subr.mxu0 0.0
        %5746 = vmatpush1.msra.mxu0 0.0
        %5747 = vmatprep.subr.mxu0 0.0
        %5748 = vmatpush1.msra.mxu0 0.0
        %5749 = vmatprep.subr.mxu0 0.0
        %5750 = vmatpush1.msra.mxu0 0.0
        %5751 = vmatprep.subr.mxu0 0.0
        %5752 = vmatpush1.msra.mxu0 0.0
        %5753 = vmatprep.subr.mxu0 0.0
        %5754 = vmatpush1.msra.mxu0 0.0
        %5755 = vmatprep.subr.mxu0 0.0
        %5756 = vmatpush1.msra.mxu0 0.0
        %5757 = vmatprep.subr.mxu0 0.0
        %5758 = vmatpush1.msra.mxu0 0.0
        %5759 = vmatprep.subr.mxu0 0.0
        %5760 = vmatpush1.msra.mxu0 0.0
        %5761 = vmatprep.subr.mxu0 0.0
        %5762 = vmatpush1.msra.mxu0 0.0
        %5763 = vmatprep.subr.mxu0 0.0
        %5764 = vmatpush1.msra.mxu0 0.0
        %5765 = vmatprep.subr.mxu0 0.0
        %5766 = vmatpush1.msra.mxu0 0.0
        %5767 = vmatprep.mubr.f32.mxu0 0.0
        %5768 = vmatmul.mubr.f32.gmra.mrb[0].mxu0 %v5367
        %v5769 = vpop.f32.mrb[0].mxu0
        %v5770 = vadd.f32 0.0, %v5769
        %v5771 = vpop.f32.mrb[0].mxu0
        %5772 = vmatprep.mubr.f32.mxu0 0.0
        %5773 = vmatmul.mubr.f32.gmra.mrb[0].mxu0 %v5369
        %v5774 = vpop.f32.mrb[0].mxu0
        %v5775 = vadd.f32 0.0, %v5774
        %v5776 = vpop.f32.mrb[0].mxu0
        %5777 = vmatprep.mubr.f32.mxu0 0.0
        %5778 = vmatmul.mubr.f32.gmra.mrb[0].mxu0 %v5371
        %v5779 = vpop.f32.mrb[0].mxu0
        %v5780 = vadd.f32 0.0, %v5779
        %v5781 = vpop.f32.mrb[0].mxu0
        %5782 = vmatprep.mubr.f32.mxu0 0.0
        %5783 = vmatmul.mubr.f32.gmra.mrb[0].mxu0 %v5373
        %v5784 = vpop.f32.mrb[0].mxu0
        %v5785 = vadd.f32 0.0, %v5784
        %v5786 = vpop.f32.mrb[0].mxu0
        %5787 = vmatprep.mubr.f32.mxu0 0.0
        %5788 = vmatmul.mubr.f32.gmra.mrb[0].mxu0 %v5375
        %v5789 = vpop.f32.mrb[0].mxu0
        %v5790 = vadd.f32 0.0, %v5789
        %v5791 = vpop.f32.mrb[0].mxu0
        %5792 = vmatprep.mubr.f32.mxu0 0.0
        %5793 = vmatmul.mubr.f32.gmra.mrb[0].mxu0 %v5377
        %v5794 = vpop.f32.mrb[0].mxu0
        %v5795 = vadd.f32 0.0, %v5794
        %v5796 = vpop.f32.mrb[0].mxu0
        %5797 = vmatprep.mubr.f32.mxu0 0.0
        %5798 = vmatmul.mubr.f32.gmra.mrb[0].mxu0 %v5379
        %v5799 = vpop.f32.mrb[0].mxu0
        %v5800 = vadd.f32 0.0, %v5799
        %v5801 = vpop.f32.mrb[0].mxu0
        %5802 = vmatprep.mubr.f32.mxu0 0.0
        %5803 = vmatmul.mubr.f32.gmra.mrb[0].mxu0 %v5381
        %v5804 = vpop.f32.mrb[0].mxu0
        %v5805 = vadd.f32 0.0, %v5804
        %v5806 = vpop.f32.mrb[0].mxu0
        %5807 = vmatprep.mubr.f32.mxu0 0.0
        %5808 = vmatmul.mubr.f32.gmra.mrb[0].mxu0 %v5383
        %v5809 = vpop.f32.mrb[0].mxu0
        %v5810 = vadd.f32 0.0, %v5809
        %v5811 = vpop.f32.mrb[0].mxu0
        %5812 = vmatprep.mubr.f32.mxu0 0.0
        %5813 = vmatmul.mubr.f32.gmra.mrb[0].mxu0 %v5385
        %v5814 = vpop.f32.mrb[0].mxu0
        %v5815 = vadd.f32 0.0, %v5814
        %v5816 = vpop.f32.mrb[0].mxu0
        %5817 = vmatprep.mubr.f32.mxu0 0.0
        %5818 = vmatmul.mubr.f32.gmra.mrb[0].mxu0 %v5387
        %v5819 = vpop.f32.mrb[0].mxu0
        %v5820 = vadd.f32 0.0, %v5819
        %v5821 = vpop.f32.mrb[0].mxu0
        %5822 = vmatprep.mubr.f32.mxu0 0.0
        %5823 = vmatmul.mubr.f32.gmra.mrb[0].mxu0 %v5389
        %v5824 = vpop.f32.mrb[0].mxu0
        %v5825 = vadd.f32 0.0, %v5824
        %v5826 = vpop.f32.mrb[0].mxu0
        %5827 = vmatprep.mubr.f32.mxu0 0.0
        %5828 = vmatmul.mubr.f32.gmra.mrb[0].mxu0 %v5391
        %v5829 = vpop.f32.mrb[0].mxu0
        %v5830 = vadd.f32 0.0, %v5829
        %v5831 = vpop.f32.mrb[0].mxu0
        %5832 = vmatprep.mubr.f32.mxu0 0.0
        %5833 = vmatmul.mubr.f32.gmra.mrb[0].mxu0 %v5393
        %v5834 = vpop.f32.mrb[0].mxu0
        %v5835 = vadd.f32 0.0, %v5834
        %v5836 = vpop.f32.mrb[0].mxu0
        %5837 = vmatprep.mubr.f32.mxu0 0.0
        %5838 = vmatmul.mubr.f32.gmra.mrb[0].mxu0 %v5395
        %v5839 = vpop.f32.mrb[0].mxu0
        %v5840 = vadd.f32 0.0, %v5839
        %v5841 = vpop.f32.mrb[0].mxu0
        %5842 = vmatprep.mubr.f32.mxu0 0.0
        %5843 = vmatmul.mubr.f32.gmra.mrb[0].mxu0 %v5397
        %v5844 = vpop.f32.mrb[0].mxu0
        %v5845 = vadd.f32 0.0, %v5844
        %v5846 = vpop.f32.mrb[0].mxu0
        %5847 = vdwg.mxu0
        %v5848 = vrcp.pop %v5399
        %v5849 = vrcp.pop %v5401
        %v5850 = vrcp.pop %v5403
        %v5851 = vrcp.pop %v5405
        %v5852 = vrcp.pop %v5407
        %v5853 = vrcp.pop %v5409
        %v5854 = vrcp.pop %v5411
        %v5855 = vrcp.pop %v5413
        %v5856 = vrcp.pop %v5415
        %v5857 = vrcp.pop %v5417
        %v5858 = vrcp.pop %v5419
        %v5859 = vrcp.pop %v5421
        %v5860 = vrcp.pop %v5423
        %v5861 = vrcp.pop %v5425
        %v5862 = vrcp.pop %v5427
        %v5863 = vrcp.pop %v5429
        %v5864 = vrcp.pop %v5431
        %v5865 = vrcp.pop %v5433
        %v5866 = vrcp.pop %v5435
        %v5867 = vrcp.pop %v5437
        %v5868 = vrcp.pop %v5439
        %v5869 = vrcp.pop %v5441
        %v5870 = vrcp.pop %v5443
        %v5871 = vrcp.pop %v5445
        %v5872 = vrcp.pop %v5447
        %v5873 = vrcp.pop %v5449
        %v5874 = vrcp.pop %v5451
        %v5875 = vrcp.pop %v5453
        %v5876 = vrcp.pop %v5455
        %v5877 = vrcp.pop %v5457
        %v5878 = vrcp.pop %v5459
        %v5879 = vrcp.pop %v5461
        %v5880 = vmul.f32 %v5577, %v5848
        %v5881 = vmul.f32 %v5582, %v5849
        %v5882 = vmul.f32 %v5587, %v5850
        %v5883 = vmul.f32 %v5592, %v5851
        %v5884 = vmul.f32 %v5597, %v5852
        %v5885 = vmul.f32 %v5602, %v5853
        %v5886 = vmul.f32 %v5607, %v5854
        %v5887 = vmul.f32 %v5612, %v5855
        %v5888 = vmul.f32 %v5617, %v5856
        %v5889 = vmul.f32 %v5622, %v5857
        %v5890 = vmul.f32 %v5627, %v5858
        %v5891 = vmul.f32 %v5632, %v5859
        %v5892 = vmul.f32 %v5637, %v5860
        %v5893 = vmul.f32 %v5642, %v5861
        %v5894 = vmul.f32 %v5647, %v5862
        %v5895 = vmul.f32 %v5652, %v5863
        %v5896 = vmul.f32 %v5770, %v5864
        %v5897 = vmul.f32 %v5775, %v5865
        %v5898 = vmul.f32 %v5780, %v5866
        %v5899 = vmul.f32 %v5785, %v5867
        %v5900 = vmul.f32 %v5790, %v5868
        %v5901 = vmul.f32 %v5795, %v5869
        %v5902 = vmul.f32 %v5800, %v5870
        %v5903 = vmul.f32 %v5805, %v5871
        %v5904 = vmul.f32 %v5810, %v5872
        %v5905 = vmul.f32 %v5815, %v5873
        %v5906 = vmul.f32 %v5820, %v5874
        %v5907 = vmul.f32 %v5825, %v5875
        %v5908 = vmul.f32 %v5830, %v5876
        %v5909 = vmul.f32 %v5835, %v5877
        %v5910 = vmul.f32 %v5840, %v5878
        %v5911 = vmul.f32 %v5845, %v5879
        %5944 = vrot.lane.b32.xlu0 %v3406, 32
        %v5945 = vpop.permute.xlu0 %5944
        %5946 = vrot.lane.b32.xlu0 %v3407, 32
        %v5947 = vpop.permute.xlu0 %5946
        %5948 = vrot.lane.b32.xlu0 %v3408, 32
        %v5949 = vpop.permute.xlu0 %5948
        %5950 = vrot.lane.b32.xlu0 %v3409, 32
        %v5951 = vpop.permute.xlu0 %5950
        %5952 = vrot.lane.b32.xlu0 %v3410, 32
        %v5953 = vpop.permute.xlu0 %5952
        %5954 = vrot.lane.b32.xlu0 %v3411, 32
        %v5955 = vpop.permute.xlu0 %5954
        %5956 = vrot.lane.b32.xlu0 %v3412, 32
        %v5957 = vpop.permute.xlu0 %5956
        %5958 = vrot.lane.b32.xlu0 %v3413, 32
        %v5959 = vpop.permute.xlu0 %5958
        %5960 = vrot.lane.b32.xlu0 %v3414, 32
        %v5961 = vpop.permute.xlu0 %5960
        %5962 = vrot.lane.b32.xlu0 %v3415, 32
        %v5963 = vpop.permute.xlu0 %5962
        %5964 = vrot.lane.b32.xlu0 %v3416, 32
        %v5965 = vpop.permute.xlu0 %5964
        %5966 = vrot.lane.b32.xlu0 %v3417, 32
        %v5967 = vpop.permute.xlu0 %5966
        %5968 = vrot.lane.b32.xlu0 %v3418, 32
        %v5969 = vpop.permute.xlu0 %5968
        %5970 = vrot.lane.b32.xlu0 %v3419, 32
        %v5971 = vpop.permute.xlu0 %5970
        %5972 = vrot.lane.b32.xlu0 %v3420, 32
        %v5973 = vpop.permute.xlu0 %5972
        %5974 = vrot.lane.b32.xlu0 %v3421, 32
        %v5975 = vpop.permute.xlu0 %5974
        %5976 = vrot.lane.b32.xlu0 %v3422, 32
        %v5977 = vpop.permute.xlu0 %5976
        %5978 = vrot.lane.b32.xlu0 %v3423, 32
        %v5979 = vpop.permute.xlu0 %5978
        %5980 = vrot.lane.b32.xlu0 %v3424, 32
        %v5981 = vpop.permute.xlu0 %5980
        %5982 = vrot.lane.b32.xlu0 %v3425, 32
        %v5983 = vpop.permute.xlu0 %5982
        %5984 = vrot.lane.b32.xlu0 %v3426, 32
        %v5985 = vpop.permute.xlu0 %5984
        %5986 = vrot.lane.b32.xlu0 %v3427, 32
        %v5987 = vpop.permute.xlu0 %5986
        %5988 = vrot.lane.b32.xlu0 %v3428, 32
        %v5989 = vpop.permute.xlu0 %5988
        %5990 = vrot.lane.b32.xlu0 %v3429, 32
        %v5991 = vpop.permute.xlu0 %5990
        %5992 = vrot.lane.b32.xlu0 %v3430, 32
        %v5993 = vpop.permute.xlu0 %5992
        %5994 = vrot.lane.b32.xlu0 %v3431, 32
        %v5995 = vpop.permute.xlu0 %5994
        %5996 = vrot.lane.b32.xlu0 %v3432, 32
        %v5997 = vpop.permute.xlu0 %5996
        %5998 = vrot.lane.b32.xlu0 %v3433, 32
        %v5999 = vpop.permute.xlu0 %5998
        %6000 = vrot.lane.b32.xlu0 %v3434, 32
        %v6001 = vpop.permute.xlu0 %6000
        %6002 = vrot.lane.b32.xlu0 %v3435, 32
        %v6003 = vpop.permute.xlu0 %6002
        %6004 = vrot.lane.b32.xlu0 %v3436, 32
        %v6005 = vpop.permute.xlu0 %6004
        %6006 = vrot.lane.b32.xlu0 %v3437, 32
        %v6007 = vpop.permute.xlu0 %6006
        %6072 = vrot.lane.b32.xlu0 %v4643, 64
        %v6073 = vpop.permute.xlu0 %6072
        %6074 = vrot.lane.b32.xlu0 %v4644, 64
        %v6075 = vpop.permute.xlu0 %6074
        %6076 = vrot.lane.b32.xlu0 %v4645, 64
        %v6077 = vpop.permute.xlu0 %6076
        %6078 = vrot.lane.b32.xlu0 %v4646, 64
        %v6079 = vpop.permute.xlu0 %6078
        %6080 = vrot.lane.b32.xlu0 %v4647, 64
        %v6081 = vpop.permute.xlu0 %6080
        %6082 = vrot.lane.b32.xlu0 %v4648, 64
        %v6083 = vpop.permute.xlu0 %6082
        %6084 = vrot.lane.b32.xlu0 %v4649, 64
        %v6085 = vpop.permute.xlu0 %6084
        %6086 = vrot.lane.b32.xlu0 %v4650, 64
        %v6087 = vpop.permute.xlu0 %6086
        %6088 = vrot.lane.b32.xlu0 %v4651, 64
        %v6089 = vpop.permute.xlu0 %6088
        %6090 = vrot.lane.b32.xlu0 %v4652, 64
        %v6091 = vpop.permute.xlu0 %6090
        %6092 = vrot.lane.b32.xlu0 %v4653, 64
        %v6093 = vpop.permute.xlu0 %6092
        %6094 = vrot.lane.b32.xlu0 %v4654, 64
        %v6095 = vpop.permute.xlu0 %6094
        %6096 = vrot.lane.b32.xlu0 %v4655, 64
        %v6097 = vpop.permute.xlu0 %6096
        %6098 = vrot.lane.b32.xlu0 %v4656, 64
        %v6099 = vpop.permute.xlu0 %6098
        %6100 = vrot.lane.b32.xlu0 %v4657, 64
        %v6101 = vpop.permute.xlu0 %6100
        %6102 = vrot.lane.b32.xlu0 %v4658, 64
        %v6103 = vpop.permute.xlu0 %6102
        %6104 = vrot.lane.b32.xlu0 %v4659, 64
        %v6105 = vpop.permute.xlu0 %6104
        %6106 = vrot.lane.b32.xlu0 %v4660, 64
        %v6107 = vpop.permute.xlu0 %6106
        %6108 = vrot.lane.b32.xlu0 %v4661, 64
        %v6109 = vpop.permute.xlu0 %6108
        %6110 = vrot.lane.b32.xlu0 %v4662, 64
        %v6111 = vpop.permute.xlu0 %6110
        %6112 = vrot.lane.b32.xlu0 %v4663, 64
        %v6113 = vpop.permute.xlu0 %6112
        %6114 = vrot.lane.b32.xlu0 %v4664, 64
        %v6115 = vpop.permute.xlu0 %6114
        %6116 = vrot.lane.b32.xlu0 %v4665, 64
        %v6117 = vpop.permute.xlu0 %6116
        %6118 = vrot.lane.b32.xlu0 %v4666, 64
        %v6119 = vpop.permute.xlu0 %6118
        %6120 = vrot.lane.b32.xlu0 %v4667, 64
        %v6121 = vpop.permute.xlu0 %6120
        %6122 = vrot.lane.b32.xlu0 %v4668, 64
        %v6123 = vpop.permute.xlu0 %6122
        %6124 = vrot.lane.b32.xlu0 %v4669, 64
        %v6125 = vpop.permute.xlu0 %6124
        %6126 = vrot.lane.b32.xlu0 %v4670, 64
        %v6127 = vpop.permute.xlu0 %6126
        %6128 = vrot.lane.b32.xlu0 %v4671, 64
        %v6129 = vpop.permute.xlu0 %6128
        %6130 = vrot.lane.b32.xlu0 %v4672, 64
        %v6131 = vpop.permute.xlu0 %6130
        %6132 = vrot.lane.b32.xlu0 %v4673, 64
        %v6133 = vpop.permute.xlu0 %6132
        %6134 = vrot.lane.b32.xlu0 %v4674, 64
        %v6135 = vpop.permute.xlu0 %6134
        %6200 = vrot.lane.b32.xlu0 %v5880, 96
        %v6201 = vpop.permute.xlu0 %6200
        %6202 = vrot.lane.b32.xlu0 %v5881, 96
        %v6203 = vpop.permute.xlu0 %6202
        %6204 = vrot.lane.b32.xlu0 %v5882, 96
        %v6205 = vpop.permute.xlu0 %6204
        %6206 = vrot.lane.b32.xlu0 %v5883, 96
        %v6207 = vpop.permute.xlu0 %6206
        %6208 = vrot.lane.b32.xlu0 %v5884, 96
        %v6209 = vpop.permute.xlu0 %6208
        %6210 = vrot.lane.b32.xlu0 %v5885, 96
        %v6211 = vpop.permute.xlu0 %6210
        %6212 = vrot.lane.b32.xlu0 %v5886, 96
        %v6213 = vpop.permute.xlu0 %6212
        %6214 = vrot.lane.b32.xlu0 %v5887, 96
        %v6215 = vpop.permute.xlu0 %6214
        %6216 = vrot.lane.b32.xlu0 %v5888, 96
        %v6217 = vpop.permute.xlu0 %6216
        %6218 = vrot.lane.b32.xlu0 %v5889, 96
        %v6219 = vpop.permute.xlu0 %6218
        %6220 = vrot.lane.b32.xlu0 %v5890, 96
        %v6221 = vpop.permute.xlu0 %6220
        %6222 = vrot.lane.b32.xlu0 %v5891, 96
        %v6223 = vpop.permute.xlu0 %6222
        %6224 = vrot.lane.b32.xlu0 %v5892, 96
        %v6225 = vpop.permute.xlu0 %6224
        %6226 = vrot.lane.b32.xlu0 %v5893, 96
        %v6227 = vpop.permute.xlu0 %6226
        %6228 = vrot.lane.b32.xlu0 %v5894, 96
        %v6229 = vpop.permute.xlu0 %6228
        %6230 = vrot.lane.b32.xlu0 %v5895, 96
        %v6231 = vpop.permute.xlu0 %6230
        %6232 = vrot.lane.b32.xlu0 %v5896, 96
        %v6233 = vpop.permute.xlu0 %6232
        %6234 = vrot.lane.b32.xlu0 %v5897, 96
        %v6235 = vpop.permute.xlu0 %6234
        %6236 = vrot.lane.b32.xlu0 %v5898, 96
        %v6237 = vpop.permute.xlu0 %6236
        %6238 = vrot.lane.b32.xlu0 %v5899, 96
        %v6239 = vpop.permute.xlu0 %6238
        %6240 = vrot.lane.b32.xlu0 %v5900, 96
        %v6241 = vpop.permute.xlu0 %6240
        %6242 = vrot.lane.b32.xlu0 %v5901, 96
        %v6243 = vpop.permute.xlu0 %6242
        %6244 = vrot.lane.b32.xlu0 %v5902, 96
        %v6245 = vpop.permute.xlu0 %6244
        %6246 = vrot.lane.b32.xlu0 %v5903, 96
        %v6247 = vpop.permute.xlu0 %6246
        %6248 = vrot.lane.b32.xlu0 %v5904, 96
        %v6249 = vpop.permute.xlu0 %6248
        %6250 = vrot.lane.b32.xlu0 %v5905, 96
        %v6251 = vpop.permute.xlu0 %6250
        %6252 = vrot.lane.b32.xlu0 %v5906, 96
        %v6253 = vpop.permute.xlu0 %6252
        %6254 = vrot.lane.b32.xlu0 %v5907, 96
        %v6255 = vpop.permute.xlu0 %6254
        %6256 = vrot.lane.b32.xlu0 %v5908, 96
        %v6257 = vpop.permute.xlu0 %6256
        %6258 = vrot.lane.b32.xlu0 %v5909, 96
        %v6259 = vpop.permute.xlu0 %6258
        %6260 = vrot.lane.b32.xlu0 %v5910, 96
        %v6261 = vpop.permute.xlu0 %6260
        %6262 = vrot.lane.b32.xlu0 %v5911, 96
        %v6263 = vpop.permute.xlu0 %6262
        %v6296 = vsel %vm1108, %v2137, %v5945
        %v6297 = vsel %vm1108, %v2138, %v5947
        %v6298 = vsel %vm1108, %v2139, %v5949
        %v6299 = vsel %vm1108, %v2140, %v5951
        %v6300 = vsel %vm1108, %v2141, %v5953
        %v6301 = vsel %vm1108, %v2142, %v5955
        %v6302 = vsel %vm1108, %v2143, %v5957
        %v6303 = vsel %vm1108, %v2144, %v5959
        %v6304 = vsel %vm1108, %v2145, %v5961
        %v6305 = vsel %vm1108, %v2146, %v5963
        %v6306 = vsel %vm1108, %v2147, %v5965
        %v6307 = vsel %vm1108, %v2148, %v5967
        %v6308 = vsel %vm1108, %v2149, %v5969
        %v6309 = vsel %vm1108, %v2150, %v5971
        %v6310 = vsel %vm1108, %v2151, %v5973
        %v6311 = vsel %vm1108, %v2152, %v5975
        %v6312 = vsel %vm1108, %v2153, %v5977
        %v6313 = vsel %vm1108, %v2154, %v5979
        %v6314 = vsel %vm1108, %v2155, %v5981
        %v6315 = vsel %vm1108, %v2156, %v5983
        %v6316 = vsel %vm1108, %v2157, %v5985
        %v6317 = vsel %vm1108, %v2158, %v5987
        %v6318 = vsel %vm1108, %v2159, %v5989
        %v6319 = vsel %vm1108, %v2160, %v5991
        %v6320 = vsel %vm1108, %v2161, %v5993
        %v6321 = vsel %vm1108, %v2162, %v5995
        %v6322 = vsel %vm1108, %v2163, %v5997
        %v6323 = vsel %vm1108, %v2164, %v5999
        %v6324 = vsel %vm1108, %v2165, %v6001
        %v6325 = vsel %vm1108, %v2166, %v6003
        %v6326 = vsel %vm1108, %v2167, %v6005
        %v6327 = vsel %vm1108, %v2168, %v6007
        %vm6328 = vcmask 523264
        %v6329 = vsel %vm6328, %v6296, %v6073
        %v6330 = vsel %vm6328, %v6297, %v6075
        %v6331 = vsel %vm6328, %v6298, %v6077
        %v6332 = vsel %vm6328, %v6299, %v6079
        %v6333 = vsel %vm6328, %v6300, %v6081
        %v6334 = vsel %vm6328, %v6301, %v6083
        %v6335 = vsel %vm6328, %v6302, %v6085
        %v6336 = vsel %vm6328, %v6303, %v6087
        %v6337 = vsel %vm6328, %v6304, %v6089
        %v6338 = vsel %vm6328, %v6305, %v6091
        %v6339 = vsel %vm6328, %v6306, %v6093
        %v6340 = vsel %vm6328, %v6307, %v6095
        %v6341 = vsel %vm6328, %v6308, %v6097
        %v6342 = vsel %vm6328, %v6309, %v6099
        %v6343 = vsel %vm6328, %v6310, %v6101
        %v6344 = vsel %vm6328, %v6311, %v6103
        %v6345 = vsel %vm6328, %v6312, %v6105
        %v6346 = vsel %vm6328, %v6313, %v6107
        %v6347 = vsel %vm6328, %v6314, %v6109
        %v6348 = vsel %vm6328, %v6315, %v6111
        %v6349 = vsel %vm6328, %v6316, %v6113
        %v6350 = vsel %vm6328, %v6317, %v6115
        %v6351 = vsel %vm6328, %v6318, %v6117
        %v6352 = vsel %vm6328, %v6319, %v6119
        %v6353 = vsel %vm6328, %v6320, %v6121
        %v6354 = vsel %vm6328, %v6321, %v6123
        %v6355 = vsel %vm6328, %v6322, %v6125
        %v6356 = vsel %vm6328, %v6323, %v6127
        %v6357 = vsel %vm6328, %v6324, %v6129
        %v6358 = vsel %vm6328, %v6325, %v6131
        %v6359 = vsel %vm6328, %v6326, %v6133
        %v6360 = vsel %vm6328, %v6327, %v6135
        %vm6361 = vcmask 785408
        %v6362 = vsel %vm6361, %v6329, %v6201
        %v6363 = vsel %vm6361, %v6330, %v6203
        %v6364 = vsel %vm6361, %v6331, %v6205
        %v6365 = vsel %vm6361, %v6332, %v6207
        %v6366 = vsel %vm6361, %v6333, %v6209
        %v6367 = vsel %vm6361, %v6334, %v6211
        %v6368 = vsel %vm6361, %v6335, %v6213
        %v6369 = vsel %vm6361, %v6336, %v6215
        %v6370 = vsel %vm6361, %v6337, %v6217
        %v6371 = vsel %vm6361, %v6338, %v6219
        %v6372 = vsel %vm6361, %v6339, %v6221
        %v6373 = vsel %vm6361, %v6340, %v6223
        %v6374 = vsel %vm6361, %v6341, %v6225
        %v6375 = vsel %vm6361, %v6342, %v6227
        %v6376 = vsel %vm6361, %v6343, %v6229
        %v6377 = vsel %vm6361, %v6344, %v6231
        %v6378 = vsel %vm6361, %v6345, %v6233
        %v6379 = vsel %vm6361, %v6346, %v6235
        %v6380 = vsel %vm6361, %v6347, %v6237
        %v6381 = vsel %vm6361, %v6348, %v6239
        %v6382 = vsel %vm6361, %v6349, %v6241
        %v6383 = vsel %vm6361, %v6350, %v6243
        %v6384 = vsel %vm6361, %v6351, %v6245
        %v6385 = vsel %vm6361, %v6352, %v6247
        %v6386 = vsel %vm6361, %v6353, %v6249
        %v6387 = vsel %vm6361, %v6354, %v6251
        %v6388 = vsel %vm6361, %v6355, %v6253
        %v6389 = vsel %vm6361, %v6356, %v6255
        %v6390 = vsel %vm6361, %v6357, %v6257
        %v6391 = vsel %vm6361, %v6358, %v6259
        %v6392 = vsel %vm6361, %v6359, %v6261
        %v6393 = vsel %vm6361, %v6360, %v6263
        %v6394 = vld [vmem:[#allocation7] sm:$0xff]
        %v6395 = vld [vmem:[#allocation7 + $0x8] sm:$0xff]
        %v6396 = vld [vmem:[#allocation7 + $0x10] sm:$0xff]
        %v6397 = vld [vmem:[#allocation7 + $0x18] sm:$0xff]
        %v6398 = vld [vmem:[#allocation7 + $0x20] sm:$0xff]
        %v6399 = vld [vmem:[#allocation7 + $0x28] sm:$0xff]
        %v6400 = vld [vmem:[#allocation7 + $0x30] sm:$0xff]
        %v6401 = vld [vmem:[#allocation7 + $0x38] sm:$0xff]
        %v6402 = vld [vmem:[#allocation7 + $0x40] sm:$0xff]
        %v6403 = vld [vmem:[#allocation7 + $0x48] sm:$0xff]
        %v6404 = vld [vmem:[#allocation7 + $0x50] sm:$0xff]
        %v6405 = vld [vmem:[#allocation7 + $0x58] sm:$0xff]
        %v6406 = vld [vmem:[#allocation7 + $0x60] sm:$0xff]
        %v6407 = vld [vmem:[#allocation7 + $0x68] sm:$0xff]
        %v6408 = vld [vmem:[#allocation7 + $0x70] sm:$0xff]
        %v6409 = vld [vmem:[#allocation7 + $0x78] sm:$0xff]
        %v6410 = vld [vmem:[%s3] sm:$0x1]
        %v6412 = vlaneseq
        %v6413 = vshrl.u32 %v6412, 7
        %v6414 = vsub.s32 0, %v6413
        %v6415 = vrot.slane %v6410, %v6414
        %6417 = vmatprep.subr.mxu0 0.0
        %6418 = vmatpush1.msra.mxu0 %v6394
        %6419 = vmatprep.subr.mxu0 0.0
        %6420 = vmatpush1.msra.mxu0 %v6395
        %6421 = vmatprep.subr.mxu0 0.0
        %6422 = vmatpush1.msra.mxu0 %v6396
        %6423 = vmatprep.subr.mxu0 0.0
        %6424 = vmatpush1.msra.mxu0 %v6397
        %6425 = vmatprep.subr.mxu0 0.0
        %6426 = vmatpush1.msra.mxu0 %v6398
        %6427 = vmatprep.subr.mxu0 0.0
        %6428 = vmatpush1.msra.mxu0 %v6399
        %6429 = vmatprep.subr.mxu0 0.0
        %6430 = vmatpush1.msra.mxu0 %v6400
        %6431 = vmatprep.subr.mxu0 0.0
        %6432 = vmatpush1.msra.mxu0 %v6401
        %6433 = vmatprep.subr.mxu0 0.0
        %6434 = vmatpush1.msra.mxu0 %v6402
        %6435 = vmatprep.subr.mxu0 0.0
        %6436 = vmatpush1.msra.mxu0 %v6403
        %6437 = vmatprep.subr.mxu0 0.0
        %6438 = vmatpush1.msra.mxu0 %v6404
        %6439 = vmatprep.subr.mxu0 0.0
        %6440 = vmatpush1.msra.mxu0 %v6405
        %6441 = vmatprep.subr.mxu0 0.0
        %6442 = vmatpush1.msra.mxu0 %v6406
        %6443 = vmatprep.subr.mxu0 0.0
        %6444 = vmatpush1.msra.mxu0 %v6407
        %6445 = vmatprep.subr.mxu0 0.0
        %6446 = vmatpush1.msra.mxu0 %v6408
        %6447 = vmatprep.subr.mxu0 0.0
        %6448 = vmatpush1.msra.mxu0 %v6409
        %6449 = vmatprep.subr.mxu0 0.0
        %6450 = vmatpush1.msra.mxu0 0.0
        %6451 = vmatprep.subr.mxu0 0.0
        %6452 = vmatpush1.msra.mxu0 0.0
        %6453 = vmatprep.subr.mxu0 0.0
        %6454 = vmatpush1.msra.mxu0 0.0
        %6455 = vmatprep.subr.mxu0 0.0
        %6456 = vmatpush1.msra.mxu0 0.0
        %6457 = vmatprep.subr.mxu0 0.0
        %6458 = vmatpush1.msra.mxu0 0.0
        %6459 = vmatprep.subr.mxu0 0.0
        %6460 = vmatpush1.msra.mxu0 0.0
        %6461 = vmatprep.subr.mxu0 0.0
        %6462 = vmatpush1.msra.mxu0 0.0
        %6463 = vmatprep.subr.mxu0 0.0
        %6464 = vmatpush1.msra.mxu0 0.0
        %6465 = vmatprep.subr.mxu0 0.0
        %6466 = vmatpush1.msra.mxu0 0.0
        %6467 = vmatprep.subr.mxu0 0.0
        %6468 = vmatpush1.msra.mxu0 0.0
        %6469 = vmatprep.subr.mxu0 0.0
        %6470 = vmatpush1.msra.mxu0 0.0
        %6471 = vmatprep.subr.mxu0 0.0
        %6472 = vmatpush1.msra.mxu0 0.0
        %6473 = vmatprep.subr.mxu0 0.0
        %6474 = vmatpush1.msra.mxu0 0.0
        %6475 = vmatprep.subr.mxu0 0.0
        %6476 = vmatpush1.msra.mxu0 0.0
        %6477 = vmatprep.subr.mxu0 0.0
        %6478 = vmatpush1.msra.mxu0 0.0
        %6479 = vmatprep.subr.mxu0 0.0
        %6480 = vmatpush1.msra.mxu0 0.0
        %6481 = vmatprep.mubr.f32.mxu0 0.0
        %6482 = vmatmul.mubr.f32.gmra.mrb[0].mxu0 %v6362
        %v6483 = vpop.f32.mrb[0].mxu0
        %v6484 = vadd.f32 %v6415, %v6483
        %v6485 = vpop.f32.mrb[0].mxu0
        %6486 = vmatprep.mubr.f32.mxu0 0.0
        %6487 = vmatmul.mubr.f32.gmra.mrb[0].mxu0 %v6363
        %v6488 = vpop.f32.mrb[0].mxu0
        %v6489 = vadd.f32 %v6415, %v6488
        %v6490 = vpop.f32.mrb[0].mxu0
        %6491 = vmatprep.mubr.f32.mxu0 0.0
        %6492 = vmatmul.mubr.f32.gmra.mrb[0].mxu0 %v6364
        %v6493 = vpop.f32.mrb[0].mxu0
        %v6494 = vadd.f32 %v6415, %v6493
        %v6495 = vpop.f32.mrb[0].mxu0
        %6496 = vmatprep.mubr.f32.mxu0 0.0
        %6497 = vmatmul.mubr.f32.gmra.mrb[0].mxu0 %v6365
        %v6498 = vpop.f32.mrb[0].mxu0
        %v6499 = vadd.f32 %v6415, %v6498
        %v6500 = vpop.f32.mrb[0].mxu0
        %6501 = vmatprep.mubr.f32.mxu0 0.0
        %6502 = vmatmul.mubr.f32.gmra.mrb[0].mxu0 %v6366
        %v6503 = vpop.f32.mrb[0].mxu0
        %v6504 = vadd.f32 %v6415, %v6503
        %v6505 = vpop.f32.mrb[0].mxu0
        %6506 = vmatprep.mubr.f32.mxu0 0.0
        %6507 = vmatmul.mubr.f32.gmra.mrb[0].mxu0 %v6367
        %v6508 = vpop.f32.mrb[0].mxu0
        %v6509 = vadd.f32 %v6415, %v6508
        %v6510 = vpop.f32.mrb[0].mxu0
        %6511 = vmatprep.mubr.f32.mxu0 0.0
        %6512 = vmatmul.mubr.f32.gmra.mrb[0].mxu0 %v6368
        %v6513 = vpop.f32.mrb[0].mxu0
        %v6514 = vadd.f32 %v6415, %v6513
        %v6515 = vpop.f32.mrb[0].mxu0
        %6516 = vmatprep.mubr.f32.mxu0 0.0
        %6517 = vmatmul.mubr.f32.gmra.mrb[0].mxu0 %v6369
        %v6518 = vpop.f32.mrb[0].mxu0
        %v6519 = vadd.f32 %v6415, %v6518
        %v6520 = vpop.f32.mrb[0].mxu0
        %6521 = vmatprep.mubr.f32.mxu0 0.0
        %6522 = vmatmul.mubr.f32.gmra.mrb[0].mxu0 %v6370
        %v6523 = vpop.f32.mrb[0].mxu0
        %v6524 = vadd.f32 %v6415, %v6523
        %v6525 = vpop.f32.mrb[0].mxu0
        %6526 = vmatprep.mubr.f32.mxu0 0.0
        %6527 = vmatmul.mubr.f32.gmra.mrb[0].mxu0 %v6371
        %v6528 = vpop.f32.mrb[0].mxu0
        %v6529 = vadd.f32 %v6415, %v6528
        %v6530 = vpop.f32.mrb[0].mxu0
        %6531 = vmatprep.mubr.f32.mxu0 0.0
        %6532 = vmatmul.mubr.f32.gmra.mrb[0].mxu0 %v6372
        %v6533 = vpop.f32.mrb[0].mxu0
        %v6534 = vadd.f32 %v6415, %v6533
        %v6535 = vpop.f32.mrb[0].mxu0
        %6536 = vmatprep.mubr.f32.mxu0 0.0
        %6537 = vmatmul.mubr.f32.gmra.mrb[0].mxu0 %v6373
        %v6538 = vpop.f32.mrb[0].mxu0
        %v6539 = vadd.f32 %v6415, %v6538
        %v6540 = vpop.f32.mrb[0].mxu0
        %6541 = vmatprep.mubr.f32.mxu0 0.0
        %6542 = vmatmul.mubr.f32.gmra.mrb[0].mxu0 %v6374
        %v6543 = vpop.f32.mrb[0].mxu0
        %v6544 = vadd.f32 %v6415, %v6543
        %v6545 = vpop.f32.mrb[0].mxu0
        %6546 = vmatprep.mubr.f32.mxu0 0.0
        %6547 = vmatmul.mubr.f32.gmra.mrb[0].mxu0 %v6375
        %v6548 = vpop.f32.mrb[0].mxu0
        %v6549 = vadd.f32 %v6415, %v6548
        %v6550 = vpop.f32.mrb[0].mxu0
        %6551 = vmatprep.mubr.f32.mxu0 0.0
        %6552 = vmatmul.mubr.f32.gmra.mrb[0].mxu0 %v6376
        %v6553 = vpop.f32.mrb[0].mxu0
        %v6554 = vadd.f32 %v6415, %v6553
        %v6555 = vpop.f32.mrb[0].mxu0
        %6556 = vmatprep.mubr.f32.mxu0 0.0
        %6557 = vmatmul.mubr.f32.gmra.mrb[0].mxu0 %v6377
        %v6558 = vpop.f32.mrb[0].mxu0
        %v6559 = vadd.f32 %v6415, %v6558
        %v6560 = vpop.f32.mrb[0].mxu0
        %6561 = vmatprep.mubr.f32.mxu0 0.0
        %6562 = vmatmul.mubr.f32.gmra.mrb[0].mxu0 %v6378
        %v6563 = vpop.f32.mrb[0].mxu0
        %v6564 = vadd.f32 %v6415, %v6563
        %v6565 = vpop.f32.mrb[0].mxu0
        %6566 = vmatprep.mubr.f32.mxu0 0.0
        %6567 = vmatmul.mubr.f32.gmra.mrb[0].mxu0 %v6379
        %v6568 = vpop.f32.mrb[0].mxu0
        %v6569 = vadd.f32 %v6415, %v6568
        %v6570 = vpop.f32.mrb[0].mxu0
        %6571 = vmatprep.mubr.f32.mxu0 0.0
        %6572 = vmatmul.mubr.f32.gmra.mrb[0].mxu0 %v6380
        %v6573 = vpop.f32.mrb[0].mxu0
        %v6574 = vadd.f32 %v6415, %v6573
        %v6575 = vpop.f32.mrb[0].mxu0
        %6576 = vmatprep.mubr.f32.mxu0 0.0
        %6577 = vmatmul.mubr.f32.gmra.mrb[0].mxu0 %v6381
        %v6578 = vpop.f32.mrb[0].mxu0
        %v6579 = vadd.f32 %v6415, %v6578
        %v6580 = vpop.f32.mrb[0].mxu0
        %6581 = vmatprep.mubr.f32.mxu0 0.0
        %6582 = vmatmul.mubr.f32.gmra.mrb[0].mxu0 %v6382
        %v6583 = vpop.f32.mrb[0].mxu0
        %v6584 = vadd.f32 %v6415, %v6583
        %v6585 = vpop.f32.mrb[0].mxu0
        %6586 = vmatprep.mubr.f32.mxu0 0.0
        %6587 = vmatmul.mubr.f32.gmra.mrb[0].mxu0 %v6383
        %v6588 = vpop.f32.mrb[0].mxu0
        %v6589 = vadd.f32 %v6415, %v6588
        %v6590 = vpop.f32.mrb[0].mxu0
        %6591 = vmatprep.mubr.f32.mxu0 0.0
        %6592 = vmatmul.mubr.f32.gmra.mrb[0].mxu0 %v6384
        %v6593 = vpop.f32.mrb[0].mxu0
        %v6594 = vadd.f32 %v6415, %v6593
        %v6595 = vpop.f32.mrb[0].mxu0
        %6596 = vmatprep.mubr.f32.mxu0 0.0
        %6597 = vmatmul.mubr.f32.gmra.mrb[0].mxu0 %v6385
        %v6598 = vpop.f32.mrb[0].mxu0
        %v6599 = vadd.f32 %v6415, %v6598
        %v6600 = vpop.f32.mrb[0].mxu0
        %6601 = vmatprep.mubr.f32.mxu0 0.0
        %6602 = vmatmul.mubr.f32.gmra.mrb[0].mxu0 %v6386
        %v6603 = vpop.f32.mrb[0].mxu0
        %v6604 = vadd.f32 %v6415, %v6603
        %v6605 = vpop.f32.mrb[0].mxu0
        %6606 = vmatprep.mubr.f32.mxu0 0.0
        %6607 = vmatmul.mubr.f32.gmra.mrb[0].mxu0 %v6387
        %v6608 = vpop.f32.mrb[0].mxu0
        %v6609 = vadd.f32 %v6415, %v6608
        %v6610 = vpop.f32.mrb[0].mxu0
        %6611 = vmatprep.mubr.f32.mxu0 0.0
        %6612 = vmatmul.mubr.f32.gmra.mrb[0].mxu0 %v6388
        %v6613 = vpop.f32.mrb[0].mxu0
        %v6614 = vadd.f32 %v6415, %v6613
        %v6615 = vpop.f32.mrb[0].mxu0
        %6616 = vmatprep.mubr.f32.mxu0 0.0
        %6617 = vmatmul.mubr.f32.gmra.mrb[0].mxu0 %v6389
        %v6618 = vpop.f32.mrb[0].mxu0
        %v6619 = vadd.f32 %v6415, %v6618
        %v6620 = vpop.f32.mrb[0].mxu0
        %6621 = vmatprep.mubr.f32.mxu0 0.0
        %6622 = vmatmul.mubr.f32.gmra.mrb[0].mxu0 %v6390
        %v6623 = vpop.f32.mrb[0].mxu0
        %v6624 = vadd.f32 %v6415, %v6623
        %v6625 = vpop.f32.mrb[0].mxu0
        %6626 = vmatprep.mubr.f32.mxu0 0.0
        %6627 = vmatmul.mubr.f32.gmra.mrb[0].mxu0 %v6391
        %v6628 = vpop.f32.mrb[0].mxu0
        %v6629 = vadd.f32 %v6415, %v6628
        %v6630 = vpop.f32.mrb[0].mxu0
        %6631 = vmatprep.mubr.f32.mxu0 0.0
        %6632 = vmatmul.mubr.f32.gmra.mrb[0].mxu0 %v6392
        %v6633 = vpop.f32.mrb[0].mxu0
        %v6634 = vadd.f32 %v6415, %v6633
        %v6635 = vpop.f32.mrb[0].mxu0
        %6636 = vmatprep.mubr.f32.mxu0 0.0
        %6637 = vmatmul.mubr.f32.gmra.mrb[0].mxu0 %v6393
        %v6638 = vpop.f32.mrb[0].mxu0
        %v6639 = vadd.f32 %v6415, %v6638
        %v6640 = vpop.f32.mrb[0].mxu0
        %6641 = vdwg.mxu0
        %6642 = vst [vmem:[%s375] sm:$0xff] %v6484
        %6643 = vst [vmem:[%s375 + $0x8] sm:$0xff] %v6489
        %6644 = vst [vmem:[%s375 + $0x10] sm:$0xff] %v6494
        %6645 = vst [vmem:[%s375 + $0x18] sm:$0xff] %v6499
        %6646 = vst [vmem:[%s375 + $0x20] sm:$0xff] %v6504
        %6647 = vst [vmem:[%s375 + $0x28] sm:$0xff] %v6509
        %6648 = vst [vmem:[%s375 + $0x30] sm:$0xff] %v6514
        %6649 = vst [vmem:[%s375 + $0x38] sm:$0xff] %v6519
        %6650 = vst [vmem:[%s375 + $0x40] sm:$0xff] %v6524
        %6651 = vst [vmem:[%s375 + $0x48] sm:$0xff] %v6529
        %6652 = vst [vmem:[%s375 + $0x50] sm:$0xff] %v6534
        %6653 = vst [vmem:[%s375 + $0x58] sm:$0xff] %v6539
        %6654 = vst [vmem:[%s375 + $0x60] sm:$0xff] %v6544
        %6655 = vst [vmem:[%s375 + $0x68] sm:$0xff] %v6549
        %6656 = vst [vmem:[%s375 + $0x70] sm:$0xff] %v6554
        %6657 = vst [vmem:[%s375 + $0x78] sm:$0xff] %v6559
        %6658 = vst [vmem:[%s375 + $0x80] sm:$0xff] %v6564
        %6659 = vst [vmem:[%s375 + $0x88] sm:$0xff] %v6569
        %6660 = vst [vmem:[%s375 + $0x90] sm:$0xff] %v6574
        %6661 = vst [vmem:[%s375 + $0x98] sm:$0xff] %v6579
        %6662 = vst [vmem:[%s375 + $0xa0] sm:$0xff] %v6584
        %6663 = vst [vmem:[%s375 + $0xa8] sm:$0xff] %v6589
        %6664 = vst [vmem:[%s375 + $0xb0] sm:$0xff] %v6594
        %6665 = vst [vmem:[%s375 + $0xb8] sm:$0xff] %v6599
        %6666 = vst [vmem:[%s375 + $0xc0] sm:$0xff] %v6604
        %6667 = vst [vmem:[%s375 + $0xc8] sm:$0xff] %v6609
        %6668 = vst [vmem:[%s375 + $0xd0] sm:$0xff] %v6614
        %6669 = vst [vmem:[%s375 + $0xd8] sm:$0xff] %v6619
        %6670 = vst [vmem:[%s375 + $0xe0] sm:$0xff] %v6624
        %6671 = vst [vmem:[%s375 + $0xe8] sm:$0xff] %v6629
        %6672 = vst [vmem:[%s375 + $0xf0] sm:$0xff] %v6634
        %6673 = vst [vmem:[%s375 + $0xf8] sm:$0xff] %v6639
        %s6674 = sand.u32 %s152, 1
        %s6675 = scalar_lea.sflag [#allocation4], %s6674
        %s6676 = sand.u32 %s152, 1
        %s6677 = smul.addr %s6676, 256
        %s6678 = scalar_lea.vmem [#allocation10], %s6677
        %s6679 = sand.u32 %s34, 1
        %s6680 = scalar_lea.sflag [#allocation12], %s6679
        %s6681 = sand.u32 %s178, 1
        %s6682 = smul.addr %s6681, 256
        %s6683 = scalar_lea.vmem [#allocation11], %s6682
        %s6684 = sand.u32 %s34, 1
        %s6685 = scalar_lea.sflag [#allocation12], %s6684
        %s6686 = sand.u32 %s204, 1
        %s6687 = smul.addr %s6686, 256
        %s6688 = scalar_lea.vmem [#allocation13], %s6687
        %s6689 = sand.u32 %s230, 1
        %s6690 = scalar_lea.sflag [#allocation15], %s6689
        %s6691 = sand.u32 %s230, 1
        %s6692 = smul.addr %s6691, 256
        %s6693 = scalar_lea.vmem [#allocation14], %s6692
        // Predicated region
        $region57: #{tpu_custom_call.1} parent=39 // pred_check
          %p6694 = pneg %p162
        $region58: #{tpu_custom_call.1} parent=39 // pred_check_branch
          %6696 = sbr.rel (%p6694) target = $region60
        $region59: #{tpu_custom_call.1} parent=39 // pred_region
          %s6697 = smul.u32 2, %s34
          %s6699 = ssub.s32 4096, 4096
          %6700 = vsyncadd %s6675, %s6699
          %s6701 = smul.addr %s6697, 16
          %s6702 = smul.addr %s6701, 128
          %s6703 = scalar_lea.hbm %s5, %s6702
          %s6704 = sshll.u32 %s6678, 4
          %s6705 = int_to_ptr.vmem [resolvable:$true] %s6704
          %6710 = dma.vmem_to_hbm [thread:$0]  %s6705, 4096, %s6703, %s6675, 128, 128, 8
        $region60: #{tpu_custom_call.1} parent=39 // pred_fallthru
          _
        // Predicated region
        $region61: #{tpu_custom_call.1} parent=39 // pred_check
          %p6711 = pneg %p188
        $region62: #{tpu_custom_call.1} parent=39 // pred_check_branch
          %6713 = sbr.rel (%p6711) target = $region64
        $region63: #{tpu_custom_call.1} parent=39 // pred_region
          %s6714 = smul.u32 2, %s34
          %s6716 = ssub.s32 4096, 4096
          %6717 = vsyncadd %s6680, %s6716
          %s6718 = smul.addr %s6714, 16
          %s6719 = smul.addr %s6718, 128
          %s6720 = scalar_lea.hbm %s6, %s6719
          %s6721 = sshll.u32 %s6683, 4
          %s6722 = int_to_ptr.vmem [resolvable:$true] %s6721
          %6727 = dma.vmem_to_hbm [thread:$0]  %s6722, 4096, %s6720, %s6680, 128, 128, 8
        $region64: #{tpu_custom_call.1} parent=39 // pred_fallthru
          _
        // Predicated region
        $region65: #{tpu_custom_call.1} parent=39 // pred_check
          %p6728 = pneg %p214
        $region66: #{tpu_custom_call.1} parent=39 // pred_check_branch
          %6730 = sbr.rel (%p6728) target = $region68
        $region67: #{tpu_custom_call.1} parent=39 // pred_region
          %s6731 = smul.u32 2, %s34
          %s6733 = ssub.s32 4096, 4096
          %6734 = vsyncadd %s6685, %s6733
          %s6735 = smul.addr %s6731, 16
          %s6736 = smul.addr %s6735, 128
          %s6737 = scalar_lea.hbm %s7, %s6736
          %s6738 = sshll.u32 %s6688, 4
          %s6739 = int_to_ptr.vmem [resolvable:$true] %s6738
          %6744 = dma.vmem_to_hbm [thread:$0]  %s6739, 4096, %s6737, %s6685, 128, 128, 8
        $region68: #{tpu_custom_call.1} parent=39 // pred_fallthru
          _
        // Predicated region
        $region69: #{tpu_custom_call.1} parent=39 // pred_check
          %p6745 = pneg %p240
        $region70: #{tpu_custom_call.1} parent=39 // pred_check_branch
          %6747 = sbr.rel (%p6745) target = $region72
        $region71: #{tpu_custom_call.1} parent=39 // pred_region
          %s6748 = smul.u32 2, %s34
          %s6750 = ssub.s32 4096, 4096
          %6751 = vsyncadd %s6690, %s6750
          %s6752 = smul.addr %s6748, 16
          %s6753 = smul.addr %s6752, 128
          %s6754 = scalar_lea.hbm %s8, %s6753
          %s6755 = sshll.u32 %s6693, 4
          %s6756 = int_to_ptr.vmem [resolvable:$true] %s6755
          %6761 = dma.vmem_to_hbm [thread:$0]  %s6756, 4096, %s6754, %s6690, 128, 128, 8
        $region72: #{tpu_custom_call.1} parent=39 // pred_fallthru
          _
      $region40: #{tpu_custom_call.1} parent=5 // pred_fallthru
        _
      %p6762 = scmp.le.s32.totalorder 2, %s29
      // Predicated region
      $region73: #{tpu_custom_call.1} parent=5 // pred_check
        %p6763 = pneg %p6762
      $region74: #{tpu_custom_call.1} parent=5 // pred_check_branch
        %6765 = sbr.rel (%p6763) target = $region76
      $region75: #{tpu_custom_call.1} parent=5 // pred_region
        %s6766 = ssub.s32 %s29, 2
        // Predicated region
        $region77: #{tpu_custom_call.1} parent=75 // pred_check
          %p6767 = pneg %p168
        $region78: #{tpu_custom_call.1} parent=75 // pred_check_branch
          %6769 = sbr.rel (%p6767) target = $region80
        $region79: #{tpu_custom_call.1} parent=75 // pred_region
          %s6770 = sand.u32 %s153, 1
          %s6771 = scalar_lea.sflag [#allocation4], %s6770
          %s6772 = sand.u32 %s153, 1
          %s6773 = smul.addr %s6772, 256
          %s6774 = scalar_lea.vmem [#allocation10], %s6773
          %6775 = dma.done %s6771, 4096
        $region80: #{tpu_custom_call.1} parent=75 // pred_fallthru
          _
        // Predicated region
        $region81: #{tpu_custom_call.1} parent=75 // pred_check
          %p6776 = pneg %p194
        $region82: #{tpu_custom_call.1} parent=75 // pred_check_branch
          %6778 = sbr.rel (%p6776) target = $region84
        $region83: #{tpu_custom_call.1} parent=75 // pred_region
          %s6779 = sand.u32 %s35, 1
          %s6780 = scalar_lea.sflag [#allocation12], %s6779
          %s6781 = sand.u32 %s179, 1
          %s6782 = smul.addr %s6781, 256
          %s6783 = scalar_lea.vmem [#allocation11], %s6782
          %6784 = dma.done %s6780, 4096
        $region84: #{tpu_custom_call.1} parent=75 // pred_fallthru
          _
        // Predicated region
        $region85: #{tpu_custom_call.1} parent=75 // pred_check
          %p6785 = pneg %p220
        $region86: #{tpu_custom_call.1} parent=75 // pred_check_branch
          %6787 = sbr.rel (%p6785) target = $region88
        $region87: #{tpu_custom_call.1} parent=75 // pred_region
          %s6788 = sand.u32 %s35, 1
          %s6789 = scalar_lea.sflag [#allocation12], %s6788
          %s6790 = sand.u32 %s205, 1
          %s6791 = smul.addr %s6790, 256
          %s6792 = scalar_lea.vmem [#allocation13], %s6791
          %6793 = dma.done %s6789, 4096
        $region88: #{tpu_custom_call.1} parent=75 // pred_fallthru
          _
        // Predicated region
        $region89: #{tpu_custom_call.1} parent=75 // pred_check
          %p6794 = pneg %p246
        $region90: #{tpu_custom_call.1} parent=75 // pred_check_branch
          %6796 = sbr.rel (%p6794) target = $region92
        $region91: #{tpu_custom_call.1} parent=75 // pred_region
          %s6797 = sand.u32 %s231, 1
          %s6798 = scalar_lea.sflag [#allocation15], %s6797
          %s6799 = sand.u32 %s231, 1
          %s6800 = smul.addr %s6799, 256
          %s6801 = scalar_lea.vmem [#allocation14], %s6800
          %6802 = dma.done %s6798, 4096
        $region92: #{tpu_custom_call.1} parent=75 // pred_fallthru
          _
      $region76: #{tpu_custom_call.1} parent=5 // pred_fallthru
        _
    $region6: #{tpu_custom_call.1} parent=1 // loop_footer
      %s33 = sadd.s32 1, %s29
    $region7: #{tpu_custom_call.1} parent=1 // loop_footer_branch
      %28 = sbr.rel target = $region3
    $region8: #{tpu_custom_call.1} parent=1 // loop_exit
      _
    %6803 = vsyncpa [#allocation3], 1
    %s6804 = scalar_lea.sflag [#allocation3], 1
    %6805 = vsyncpa %s6804, 1
    %6806 = vsyncpa [#allocation6], 1
    %6807 = vsyncpa [#allocation9], 1
    %6808 = vsyncpa [#allocation4], 1
    %s6809 = scalar_lea.sflag [#allocation4], 1
    %6810 = vsyncpa %s6809, 1
    %6811 = vsyncpa [#allocation12], 1
    %s6812 = scalar_lea.sflag [#allocation12], 1
    %6813 = vsyncpa %s6812, 1
    %6814 = vsyncpa [#allocation15], 1
    %s6815 = scalar_lea.sflag [#allocation15], 1
    %6816 = vsyncpa %s6815, 1

</llo_original>
